<compile_context>
chip_gen: v5e
topology: v5e:2x2
jax: 0.10.0
libtpu: 0.0.40
codegen_flags: <defaults>
</compile_context>

<pallas_src>
import functools
import math

import jax
import jax.numpy as jnp
import numpy as np
from jax.experimental import pallas as pl
from jax.experimental.pallas import tpu as pltpu

HIDDEN = 256
N_LAYERS = 8
POS_LEVELS = 10
TIME_LEVELS = 4
POS_DIM = 3 + 3 * 2 * POS_LEVELS        # 63
TIME_DIM = 1 + 1 * 2 * TIME_LEVELS      # 9
# TODO(synk): the reference __init__ declares freq_dim=8, but frequency_encoding()
# actually emits 7 features for a [B,1] frequency input; we use the true 7 so the
# forward pass (and the skip-connection shape check) is self-consistent.
FREQ_DIM = 7
OBJ_DIM = 8
INPUT_DIM = POS_DIM + TIME_DIM + FREQ_DIM + OBJ_DIM     # 87
INPUT_PAD = 128                                          # lane-aligned K
HEAD_DIM = HIDDEN // 2                                   # 128
SMALL_HEAD = HEAD_DIM // 2                               # 64
HEAD1_DIM = 2 * HEAD_DIM + 2 * SMALL_HEAD                # 384 (fused head layer-1)
OUT_PAD = 128                                            # lane-dense output slab
SCAT_COL = 6
LN_EPS = 1e-5
SKIP_LAYER = N_LAYERS // 2
MID_LAYERS = [i for i in range(N_LAYERS) if i not in (0, SKIP_LAYER)]

MAX_TILE_M = 1024                                        # perf review: 1024-2048
VMEM_LIMIT_BYTES = 48 * 1024 * 1024                      # < v7x 64 MiB physical

PACKED_ORDER = ["w0", "wmid", "wskip_x", "wskip_f", "bb_b", "ln_g", "ln_b",
                "head_w1", "head_b1", "head_w2", "head_b2"]


@functools.lru_cache(maxsize=None)
def _ln_in_bf16() -> bool:
    """bf16 LayerNorm normalize/affine only on chips with packed-bf16 VALUs."""
    try:
        kind = jax.devices()[0].device_kind.lower()
    except Exception:
        return False
    return ("v6" in kind) or ("v7" in kind)


def _choose_tile_m(batch: int) -> int:
    """Large tiles to amortize per-step overhead; >=2 tiles when there is
    enough work to split across v7x's two TensorCores."""
    if batch <= 256:
        # Single small tile; padding up to force 2 steps would add pure-padding
        # work on single-TC chips (v5e/v6e).
        return max(128, pl.cdiv(batch, 128) * 128)
    if batch >= 2 * MAX_TILE_M:
        return MAX_TILE_M
    half = pl.cdiv(batch, 2)
    return min(MAX_TILE_M, pl.cdiv(half, 128) * 128)


# ---------------------------------------------------------------------------
# Pallas kernel: 8 x [Linear -> LayerNorm -> ReLU] backbone + fused heads.
# ---------------------------------------------------------------------------
def em_nerf_kernel(
    feats_ref,
    w0_ref, wmid_ref, wskip_x_ref, wskip_f_ref,
    bb_b_ref, ln_g_ref, ln_b_ref,
    hw1_ref, hb1_ref, hw2_ref, hb2_ref,
    out_ref,
    *, ln_bf16,
):
    bf16 = jnp.bfloat16
    inv_n = 1.0 / HIDDEN
    feats = feats_ref[...]                  # [tile_m, 128] bf16 (zero-padded cols)
    skip = feats
    x = feats
    mid = 0
    for i in range(N_LAYERS):
        if i == 0:
            h = jnp.dot(x, w0_ref[...], preferred_element_type=jnp.float32)
        elif i == SKIP_LAYER:
            # torch.cat([x, skip], 1) @ W  ==  x @ W[:H] + skip @ W[H:]
            h = (jnp.dot(x, wskip_x_ref[...], preferred_element_type=jnp.float32)
                 + jnp.dot(skip, wskip_f_ref[...], preferred_element_type=jnp.float32))
        else:
            h = jnp.dot(x, wmid_ref[mid], preferred_element_type=jnp.float32)
            mid += 1
        # Bias + one-pass LayerNorm statistics in f32: var = E[h^2] - mu^2.
        h = h + bb_b_ref[i:i + 1, :]
        s1 = jnp.sum(h, axis=-1, keepdims=True)
        s2 = jnp.sum(h * h, axis=-1, keepdims=True)
        mu = s1 * inv_n
        var = jnp.maximum(s2 * inv_n - mu * mu, 0.0)
        inv = jax.lax.rsqrt(var + LN_EPS)
        if ln_bf16:
            # v6e/v7x: packed-bf16 VALU -> normalize/affine/ReLU in bf16.
            y = ((h.astype(bf16) - mu.astype(bf16)) * inv.astype(bf16)
                 * ln_g_ref[i:i + 1, :].astype(bf16)
                 + ln_b_ref[i:i + 1, :].astype(bf16))
            x = jnp.maximum(y, 0)
        else:
            # v5e (no bf16 VPU): keep the affine in f32, cast only for the MXU.
            y = (h - mu) * inv * ln_g_ref[i:i + 1, :] + ln_b_ref[i:i + 1, :]
            x = jnp.maximum(y, 0.0).astype(bf16)
        # nn.Dropout(0.1) is identity at inference.

    # Fused heads: one lane-dense N=384 matmul, ReLU, then one block-diagonal
    # [384, 128] matmul producing a single lane-dense bf16 output slab.
    h1 = jnp.dot(x, hw1_ref[...], preferred_element_type=jnp.float32) + hb1_ref[...]
    h1 = jnp.maximum(h1, 0.0).astype(bf16)
    out = jnp.dot(h1, hw2_ref[...], preferred_element_type=jnp.float32) + hb2_ref[...]
    out_ref[...] = out.astype(out_ref.dtype)


# ---------------------------------------------------------------------------
# Parameter init (deterministic): kaiming_normal_(relu) => N(0, 2/fan_in),
# biases zero, LayerNorm gamma=1 / beta=0 (matches _init_weights).
# ---------------------------------------------------------------------------
def _kaiming(key, fan_in, fan_out):
    std = math.sqrt(2.0 / fan_in)
    return (std * jax.random.normal(key, (fan_in, fan_out))).astype(jnp.float32)


def init_params(key):
    keys = jax.random.split(key, 11)
    p = {}
    p["w0"] = _kaiming(keys[0], INPUT_DIM, HIDDEN)
    p["wmid"] = jnp.stack(
        [_kaiming(k, HIDDEN, HIDDEN)
         for k in jax.random.split(keys[1], len(MID_LAYERS))], axis=0)
    wskip = _kaiming(keys[2], HIDDEN + INPUT_DIM, HIDDEN)
    p["wskip_x"] = wskip[:HIDDEN]
    p["wskip_f"] = wskip[HIDDEN:]
    p["bb_b"] = jnp.zeros((N_LAYERS, HIDDEN), jnp.float32)
    p["ln_g"] = jnp.ones((N_LAYERS, HIDDEN), jnp.float32)
    p["ln_b"] = jnp.zeros((N_LAYERS, HIDDEN), jnp.float32)
    p["ew1"] = _kaiming(keys[3], HIDDEN, HEAD_DIM)
    p["eb1"] = jnp.zeros((1, HEAD_DIM), jnp.float32)
    p["ew2"] = _kaiming(keys[4], HEAD_DIM, 3)
    p["eb2"] = jnp.zeros((1, 3), jnp.float32)
    p["mw1"] = _kaiming(keys[5], HIDDEN, HEAD_DIM)
    p["mb1"] = jnp.zeros((1, HEAD_DIM), jnp.float32)
    p["mw2"] = _kaiming(keys[6], HEAD_DIM, 3)
    p["mb2"] = jnp.zeros((1, 3), jnp.float32)
    p["sw1"] = _kaiming(keys[7], HIDDEN, SMALL_HEAD)
    p["sb1"] = jnp.zeros((1, SMALL_HEAD), jnp.float32)
    p["sw2"] = _kaiming(keys[8], SMALL_HEAD, 1)
    p["sb2"] = jnp.zeros((1, 1), jnp.float32)
    p["dw1"] = _kaiming(keys[9], HIDDEN, SMALL_HEAD)
    p["db1"] = jnp.zeros((1, SMALL_HEAD), jnp.float32)
    p["dw2"] = _kaiming(keys[10], SMALL_HEAD, 1)
    p["db2"] = jnp.zeros((1, 1), jnp.float32)
    return p


def pack_params(p):
    """Pad / fuse / cast raw f32 params into the kernel-side layout (done once)."""
    bf16 = jnp.bfloat16
    w0 = jnp.zeros((INPUT_PAD, HIDDEN), jnp.float32).at[:INPUT_DIM].set(p["w0"])
    wskip_f = jnp.zeros((INPUT_PAD, HIDDEN), jnp.float32).at[:INPUT_DIM].set(p["wskip_f"])
    head_w1 = jnp.concatenate([p["ew1"], p["mw1"], p["sw1"], p["dw1"]], axis=1)   # [256,384]
    head_b1 = jnp.concatenate([p["eb1"], p["mb1"], p["sb1"], p["db1"]], axis=1)   # [1,384] f32
    hw2 = jnp.zeros((HEAD1_DIM, OUT_PAD), jnp.float32)
    hw2 = hw2.at[0:HEAD_DIM, 0:3].set(p["ew2"])
    hw2 = hw2.at[HEAD_DIM:2 * HEAD_DIM, 3:6].set(p["mw2"])
    hw2 = hw2.at[2 * HEAD_DIM:2 * HEAD_DIM + SMALL_HEAD, 6:7].set(p["sw2"])
    hw2 = hw2.at[2 * HEAD_DIM + SMALL_HEAD:, 7:8].set(p["dw2"])
    hb2 = jnp.zeros((1, OUT_PAD), jnp.float32)
    hb2 = hb2.at[:, 0:3].set(p["eb2"]).at[:, 3:6].set(p["mb2"])
    hb2 = hb2.at[:, 6:7].set(p["sb2"]).at[:, 7:8].set(p["db2"])
    return {
        "w0": w0.astype(bf16),
        "wmid": p["wmid"].astype(bf16),
        "wskip_x": p["wskip_x"].astype(bf16),
        "wskip_f": wskip_f.astype(bf16),
        "bb_b": p["bb_b"], "ln_g": p["ln_g"], "ln_b": p["ln_b"],
        "head_w1": head_w1.astype(bf16),
        "head_b1": head_b1,
        "head_w2": hw2.astype(bf16),
        "head_b2": hb2,
    }


# ---------------------------------------------------------------------------
# Input encodings (tiny elementwise glue, kept in plain JAX).
# ---------------------------------------------------------------------------
def positional_encoding(x, levels):
    enc = [x]
    for level in range(levels):
        enc.append(jnp.sin((2.0 ** level) * math.pi * x))
        enc.append(jnp.cos((2.0 ** level) * math.pi * x))
    return jnp.concatenate(enc, axis=-1)


def frequency_encoding(freq):
    log_freq = jnp.log10(jnp.clip(freq, 1e6, 1e12))
    normalized = (log_freq - 6.0) / 6.0
    enc = [normalized]
    for i in range(3):
        enc.append(jnp.sin((2.0 ** i) * math.pi * normalized))
        enc.append(jnp.cos((2.0 ** i) * math.pi * normalized))
    return jnp.concatenate(enc, axis=-1)


def build_features(positions, frequencies, times, dynamic_objects):
    pos_enc = positional_encoding(positions, POS_LEVELS)     # [B, 63]
    time_enc = positional_encoding(times, TIME_LEVELS)       # [B, 9]
    freq_enc = frequency_encoding(frequencies)                # [B, 7]
    obj = jnp.tanh(dynamic_objects)                           # [B, 8]
    return jnp.concatenate([pos_enc, time_enc, freq_enc, obj], axis=1)  # [B, 87]


def _resident_spec(shape):
    """Full-array block with a constant index_map -> stays resident in VMEM."""
    nd = len(shape)
    return pl.BlockSpec(shape, lambda i, _nd=nd: (0,) * _nd)


@jax.jit
def em_nerf_forward(packed, positions, frequencies, times, dynamic_objects):
    feats = build_features(positions, frequencies, times, dynamic_objects)  # [B,87] f32
    batch = feats.shape[0]
    tile_m = _choose_tile_m(batch)
    b_pad = pl.cdiv(batch, tile_m) * tile_m
    feats_p = jnp.pad(feats, ((0, b_pad - batch), (0, INPUT_PAD - INPUT_DIM)))
    feats_p = feats_p.astype(jnp.bfloat16)                                  # [B_pad,128]

    grid = (b_pad // tile_m,)
    in_specs = [pl.BlockSpec((tile_m, INPUT_PAD), lambda i: (i, 0))]
    in_specs += [_resident_spec(packed[k].shape) for k in PACKED_ORDER]
    out_spec = pl.BlockSpec((tile_m, OUT_PAD), lambda i: (i, 0))

    kernel = functools.partial(em_nerf_kernel, ln_bf16=_ln_in_bf16())
    out = pl.pallas_call(
        kernel,
        out_shape=jax.ShapeDtypeStruct((b_pad, OUT_PAD), jnp.bfloat16),
        grid=grid,
        in_specs=in_specs,
        out_specs=out_spec,
        compiler_params=pltpu.CompilerParams(
            dimension_semantics=("parallel",),
            vmem_limit_bytes=VMEM_LIMIT_BYTES),
    )(feats_p, *[packed[k] for k in PACKED_ORDER])

    out = out[:batch].astype(jnp.float32)
    # Sigmoid on the single scattering column applied here (B x 1 elements)
    # instead of over the full tile_m x 128 slab in-kernel.
    return {
        "electric_field": out[:, 0:3],
        "magnetic_field": out[:, 3:6],
        "scattering_coefficient": jax.nn.sigmoid(out[:, SCAT_COL:SCAT_COL + 1]),
        "propagation_delay": out[:, 7:8],
    }


# ---------------------------------------------------------------------------
# Pure-JAX references for correctness checks.
#   * reference_forward_mixed: mirrors the kernel math exactly (bf16 operands /
#     f32 accumulation, one-pass LN stats, bf16 or f32 affine) -> tight check.
#   * reference_forward_f32: full-f32 reference of the original module
#     (loose tolerance; bounds the mixed-precision deviation).
# ---------------------------------------------------------------------------
def reference_forward_mixed(params, positions, frequencies, times, dynamic_objects,
                            ln_bf16):
    bf16 = jnp.bfloat16
    inv_n = 1.0 / HIDDEN
    feats = build_features(positions, frequencies, times, dynamic_objects).astype(bf16)
    x, skip, mid = feats, feats, 0
    for i in range(N_LAYERS):
        if i == 0:
            h = jnp.dot(x, params["w0"].astype(bf16), preferred_element_type=jnp.float32)
        elif i == SKIP_LAYER:
            h = (jnp.dot(x, params["wskip_x"].astype(bf16), preferred_element_type=jnp.float32)
                 + jnp.dot(skip, params["wskip_f"].astype(bf16), preferred_element_type=jnp.float32))
        else:
            h = jnp.dot(x, params["wmid"][mid].astype(bf16),
                        preferred_element_type=jnp.float32)
            mid += 1
        h = h + params["bb_b"][i]
        s1 = jnp.sum(h, -1, keepdims=True)
        s2 = jnp.sum(h * h, -1, keepdims=True)
        mu = s1 * inv_n
        var = jnp.maximum(s2 * inv_n - mu * mu, 0.0)
        inv = jax.lax.rsqrt(var + LN_EPS)
        if ln_bf16:
            y = ((h.astype(bf16) - mu.astype(bf16)) * inv.astype(bf16)
                 * params["ln_g"][i].astype(bf16) + params["ln_b"][i].astype(bf16))
            x = jnp.maximum(y, 0)
        else:
            y = (h - mu) * inv * params["ln_g"][i] + params["ln_b"][i]
            x = jnp.maximum(y, 0.0).astype(bf16)

    def head(w1, b1, w2, b2):
        h1 = jnp.maximum(
            jnp.dot(x, w1.astype(bf16), preferred_element_type=jnp.float32) + b1, 0.0
        ).astype(bf16)
        o = jnp.dot(h1, w2.astype(bf16), preferred_element_type=jnp.float32) + b2
        return o.astype(bf16).astype(jnp.float32)   # mirror the kernel's bf16 output slab

    return {
        "electric_field": head(params["ew1"], params["eb1"], params["ew2"], params["eb2"]),
        "magnetic_field": head(params["mw1"], params["mb1"], params["mw2"], params["mb2"]),
        "scattering_coefficient": jax.nn.sigmoid(
            head(params["sw1"], params["sb1"], params["sw2"], params["sb2"])),
        "propagation_delay": head(params["dw1"], params["db1"], params["dw2"], params["db2"]),
    }


def reference_forward_f32(params, positions, frequencies, times, dynamic_objects):
    dot = functools.partial(jnp.dot, precision=jax.lax.Precision.HIGHEST)
    feats = build_features(positions, frequencies, times, dynamic_objects)
    x, skip, mid = feats, feats, 0
    for i in range(N_LAYERS):
        if i == 0:
            h = dot(x, params["w0"])
        elif i == SKIP_LAYER:
            h = dot(jnp.concatenate([x, skip], axis=1),
                    jnp.concatenate([params["wskip_x"], params["wskip_f"]], axis=0))
        else:
            h = dot(x, params["wmid"][mid]); mid += 1
        h = h + params["bb_b"][i]
        mu = jnp.mean(h, -1, keepdims=True)
        var = jnp.mean((h - mu) ** 2, -1, keepdims=True)
        h = (h - mu) / jnp.sqrt(var + LN_EPS)
        h = h * params["ln_g"][i] + params["ln_b"][i]
        x = jnp.maximum(h, 0.0)

    def head(w1, b1, w2, b2):
        return dot(jnp.maximum(dot(x, w1) + b1, 0.0), w2) + b2

    return {
        "electric_field": head(params["ew1"], params["eb1"], params["ew2"], params["eb2"]),
        "magnetic_field": head(params["mw1"], params["mb1"], params["mw2"], params["mb2"]),
        "scattering_coefficient": jax.nn.sigmoid(
            head(params["sw1"], params["sb1"], params["sw2"], params["sb2"])),
        "propagation_delay": head(params["dw1"], params["db1"], params["dw2"], params["db2"]),
    }


if __name__ == "__main__":
    B = 8
    key = jax.random.PRNGKey(0)
    kp, k1, k2, k3, k4 = jax.random.split(key, 5)
    params = init_params(kp)
    packed = pack_params(params)

    positions = jax.random.normal(k1, (B, 3), jnp.float32)
    frequencies = 10.0 ** jax.random.uniform(k2, (B, 1), jnp.float32, 6.0, 12.0)
    times = jax.random.uniform(k3, (B, 1), jnp.float32)
    dynamic_objects = jax.random.normal(k4, (B, OBJ_DIM), jnp.float32)

    out = em_nerf_forward(packed, positions, frequencies, times, dynamic_objects)
    out = jax.block_until_ready(out)

    ref_mix = reference_forward_mixed(params, positions, frequencies, times,
                                      dynamic_objects, _ln_in_bf16())
    ref_f32 = reference_forward_f32(params, positions, frequencies, times, dynamic_objects)
    for name in ("electric_field", "magnetic_field",
                 "scattering_coefficient", "propagation_delay"):
        # Tight check vs the same-math (bf16 operand / f32 accum) reference.
        np.testing.assert_allclose(np.asarray(out[name]), np.asarray(ref_mix[name]),
                                   rtol=1e-2, atol=1e-2)
        # Loose sanity check vs the full-f32 reference of the original module.
        np.testing.assert_allclose(np.asarray(out[name]), np.asarray(ref_f32[name]),
                                   rtol=1e-1, atol=1e-1)
    print("KERNEL_OK")
</pallas_src>

<mosaic_0001>
module attributes {stable_mosaic.version = 11 : i64} {
  func.func @em_nerf_kernel(%arg0: i32, %arg1: memref<128x128xbf16, #tpu.memory_space<vmem>>, %arg2: memref<128x256xbf16, #tpu.memory_space<vmem>>, %arg3: memref<6x256x256xbf16, #tpu.memory_space<vmem>>, %arg4: memref<256x256xbf16, #tpu.memory_space<vmem>>, %arg5: memref<128x256xbf16, #tpu.memory_space<vmem>>, %arg6: memref<8x256xf32, #tpu.memory_space<vmem>>, %arg7: memref<8x256xf32, #tpu.memory_space<vmem>>, %arg8: memref<8x256xf32, #tpu.memory_space<vmem>>, %arg9: memref<256x384xbf16, #tpu.memory_space<vmem>>, %arg10: memref<1x384xf32, #tpu.memory_space<vmem>>, %arg11: memref<384x128xbf16, #tpu.memory_space<vmem>>, %arg12: memref<1x128xf32, #tpu.memory_space<vmem>>, %arg13: memref<128x128xbf16, #tpu.memory_space<vmem>>) attributes {dimension_semantics = [#tpu.dimension_semantics<parallel>], iteration_bounds = array<i64: 1>, scalar_prefetch = 0 : i64, scratch_operands = 0 : i64, tpu.core_type = #tpu.core_type<tc>, window_params = [{transform_indices = @transform_0, window_bounds = array<i64: 128, 128>}, {pipeline_mode = #tpu.pipeline_mode<synchronous>, transform_indices = @transform_1, window_bounds = array<i64: 128, 256>}, {pipeline_mode = #tpu.pipeline_mode<synchronous>, transform_indices = @transform_2, window_bounds = array<i64: 6, 256, 256>}, {pipeline_mode = #tpu.pipeline_mode<synchronous>, transform_indices = @transform_3, window_bounds = array<i64: 256, 256>}, {pipeline_mode = #tpu.pipeline_mode<synchronous>, transform_indices = @transform_4, window_bounds = array<i64: 128, 256>}, {pipeline_mode = #tpu.pipeline_mode<synchronous>, transform_indices = @transform_5, window_bounds = array<i64: 8, 256>}, {pipeline_mode = #tpu.pipeline_mode<synchronous>, transform_indices = @transform_6, window_bounds = array<i64: 8, 256>}, {pipeline_mode = #tpu.pipeline_mode<synchronous>, transform_indices = @transform_7, window_bounds = array<i64: 8, 256>}, {pipeline_mode = #tpu.pipeline_mode<synchronous>, transform_indices = @transform_8, window_bounds = array<i64: 256, 384>}, {pipeline_mode = #tpu.pipeline_mode<synchronous>, transform_indices = @transform_9, window_bounds = array<i64: 1, 384>}, {pipeline_mode = #tpu.pipeline_mode<synchronous>, transform_indices = @transform_10, window_bounds = array<i64: 384, 128>}, {pipeline_mode = #tpu.pipeline_mode<synchronous>, transform_indices = @transform_11, window_bounds = array<i64: 1, 128>}, {transform_indices = @transform_12, window_bounds = array<i64: 128, 128>}]} {
    %c0 = arith.constant 0 : index
    %c0_0 = arith.constant 0 : index
    %0 = vector.load %arg1[%c0, %c0_0] : memref<128x128xbf16, #tpu.memory_space<vmem>>, vector<128x128xbf16>
    %c0_1 = arith.constant 0 : index
    %c0_2 = arith.constant 0 : index
    %1 = vector.load %arg2[%c0_1, %c0_2] : memref<128x256xbf16, #tpu.memory_space<vmem>>, vector<128x256xbf16>
    %cst = arith.constant dense<0.000000e+00> : vector<128x256xf32>
    %2 = tpu.matmul %0, %1, %cst {dimension_numbers = #tpu.dot_dimension_numbers<[1], [0], [0], [1], [0, 0, 1, 1], [], []>} : vector<128x128xbf16>, vector<128x256xbf16>, vector<128x256xf32> -> vector<128x256xf32>
    %c0_3 = arith.constant 0 : index
    %c0_4 = arith.constant 0 : index
    %3 = vector.load %arg6[%c0_3, %c0_4] : memref<8x256xf32, #tpu.memory_space<vmem>>, vector<1x256xf32>
    %4 = vector.broadcast %3 : vector<1x256xf32> to vector<128x256xf32>
    %5 = arith.addf %2, %4 : vector<128x256xf32>
    %cst_5 = arith.constant dense<0.000000e+00> : vector<128xf32>
    %6 = vector.multi_reduction <add>, %5, %cst_5 [1] : vector<128x256xf32> to vector<128xf32>
    %7 = vector.shape_cast %6 : vector<128xf32> to vector<128x1xf32>
    %8 = arith.mulf %5, %5 : vector<128x256xf32>
    %cst_6 = arith.constant dense<0.000000e+00> : vector<128xf32>
    %9 = vector.multi_reduction <add>, %8, %cst_6 [1] : vector<128x256xf32> to vector<128xf32>
    %10 = vector.shape_cast %9 : vector<128xf32> to vector<128x1xf32>
    %cst_7 = arith.constant 3.906250e-03 : f32
    %11 = vector.broadcast %cst_7 : f32 to vector<128x1xf32>
    %12 = arith.mulf %7, %11 : vector<128x1xf32>
    %cst_8 = arith.constant 3.906250e-03 : f32
    %13 = vector.broadcast %cst_8 : f32 to vector<128x1xf32>
    %14 = arith.mulf %10, %13 : vector<128x1xf32>
    %15 = arith.mulf %12, %12 : vector<128x1xf32>
    %16 = arith.subf %14, %15 : vector<128x1xf32>
    %cst_9 = arith.constant 0.000000e+00 : f32
    %17 = vector.broadcast %cst_9 : f32 to vector<128x1xf32>
    %18 = arith.maximumf %16, %17 : vector<128x1xf32>
    %cst_10 = arith.constant 9.99999974E-6 : f32
    %19 = vector.broadcast %cst_10 : f32 to vector<128x1xf32>
    %20 = arith.addf %18, %19 : vector<128x1xf32>
    %21 = math.rsqrt %20 : vector<128x1xf32>
    %22 = vector.broadcast %12 : vector<128x1xf32> to vector<128x256xf32>
    %23 = arith.subf %5, %22 : vector<128x256xf32>
    %24 = vector.broadcast %21 : vector<128x1xf32> to vector<128x256xf32>
    %25 = arith.mulf %23, %24 : vector<128x256xf32>
    %c0_11 = arith.constant 0 : index
    %c0_12 = arith.constant 0 : index
    %26 = vector.load %arg7[%c0_11, %c0_12] : memref<8x256xf32, #tpu.memory_space<vmem>>, vector<1x256xf32>
    %27 = vector.broadcast %26 : vector<1x256xf32> to vector<128x256xf32>
    %28 = arith.mulf %25, %27 : vector<128x256xf32>
    %c0_13 = arith.constant 0 : index
    %c0_14 = arith.constant 0 : index
    %29 = vector.load %arg8[%c0_13, %c0_14] : memref<8x256xf32, #tpu.memory_space<vmem>>, vector<1x256xf32>
    %30 = vector.broadcast %29 : vector<1x256xf32> to vector<128x256xf32>
    %31 = arith.addf %28, %30 : vector<128x256xf32>
    %cst_15 = arith.constant 0.000000e+00 : f32
    %32 = vector.broadcast %cst_15 : f32 to vector<128x256xf32>
    %33 = arith.maximumf %31, %32 : vector<128x256xf32>
    %34 = arith.truncf %33 : vector<128x256xf32> to vector<128x256xbf16>
    %c0_16 = arith.constant 0 : index
    %c0_17 = arith.constant 0 : index
    %c0_18 = arith.constant 0 : index
    %35 = vector.load %arg3[%c0_16, %c0_17, %c0_18] : memref<6x256x256xbf16, #tpu.memory_space<vmem>>, vector<1x256x256xbf16>
    %36 = vector.shape_cast %35 : vector<1x256x256xbf16> to vector<256x256xbf16>
    %cst_19 = arith.constant dense<0.000000e+00> : vector<128x256xf32>
    %37 = tpu.matmul %34, %36, %cst_19 {dimension_numbers = #tpu.dot_dimension_numbers<[1], [0], [0], [1], [0, 0, 1, 1], [], []>} : vector<128x256xbf16>, vector<256x256xbf16>, vector<128x256xf32> -> vector<128x256xf32>
    %c1 = arith.constant 1 : index
    %c0_20 = arith.constant 0 : index
    %38 = vector.load %arg6[%c1, %c0_20] : memref<8x256xf32, #tpu.memory_space<vmem>>, vector<1x256xf32>
    %39 = vector.broadcast %38 : vector<1x256xf32> to vector<128x256xf32>
    %40 = arith.addf %37, %39 : vector<128x256xf32>
    %cst_21 = arith.constant dense<0.000000e+00> : vector<128xf32>
    %41 = vector.multi_reduction <add>, %40, %cst_21 [1] : vector<128x256xf32> to vector<128xf32>
    %42 = vector.shape_cast %41 : vector<128xf32> to vector<128x1xf32>
    %43 = arith.mulf %40, %40 : vector<128x256xf32>
    %cst_22 = arith.constant dense<0.000000e+00> : vector<128xf32>
    %44 = vector.multi_reduction <add>, %43, %cst_22 [1] : vector<128x256xf32> to vector<128xf32>
    %45 = vector.shape_cast %44 : vector<128xf32> to vector<128x1xf32>
    %cst_23 = arith.constant 3.906250e-03 : f32
    %46 = vector.broadcast %cst_23 : f32 to vector<128x1xf32>
    %47 = arith.mulf %42, %46 : vector<128x1xf32>
    %cst_24 = arith.constant 3.906250e-03 : f32
    %48 = vector.broadcast %cst_24 : f32 to vector<128x1xf32>
    %49 = arith.mulf %45, %48 : vector<128x1xf32>
    %50 = arith.mulf %47, %47 : vector<128x1xf32>
    %51 = arith.subf %49, %50 : vector<128x1xf32>
    %cst_25 = arith.constant 0.000000e+00 : f32
    %52 = vector.broadcast %cst_25 : f32 to vector<128x1xf32>
    %53 = arith.maximumf %51, %52 : vector<128x1xf32>
    %cst_26 = arith.constant 9.99999974E-6 : f32
    %54 = vector.broadcast %cst_26 : f32 to vector<128x1xf32>
    %55 = arith.addf %53, %54 : vector<128x1xf32>
    %56 = math.rsqrt %55 : vector<128x1xf32>
    %57 = vector.broadcast %47 : vector<128x1xf32> to vector<128x256xf32>
    %58 = arith.subf %40, %57 : vector<128x256xf32>
    %59 = vector.broadcast %56 : vector<128x1xf32> to vector<128x256xf32>
    %60 = arith.mulf %58, %59 : vector<128x256xf32>
    %c1_27 = arith.constant 1 : index
    %c0_28 = arith.constant 0 : index
    %61 = vector.load %arg7[%c1_27, %c0_28] : memref<8x256xf32, #tpu.memory_space<vmem>>, vector<1x256xf32>
    %62 = vector.broadcast %61 : vector<1x256xf32> to vector<128x256xf32>
    %63 = arith.mulf %60, %62 : vector<128x256xf32>
    %c1_29 = arith.constant 1 : index
    %c0_30 = arith.constant 0 : index
    %64 = vector.load %arg8[%c1_29, %c0_30] : memref<8x256xf32, #tpu.memory_space<vmem>>, vector<1x256xf32>
    %65 = vector.broadcast %64 : vector<1x256xf32> to vector<128x256xf32>
    %66 = arith.addf %63, %65 : vector<128x256xf32>
    %cst_31 = arith.constant 0.000000e+00 : f32
    %67 = vector.broadcast %cst_31 : f32 to vector<128x256xf32>
    %68 = arith.maximumf %66, %67 : vector<128x256xf32>
    %69 = arith.truncf %68 : vector<128x256xf32> to vector<128x256xbf16>
    %c1_32 = arith.constant 1 : index
    %c0_33 = arith.constant 0 : index
    %c0_34 = arith.constant 0 : index
    %70 = vector.load %arg3[%c1_32, %c0_33, %c0_34] : memref<6x256x256xbf16, #tpu.memory_space<vmem>>, vector<1x256x256xbf16>
    %71 = vector.shape_cast %70 : vector<1x256x256xbf16> to vector<256x256xbf16>
    %cst_35 = arith.constant dense<0.000000e+00> : vector<128x256xf32>
    %72 = tpu.matmul %69, %71, %cst_35 {dimension_numbers = #tpu.dot_dimension_numbers<[1], [0], [0], [1], [0, 0, 1, 1], [], []>} : vector<128x256xbf16>, vector<256x256xbf16>, vector<128x256xf32> -> vector<128x256xf32>
    %c2 = arith.constant 2 : index
    %c0_36 = arith.constant 0 : index
    %73 = vector.load %arg6[%c2, %c0_36] : memref<8x256xf32, #tpu.memory_space<vmem>>, vector<1x256xf32>
    %74 = vector.broadcast %73 : vector<1x256xf32> to vector<128x256xf32>
    %75 = arith.addf %72, %74 : vector<128x256xf32>
    %cst_37 = arith.constant dense<0.000000e+00> : vector<128xf32>
    %76 = vector.multi_reduction <add>, %75, %cst_37 [1] : vector<128x256xf32> to vector<128xf32>
    %77 = vector.shape_cast %76 : vector<128xf32> to vector<128x1xf32>
    %78 = arith.mulf %75, %75 : vector<128x256xf32>
    %cst_38 = arith.constant dense<0.000000e+00> : vector<128xf32>
    %79 = vector.multi_reduction <add>, %78, %cst_38 [1] : vector<128x256xf32> to vector<128xf32>
    %80 = vector.shape_cast %79 : vector<128xf32> to vector<128x1xf32>
    %cst_39 = arith.constant 3.906250e-03 : f32
    %81 = vector.broadcast %cst_39 : f32 to vector<128x1xf32>
    %82 = arith.mulf %77, %81 : vector<128x1xf32>
    %cst_40 = arith.constant 3.906250e-03 : f32
    %83 = vector.broadcast %cst_40 : f32 to vector<128x1xf32>
    %84 = arith.mulf %80, %83 : vector<128x1xf32>
    %85 = arith.mulf %82, %82 : vector<128x1xf32>
    %86 = arith.subf %84, %85 : vector<128x1xf32>
    %cst_41 = arith.constant 0.000000e+00 : f32
    %87 = vector.broadcast %cst_41 : f32 to vector<128x1xf32>
    %88 = arith.maximumf %86, %87 : vector<128x1xf32>
    %cst_42 = arith.constant 9.99999974E-6 : f32
    %89 = vector.broadcast %cst_42 : f32 to vector<128x1xf32>
    %90 = arith.addf %88, %89 : vector<128x1xf32>
    %91 = math.rsqrt %90 : vector<128x1xf32>
    %92 = vector.broadcast %82 : vector<128x1xf32> to vector<128x256xf32>
    %93 = arith.subf %75, %92 : vector<128x256xf32>
    %94 = vector.broadcast %91 : vector<128x1xf32> to vector<128x256xf32>
    %95 = arith.mulf %93, %94 : vector<128x256xf32>
    %c2_43 = arith.constant 2 : index
    %c0_44 = arith.constant 0 : index
    %96 = vector.load %arg7[%c2_43, %c0_44] : memref<8x256xf32, #tpu.memory_space<vmem>>, vector<1x256xf32>
    %97 = vector.broadcast %96 : vector<1x256xf32> to vector<128x256xf32>
    %98 = arith.mulf %95, %97 : vector<128x256xf32>
    %c2_45 = arith.constant 2 : index
    %c0_46 = arith.constant 0 : index
    %99 = vector.load %arg8[%c2_45, %c0_46] : memref<8x256xf32, #tpu.memory_space<vmem>>, vector<1x256xf32>
    %100 = vector.broadcast %99 : vector<1x256xf32> to vector<128x256xf32>
    %101 = arith.addf %98, %100 : vector<128x256xf32>
    %cst_47 = arith.constant 0.000000e+00 : f32
    %102 = vector.broadcast %cst_47 : f32 to vector<128x256xf32>
    %103 = arith.maximumf %101, %102 : vector<128x256xf32>
    %104 = arith.truncf %103 : vector<128x256xf32> to vector<128x256xbf16>
    %c2_48 = arith.constant 2 : index
    %c0_49 = arith.constant 0 : index
    %c0_50 = arith.constant 0 : index
    %105 = vector.load %arg3[%c2_48, %c0_49, %c0_50] : memref<6x256x256xbf16, #tpu.memory_space<vmem>>, vector<1x256x256xbf16>
    %106 = vector.shape_cast %105 : vector<1x256x256xbf16> to vector<256x256xbf16>
    %cst_51 = arith.constant dense<0.000000e+00> : vector<128x256xf32>
    %107 = tpu.matmul %104, %106, %cst_51 {dimension_numbers = #tpu.dot_dimension_numbers<[1], [0], [0], [1], [0, 0, 1, 1], [], []>} : vector<128x256xbf16>, vector<256x256xbf16>, vector<128x256xf32> -> vector<128x256xf32>
    %c3 = arith.constant 3 : index
    %c0_52 = arith.constant 0 : index
    %108 = vector.load %arg6[%c3, %c0_52] : memref<8x256xf32, #tpu.memory_space<vmem>>, vector<1x256xf32>
    %109 = vector.broadcast %108 : vector<1x256xf32> to vector<128x256xf32>
    %110 = arith.addf %107, %109 : vector<128x256xf32>
    %cst_53 = arith.constant dense<0.000000e+00> : vector<128xf32>
    %111 = vector.multi_reduction <add>, %110, %cst_53 [1] : vector<128x256xf32> to vector<128xf32>
    %112 = vector.shape_cast %111 : vector<128xf32> to vector<128x1xf32>
    %113 = arith.mulf %110, %110 : vector<128x256xf32>
    %cst_54 = arith.constant dense<0.000000e+00> : vector<128xf32>
    %114 = vector.multi_reduction <add>, %113, %cst_54 [1] : vector<128x256xf32> to vector<128xf32>
    %115 = vector.shape_cast %114 : vector<128xf32> to vector<128x1xf32>
    %cst_55 = arith.constant 3.906250e-03 : f32
    %116 = vector.broadcast %cst_55 : f32 to vector<128x1xf32>
    %117 = arith.mulf %112, %116 : vector<128x1xf32>
    %cst_56 = arith.constant 3.906250e-03 : f32
    %118 = vector.broadcast %cst_56 : f32 to vector<128x1xf32>
    %119 = arith.mulf %115, %118 : vector<128x1xf32>
    %120 = arith.mulf %117, %117 : vector<128x1xf32>
    %121 = arith.subf %119, %120 : vector<128x1xf32>
    %cst_57 = arith.constant 0.000000e+00 : f32
    %122 = vector.broadcast %cst_57 : f32 to vector<128x1xf32>
    %123 = arith.maximumf %121, %122 : vector<128x1xf32>
    %cst_58 = arith.constant 9.99999974E-6 : f32
    %124 = vector.broadcast %cst_58 : f32 to vector<128x1xf32>
    %125 = arith.addf %123, %124 : vector<128x1xf32>
    %126 = math.rsqrt %125 : vector<128x1xf32>
    %127 = vector.broadcast %117 : vector<128x1xf32> to vector<128x256xf32>
    %128 = arith.subf %110, %127 : vector<128x256xf32>
    %129 = vector.broadcast %126 : vector<128x1xf32> to vector<128x256xf32>
    %130 = arith.mulf %128, %129 : vector<128x256xf32>
    %c3_59 = arith.constant 3 : index
    %c0_60 = arith.constant 0 : index
    %131 = vector.load %arg7[%c3_59, %c0_60] : memref<8x256xf32, #tpu.memory_space<vmem>>, vector<1x256xf32>
    %132 = vector.broadcast %131 : vector<1x256xf32> to vector<128x256xf32>
    %133 = arith.mulf %130, %132 : vector<128x256xf32>
    %c3_61 = arith.constant 3 : index
    %c0_62 = arith.constant 0 : index
    %134 = vector.load %arg8[%c3_61, %c0_62] : memref<8x256xf32, #tpu.memory_space<vmem>>, vector<1x256xf32>
    %135 = vector.broadcast %134 : vector<1x256xf32> to vector<128x256xf32>
    %136 = arith.addf %133, %135 : vector<128x256xf32>
    %cst_63 = arith.constant 0.000000e+00 : f32
    %137 = vector.broadcast %cst_63 : f32 to vector<128x256xf32>
    %138 = arith.maximumf %136, %137 : vector<128x256xf32>
    %139 = arith.truncf %138 : vector<128x256xf32> to vector<128x256xbf16>
    %c0_64 = arith.constant 0 : index
    %c0_65 = arith.constant 0 : index
    %140 = vector.load %arg4[%c0_64, %c0_65] : memref<256x256xbf16, #tpu.memory_space<vmem>>, vector<256x256xbf16>
    %cst_66 = arith.constant dense<0.000000e+00> : vector<128x256xf32>
    %141 = tpu.matmul %139, %140, %cst_66 {dimension_numbers = #tpu.dot_dimension_numbers<[1], [0], [0], [1], [0, 0, 1, 1], [], []>} : vector<128x256xbf16>, vector<256x256xbf16>, vector<128x256xf32> -> vector<128x256xf32>
    %c0_67 = arith.constant 0 : index
    %c0_68 = arith.constant 0 : index
    %142 = vector.load %arg5[%c0_67, %c0_68] : memref<128x256xbf16, #tpu.memory_space<vmem>>, vector<128x256xbf16>
    %cst_69 = arith.constant dense<0.000000e+00> : vector<128x256xf32>
    %143 = tpu.matmul %0, %142, %cst_69 {dimension_numbers = #tpu.dot_dimension_numbers<[1], [0], [0], [1], [0, 0, 1, 1], [], []>} : vector<128x128xbf16>, vector<128x256xbf16>, vector<128x256xf32> -> vector<128x256xf32>
    %144 = arith.addf %141, %143 : vector<128x256xf32>
    %c4 = arith.constant 4 : index
    %c0_70 = arith.constant 0 : index
    %145 = vector.load %arg6[%c4, %c0_70] : memref<8x256xf32, #tpu.memory_space<vmem>>, vector<1x256xf32>
    %146 = vector.broadcast %145 : vector<1x256xf32> to vector<128x256xf32>
    %147 = arith.addf %144, %146 : vector<128x256xf32>
    %cst_71 = arith.constant dense<0.000000e+00> : vector<128xf32>
    %148 = vector.multi_reduction <add>, %147, %cst_71 [1] : vector<128x256xf32> to vector<128xf32>
    %149 = vector.shape_cast %148 : vector<128xf32> to vector<128x1xf32>
    %150 = arith.mulf %147, %147 : vector<128x256xf32>
    %cst_72 = arith.constant dense<0.000000e+00> : vector<128xf32>
    %151 = vector.multi_reduction <add>, %150, %cst_72 [1] : vector<128x256xf32> to vector<128xf32>
    %152 = vector.shape_cast %151 : vector<128xf32> to vector<128x1xf32>
    %cst_73 = arith.constant 3.906250e-03 : f32
    %153 = vector.broadcast %cst_73 : f32 to vector<128x1xf32>
    %154 = arith.mulf %149, %153 : vector<128x1xf32>
    %cst_74 = arith.constant 3.906250e-03 : f32
    %155 = vector.broadcast %cst_74 : f32 to vector<128x1xf32>
    %156 = arith.mulf %152, %155 : vector<128x1xf32>
    %157 = arith.mulf %154, %154 : vector<128x1xf32>
    %158 = arith.subf %156, %157 : vector<128x1xf32>
    %cst_75 = arith.constant 0.000000e+00 : f32
    %159 = vector.broadcast %cst_75 : f32 to vector<128x1xf32>
    %160 = arith.maximumf %158, %159 : vector<128x1xf32>
    %cst_76 = arith.constant 9.99999974E-6 : f32
    %161 = vector.broadcast %cst_76 : f32 to vector<128x1xf32>
    %162 = arith.addf %160, %161 : vector<128x1xf32>
    %163 = math.rsqrt %162 : vector<128x1xf32>
    %164 = vector.broadcast %154 : vector<128x1xf32> to vector<128x256xf32>
    %165 = arith.subf %147, %164 : vector<128x256xf32>
    %166 = vector.broadcast %163 : vector<128x1xf32> to vector<128x256xf32>
    %167 = arith.mulf %165, %166 : vector<128x256xf32>
    %c4_77 = arith.constant 4 : index
    %c0_78 = arith.constant 0 : index
    %168 = vector.load %arg7[%c4_77, %c0_78] : memref<8x256xf32, #tpu.memory_space<vmem>>, vector<1x256xf32>
    %169 = vector.broadcast %168 : vector<1x256xf32> to vector<128x256xf32>
    %170 = arith.mulf %167, %169 : vector<128x256xf32>
    %c4_79 = arith.constant 4 : index
    %c0_80 = arith.constant 0 : index
    %171 = vector.load %arg8[%c4_79, %c0_80] : memref<8x256xf32, #tpu.memory_space<vmem>>, vector<1x256xf32>
    %172 = vector.broadcast %171 : vector<1x256xf32> to vector<128x256xf32>
    %173 = arith.addf %170, %172 : vector<128x256xf32>
    %cst_81 = arith.constant 0.000000e+00 : f32
    %174 = vector.broadcast %cst_81 : f32 to vector<128x256xf32>
    %175 = arith.maximumf %173, %174 : vector<128x256xf32>
    %176 = arith.truncf %175 : vector<128x256xf32> to vector<128x256xbf16>
    %c3_82 = arith.constant 3 : index
    %c0_83 = arith.constant 0 : index
    %c0_84 = arith.constant 0 : index
    %177 = vector.load %arg3[%c3_82, %c0_83, %c0_84] : memref<6x256x256xbf16, #tpu.memory_space<vmem>>, vector<1x256x256xbf16>
    %178 = vector.shape_cast %177 : vector<1x256x256xbf16> to vector<256x256xbf16>
    %cst_85 = arith.constant dense<0.000000e+00> : vector<128x256xf32>
    %179 = tpu.matmul %176, %178, %cst_85 {dimension_numbers = #tpu.dot_dimension_numbers<[1], [0], [0], [1], [0, 0, 1, 1], [], []>} : vector<128x256xbf16>, vector<256x256xbf16>, vector<128x256xf32> -> vector<128x256xf32>
    %c5 = arith.constant 5 : index
    %c0_86 = arith.constant 0 : index
    %180 = vector.load %arg6[%c5, %c0_86] : memref<8x256xf32, #tpu.memory_space<vmem>>, vector<1x256xf32>
    %181 = vector.broadcast %180 : vector<1x256xf32> to vector<128x256xf32>
    %182 = arith.addf %179, %181 : vector<128x256xf32>
    %cst_87 = arith.constant dense<0.000000e+00> : vector<128xf32>
    %183 = vector.multi_reduction <add>, %182, %cst_87 [1] : vector<128x256xf32> to vector<128xf32>
    %184 = vector.shape_cast %183 : vector<128xf32> to vector<128x1xf32>
    %185 = arith.mulf %182, %182 : vector<128x256xf32>
    %cst_88 = arith.constant dense<0.000000e+00> : vector<128xf32>
    %186 = vector.multi_reduction <add>, %185, %cst_88 [1] : vector<128x256xf32> to vector<128xf32>
    %187 = vector.shape_cast %186 : vector<128xf32> to vector<128x1xf32>
    %cst_89 = arith.constant 3.906250e-03 : f32
    %188 = vector.broadcast %cst_89 : f32 to vector<128x1xf32>
    %189 = arith.mulf %184, %188 : vector<128x1xf32>
    %cst_90 = arith.constant 3.906250e-03 : f32
    %190 = vector.broadcast %cst_90 : f32 to vector<128x1xf32>
    %191 = arith.mulf %187, %190 : vector<128x1xf32>
    %192 = arith.mulf %189, %189 : vector<128x1xf32>
    %193 = arith.subf %191, %192 : vector<128x1xf32>
    %cst_91 = arith.constant 0.000000e+00 : f32
    %194 = vector.broadcast %cst_91 : f32 to vector<128x1xf32>
    %195 = arith.maximumf %193, %194 : vector<128x1xf32>
    %cst_92 = arith.constant 9.99999974E-6 : f32
    %196 = vector.broadcast %cst_92 : f32 to vector<128x1xf32>
    %197 = arith.addf %195, %196 : vector<128x1xf32>
    %198 = math.rsqrt %197 : vector<128x1xf32>
    %199 = vector.broadcast %189 : vector<128x1xf32> to vector<128x256xf32>
    %200 = arith.subf %182, %199 : vector<128x256xf32>
    %201 = vector.broadcast %198 : vector<128x1xf32> to vector<128x256xf32>
    %202 = arith.mulf %200, %201 : vector<128x256xf32>
    %c5_93 = arith.constant 5 : index
    %c0_94 = arith.constant 0 : index
    %203 = vector.load %arg7[%c5_93, %c0_94] : memref<8x256xf32, #tpu.memory_space<vmem>>, vector<1x256xf32>
    %204 = vector.broadcast %203 : vector<1x256xf32> to vector<128x256xf32>
    %205 = arith.mulf %202, %204 : vector<128x256xf32>
    %c5_95 = arith.constant 5 : index
    %c0_96 = arith.constant 0 : index
    %206 = vector.load %arg8[%c5_95, %c0_96] : memref<8x256xf32, #tpu.memory_space<vmem>>, vector<1x256xf32>
    %207 = vector.broadcast %206 : vector<1x256xf32> to vector<128x256xf32>
    %208 = arith.addf %205, %207 : vector<128x256xf32>
    %cst_97 = arith.constant 0.000000e+00 : f32
    %209 = vector.broadcast %cst_97 : f32 to vector<128x256xf32>
    %210 = arith.maximumf %208, %209 : vector<128x256xf32>
    %211 = arith.truncf %210 : vector<128x256xf32> to vector<128x256xbf16>
    %c4_98 = arith.constant 4 : index
    %c0_99 = arith.constant 0 : index
    %c0_100 = arith.constant 0 : index
    %212 = vector.load %arg3[%c4_98, %c0_99, %c0_100] : memref<6x256x256xbf16, #tpu.memory_space<vmem>>, vector<1x256x256xbf16>
    %213 = vector.shape_cast %212 : vector<1x256x256xbf16> to vector<256x256xbf16>
    %cst_101 = arith.constant dense<0.000000e+00> : vector<128x256xf32>
    %214 = tpu.matmul %211, %213, %cst_101 {dimension_numbers = #tpu.dot_dimension_numbers<[1], [0], [0], [1], [0, 0, 1, 1], [], []>} : vector<128x256xbf16>, vector<256x256xbf16>, vector<128x256xf32> -> vector<128x256xf32>
    %c6 = arith.constant 6 : index
    %c0_102 = arith.constant 0 : index
    %215 = vector.load %arg6[%c6, %c0_102] : memref<8x256xf32, #tpu.memory_space<vmem>>, vector<1x256xf32>
    %216 = vector.broadcast %215 : vector<1x256xf32> to vector<128x256xf32>
    %217 = arith.addf %214, %216 : vector<128x256xf32>
    %cst_103 = arith.constant dense<0.000000e+00> : vector<128xf32>
    %218 = vector.multi_reduction <add>, %217, %cst_103 [1] : vector<128x256xf32> to vector<128xf32>
    %219 = vector.shape_cast %218 : vector<128xf32> to vector<128x1xf32>
    %220 = arith.mulf %217, %217 : vector<128x256xf32>
    %cst_104 = arith.constant dense<0.000000e+00> : vector<128xf32>
    %221 = vector.multi_reduction <add>, %220, %cst_104 [1] : vector<128x256xf32> to vector<128xf32>
    %222 = vector.shape_cast %221 : vector<128xf32> to vector<128x1xf32>
    %cst_105 = arith.constant 3.906250e-03 : f32
    %223 = vector.broadcast %cst_105 : f32 to vector<128x1xf32>
    %224 = arith.mulf %219, %223 : vector<128x1xf32>
    %cst_106 = arith.constant 3.906250e-03 : f32
    %225 = vector.broadcast %cst_106 : f32 to vector<128x1xf32>
    %226 = arith.mulf %222, %225 : vector<128x1xf32>
    %227 = arith.mulf %224, %224 : vector<128x1xf32>
    %228 = arith.subf %226, %227 : vector<128x1xf32>
    %cst_107 = arith.constant 0.000000e+00 : f32
    %229 = vector.broadcast %cst_107 : f32 to vector<128x1xf32>
    %230 = arith.maximumf %228, %229 : vector<128x1xf32>
    %cst_108 = arith.constant 9.99999974E-6 : f32
    %231 = vector.broadcast %cst_108 : f32 to vector<128x1xf32>
    %232 = arith.addf %230, %231 : vector<128x1xf32>
    %233 = math.rsqrt %232 : vector<128x1xf32>
    %234 = vector.broadcast %224 : vector<128x1xf32> to vector<128x256xf32>
    %235 = arith.subf %217, %234 : vector<128x256xf32>
    %236 = vector.broadcast %233 : vector<128x1xf32> to vector<128x256xf32>
    %237 = arith.mulf %235, %236 : vector<128x256xf32>
    %c6_109 = arith.constant 6 : index
    %c0_110 = arith.constant 0 : index
    %238 = vector.load %arg7[%c6_109, %c0_110] : memref<8x256xf32, #tpu.memory_space<vmem>>, vector<1x256xf32>
    %239 = vector.broadcast %238 : vector<1x256xf32> to vector<128x256xf32>
    %240 = arith.mulf %237, %239 : vector<128x256xf32>
    %c6_111 = arith.constant 6 : index
    %c0_112 = arith.constant 0 : index
    %241 = vector.load %arg8[%c6_111, %c0_112] : memref<8x256xf32, #tpu.memory_space<vmem>>, vector<1x256xf32>
    %242 = vector.broadcast %241 : vector<1x256xf32> to vector<128x256xf32>
    %243 = arith.addf %240, %242 : vector<128x256xf32>
    %cst_113 = arith.constant 0.000000e+00 : f32
    %244 = vector.broadcast %cst_113 : f32 to vector<128x256xf32>
    %245 = arith.maximumf %243, %244 : vector<128x256xf32>
    %246 = arith.truncf %245 : vector<128x256xf32> to vector<128x256xbf16>
    %c5_114 = arith.constant 5 : index
    %c0_115 = arith.constant 0 : index
    %c0_116 = arith.constant 0 : index
    %247 = vector.load %arg3[%c5_114, %c0_115, %c0_116] : memref<6x256x256xbf16, #tpu.memory_space<vmem>>, vector<1x256x256xbf16>
    %248 = vector.shape_cast %247 : vector<1x256x256xbf16> to vector<256x256xbf16>
    %cst_117 = arith.constant dense<0.000000e+00> : vector<128x256xf32>
    %249 = tpu.matmul %246, %248, %cst_117 {dimension_numbers = #tpu.dot_dimension_numbers<[1], [0], [0], [1], [0, 0, 1, 1], [], []>} : vector<128x256xbf16>, vector<256x256xbf16>, vector<128x256xf32> -> vector<128x256xf32>
    %c7 = arith.constant 7 : index
    %c0_118 = arith.constant 0 : index
    %250 = vector.load %arg6[%c7, %c0_118] : memref<8x256xf32, #tpu.memory_space<vmem>>, vector<1x256xf32>
    %251 = vector.broadcast %250 : vector<1x256xf32> to vector<128x256xf32>
    %252 = arith.addf %249, %251 : vector<128x256xf32>
    %cst_119 = arith.constant dense<0.000000e+00> : vector<128xf32>
    %253 = vector.multi_reduction <add>, %252, %cst_119 [1] : vector<128x256xf32> to vector<128xf32>
    %254 = vector.shape_cast %253 : vector<128xf32> to vector<128x1xf32>
    %255 = arith.mulf %252, %252 : vector<128x256xf32>
    %cst_120 = arith.constant dense<0.000000e+00> : vector<128xf32>
    %256 = vector.multi_reduction <add>, %255, %cst_120 [1] : vector<128x256xf32> to vector<128xf32>
    %257 = vector.shape_cast %256 : vector<128xf32> to vector<128x1xf32>
    %cst_121 = arith.constant 3.906250e-03 : f32
    %258 = vector.broadcast %cst_121 : f32 to vector<128x1xf32>
    %259 = arith.mulf %254, %258 : vector<128x1xf32>
    %cst_122 = arith.constant 3.906250e-03 : f32
    %260 = vector.broadcast %cst_122 : f32 to vector<128x1xf32>
    %261 = arith.mulf %257, %260 : vector<128x1xf32>
    %262 = arith.mulf %259, %259 : vector<128x1xf32>
    %263 = arith.subf %261, %262 : vector<128x1xf32>
    %cst_123 = arith.constant 0.000000e+00 : f32
    %264 = vector.broadcast %cst_123 : f32 to vector<128x1xf32>
    %265 = arith.maximumf %263, %264 : vector<128x1xf32>
    %cst_124 = arith.constant 9.99999974E-6 : f32
    %266 = vector.broadcast %cst_124 : f32 to vector<128x1xf32>
    %267 = arith.addf %265, %266 : vector<128x1xf32>
    %268 = math.rsqrt %267 : vector<128x1xf32>
    %269 = vector.broadcast %259 : vector<128x1xf32> to vector<128x256xf32>
    %270 = arith.subf %252, %269 : vector<128x256xf32>
    %271 = vector.broadcast %268 : vector<128x1xf32> to vector<128x256xf32>
    %272 = arith.mulf %270, %271 : vector<128x256xf32>
    %c7_125 = arith.constant 7 : index
    %c0_126 = arith.constant 0 : index
    %273 = vector.load %arg7[%c7_125, %c0_126] : memref<8x256xf32, #tpu.memory_space<vmem>>, vector<1x256xf32>
    %274 = vector.broadcast %273 : vector<1x256xf32> to vector<128x256xf32>
    %275 = arith.mulf %272, %274 : vector<128x256xf32>
    %c7_127 = arith.constant 7 : index
    %c0_128 = arith.constant 0 : index
    %276 = vector.load %arg8[%c7_127, %c0_128] : memref<8x256xf32, #tpu.memory_space<vmem>>, vector<1x256xf32>
    %277 = vector.broadcast %276 : vector<1x256xf32> to vector<128x256xf32>
    %278 = arith.addf %275, %277 : vector<128x256xf32>
    %cst_129 = arith.constant 0.000000e+00 : f32
    %279 = vector.broadcast %cst_129 : f32 to vector<128x256xf32>
    %280 = arith.maximumf %278, %279 : vector<128x256xf32>
    %281 = arith.truncf %280 : vector<128x256xf32> to vector<128x256xbf16>
    %c0_130 = arith.constant 0 : index
    %c0_131 = arith.constant 0 : index
    %282 = vector.load %arg9[%c0_130, %c0_131] : memref<256x384xbf16, #tpu.memory_space<vmem>>, vector<256x384xbf16>
    %cst_132 = arith.constant dense<0.000000e+00> : vector<128x384xf32>
    %283 = tpu.matmul %281, %282, %cst_132 {dimension_numbers = #tpu.dot_dimension_numbers<[1], [0], [0], [1], [0, 0, 1, 1], [], []>} : vector<128x256xbf16>, vector<256x384xbf16>, vector<128x384xf32> -> vector<128x384xf32>
    %c0_133 = arith.constant 0 : index
    %c0_134 = arith.constant 0 : index
    %284 = vector.load %arg10[%c0_133, %c0_134] : memref<1x384xf32, #tpu.memory_space<vmem>>, vector<1x384xf32>
    %285 = vector.broadcast %284 : vector<1x384xf32> to vector<128x384xf32>
    %286 = arith.addf %283, %285 : vector<128x384xf32>
    %cst_135 = arith.constant 0.000000e+00 : f32
    %287 = vector.broadcast %cst_135 : f32 to vector<128x384xf32>
    %288 = arith.maximumf %286, %287 : vector<128x384xf32>
    %289 = arith.truncf %288 : vector<128x384xf32> to vector<128x384xbf16>
    %c0_136 = arith.constant 0 : index
    %c0_137 = arith.constant 0 : index
    %290 = vector.load %arg11[%c0_136, %c0_137] : memref<384x128xbf16, #tpu.memory_space<vmem>>, vector<384x128xbf16>
    %cst_138 = arith.constant dense<0.000000e+00> : vector<128x128xf32>
    %291 = tpu.matmul %289, %290, %cst_138 {dimension_numbers = #tpu.dot_dimension_numbers<[1], [0], [0], [1], [0, 0, 1, 1], [], []>} : vector<128x384xbf16>, vector<384x128xbf16>, vector<128x128xf32> -> vector<128x128xf32>
    %c0_139 = arith.constant 0 : index
    %c0_140 = arith.constant 0 : index
    %292 = vector.load %arg12[%c0_139, %c0_140] : memref<1x128xf32, #tpu.memory_space<vmem>>, vector<1x128xf32>
    %293 = vector.broadcast %292 : vector<1x128xf32> to vector<128x128xf32>
    %294 = arith.addf %291, %293 : vector<128x128xf32>
    %295 = arith.truncf %294 : vector<128x128xf32> to vector<128x128xbf16>
    %c0_141 = arith.constant 0 : index
    %c0_142 = arith.constant 0 : index
    %296 = vector.load %arg13[%c0_141, %c0_142] : memref<128x128xbf16, #tpu.memory_space<vmem>>, vector<128x128xbf16>
    tpu.vector_store %arg13[%c0_141, %c0_142], %295 {strides = array<i32>} : memref<128x128xbf16, #tpu.memory_space<vmem>>, vector<128x128xbf16>,
    return
  }
  func.func @transform_0(%arg0: i32) -> (i32, i32) {
    %c0_i32 = arith.constant 0 : i32
    %c0_i32_0 = arith.constant 0 : i32
    return %arg0, %c0_i32 : i32, i32
  }
  func.func @transform_1(%arg0: i32) -> (i32, i32) {
    %c0_i32 = arith.constant 0 : i32
    %c0_i32_0 = arith.constant 0 : i32
    %c0_i32_1 = arith.constant 0 : i32
    return %c0_i32, %c0_i32_0 : i32, i32
  }
  func.func @transform_2(%arg0: i32) -> (i32, i32, i32) {
    %c0_i32 = arith.constant 0 : i32
    %c0_i32_0 = arith.constant 0 : i32
    %c0_i32_1 = arith.constant 0 : i32
    %c0_i32_2 = arith.constant 0 : i32
    return %c0_i32, %c0_i32_0, %c0_i32_1 : i32, i32, i32
  }
  func.func @transform_3(%arg0: i32) -> (i32, i32) {
    %c0_i32 = arith.constant 0 : i32
    %c0_i32_0 = arith.constant 0 : i32
    %c0_i32_1 = arith.constant 0 : i32
    return %c0_i32, %c0_i32_0 : i32, i32
  }
  func.func @transform_4(%arg0: i32) -> (i32, i32) {
    %c0_i32 = arith.constant 0 : i32
    %c0_i32_0 = arith.constant 0 : i32
    %c0_i32_1 = arith.constant 0 : i32
    return %c0_i32, %c0_i32_0 : i32, i32
  }
  func.func @transform_5(%arg0: i32) -> (i32, i32) {
    %c0_i32 = arith.constant 0 : i32
    %c0_i32_0 = arith.constant 0 : i32
    %c0_i32_1 = arith.constant 0 : i32
    return %c0_i32, %c0_i32_0 : i32, i32
  }
  func.func @transform_6(%arg0: i32) -> (i32, i32) {
    %c0_i32 = arith.constant 0 : i32
    %c0_i32_0 = arith.constant 0 : i32
    %c0_i32_1 = arith.constant 0 : i32
    return %c0_i32, %c0_i32_0 : i32, i32
  }
  func.func @transform_7(%arg0: i32) -> (i32, i32) {
    %c0_i32 = arith.constant 0 : i32
    %c0_i32_0 = arith.constant 0 : i32
    %c0_i32_1 = arith.constant 0 : i32
    return %c0_i32, %c0_i32_0 : i32, i32
  }
  func.func @transform_8(%arg0: i32) -> (i32, i32) {
    %c0_i32 = arith.constant 0 : i32
    %c0_i32_0 = arith.constant 0 : i32
    %c0_i32_1 = arith.constant 0 : i32
    return %c0_i32, %c0_i32_0 : i32, i32
  }
  func.func @transform_9(%arg0: i32) -> (i32, i32) {
    %c0_i32 = arith.constant 0 : i32
    %c0_i32_0 = arith.constant 0 : i32
    %c0_i32_1 = arith.constant 0 : i32
    return %c0_i32, %c0_i32_0 : i32, i32
  }
  func.func @transform_10(%arg0: i32) -> (i32, i32) {
    %c0_i32 = arith.constant 0 : i32
    %c0_i32_0 = arith.constant 0 : i32
    %c0_i32_1 = arith.constant 0 : i32
    return %c0_i32, %c0_i32_0 : i32, i32
  }
  func.func @transform_11(%arg0: i32) -> (i32, i32) {
    %c0_i32 = arith.constant 0 : i32
    %c0_i32_0 = arith.constant 0 : i32
    %c0_i32_1 = arith.constant 0 : i32
    return %c0_i32, %c0_i32_0 : i32, i32
  }
  func.func @transform_12(%arg0: i32) -> (i32, i32) {
    %c0_i32 = arith.constant 0 : i32
    %c0_i32_0 = arith.constant 0 : i32
    return %arg0, %c0_i32 : i32, i32
  }
}

</mosaic_0001>

<llo_original>
// kernel: em_nerf_forward.1
$region0: #{em_nerf_forward.1}
  #allocation0 [shape = 'u32[]', space=smem, size = 0x4, offset = 0x4, fixed_abs, tag = 'smem constant byte address 0x4 - core index']
  #allocation1 [shape = 'u32[72,128]{1,0:T(1,128)}', space=vmem, size = 0x9000, scoped, tag = 'internal scratch']
  %s0 = inlined_call_operand.vmem [shape: bf16[128,128], index: 0, kind: input, shape index: {}]
  %s1 = inlined_call_operand.hbm [shape: bf16[128,256], index: 1, kind: input, shape index: {}]
  %s2 = inlined_call_operand.hbm [shape: bf16[6,256,256], index: 2, kind: input, shape index: {}]
  %s3 = inlined_call_operand.hbm [shape: bf16[256,256], index: 3, kind: input, shape index: {}]
  %s4 = inlined_call_operand.hbm [shape: bf16[128,256], index: 4, kind: input, shape index: {}]
  %s5 = inlined_call_operand.vmem [shape: f32[8,256], index: 5, kind: input, shape index: {}]
  %s6 = inlined_call_operand.vmem [shape: f32[8,256], index: 6, kind: input, shape index: {}]
  %s7 = inlined_call_operand.vmem [shape: f32[8,256], index: 7, kind: input, shape index: {}]
  %s8 = inlined_call_operand.hbm [shape: bf16[256,384], index: 8, kind: input, shape index: {}]
  %s9 = inlined_call_operand.vmem [shape: f32[1,384], index: 9, kind: input, shape index: {}]
  %s10 = inlined_call_operand.vmem [shape: bf16[384,128], index: 10, kind: input, shape index: {}]
  %s11 = inlined_call_operand.vmem [shape: f32[1,128], index: 11, kind: input, shape index: {}]
  %s12 = inlined_call_operand.vmem [shape: bf16[128,128], index: 12, kind: output, shape index: {}]
  %s13 = sld [smem:[#allocation0]]
  $region78: #{em_nerf_forward.1} parent=0
    _
  %s15 = ssub.s32 1, %s13
  %s16 = scalar_select 0, %s15, %s13
  $region1: #{em_nerf_forward.1} parent=0
    #allocation2 [shape = 'u8[65536]{0}', space=vmem, size = 0x10000, scoped, tag = 'input window, operand 1, single buffered']
    #allocation3 [shape = 's32[1]{0}', space=sflag, size = 0x4, scoped, tag = 'scoped memory for em_nerf_forward.1']
    #allocation4 [shape = 'u8[786432]{0}', space=vmem, size = 0xc0000, scoped, tag = 'input window, operand 2, single buffered']
    #allocation5 [shape = 's32[1]{0}', space=sflag, size = 0x4, scoped, tag = 'scoped memory for em_nerf_forward.1']
    #allocation6 [shape = 'u8[131072]{0}', space=vmem, size = 0x20000, scoped, tag = 'input window, operand 3, single buffered']
    #allocation7 [shape = 'u8[65536]{0}', space=vmem, size = 0x10000, scoped, tag = 'input window, operand 4, single buffered']
    #allocation8 [shape = 's32[1]{0}', space=sflag, size = 0x4, scoped, tag = 'scoped memory for em_nerf_forward.1']
    #allocation9 [shape = 'u8[196608]{0}', space=vmem, size = 0x30000, scoped, tag = 'input window, operand 8, single buffered']
    %17 = vsyncpa [#allocation3], 0
    %18 = vsyncpa [#allocation5], 0
    %19 = vsyncpa [#allocation8], 0
    // Predicated region
    $region2: #{em_nerf_forward.1} parent=1 // pred_check
      _
    $region3: #{em_nerf_forward.1} parent=1 // pred_check_branch
      %21 = sbr.rel (0) target = $region5
    $region4: #{em_nerf_forward.1} parent=1 // pred_region
      _
    $region5: #{em_nerf_forward.1} parent=1 // pred_fallthru
      _
    // Predicated region
    $region6: #{em_nerf_forward.1} parent=1 // pred_check
      _
    $region7: #{em_nerf_forward.1} parent=1 // pred_check_branch
      %23 = sbr.rel (0) target = $region9
    $region8: #{em_nerf_forward.1} parent=1 // pred_region
      %25 = vsyncadd [#allocation3], 0
      %s26 = sshll.u32 %s1, 4
      %s27 = int_to_ptr.hbm [resolvable:$true] %s26
      %s28 = sshll.u32 [#allocation2], 4
      %s29 = int_to_ptr.vmem [resolvable:$true] %s28
      %34 = dma.hbm_to_vmem [thread:$0]  %s27, 2048, %s29, [#allocation3], 128, 128, 8
    $region9: #{em_nerf_forward.1} parent=1 // pred_fallthru
      _
    // Predicated region
    $region10: #{em_nerf_forward.1} parent=1 // pred_check
      _
    $region11: #{em_nerf_forward.1} parent=1 // pred_check_branch
      %36 = sbr.rel (0) target = $region13
    $region12: #{em_nerf_forward.1} parent=1 // pred_region
      %38 = vsyncadd [#allocation5], 0
      %s39 = sshll.u32 %s2, 4
      %s40 = int_to_ptr.hbm [resolvable:$true] %s39
      %s41 = sshll.u32 [#allocation4], 4
      %s42 = int_to_ptr.vmem [resolvable:$true] %s41
      %47 = dma.hbm_to_vmem [thread:$0]  %s40, 24576, %s42, [#allocation5], 128, 128, 8
    $region13: #{em_nerf_forward.1} parent=1 // pred_fallthru
      _
    // Predicated region
    $region14: #{em_nerf_forward.1} parent=1 // pred_check
      _
    $region15: #{em_nerf_forward.1} parent=1 // pred_check_branch
      %49 = sbr.rel (0) target = $region17
    $region16: #{em_nerf_forward.1} parent=1 // pred_region
      %51 = vsyncadd [#allocation5], 0
      %s52 = sshll.u32 %s3, 4
      %s53 = int_to_ptr.hbm [resolvable:$true] %s52
      %s54 = sshll.u32 [#allocation6], 4
      %s55 = int_to_ptr.vmem [resolvable:$true] %s54
      %60 = dma.hbm_to_vmem [thread:$0]  %s53, 4096, %s55, [#allocation5], 128, 128, 8
    $region17: #{em_nerf_forward.1} parent=1 // pred_fallthru
      _
    // Predicated region
    $region18: #{em_nerf_forward.1} parent=1 // pred_check
      _
    $region19: #{em_nerf_forward.1} parent=1 // pred_check_branch
      %62 = sbr.rel (0) target = $region21
    $region20: #{em_nerf_forward.1} parent=1 // pred_region
      %64 = vsyncadd [#allocation8], 0
      %s65 = sshll.u32 %s4, 4
      %s66 = int_to_ptr.hbm [resolvable:$true] %s65
      %s67 = sshll.u32 [#allocation7], 4
      %s68 = int_to_ptr.vmem [resolvable:$true] %s67
      %73 = dma.hbm_to_vmem [thread:$0]  %s66, 2048, %s68, [#allocation8], 128, 128, 8
    $region21: #{em_nerf_forward.1} parent=1 // pred_fallthru
      _
    // Predicated region
    $region22: #{em_nerf_forward.1} parent=1 // pred_check
      _
    $region23: #{em_nerf_forward.1} parent=1 // pred_check_branch
      %75 = sbr.rel (0) target = $region25
    $region24: #{em_nerf_forward.1} parent=1 // pred_region
      _
    $region25: #{em_nerf_forward.1} parent=1 // pred_fallthru
      _
    // Predicated region
    $region26: #{em_nerf_forward.1} parent=1 // pred_check
      _
    $region27: #{em_nerf_forward.1} parent=1 // pred_check_branch
      %77 = sbr.rel (0) target = $region29
    $region28: #{em_nerf_forward.1} parent=1 // pred_region
      _
    $region29: #{em_nerf_forward.1} parent=1 // pred_fallthru
      _
    // Predicated region
    $region30: #{em_nerf_forward.1} parent=1 // pred_check
      _
    $region31: #{em_nerf_forward.1} parent=1 // pred_check_branch
      %79 = sbr.rel (0) target = $region33
    $region32: #{em_nerf_forward.1} parent=1 // pred_region
      _
    $region33: #{em_nerf_forward.1} parent=1 // pred_fallthru
      _
    // Predicated region
    $region34: #{em_nerf_forward.1} parent=1 // pred_check
      _
    $region35: #{em_nerf_forward.1} parent=1 // pred_check_branch
      %81 = sbr.rel (0) target = $region37
    $region36: #{em_nerf_forward.1} parent=1 // pred_region
      %83 = vsyncadd [#allocation8], 0
      %s84 = sshll.u32 %s8, 4
      %s85 = int_to_ptr.hbm [resolvable:$true] %s84
      %s86 = sshll.u32 [#allocation9], 4
      %s87 = int_to_ptr.vmem [resolvable:$true] %s86
      %92 = dma.hbm_to_vmem [thread:$0]  %s85, 6144, %s87, [#allocation8], 192, 192, 12
    $region37: #{em_nerf_forward.1} parent=1 // pred_fallthru
      _
    // Predicated region
    $region38: #{em_nerf_forward.1} parent=1 // pred_check
      _
    $region39: #{em_nerf_forward.1} parent=1 // pred_check_branch
      %94 = sbr.rel (0) target = $region41
    $region40: #{em_nerf_forward.1} parent=1 // pred_region
      _
    $region41: #{em_nerf_forward.1} parent=1 // pred_fallthru
      _
    // Predicated region
    $region42: #{em_nerf_forward.1} parent=1 // pred_check
      _
    $region43: #{em_nerf_forward.1} parent=1 // pred_check_branch
      %96 = sbr.rel (0) target = $region45
    $region44: #{em_nerf_forward.1} parent=1 // pred_region
      _
    $region45: #{em_nerf_forward.1} parent=1 // pred_fallthru
      _
    // Predicated region
    $region46: #{em_nerf_forward.1} parent=1 // pred_check
      _
    $region47: #{em_nerf_forward.1} parent=1 // pred_check_branch
      %98 = sbr.rel (0) target = $region49
    $region48: #{em_nerf_forward.1} parent=1 // pred_region
      _
    $region49: #{em_nerf_forward.1} parent=1 // pred_fallthru
      _
    // Predicated region
    $region50: #{em_nerf_forward.1} parent=1 // pred_check
      _
    $region51: #{em_nerf_forward.1} parent=1 // pred_check_branch
      %100 = sbr.rel (0) target = $region53
    $region52: #{em_nerf_forward.1} parent=1 // pred_region
      %102 = dma.done [#allocation3], 2048
    $region53: #{em_nerf_forward.1} parent=1 // pred_fallthru
      _
    // Predicated region
    $region54: #{em_nerf_forward.1} parent=1 // pred_check
      _
    $region55: #{em_nerf_forward.1} parent=1 // pred_check_branch
      %104 = sbr.rel (0) target = $region57
    $region56: #{em_nerf_forward.1} parent=1 // pred_region
      %106 = dma.done [#allocation5], 24576
    $region57: #{em_nerf_forward.1} parent=1 // pred_fallthru
      _
    // Predicated region
    $region58: #{em_nerf_forward.1} parent=1 // pred_check
      _
    $region59: #{em_nerf_forward.1} parent=1 // pred_check_branch
      %108 = sbr.rel (0) target = $region61
    $region60: #{em_nerf_forward.1} parent=1 // pred_region
      %110 = dma.done [#allocation5], 4096
    $region61: #{em_nerf_forward.1} parent=1 // pred_fallthru
      _
    // Predicated region
    $region62: #{em_nerf_forward.1} parent=1 // pred_check
      _
    $region63: #{em_nerf_forward.1} parent=1 // pred_check_branch
      %112 = sbr.rel (0) target = $region65
    $region64: #{em_nerf_forward.1} parent=1 // pred_region
      %114 = dma.done [#allocation8], 2048
    $region65: #{em_nerf_forward.1} parent=1 // pred_fallthru
      _
    // Predicated region
    $region66: #{em_nerf_forward.1} parent=1 // pred_check
      _
    $region67: #{em_nerf_forward.1} parent=1 // pred_check_branch
      %116 = sbr.rel (0) target = $region69
    $region68: #{em_nerf_forward.1} parent=1 // pred_region
      %118 = dma.done [#allocation8], 6144
    $region69: #{em_nerf_forward.1} parent=1 // pred_fallthru
      _
    %v119 = vld [vmem:[%s0] sm:$0xf]
    %v120 = vld [vmem:[%s0 + $0x4] sm:$0xf]
    %v121 = vld [vmem:[%s0 + $0x8] sm:$0xf]
    %v122 = vld [vmem:[%s0 + $0xc] sm:$0xf]
    %v123 = vld [vmem:[%s0 + $0x10] sm:$0xf]
    %v124 = vld [vmem:[%s0 + $0x14] sm:$0xf]
    %v125 = vld [vmem:[%s0 + $0x18] sm:$0xf]
    %v126 = vld [vmem:[%s0 + $0x1c] sm:$0xf]
    %v127 = vld [vmem:[%s0 + $0x20] sm:$0xf]
    %v128 = vld [vmem:[%s0 + $0x24] sm:$0xf]
    %v129 = vld [vmem:[%s0 + $0x28] sm:$0xf]
    %v130 = vld [vmem:[%s0 + $0x2c] sm:$0xf]
    %v131 = vld [vmem:[%s0 + $0x30] sm:$0xf]
    %v132 = vld [vmem:[%s0 + $0x34] sm:$0xf]
    %v133 = vld [vmem:[%s0 + $0x38] sm:$0xf]
    %v134 = vld [vmem:[%s0 + $0x3c] sm:$0xf]
    %v135 = vld [vmem:[#allocation2] sm:$0xff]
    %v136 = vld [vmem:[#allocation2 + $0x8] sm:$0xff]
    %v137 = vld [vmem:[#allocation2 + $0x10] sm:$0xff]
    %v138 = vld [vmem:[#allocation2 + $0x18] sm:$0xff]
    %v139 = vld [vmem:[#allocation2 + $0x20] sm:$0xff]
    %v140 = vld [vmem:[#allocation2 + $0x28] sm:$0xff]
    %v141 = vld [vmem:[#allocation2 + $0x30] sm:$0xff]
    %v142 = vld [vmem:[#allocation2 + $0x38] sm:$0xff]
    %v143 = vld [vmem:[#allocation2 + $0x40] sm:$0xff]
    %v144 = vld [vmem:[#allocation2 + $0x48] sm:$0xff]
    %v145 = vld [vmem:[#allocation2 + $0x50] sm:$0xff]
    %v146 = vld [vmem:[#allocation2 + $0x58] sm:$0xff]
    %v147 = vld [vmem:[#allocation2 + $0x60] sm:$0xff]
    %v148 = vld [vmem:[#allocation2 + $0x68] sm:$0xff]
    %v149 = vld [vmem:[#allocation2 + $0x70] sm:$0xff]
    %v150 = vld [vmem:[#allocation2 + $0x78] sm:$0xff]
    %v151 = vld [vmem:[%s5] ss:$8 sm:$0x3]
    %v153 = vperm.slane %v151, 0
    %v154 = vperm.slane %v151, 1
    %v173 = vunpack.c.l.b16 %v119
    %v174 = vunpack.c.l.b16 %v120
    %v175 = vunpack.c.l.b16 %v121
    %v176 = vunpack.c.l.b16 %v122
    %v177 = vunpack.c.l.b16 %v123
    %v178 = vunpack.c.l.b16 %v124
    %v179 = vunpack.c.l.b16 %v125
    %v180 = vunpack.c.l.b16 %v126
    %v181 = vunpack.c.l.b16 %v127
    %v182 = vunpack.c.l.b16 %v128
    %v183 = vunpack.c.l.b16 %v129
    %v184 = vunpack.c.l.b16 %v130
    %v185 = vunpack.c.l.b16 %v131
    %v186 = vunpack.c.l.b16 %v132
    %v187 = vunpack.c.l.b16 %v133
    %v188 = vunpack.c.l.b16 %v134
    %v189 = vpack.c.b16 %v174, %v173
    %v190 = vpack.c.b16 %v176, %v175
    %v191 = vpack.c.b16 %v178, %v177
    %v192 = vpack.c.b16 %v180, %v179
    %v193 = vpack.c.b16 %v182, %v181
    %v194 = vpack.c.b16 %v184, %v183
    %v195 = vpack.c.b16 %v186, %v185
    %v196 = vpack.c.b16 %v188, %v187
    %v221 = vunpack.c.l.b16 %v135
    %v222 = vunpack.c.h.b16 %v135
    %v223 = vunpack.c.l.b16 %v136
    %v224 = vunpack.c.h.b16 %v136
    %v225 = vunpack.c.l.b16 %v137
    %v226 = vunpack.c.h.b16 %v137
    %v227 = vunpack.c.l.b16 %v138
    %v228 = vunpack.c.h.b16 %v138
    %v229 = vunpack.c.l.b16 %v139
    %v230 = vunpack.c.h.b16 %v139
    %v231 = vunpack.c.l.b16 %v140
    %v232 = vunpack.c.h.b16 %v140
    %v233 = vunpack.c.l.b16 %v141
    %v234 = vunpack.c.h.b16 %v141
    %v235 = vunpack.c.l.b16 %v142
    %v236 = vunpack.c.h.b16 %v142
    %v237 = vunpack.c.l.b16 %v143
    %v238 = vunpack.c.h.b16 %v143
    %v239 = vunpack.c.l.b16 %v144
    %v240 = vunpack.c.h.b16 %v144
    %v241 = vunpack.c.l.b16 %v145
    %v242 = vunpack.c.h.b16 %v145
    %v243 = vunpack.c.l.b16 %v146
    %v244 = vunpack.c.h.b16 %v146
    %v245 = vunpack.c.l.b16 %v147
    %v246 = vunpack.c.h.b16 %v147
    %v247 = vunpack.c.l.b16 %v148
    %v248 = vunpack.c.h.b16 %v148
    %v249 = vunpack.c.l.b16 %v149
    %v250 = vunpack.c.h.b16 %v149
    %v251 = vunpack.c.l.b16 %v150
    %v252 = vunpack.c.h.b16 %v150
    %v253 = vpack.c.b16 %v223, %v221
    %v254 = vpack.c.b16 %v224, %v222
    %v255 = vpack.c.b16 %v227, %v225
    %v256 = vpack.c.b16 %v228, %v226
    %v257 = vpack.c.b16 %v231, %v229
    %v258 = vpack.c.b16 %v232, %v230
    %v259 = vpack.c.b16 %v235, %v233
    %v260 = vpack.c.b16 %v236, %v234
    %v261 = vpack.c.b16 %v239, %v237
    %v262 = vpack.c.b16 %v240, %v238
    %v263 = vpack.c.b16 %v243, %v241
    %v264 = vpack.c.b16 %v244, %v242
    %v265 = vpack.c.b16 %v247, %v245
    %v266 = vpack.c.b16 %v248, %v246
    %v267 = vpack.c.b16 %v251, %v249
    %v268 = vpack.c.b16 %v252, %v250
    %285 = vmatpush.bf16.msra.mxu0 %v267
    %286 = vmatpush.bf16.msra.mxu0 %v265
    %287 = vmatpush.bf16.msra.mxu0 %v263
    %288 = vmatpush.bf16.msra.mxu0 %v261
    %289 = vmatpush.bf16.msra.mxu0 %v259
    %290 = vmatpush.bf16.msra.mxu0 %v257
    %291 = vmatpush.bf16.msra.mxu0 %v255
    %292 = vmatpush.bf16.msra.mxu0 %v253
    %293 = vmatmul.bf16.gmra.mxu0 %v189
    %v294 = vpop.f32.mrf.mxu0
    %v295 = vadd.f32 %v153, %v294
    %v296 = vpop.f32.mrf.mxu0
    %v297 = vadd.f32 %v153, %v296
    %298 = vmatmul.bf16.gmra.mxu0 %v190
    %v299 = vpop.f32.mrf.mxu0
    %v300 = vadd.f32 %v153, %v299
    %v301 = vpop.f32.mrf.mxu0
    %v302 = vadd.f32 %v153, %v301
    %303 = vmatmul.bf16.gmra.mxu0 %v191
    %v304 = vpop.f32.mrf.mxu0
    %v305 = vadd.f32 %v153, %v304
    %v306 = vpop.f32.mrf.mxu0
    %v307 = vadd.f32 %v153, %v306
    %308 = vmatmul.bf16.gmra.mxu0 %v192
    %v309 = vpop.f32.mrf.mxu0
    %v310 = vadd.f32 %v153, %v309
    %v311 = vpop.f32.mrf.mxu0
    %v312 = vadd.f32 %v153, %v311
    %313 = vmatmul.bf16.gmra.mxu0 %v193
    %v314 = vpop.f32.mrf.mxu0
    %v315 = vadd.f32 %v153, %v314
    %v316 = vpop.f32.mrf.mxu0
    %v317 = vadd.f32 %v153, %v316
    %318 = vmatmul.bf16.gmra.mxu0 %v194
    %v319 = vpop.f32.mrf.mxu0
    %v320 = vadd.f32 %v153, %v319
    %v321 = vpop.f32.mrf.mxu0
    %v322 = vadd.f32 %v153, %v321
    %323 = vmatmul.bf16.gmra.mxu0 %v195
    %v324 = vpop.f32.mrf.mxu0
    %v325 = vadd.f32 %v153, %v324
    %v326 = vpop.f32.mrf.mxu0
    %v327 = vadd.f32 %v153, %v326
    %328 = vmatmul.bf16.gmra.mxu0 %v196
    %v329 = vpop.f32.mrf.mxu0
    %v330 = vadd.f32 %v153, %v329
    %v331 = vpop.f32.mrf.mxu0
    %v332 = vadd.f32 %v153, %v331
    %333 = vdwg.mxu0
    %334 = vmatpush.bf16.msra.mxu0 %v268
    %335 = vmatpush.bf16.msra.mxu0 %v266
    %336 = vmatpush.bf16.msra.mxu0 %v264
    %337 = vmatpush.bf16.msra.mxu0 %v262
    %338 = vmatpush.bf16.msra.mxu0 %v260
    %339 = vmatpush.bf16.msra.mxu0 %v258
    %340 = vmatpush.bf16.msra.mxu0 %v256
    %341 = vmatpush.bf16.msra.mxu0 %v254
    %342 = vmatmul.bf16.gmra.mxu0 %v189
    %v343 = vpop.f32.mrf.mxu0
    %v344 = vadd.f32 %v154, %v343
    %v345 = vpop.f32.mrf.mxu0
    %v346 = vadd.f32 %v154, %v345
    %347 = vmatmul.bf16.gmra.mxu0 %v190
    %v348 = vpop.f32.mrf.mxu0
    %v349 = vadd.f32 %v154, %v348
    %v350 = vpop.f32.mrf.mxu0
    %v351 = vadd.f32 %v154, %v350
    %352 = vmatmul.bf16.gmra.mxu0 %v191
    %v353 = vpop.f32.mrf.mxu0
    %v354 = vadd.f32 %v154, %v353
    %v355 = vpop.f32.mrf.mxu0
    %v356 = vadd.f32 %v154, %v355
    %357 = vmatmul.bf16.gmra.mxu0 %v192
    %v358 = vpop.f32.mrf.mxu0
    %v359 = vadd.f32 %v154, %v358
    %v360 = vpop.f32.mrf.mxu0
    %v361 = vadd.f32 %v154, %v360
    %362 = vmatmul.bf16.gmra.mxu0 %v193
    %v363 = vpop.f32.mrf.mxu0
    %v364 = vadd.f32 %v154, %v363
    %v365 = vpop.f32.mrf.mxu0
    %v366 = vadd.f32 %v154, %v365
    %367 = vmatmul.bf16.gmra.mxu0 %v194
    %v368 = vpop.f32.mrf.mxu0
    %v369 = vadd.f32 %v154, %v368
    %v370 = vpop.f32.mrf.mxu0
    %v371 = vadd.f32 %v154, %v370
    %372 = vmatmul.bf16.gmra.mxu0 %v195
    %v373 = vpop.f32.mrf.mxu0
    %v374 = vadd.f32 %v154, %v373
    %v375 = vpop.f32.mrf.mxu0
    %v376 = vadd.f32 %v154, %v375
    %377 = vmatmul.bf16.gmra.mxu0 %v196
    %v378 = vpop.f32.mrf.mxu0
    %v379 = vadd.f32 %v154, %v378
    %v380 = vpop.f32.mrf.mxu0
    %v381 = vadd.f32 %v154, %v380
    %382 = vdwg.mxu0
    %v383 = vadd.f32 %v295, %v344
    %384 = vadd.xlane.f32.xlu0 %v383
    %v385 = vpop.xlane.xlu0 %384
    %v386 = vadd.f32 %v297, %v346
    %387 = vadd.xlane.f32.xlu0 %v386
    %v388 = vpop.xlane.xlu0 %387
    %v389 = vadd.f32 %v300, %v349
    %390 = vadd.xlane.f32.xlu0 %v389
    %v391 = vpop.xlane.xlu0 %390
    %v392 = vadd.f32 %v302, %v351
    %393 = vadd.xlane.f32.xlu0 %v392
    %v394 = vpop.xlane.xlu0 %393
    %v395 = vadd.f32 %v305, %v354
    %396 = vadd.xlane.f32.xlu0 %v395
    %v397 = vpop.xlane.xlu0 %396
    %v398 = vadd.f32 %v307, %v356
    %399 = vadd.xlane.f32.xlu0 %v398
    %v400 = vpop.xlane.xlu0 %399
    %v401 = vadd.f32 %v310, %v359
    %402 = vadd.xlane.f32.xlu0 %v401
    %v403 = vpop.xlane.xlu0 %402
    %v404 = vadd.f32 %v312, %v361
    %405 = vadd.xlane.f32.xlu0 %v404
    %v406 = vpop.xlane.xlu0 %405
    %v407 = vadd.f32 %v315, %v364
    %408 = vadd.xlane.f32.xlu0 %v407
    %v409 = vpop.xlane.xlu0 %408
    %v410 = vadd.f32 %v317, %v366
    %411 = vadd.xlane.f32.xlu0 %v410
    %v412 = vpop.xlane.xlu0 %411
    %v413 = vadd.f32 %v320, %v369
    %414 = vadd.xlane.f32.xlu0 %v413
    %v415 = vpop.xlane.xlu0 %414
    %v416 = vadd.f32 %v322, %v371
    %417 = vadd.xlane.f32.xlu0 %v416
    %v418 = vpop.xlane.xlu0 %417
    %v419 = vadd.f32 %v325, %v374
    %420 = vadd.xlane.f32.xlu0 %v419
    %v421 = vpop.xlane.xlu0 %420
    %v422 = vadd.f32 %v327, %v376
    %423 = vadd.xlane.f32.xlu0 %v422
    %v424 = vpop.xlane.xlu0 %423
    %v425 = vadd.f32 %v330, %v379
    %426 = vadd.xlane.f32.xlu0 %v425
    %v427 = vpop.xlane.xlu0 %426
    %v428 = vadd.f32 %v332, %v381
    %429 = vadd.xlane.f32.xlu0 %v428
    %v430 = vpop.xlane.xlu0 %429
    %v431 = vmul.f32 %v295, %v295
    %v432 = vmul.f32 %v344, %v344
    %v433 = vmul.f32 %v297, %v297
    %v434 = vmul.f32 %v346, %v346
    %v435 = vmul.f32 %v300, %v300
    %v436 = vmul.f32 %v349, %v349
    %v437 = vmul.f32 %v302, %v302
    %v438 = vmul.f32 %v351, %v351
    %v439 = vmul.f32 %v305, %v305
    %v440 = vmul.f32 %v354, %v354
    %v441 = vmul.f32 %v307, %v307
    %v442 = vmul.f32 %v356, %v356
    %v443 = vmul.f32 %v310, %v310
    %v444 = vmul.f32 %v359, %v359
    %v445 = vmul.f32 %v312, %v312
    %v446 = vmul.f32 %v361, %v361
    %v447 = vmul.f32 %v315, %v315
    %v448 = vmul.f32 %v364, %v364
    %v449 = vmul.f32 %v317, %v317
    %v450 = vmul.f32 %v366, %v366
    %v451 = vmul.f32 %v320, %v320
    %v452 = vmul.f32 %v369, %v369
    %v453 = vmul.f32 %v322, %v322
    %v454 = vmul.f32 %v371, %v371
    %v455 = vmul.f32 %v325, %v325
    %v456 = vmul.f32 %v374, %v374
    %v457 = vmul.f32 %v327, %v327
    %v458 = vmul.f32 %v376, %v376
    %v459 = vmul.f32 %v330, %v330
    %v460 = vmul.f32 %v379, %v379
    %v461 = vmul.f32 %v332, %v332
    %v462 = vmul.f32 %v381, %v381
    %v463 = vadd.f32 %v431, %v432
    %464 = vadd.xlane.f32.xlu0 %v463
    %v465 = vpop.xlane.xlu0 %464
    %v466 = vadd.f32 %v433, %v434
    %467 = vadd.xlane.f32.xlu0 %v466
    %v468 = vpop.xlane.xlu0 %467
    %v469 = vadd.f32 %v435, %v436
    %470 = vadd.xlane.f32.xlu0 %v469
    %v471 = vpop.xlane.xlu0 %470
    %v472 = vadd.f32 %v437, %v438
    %473 = vadd.xlane.f32.xlu0 %v472
    %v474 = vpop.xlane.xlu0 %473
    %v475 = vadd.f32 %v439, %v440
    %476 = vadd.xlane.f32.xlu0 %v475
    %v477 = vpop.xlane.xlu0 %476
    %v478 = vadd.f32 %v441, %v442
    %479 = vadd.xlane.f32.xlu0 %v478
    %v480 = vpop.xlane.xlu0 %479
    %v481 = vadd.f32 %v443, %v444
    %482 = vadd.xlane.f32.xlu0 %v481
    %v483 = vpop.xlane.xlu0 %482
    %v484 = vadd.f32 %v445, %v446
    %485 = vadd.xlane.f32.xlu0 %v484
    %v486 = vpop.xlane.xlu0 %485
    %v487 = vadd.f32 %v447, %v448
    %488 = vadd.xlane.f32.xlu0 %v487
    %v489 = vpop.xlane.xlu0 %488
    %v490 = vadd.f32 %v449, %v450
    %491 = vadd.xlane.f32.xlu0 %v490
    %v492 = vpop.xlane.xlu0 %491
    %v493 = vadd.f32 %v451, %v452
    %494 = vadd.xlane.f32.xlu0 %v493
    %v495 = vpop.xlane.xlu0 %494
    %v496 = vadd.f32 %v453, %v454
    %497 = vadd.xlane.f32.xlu0 %v496
    %v498 = vpop.xlane.xlu0 %497
    %v499 = vadd.f32 %v455, %v456
    %500 = vadd.xlane.f32.xlu0 %v499
    %v501 = vpop.xlane.xlu0 %500
    %v502 = vadd.f32 %v457, %v458
    %503 = vadd.xlane.f32.xlu0 %v502
    %v504 = vpop.xlane.xlu0 %503
    %v505 = vadd.f32 %v459, %v460
    %506 = vadd.xlane.f32.xlu0 %v505
    %v507 = vpop.xlane.xlu0 %506
    %v508 = vadd.f32 %v461, %v462
    %509 = vadd.xlane.f32.xlu0 %v508
    %v510 = vpop.xlane.xlu0 %509
    %v511 = vmul.f32 %v385, 0.00390625
    %v512 = vmul.f32 %v388, 0.00390625
    %v513 = vmul.f32 %v391, 0.00390625
    %v514 = vmul.f32 %v394, 0.00390625
    %v515 = vmul.f32 %v397, 0.00390625
    %v516 = vmul.f32 %v400, 0.00390625
    %v517 = vmul.f32 %v403, 0.00390625
    %v518 = vmul.f32 %v406, 0.00390625
    %v519 = vmul.f32 %v409, 0.00390625
    %v520 = vmul.f32 %v412, 0.00390625
    %v521 = vmul.f32 %v415, 0.00390625
    %v522 = vmul.f32 %v418, 0.00390625
    %v523 = vmul.f32 %v421, 0.00390625
    %v524 = vmul.f32 %v424, 0.00390625
    %v525 = vmul.f32 %v427, 0.00390625
    %v526 = vmul.f32 %v430, 0.00390625
    %v527 = vmul.f32 %v465, 0.00390625
    %v528 = vmul.f32 %v468, 0.00390625
    %v529 = vmul.f32 %v471, 0.00390625
    %v530 = vmul.f32 %v474, 0.00390625
    %v531 = vmul.f32 %v477, 0.00390625
    %v532 = vmul.f32 %v480, 0.00390625
    %v533 = vmul.f32 %v483, 0.00390625
    %v534 = vmul.f32 %v486, 0.00390625
    %v535 = vmul.f32 %v489, 0.00390625
    %v536 = vmul.f32 %v492, 0.00390625
    %v537 = vmul.f32 %v495, 0.00390625
    %v538 = vmul.f32 %v498, 0.00390625
    %v539 = vmul.f32 %v501, 0.00390625
    %v540 = vmul.f32 %v504, 0.00390625
    %v541 = vmul.f32 %v507, 0.00390625
    %v542 = vmul.f32 %v510, 0.00390625
    %v543 = vmul.f32 %v511, %v511
    %v544 = vmul.f32 %v512, %v512
    %v545 = vmul.f32 %v513, %v513
    %v546 = vmul.f32 %v514, %v514
    %v547 = vmul.f32 %v515, %v515
    %v548 = vmul.f32 %v516, %v516
    %v549 = vmul.f32 %v517, %v517
    %v550 = vmul.f32 %v518, %v518
    %v551 = vmul.f32 %v519, %v519
    %v552 = vmul.f32 %v520, %v520
    %v553 = vmul.f32 %v521, %v521
    %v554 = vmul.f32 %v522, %v522
    %v555 = vmul.f32 %v523, %v523
    %v556 = vmul.f32 %v524, %v524
    %v557 = vmul.f32 %v525, %v525
    %v558 = vmul.f32 %v526, %v526
    %v559 = vsub.f32 %v527, %v543
    %v560 = vsub.f32 %v528, %v544
    %v561 = vsub.f32 %v529, %v545
    %v562 = vsub.f32 %v530, %v546
    %v563 = vsub.f32 %v531, %v547
    %v564 = vsub.f32 %v532, %v548
    %v565 = vsub.f32 %v533, %v549
    %v566 = vsub.f32 %v534, %v550
    %v567 = vsub.f32 %v535, %v551
    %v568 = vsub.f32 %v536, %v552
    %v569 = vsub.f32 %v537, %v553
    %v570 = vsub.f32 %v538, %v554
    %v571 = vsub.f32 %v539, %v555
    %v572 = vsub.f32 %v540, %v556
    %v573 = vsub.f32 %v541, %v557
    %v574 = vsub.f32 %v542, %v558
    %v575 = vmax.f32 %v559, 0.0
    %v576 = vmax.f32 %v560, 0.0
    %v577 = vmax.f32 %v561, 0.0
    %v578 = vmax.f32 %v562, 0.0
    %v579 = vmax.f32 %v563, 0.0
    %v580 = vmax.f32 %v564, 0.0
    %v581 = vmax.f32 %v565, 0.0
    %v582 = vmax.f32 %v566, 0.0
    %v583 = vmax.f32 %v567, 0.0
    %v584 = vmax.f32 %v568, 0.0
    %v585 = vmax.f32 %v569, 0.0
    %v586 = vmax.f32 %v570, 0.0
    %v587 = vmax.f32 %v571, 0.0
    %v588 = vmax.f32 %v572, 0.0
    %v589 = vmax.f32 %v573, 0.0
    %v590 = vmax.f32 %v574, 0.0
    %v591 = vadd.f32 %v575, 1e-05
    %v592 = vadd.f32 %v576, 1e-05
    %v593 = vadd.f32 %v577, 1e-05
    %v594 = vadd.f32 %v578, 1e-05
    %v595 = vadd.f32 %v579, 1e-05
    %v596 = vadd.f32 %v580, 1e-05
    %v597 = vadd.f32 %v581, 1e-05
    %v598 = vadd.f32 %v582, 1e-05
    %v599 = vadd.f32 %v583, 1e-05
    %v600 = vadd.f32 %v584, 1e-05
    %v601 = vadd.f32 %v585, 1e-05
    %v602 = vadd.f32 %v586, 1e-05
    %v603 = vadd.f32 %v587, 1e-05
    %v604 = vadd.f32 %v588, 1e-05
    %v605 = vadd.f32 %v589, 1e-05
    %v606 = vadd.f32 %v590, 1e-05
    %v607 = vrsqrt.pop %v591
    %v608 = vmul.f32 %v607, %v591
    %v609 = vmul.f32 %v608, %v607
    %v610 = vmul.f32 0.5, %v609
    %v611 = vsub.f32 1.5, %v610
    %v612 = vmul.f32 %v607, %v611
    %vm613 = vweird.f32 %v591
    %vm614 = vweird.f32 %v607
    %vm615 = vmor %vm613, %vm614
    %v616 = vsel %vm615, %v607, %v612
    %v617 = vrsqrt.pop %v592
    %v618 = vmul.f32 %v617, %v592
    %v619 = vmul.f32 %v618, %v617
    %v620 = vmul.f32 0.5, %v619
    %v621 = vsub.f32 1.5, %v620
    %v622 = vmul.f32 %v617, %v621
    %vm623 = vweird.f32 %v592
    %vm624 = vweird.f32 %v617
    %vm625 = vmor %vm623, %vm624
    %v626 = vsel %vm625, %v617, %v622
    %v627 = vrsqrt.pop %v593
    %v628 = vmul.f32 %v627, %v593
    %v629 = vmul.f32 %v628, %v627
    %v630 = vmul.f32 0.5, %v629
    %v631 = vsub.f32 1.5, %v630
    %v632 = vmul.f32 %v627, %v631
    %vm633 = vweird.f32 %v593
    %vm634 = vweird.f32 %v627
    %vm635 = vmor %vm633, %vm634
    %v636 = vsel %vm635, %v627, %v632
    %v637 = vrsqrt.pop %v594
    %v638 = vmul.f32 %v637, %v594
    %v639 = vmul.f32 %v638, %v637
    %v640 = vmul.f32 0.5, %v639
    %v641 = vsub.f32 1.5, %v640
    %v642 = vmul.f32 %v637, %v641
    %vm643 = vweird.f32 %v594
    %vm644 = vweird.f32 %v637
    %vm645 = vmor %vm643, %vm644
    %v646 = vsel %vm645, %v637, %v642
    %v647 = vrsqrt.pop %v595
    %v648 = vmul.f32 %v647, %v595
    %v649 = vmul.f32 %v648, %v647
    %v650 = vmul.f32 0.5, %v649
    %v651 = vsub.f32 1.5, %v650
    %v652 = vmul.f32 %v647, %v651
    %vm653 = vweird.f32 %v595
    %vm654 = vweird.f32 %v647
    %vm655 = vmor %vm653, %vm654
    %v656 = vsel %vm655, %v647, %v652
    %v657 = vrsqrt.pop %v596
    %v658 = vmul.f32 %v657, %v596
    %v659 = vmul.f32 %v658, %v657
    %v660 = vmul.f32 0.5, %v659
    %v661 = vsub.f32 1.5, %v660
    %v662 = vmul.f32 %v657, %v661
    %vm663 = vweird.f32 %v596
    %vm664 = vweird.f32 %v657
    %vm665 = vmor %vm663, %vm664
    %v666 = vsel %vm665, %v657, %v662
    %v667 = vrsqrt.pop %v597
    %v668 = vmul.f32 %v667, %v597
    %v669 = vmul.f32 %v668, %v667
    %v670 = vmul.f32 0.5, %v669
    %v671 = vsub.f32 1.5, %v670
    %v672 = vmul.f32 %v667, %v671
    %vm673 = vweird.f32 %v597
    %vm674 = vweird.f32 %v667
    %vm675 = vmor %vm673, %vm674
    %v676 = vsel %vm675, %v667, %v672
    %v677 = vrsqrt.pop %v598
    %v678 = vmul.f32 %v677, %v598
    %v679 = vmul.f32 %v678, %v677
    %v680 = vmul.f32 0.5, %v679
    %v681 = vsub.f32 1.5, %v680
    %v682 = vmul.f32 %v677, %v681
    %vm683 = vweird.f32 %v598
    %vm684 = vweird.f32 %v677
    %vm685 = vmor %vm683, %vm684
    %v686 = vsel %vm685, %v677, %v682
    %v687 = vrsqrt.pop %v599
    %v688 = vmul.f32 %v687, %v599
    %v689 = vmul.f32 %v688, %v687
    %v690 = vmul.f32 0.5, %v689
    %v691 = vsub.f32 1.5, %v690
    %v692 = vmul.f32 %v687, %v691
    %vm693 = vweird.f32 %v599
    %vm694 = vweird.f32 %v687
    %vm695 = vmor %vm693, %vm694
    %v696 = vsel %vm695, %v687, %v692
    %v697 = vrsqrt.pop %v600
    %v698 = vmul.f32 %v697, %v600
    %v699 = vmul.f32 %v698, %v697
    %v700 = vmul.f32 0.5, %v699
    %v701 = vsub.f32 1.5, %v700
    %v702 = vmul.f32 %v697, %v701
    %vm703 = vweird.f32 %v600
    %vm704 = vweird.f32 %v697
    %vm705 = vmor %vm703, %vm704
    %v706 = vsel %vm705, %v697, %v702
    %v707 = vrsqrt.pop %v601
    %v708 = vmul.f32 %v707, %v601
    %v709 = vmul.f32 %v708, %v707
    %v710 = vmul.f32 0.5, %v709
    %v711 = vsub.f32 1.5, %v710
    %v712 = vmul.f32 %v707, %v711
    %vm713 = vweird.f32 %v601
    %vm714 = vweird.f32 %v707
    %vm715 = vmor %vm713, %vm714
    %v716 = vsel %vm715, %v707, %v712
    %v717 = vrsqrt.pop %v602
    %v718 = vmul.f32 %v717, %v602
    %v719 = vmul.f32 %v718, %v717
    %v720 = vmul.f32 0.5, %v719
    %v721 = vsub.f32 1.5, %v720
    %v722 = vmul.f32 %v717, %v721
    %vm723 = vweird.f32 %v602
    %vm724 = vweird.f32 %v717
    %vm725 = vmor %vm723, %vm724
    %v726 = vsel %vm725, %v717, %v722
    %v727 = vrsqrt.pop %v603
    %v728 = vmul.f32 %v727, %v603
    %v729 = vmul.f32 %v728, %v727
    %v730 = vmul.f32 0.5, %v729
    %v731 = vsub.f32 1.5, %v730
    %v732 = vmul.f32 %v727, %v731
    %vm733 = vweird.f32 %v603
    %vm734 = vweird.f32 %v727
    %vm735 = vmor %vm733, %vm734
    %v736 = vsel %vm735, %v727, %v732
    %v737 = vrsqrt.pop %v604
    %v738 = vmul.f32 %v737, %v604
    %v739 = vmul.f32 %v738, %v737
    %v740 = vmul.f32 0.5, %v739
    %v741 = vsub.f32 1.5, %v740
    %v742 = vmul.f32 %v737, %v741
    %vm743 = vweird.f32 %v604
    %vm744 = vweird.f32 %v737
    %vm745 = vmor %vm743, %vm744
    %v746 = vsel %vm745, %v737, %v742
    %v747 = vrsqrt.pop %v605
    %v748 = vmul.f32 %v747, %v605
    %v749 = vmul.f32 %v748, %v747
    %v750 = vmul.f32 0.5, %v749
    %v751 = vsub.f32 1.5, %v750
    %v752 = vmul.f32 %v747, %v751
    %vm753 = vweird.f32 %v605
    %vm754 = vweird.f32 %v747
    %vm755 = vmor %vm753, %vm754
    %v756 = vsel %vm755, %v747, %v752
    %v757 = vrsqrt.pop %v606
    %v758 = vmul.f32 %v757, %v606
    %v759 = vmul.f32 %v758, %v757
    %v760 = vmul.f32 0.5, %v759
    %v761 = vsub.f32 1.5, %v760
    %v762 = vmul.f32 %v757, %v761
    %vm763 = vweird.f32 %v606
    %vm764 = vweird.f32 %v757
    %vm765 = vmor %vm763, %vm764
    %v766 = vsel %vm765, %v757, %v762
    %v767 = vsub.f32 %v295, %v511
    %v768 = vsub.f32 %v344, %v511
    %v769 = vsub.f32 %v297, %v512
    %v770 = vsub.f32 %v346, %v512
    %v771 = vsub.f32 %v300, %v513
    %v772 = vsub.f32 %v349, %v513
    %v773 = vsub.f32 %v302, %v514
    %v774 = vsub.f32 %v351, %v514
    %v775 = vsub.f32 %v305, %v515
    %v776 = vsub.f32 %v354, %v515
    %v777 = vsub.f32 %v307, %v516
    %v778 = vsub.f32 %v356, %v516
    %v779 = vsub.f32 %v310, %v517
    %v780 = vsub.f32 %v359, %v517
    %v781 = vsub.f32 %v312, %v518
    %v782 = vsub.f32 %v361, %v518
    %v783 = vsub.f32 %v315, %v519
    %v784 = vsub.f32 %v364, %v519
    %v785 = vsub.f32 %v317, %v520
    %v786 = vsub.f32 %v366, %v520
    %v787 = vsub.f32 %v320, %v521
    %v788 = vsub.f32 %v369, %v521
    %v789 = vsub.f32 %v322, %v522
    %v790 = vsub.f32 %v371, %v522
    %v791 = vsub.f32 %v325, %v523
    %v792 = vsub.f32 %v374, %v523
    %v793 = vsub.f32 %v327, %v524
    %v794 = vsub.f32 %v376, %v524
    %v795 = vsub.f32 %v330, %v525
    %v796 = vsub.f32 %v379, %v525
    %v797 = vsub.f32 %v332, %v526
    %v798 = vsub.f32 %v381, %v526
    %v799 = vmul.f32 %v767, %v616
    %v800 = vmul.f32 %v768, %v616
    %v801 = vmul.f32 %v769, %v626
    %v802 = vmul.f32 %v770, %v626
    %v803 = vmul.f32 %v771, %v636
    %v804 = vmul.f32 %v772, %v636
    %v805 = vmul.f32 %v773, %v646
    %v806 = vmul.f32 %v774, %v646
    %v807 = vmul.f32 %v775, %v656
    %v808 = vmul.f32 %v776, %v656
    %v809 = vmul.f32 %v777, %v666
    %v810 = vmul.f32 %v778, %v666
    %v811 = vmul.f32 %v779, %v676
    %v812 = vmul.f32 %v780, %v676
    %v813 = vmul.f32 %v781, %v686
    %v814 = vmul.f32 %v782, %v686
    %v815 = vmul.f32 %v783, %v696
    %v816 = vmul.f32 %v784, %v696
    %v817 = vmul.f32 %v785, %v706
    %v818 = vmul.f32 %v786, %v706
    %v819 = vmul.f32 %v787, %v716
    %v820 = vmul.f32 %v788, %v716
    %v821 = vmul.f32 %v789, %v726
    %v822 = vmul.f32 %v790, %v726
    %v823 = vmul.f32 %v791, %v736
    %v824 = vmul.f32 %v792, %v736
    %v825 = vmul.f32 %v793, %v746
    %v826 = vmul.f32 %v794, %v746
    %v827 = vmul.f32 %v795, %v756
    %v828 = vmul.f32 %v796, %v756
    %v829 = vmul.f32 %v797, %v766
    %v830 = vmul.f32 %v798, %v766
    %v831 = vld [vmem:[%s6] ss:$8 sm:$0x3]
    %v833 = vperm.slane %v831, 0
    %v834 = vperm.slane %v831, 1
    %v837 = vmul.f32 %v799, %v833
    %v838 = vmul.f32 %v800, %v834
    %v839 = vmul.f32 %v801, %v833
    %v840 = vmul.f32 %v802, %v834
    %v841 = vmul.f32 %v803, %v833
    %v842 = vmul.f32 %v804, %v834
    %v843 = vmul.f32 %v805, %v833
    %v844 = vmul.f32 %v806, %v834
    %v845 = vmul.f32 %v807, %v833
    %v846 = vmul.f32 %v808, %v834
    %v847 = vmul.f32 %v809, %v833
    %v848 = vmul.f32 %v810, %v834
    %v849 = vmul.f32 %v811, %v833
    %v850 = vmul.f32 %v812, %v834
    %v851 = vmul.f32 %v813, %v833
    %v852 = vmul.f32 %v814, %v834
    %v853 = vmul.f32 %v815, %v833
    %v854 = vmul.f32 %v816, %v834
    %v855 = vmul.f32 %v817, %v833
    %v856 = vmul.f32 %v818, %v834
    %v857 = vmul.f32 %v819, %v833
    %v858 = vmul.f32 %v820, %v834
    %v859 = vmul.f32 %v821, %v833
    %v860 = vmul.f32 %v822, %v834
    %v861 = vmul.f32 %v823, %v833
    %v862 = vmul.f32 %v824, %v834
    %v863 = vmul.f32 %v825, %v833
    %v864 = vmul.f32 %v826, %v834
    %v865 = vmul.f32 %v827, %v833
    %v866 = vmul.f32 %v828, %v834
    %v867 = vmul.f32 %v829, %v833
    %v868 = vmul.f32 %v830, %v834
    %v869 = vld [vmem:[%s7] ss:$8 sm:$0x3]
    %v871 = vperm.slane %v869, 0
    %v872 = vperm.slane %v869, 1
    %v875 = vadd.f32 %v837, %v871
    %v876 = vadd.f32 %v838, %v872
    %v877 = vadd.f32 %v839, %v871
    %v878 = vadd.f32 %v840, %v872
    %v879 = vadd.f32 %v841, %v871
    %v880 = vadd.f32 %v842, %v872
    %v881 = vadd.f32 %v843, %v871
    %v882 = vadd.f32 %v844, %v872
    %v883 = vadd.f32 %v845, %v871
    %v884 = vadd.f32 %v846, %v872
    %v885 = vadd.f32 %v847, %v871
    %v886 = vadd.f32 %v848, %v872
    %v887 = vadd.f32 %v849, %v871
    %v888 = vadd.f32 %v850, %v872
    %v889 = vadd.f32 %v851, %v871
    %v890 = vadd.f32 %v852, %v872
    %v891 = vadd.f32 %v853, %v871
    %v892 = vadd.f32 %v854, %v872
    %v893 = vadd.f32 %v855, %v871
    %v894 = vadd.f32 %v856, %v872
    %v895 = vadd.f32 %v857, %v871
    %v896 = vadd.f32 %v858, %v872
    %v897 = vadd.f32 %v859, %v871
    %v898 = vadd.f32 %v860, %v872
    %v899 = vadd.f32 %v861, %v871
    %v900 = vadd.f32 %v862, %v872
    %v901 = vadd.f32 %v863, %v871
    %v902 = vadd.f32 %v864, %v872
    %v903 = vadd.f32 %v865, %v871
    %v904 = vadd.f32 %v866, %v872
    %v905 = vadd.f32 %v867, %v871
    %v906 = vadd.f32 %v868, %v872
    %v907 = vmax.f32 %v875, 0.0
    %v908 = vmax.f32 %v876, 0.0
    %v909 = vmax.f32 %v877, 0.0
    %v910 = vmax.f32 %v878, 0.0
    %v911 = vmax.f32 %v879, 0.0
    %v912 = vmax.f32 %v880, 0.0
    %v913 = vmax.f32 %v881, 0.0
    %v914 = vmax.f32 %v882, 0.0
    %v915 = vmax.f32 %v883, 0.0
    %v916 = vmax.f32 %v884, 0.0
    %v917 = vmax.f32 %v885, 0.0
    %v918 = vmax.f32 %v886, 0.0
    %v919 = vmax.f32 %v887, 0.0
    %v920 = vmax.f32 %v888, 0.0
    %v921 = vmax.f32 %v889, 0.0
    %v922 = vmax.f32 %v890, 0.0
    %v923 = vmax.f32 %v891, 0.0
    %v924 = vmax.f32 %v892, 0.0
    %v925 = vmax.f32 %v893, 0.0
    %v926 = vmax.f32 %v894, 0.0
    %v927 = vmax.f32 %v895, 0.0
    %v928 = vmax.f32 %v896, 0.0
    %v929 = vmax.f32 %v897, 0.0
    %v930 = vmax.f32 %v898, 0.0
    %v931 = vmax.f32 %v899, 0.0
    %v932 = vmax.f32 %v900, 0.0
    %v933 = vmax.f32 %v901, 0.0
    %v934 = vmax.f32 %v902, 0.0
    %v935 = vmax.f32 %v903, 0.0
    %v936 = vmax.f32 %v904, 0.0
    %v937 = vmax.f32 %v905, 0.0
    %v938 = vmax.f32 %v906, 0.0
    %v939 = vpack.c.bf16 %v909, %v907
    %v940 = vpack.c.bf16 %v910, %v908
    %v941 = vpack.c.bf16 %v913, %v911
    %v942 = vpack.c.bf16 %v914, %v912
    %v943 = vpack.c.bf16 %v917, %v915
    %v944 = vpack.c.bf16 %v918, %v916
    %v945 = vpack.c.bf16 %v921, %v919
    %v946 = vpack.c.bf16 %v922, %v920
    %v947 = vpack.c.bf16 %v925, %v923
    %v948 = vpack.c.bf16 %v926, %v924
    %v949 = vpack.c.bf16 %v929, %v927
    %v950 = vpack.c.bf16 %v930, %v928
    %v951 = vpack.c.bf16 %v933, %v931
    %v952 = vpack.c.bf16 %v934, %v932
    %v953 = vpack.c.bf16 %v937, %v935
    %v954 = vpack.c.bf16 %v938, %v936
    %v955 = vld [vmem:[#allocation4] sm:$0xff]
    %v956 = vld [vmem:[#allocation4 + $0x8] sm:$0xff]
    %v957 = vld [vmem:[#allocation4 + $0x10] sm:$0xff]
    %v958 = vld [vmem:[#allocation4 + $0x18] sm:$0xff]
    %v959 = vld [vmem:[#allocation4 + $0x20] sm:$0xff]
    %v960 = vld [vmem:[#allocation4 + $0x28] sm:$0xff]
    %v961 = vld [vmem:[#allocation4 + $0x30] sm:$0xff]
    %v962 = vld [vmem:[#allocation4 + $0x38] sm:$0xff]
    %v963 = vld [vmem:[#allocation4 + $0x40] sm:$0xff]
    %v964 = vld [vmem:[#allocation4 + $0x48] sm:$0xff]
    %v965 = vld [vmem:[#allocation4 + $0x50] sm:$0xff]
    %v966 = vld [vmem:[#allocation4 + $0x58] sm:$0xff]
    %v967 = vld [vmem:[#allocation4 + $0x60] sm:$0xff]
    %v968 = vld [vmem:[#allocation4 + $0x68] sm:$0xff]
    %v969 = vld [vmem:[#allocation4 + $0x70] sm:$0xff]
    %v970 = vld [vmem:[#allocation4 + $0x78] sm:$0xff]
    %v971 = vld [vmem:[#allocation4 + $0x80] sm:$0xff]
    %v972 = vld [vmem:[#allocation4 + $0x88] sm:$0xff]
    %v973 = vld [vmem:[#allocation4 + $0x90] sm:$0xff]
    %v974 = vld [vmem:[#allocation4 + $0x98] sm:$0xff]
    %v975 = vld [vmem:[#allocation4 + $0xa0] sm:$0xff]
    %v976 = vld [vmem:[#allocation4 + $0xa8] sm:$0xff]
    %v977 = vld [vmem:[#allocation4 + $0xb0] sm:$0xff]
    %v978 = vld [vmem:[#allocation4 + $0xb8] sm:$0xff]
    %v979 = vld [vmem:[#allocation4 + $0xc0] sm:$0xff]
    %v980 = vld [vmem:[#allocation4 + $0xc8] sm:$0xff]
    %v981 = vld [vmem:[#allocation4 + $0xd0] sm:$0xff]
    %v982 = vld [vmem:[#allocation4 + $0xd8] sm:$0xff]
    %v983 = vld [vmem:[#allocation4 + $0xe0] sm:$0xff]
    %v984 = vld [vmem:[#allocation4 + $0xe8] sm:$0xff]
    %v985 = vld [vmem:[#allocation4 + $0xf0] sm:$0xff]
    %v986 = vld [vmem:[#allocation4 + $0xf8] sm:$0xff]
    %s987 = scalar_lea.vmem %s5, 1
    %v988 = vld [vmem:[%s987] ss:$8 sm:$0x3]
    %v990 = vperm.slane %v988, 0
    %v991 = vperm.slane %v988, 1
    %v1026 = vunpack.c.l.b16 %v955
    %v1027 = vunpack.c.h.b16 %v955
    %v1028 = vunpack.c.l.b16 %v956
    %v1029 = vunpack.c.h.b16 %v956
    %v1030 = vunpack.c.l.b16 %v957
    %v1031 = vunpack.c.h.b16 %v957
    %v1032 = vunpack.c.l.b16 %v958
    %v1033 = vunpack.c.h.b16 %v958
    %v1034 = vunpack.c.l.b16 %v959
    %v1035 = vunpack.c.h.b16 %v959
    %v1036 = vunpack.c.l.b16 %v960
    %v1037 = vunpack.c.h.b16 %v960
    %v1038 = vunpack.c.l.b16 %v961
    %v1039 = vunpack.c.h.b16 %v961
    %v1040 = vunpack.c.l.b16 %v962
    %v1041 = vunpack.c.h.b16 %v962
    %v1042 = vunpack.c.l.b16 %v963
    %v1043 = vunpack.c.h.b16 %v963
    %v1044 = vunpack.c.l.b16 %v964
    %v1045 = vunpack.c.h.b16 %v964
    %v1046 = vunpack.c.l.b16 %v965
    %v1047 = vunpack.c.h.b16 %v965
    %v1048 = vunpack.c.l.b16 %v966
    %v1049 = vunpack.c.h.b16 %v966
    %v1050 = vunpack.c.l.b16 %v967
    %v1051 = vunpack.c.h.b16 %v967
    %v1052 = vunpack.c.l.b16 %v968
    %v1053 = vunpack.c.h.b16 %v968
    %v1054 = vunpack.c.l.b16 %v969
    %v1055 = vunpack.c.h.b16 %v969
    %v1056 = vunpack.c.l.b16 %v970
    %v1057 = vunpack.c.h.b16 %v970
    %v1058 = vunpack.c.l.b16 %v971
    %v1059 = vunpack.c.h.b16 %v971
    %v1060 = vunpack.c.l.b16 %v972
    %v1061 = vunpack.c.h.b16 %v972
    %v1062 = vunpack.c.l.b16 %v973
    %v1063 = vunpack.c.h.b16 %v973
    %v1064 = vunpack.c.l.b16 %v974
    %v1065 = vunpack.c.h.b16 %v974
    %v1066 = vunpack.c.l.b16 %v975
    %v1067 = vunpack.c.h.b16 %v975
    %v1068 = vunpack.c.l.b16 %v976
    %v1069 = vunpack.c.h.b16 %v976
    %v1070 = vunpack.c.l.b16 %v977
    %v1071 = vunpack.c.h.b16 %v977
    %v1072 = vunpack.c.l.b16 %v978
    %v1073 = vunpack.c.h.b16 %v978
    %v1074 = vunpack.c.l.b16 %v979
    %v1075 = vunpack.c.h.b16 %v979
    %v1076 = vunpack.c.l.b16 %v980
    %v1077 = vunpack.c.h.b16 %v980
    %v1078 = vunpack.c.l.b16 %v981
    %v1079 = vunpack.c.h.b16 %v981
    %v1080 = vunpack.c.l.b16 %v982
    %v1081 = vunpack.c.h.b16 %v982
    %v1082 = vunpack.c.l.b16 %v983
    %v1083 = vunpack.c.h.b16 %v983
    %v1084 = vunpack.c.l.b16 %v984
    %v1085 = vunpack.c.h.b16 %v984
    %v1086 = vunpack.c.l.b16 %v985
    %v1087 = vunpack.c.h.b16 %v985
    %v1088 = vunpack.c.l.b16 %v986
    %v1089 = vunpack.c.h.b16 %v986
    %v1090 = vpack.c.b16 %v1028, %v1026
    %v1091 = vpack.c.b16 %v1029, %v1027
    %v1092 = vpack.c.b16 %v1032, %v1030
    %v1093 = vpack.c.b16 %v1033, %v1031
    %v1094 = vpack.c.b16 %v1036, %v1034
    %v1095 = vpack.c.b16 %v1037, %v1035
    %v1096 = vpack.c.b16 %v1040, %v1038
    %v1097 = vpack.c.b16 %v1041, %v1039
    %v1098 = vpack.c.b16 %v1044, %v1042
    %v1099 = vpack.c.b16 %v1045, %v1043
    %v1100 = vpack.c.b16 %v1048, %v1046
    %v1101 = vpack.c.b16 %v1049, %v1047
    %v1102 = vpack.c.b16 %v1052, %v1050
    %v1103 = vpack.c.b16 %v1053, %v1051
    %v1104 = vpack.c.b16 %v1056, %v1054
    %v1105 = vpack.c.b16 %v1057, %v1055
    %v1106 = vpack.c.b16 %v1060, %v1058
    %v1107 = vpack.c.b16 %v1061, %v1059
    %v1108 = vpack.c.b16 %v1064, %v1062
    %v1109 = vpack.c.b16 %v1065, %v1063
    %v1110 = vpack.c.b16 %v1068, %v1066
    %v1111 = vpack.c.b16 %v1069, %v1067
    %v1112 = vpack.c.b16 %v1072, %v1070
    %v1113 = vpack.c.b16 %v1073, %v1071
    %v1114 = vpack.c.b16 %v1076, %v1074
    %v1115 = vpack.c.b16 %v1077, %v1075
    %v1116 = vpack.c.b16 %v1080, %v1078
    %v1117 = vpack.c.b16 %v1081, %v1079
    %v1118 = vpack.c.b16 %v1084, %v1082
    %v1119 = vpack.c.b16 %v1085, %v1083
    %v1120 = vpack.c.b16 %v1088, %v1086
    %v1121 = vpack.c.b16 %v1089, %v1087
    %1154 = vmatpush.bf16.msra.mxu0 %v1104
    %1155 = vmatpush.bf16.msra.mxu0 %v1102
    %1156 = vmatpush.bf16.msra.mxu0 %v1100
    %1157 = vmatpush.bf16.msra.mxu0 %v1098
    %1158 = vmatpush.bf16.msra.mxu0 %v1096
    %1159 = vmatpush.bf16.msra.mxu0 %v1094
    %1160 = vmatpush.bf16.msra.mxu0 %v1092
    %1161 = vmatpush.bf16.msra.mxu0 %v1090
    %1162 = vmatmul.bf16.gmra.mxu0 %v939
    %v1163 = vpop.f32.mrf.mxu0
    %v1164 = vadd.f32 %v990, %v1163
    %v1165 = vpop.f32.mrf.mxu0
    %v1166 = vadd.f32 %v990, %v1165
    %1167 = vmatmul.bf16.gmra.mxu0 %v941
    %v1168 = vpop.f32.mrf.mxu0
    %v1169 = vadd.f32 %v990, %v1168
    %v1170 = vpop.f32.mrf.mxu0
    %v1171 = vadd.f32 %v990, %v1170
    %1172 = vmatmul.bf16.gmra.mxu0 %v943
    %v1173 = vpop.f32.mrf.mxu0
    %v1174 = vadd.f32 %v990, %v1173
    %v1175 = vpop.f32.mrf.mxu0
    %v1176 = vadd.f32 %v990, %v1175
    %1177 = vmatmul.bf16.gmra.mxu0 %v945
    %v1178 = vpop.f32.mrf.mxu0
    %v1179 = vadd.f32 %v990, %v1178
    %v1180 = vpop.f32.mrf.mxu0
    %v1181 = vadd.f32 %v990, %v1180
    %1182 = vmatmul.bf16.gmra.mxu0 %v947
    %v1183 = vpop.f32.mrf.mxu0
    %v1184 = vadd.f32 %v990, %v1183
    %v1185 = vpop.f32.mrf.mxu0
    %v1186 = vadd.f32 %v990, %v1185
    %1187 = vmatmul.bf16.gmra.mxu0 %v949
    %v1188 = vpop.f32.mrf.mxu0
    %v1189 = vadd.f32 %v990, %v1188
    %v1190 = vpop.f32.mrf.mxu0
    %v1191 = vadd.f32 %v990, %v1190
    %1192 = vmatmul.bf16.gmra.mxu0 %v951
    %v1193 = vpop.f32.mrf.mxu0
    %v1194 = vadd.f32 %v990, %v1193
    %v1195 = vpop.f32.mrf.mxu0
    %v1196 = vadd.f32 %v990, %v1195
    %1197 = vmatmul.bf16.gmra.mxu0 %v953
    %v1198 = vpop.f32.mrf.mxu0
    %v1199 = vadd.f32 %v990, %v1198
    %v1200 = vpop.f32.mrf.mxu0
    %v1201 = vadd.f32 %v990, %v1200
    %1202 = vdwg.mxu0
    %1203 = vmatpush.bf16.msra.mxu0 %v1120
    %1204 = vmatpush.bf16.msra.mxu0 %v1118
    %1205 = vmatpush.bf16.msra.mxu0 %v1116
    %1206 = vmatpush.bf16.msra.mxu0 %v1114
    %1207 = vmatpush.bf16.msra.mxu0 %v1112
    %1208 = vmatpush.bf16.msra.mxu0 %v1110
    %1209 = vmatpush.bf16.msra.mxu0 %v1108
    %1210 = vmatpush.bf16.msra.mxu0 %v1106
    %1211 = vmatmul.bf16.gmra.mxu0 %v940
    %v1212 = vpop.f32.mrf.mxu0
    %v1213 = vadd.f32 %v1164, %v1212
    %v1214 = vpop.f32.mrf.mxu0
    %v1215 = vadd.f32 %v1166, %v1214
    %1216 = vmatmul.bf16.gmra.mxu0 %v942
    %v1217 = vpop.f32.mrf.mxu0
    %v1218 = vadd.f32 %v1169, %v1217
    %v1219 = vpop.f32.mrf.mxu0
    %v1220 = vadd.f32 %v1171, %v1219
    %1221 = vmatmul.bf16.gmra.mxu0 %v944
    %v1222 = vpop.f32.mrf.mxu0
    %v1223 = vadd.f32 %v1174, %v1222
    %v1224 = vpop.f32.mrf.mxu0
    %v1225 = vadd.f32 %v1176, %v1224
    %1226 = vmatmul.bf16.gmra.mxu0 %v946
    %v1227 = vpop.f32.mrf.mxu0
    %v1228 = vadd.f32 %v1179, %v1227
    %v1229 = vpop.f32.mrf.mxu0
    %v1230 = vadd.f32 %v1181, %v1229
    %1231 = vmatmul.bf16.gmra.mxu0 %v948
    %v1232 = vpop.f32.mrf.mxu0
    %v1233 = vadd.f32 %v1184, %v1232
    %v1234 = vpop.f32.mrf.mxu0
    %v1235 = vadd.f32 %v1186, %v1234
    %1236 = vmatmul.bf16.gmra.mxu0 %v950
    %v1237 = vpop.f32.mrf.mxu0
    %v1238 = vadd.f32 %v1189, %v1237
    %v1239 = vpop.f32.mrf.mxu0
    %v1240 = vadd.f32 %v1191, %v1239
    %1241 = vmatmul.bf16.gmra.mxu0 %v952
    %v1242 = vpop.f32.mrf.mxu0
    %v1243 = vadd.f32 %v1194, %v1242
    %v1244 = vpop.f32.mrf.mxu0
    %v1245 = vadd.f32 %v1196, %v1244
    %1246 = vmatmul.bf16.gmra.mxu0 %v954
    %v1247 = vpop.f32.mrf.mxu0
    %v1248 = vadd.f32 %v1199, %v1247
    %v1249 = vpop.f32.mrf.mxu0
    %v1250 = vadd.f32 %v1201, %v1249
    %1251 = vdwg.mxu0
    %1252 = vmatpush.bf16.msra.mxu0 %v1105
    %1253 = vmatpush.bf16.msra.mxu0 %v1103
    %1254 = vmatpush.bf16.msra.mxu0 %v1101
    %1255 = vmatpush.bf16.msra.mxu0 %v1099
    %1256 = vmatpush.bf16.msra.mxu0 %v1097
    %1257 = vmatpush.bf16.msra.mxu0 %v1095
    %1258 = vmatpush.bf16.msra.mxu0 %v1093
    %1259 = vmatpush.bf16.msra.mxu0 %v1091
    %1260 = vmatmul.bf16.gmra.mxu0 %v939
    %v1261 = vpop.f32.mrf.mxu0
    %v1262 = vadd.f32 %v991, %v1261
    %v1263 = vpop.f32.mrf.mxu0
    %v1264 = vadd.f32 %v991, %v1263
    %1265 = vmatmul.bf16.gmra.mxu0 %v941
    %v1266 = vpop.f32.mrf.mxu0
    %v1267 = vadd.f32 %v991, %v1266
    %v1268 = vpop.f32.mrf.mxu0
    %v1269 = vadd.f32 %v991, %v1268
    %1270 = vmatmul.bf16.gmra.mxu0 %v943
    %v1271 = vpop.f32.mrf.mxu0
    %v1272 = vadd.f32 %v991, %v1271
    %v1273 = vpop.f32.mrf.mxu0
    %v1274 = vadd.f32 %v991, %v1273
    %1275 = vmatmul.bf16.gmra.mxu0 %v945
    %v1276 = vpop.f32.mrf.mxu0
    %v1277 = vadd.f32 %v991, %v1276
    %v1278 = vpop.f32.mrf.mxu0
    %v1279 = vadd.f32 %v991, %v1278
    %1280 = vmatmul.bf16.gmra.mxu0 %v947
    %v1281 = vpop.f32.mrf.mxu0
    %v1282 = vadd.f32 %v991, %v1281
    %v1283 = vpop.f32.mrf.mxu0
    %v1284 = vadd.f32 %v991, %v1283
    %1285 = vmatmul.bf16.gmra.mxu0 %v949
    %v1286 = vpop.f32.mrf.mxu0
    %v1287 = vadd.f32 %v991, %v1286
    %v1288 = vpop.f32.mrf.mxu0
    %v1289 = vadd.f32 %v991, %v1288
    %1290 = vmatmul.bf16.gmra.mxu0 %v951
    %v1291 = vpop.f32.mrf.mxu0
    %v1292 = vadd.f32 %v991, %v1291
    %v1293 = vpop.f32.mrf.mxu0
    %v1294 = vadd.f32 %v991, %v1293
    %1295 = vmatmul.bf16.gmra.mxu0 %v953
    %v1296 = vpop.f32.mrf.mxu0
    %v1297 = vadd.f32 %v991, %v1296
    %v1298 = vpop.f32.mrf.mxu0
    %v1299 = vadd.f32 %v991, %v1298
    %1300 = vdwg.mxu0
    %1301 = vmatpush.bf16.msra.mxu0 %v1121
    %1302 = vmatpush.bf16.msra.mxu0 %v1119
    %1303 = vmatpush.bf16.msra.mxu0 %v1117
    %1304 = vmatpush.bf16.msra.mxu0 %v1115
    %1305 = vmatpush.bf16.msra.mxu0 %v1113
    %1306 = vmatpush.bf16.msra.mxu0 %v1111
    %1307 = vmatpush.bf16.msra.mxu0 %v1109
    %1308 = vmatpush.bf16.msra.mxu0 %v1107
    %1309 = vmatmul.bf16.gmra.mxu0 %v940
    %v1310 = vpop.f32.mrf.mxu0
    %v1311 = vadd.f32 %v1262, %v1310
    %v1312 = vpop.f32.mrf.mxu0
    %v1313 = vadd.f32 %v1264, %v1312
    %1314 = vmatmul.bf16.gmra.mxu0 %v942
    %v1315 = vpop.f32.mrf.mxu0
    %v1316 = vadd.f32 %v1267, %v1315
    %v1317 = vpop.f32.mrf.mxu0
    %v1318 = vadd.f32 %v1269, %v1317
    %1319 = vmatmul.bf16.gmra.mxu0 %v944
    %v1320 = vpop.f32.mrf.mxu0
    %v1321 = vadd.f32 %v1272, %v1320
    %v1322 = vpop.f32.mrf.mxu0
    %v1323 = vadd.f32 %v1274, %v1322
    %1324 = vmatmul.bf16.gmra.mxu0 %v946
    %v1325 = vpop.f32.mrf.mxu0
    %v1326 = vadd.f32 %v1277, %v1325
    %v1327 = vpop.f32.mrf.mxu0
    %v1328 = vadd.f32 %v1279, %v1327
    %1329 = vmatmul.bf16.gmra.mxu0 %v948
    %v1330 = vpop.f32.mrf.mxu0
    %v1331 = vadd.f32 %v1282, %v1330
    %v1332 = vpop.f32.mrf.mxu0
    %v1333 = vadd.f32 %v1284, %v1332
    %1334 = vmatmul.bf16.gmra.mxu0 %v950
    %v1335 = vpop.f32.mrf.mxu0
    %v1336 = vadd.f32 %v1287, %v1335
    %v1337 = vpop.f32.mrf.mxu0
    %v1338 = vadd.f32 %v1289, %v1337
    %1339 = vmatmul.bf16.gmra.mxu0 %v952
    %v1340 = vpop.f32.mrf.mxu0
    %v1341 = vadd.f32 %v1292, %v1340
    %v1342 = vpop.f32.mrf.mxu0
    %v1343 = vadd.f32 %v1294, %v1342
    %1344 = vmatmul.bf16.gmra.mxu0 %v954
    %v1345 = vpop.f32.mrf.mxu0
    %v1346 = vadd.f32 %v1297, %v1345
    %v1347 = vpop.f32.mrf.mxu0
    %v1348 = vadd.f32 %v1299, %v1347
    %1349 = vdwg.mxu0
    %v1350 = vadd.f32 %v1213, %v1311
    %1351 = vadd.xlane.f32.xlu0 %v1350
    %v1352 = vpop.xlane.xlu0 %1351
    %v1353 = vadd.f32 %v1215, %v1313
    %1354 = vadd.xlane.f32.xlu0 %v1353
    %v1355 = vpop.xlane.xlu0 %1354
    %v1356 = vadd.f32 %v1218, %v1316
    %1357 = vadd.xlane.f32.xlu0 %v1356
    %v1358 = vpop.xlane.xlu0 %1357
    %v1359 = vadd.f32 %v1220, %v1318
    %1360 = vadd.xlane.f32.xlu0 %v1359
    %v1361 = vpop.xlane.xlu0 %1360
    %v1362 = vadd.f32 %v1223, %v1321
    %1363 = vadd.xlane.f32.xlu0 %v1362
    %v1364 = vpop.xlane.xlu0 %1363
    %v1365 = vadd.f32 %v1225, %v1323
    %1366 = vadd.xlane.f32.xlu0 %v1365
    %v1367 = vpop.xlane.xlu0 %1366
    %v1368 = vadd.f32 %v1228, %v1326
    %1369 = vadd.xlane.f32.xlu0 %v1368
    %v1370 = vpop.xlane.xlu0 %1369
    %v1371 = vadd.f32 %v1230, %v1328
    %1372 = vadd.xlane.f32.xlu0 %v1371
    %v1373 = vpop.xlane.xlu0 %1372
    %v1374 = vadd.f32 %v1233, %v1331
    %1375 = vadd.xlane.f32.xlu0 %v1374
    %v1376 = vpop.xlane.xlu0 %1375
    %v1377 = vadd.f32 %v1235, %v1333
    %1378 = vadd.xlane.f32.xlu0 %v1377
    %v1379 = vpop.xlane.xlu0 %1378
    %v1380 = vadd.f32 %v1238, %v1336
    %1381 = vadd.xlane.f32.xlu0 %v1380
    %v1382 = vpop.xlane.xlu0 %1381
    %v1383 = vadd.f32 %v1240, %v1338
    %1384 = vadd.xlane.f32.xlu0 %v1383
    %v1385 = vpop.xlane.xlu0 %1384
    %v1386 = vadd.f32 %v1243, %v1341
    %1387 = vadd.xlane.f32.xlu0 %v1386
    %v1388 = vpop.xlane.xlu0 %1387
    %v1389 = vadd.f32 %v1245, %v1343
    %1390 = vadd.xlane.f32.xlu0 %v1389
    %v1391 = vpop.xlane.xlu0 %1390
    %v1392 = vadd.f32 %v1248, %v1346
    %1393 = vadd.xlane.f32.xlu0 %v1392
    %v1394 = vpop.xlane.xlu0 %1393
    %v1395 = vadd.f32 %v1250, %v1348
    %1396 = vadd.xlane.f32.xlu0 %v1395
    %v1397 = vpop.xlane.xlu0 %1396
    %v1398 = vmul.f32 %v1213, %v1213
    %v1399 = vmul.f32 %v1311, %v1311
    %v1400 = vmul.f32 %v1215, %v1215
    %v1401 = vmul.f32 %v1313, %v1313
    %v1402 = vmul.f32 %v1218, %v1218
    %v1403 = vmul.f32 %v1316, %v1316
    %v1404 = vmul.f32 %v1220, %v1220
    %v1405 = vmul.f32 %v1318, %v1318
    %v1406 = vmul.f32 %v1223, %v1223
    %v1407 = vmul.f32 %v1321, %v1321
    %v1408 = vmul.f32 %v1225, %v1225
    %v1409 = vmul.f32 %v1323, %v1323
    %v1410 = vmul.f32 %v1228, %v1228
    %v1411 = vmul.f32 %v1326, %v1326
    %v1412 = vmul.f32 %v1230, %v1230
    %v1413 = vmul.f32 %v1328, %v1328
    %v1414 = vmul.f32 %v1233, %v1233
    %v1415 = vmul.f32 %v1331, %v1331
    %v1416 = vmul.f32 %v1235, %v1235
    %v1417 = vmul.f32 %v1333, %v1333
    %v1418 = vmul.f32 %v1238, %v1238
    %v1419 = vmul.f32 %v1336, %v1336
    %v1420 = vmul.f32 %v1240, %v1240
    %v1421 = vmul.f32 %v1338, %v1338
    %v1422 = vmul.f32 %v1243, %v1243
    %v1423 = vmul.f32 %v1341, %v1341
    %v1424 = vmul.f32 %v1245, %v1245
    %v1425 = vmul.f32 %v1343, %v1343
    %v1426 = vmul.f32 %v1248, %v1248
    %v1427 = vmul.f32 %v1346, %v1346
    %v1428 = vmul.f32 %v1250, %v1250
    %v1429 = vmul.f32 %v1348, %v1348
    %v1430 = vadd.f32 %v1398, %v1399
    %1431 = vadd.xlane.f32.xlu0 %v1430
    %v1432 = vpop.xlane.xlu0 %1431
    %v1433 = vadd.f32 %v1400, %v1401
    %1434 = vadd.xlane.f32.xlu0 %v1433
    %v1435 = vpop.xlane.xlu0 %1434
    %v1436 = vadd.f32 %v1402, %v1403
    %1437 = vadd.xlane.f32.xlu0 %v1436
    %v1438 = vpop.xlane.xlu0 %1437
    %v1439 = vadd.f32 %v1404, %v1405
    %1440 = vadd.xlane.f32.xlu0 %v1439
    %v1441 = vpop.xlane.xlu0 %1440
    %v1442 = vadd.f32 %v1406, %v1407
    %1443 = vadd.xlane.f32.xlu0 %v1442
    %v1444 = vpop.xlane.xlu0 %1443
    %v1445 = vadd.f32 %v1408, %v1409
    %1446 = vadd.xlane.f32.xlu0 %v1445
    %v1447 = vpop.xlane.xlu0 %1446
    %v1448 = vadd.f32 %v1410, %v1411
    %1449 = vadd.xlane.f32.xlu0 %v1448
    %v1450 = vpop.xlane.xlu0 %1449
    %v1451 = vadd.f32 %v1412, %v1413
    %1452 = vadd.xlane.f32.xlu0 %v1451
    %v1453 = vpop.xlane.xlu0 %1452
    %v1454 = vadd.f32 %v1414, %v1415
    %1455 = vadd.xlane.f32.xlu0 %v1454
    %v1456 = vpop.xlane.xlu0 %1455
    %v1457 = vadd.f32 %v1416, %v1417
    %1458 = vadd.xlane.f32.xlu0 %v1457
    %v1459 = vpop.xlane.xlu0 %1458
    %v1460 = vadd.f32 %v1418, %v1419
    %1461 = vadd.xlane.f32.xlu0 %v1460
    %v1462 = vpop.xlane.xlu0 %1461
    %v1463 = vadd.f32 %v1420, %v1421
    %1464 = vadd.xlane.f32.xlu0 %v1463
    %v1465 = vpop.xlane.xlu0 %1464
    %v1466 = vadd.f32 %v1422, %v1423
    %1467 = vadd.xlane.f32.xlu0 %v1466
    %v1468 = vpop.xlane.xlu0 %1467
    %v1469 = vadd.f32 %v1424, %v1425
    %1470 = vadd.xlane.f32.xlu0 %v1469
    %v1471 = vpop.xlane.xlu0 %1470
    %v1472 = vadd.f32 %v1426, %v1427
    %1473 = vadd.xlane.f32.xlu0 %v1472
    %v1474 = vpop.xlane.xlu0 %1473
    %v1475 = vadd.f32 %v1428, %v1429
    %1476 = vadd.xlane.f32.xlu0 %v1475
    %v1477 = vpop.xlane.xlu0 %1476
    %v1478 = vmul.f32 %v1352, 0.00390625
    %v1479 = vmul.f32 %v1355, 0.00390625
    %v1480 = vmul.f32 %v1358, 0.00390625
    %v1481 = vmul.f32 %v1361, 0.00390625
    %v1482 = vmul.f32 %v1364, 0.00390625
    %v1483 = vmul.f32 %v1367, 0.00390625
    %v1484 = vmul.f32 %v1370, 0.00390625
    %v1485 = vmul.f32 %v1373, 0.00390625
    %v1486 = vmul.f32 %v1376, 0.00390625
    %v1487 = vmul.f32 %v1379, 0.00390625
    %v1488 = vmul.f32 %v1382, 0.00390625
    %v1489 = vmul.f32 %v1385, 0.00390625
    %v1490 = vmul.f32 %v1388, 0.00390625
    %v1491 = vmul.f32 %v1391, 0.00390625
    %v1492 = vmul.f32 %v1394, 0.00390625
    %v1493 = vmul.f32 %v1397, 0.00390625
    %v1494 = vmul.f32 %v1432, 0.00390625
    %v1495 = vmul.f32 %v1435, 0.00390625
    %v1496 = vmul.f32 %v1438, 0.00390625
    %v1497 = vmul.f32 %v1441, 0.00390625
    %v1498 = vmul.f32 %v1444, 0.00390625
    %v1499 = vmul.f32 %v1447, 0.00390625
    %v1500 = vmul.f32 %v1450, 0.00390625
    %v1501 = vmul.f32 %v1453, 0.00390625
    %v1502 = vmul.f32 %v1456, 0.00390625
    %v1503 = vmul.f32 %v1459, 0.00390625
    %v1504 = vmul.f32 %v1462, 0.00390625
    %v1505 = vmul.f32 %v1465, 0.00390625
    %v1506 = vmul.f32 %v1468, 0.00390625
    %v1507 = vmul.f32 %v1471, 0.00390625
    %v1508 = vmul.f32 %v1474, 0.00390625
    %v1509 = vmul.f32 %v1477, 0.00390625
    %v1510 = vmul.f32 %v1478, %v1478
    %v1511 = vmul.f32 %v1479, %v1479
    %v1512 = vmul.f32 %v1480, %v1480
    %v1513 = vmul.f32 %v1481, %v1481
    %v1514 = vmul.f32 %v1482, %v1482
    %v1515 = vmul.f32 %v1483, %v1483
    %v1516 = vmul.f32 %v1484, %v1484
    %v1517 = vmul.f32 %v1485, %v1485
    %v1518 = vmul.f32 %v1486, %v1486
    %v1519 = vmul.f32 %v1487, %v1487
    %v1520 = vmul.f32 %v1488, %v1488
    %v1521 = vmul.f32 %v1489, %v1489
    %v1522 = vmul.f32 %v1490, %v1490
    %v1523 = vmul.f32 %v1491, %v1491
    %v1524 = vmul.f32 %v1492, %v1492
    %v1525 = vmul.f32 %v1493, %v1493
    %v1526 = vsub.f32 %v1494, %v1510
    %v1527 = vsub.f32 %v1495, %v1511
    %v1528 = vsub.f32 %v1496, %v1512
    %v1529 = vsub.f32 %v1497, %v1513
    %v1530 = vsub.f32 %v1498, %v1514
    %v1531 = vsub.f32 %v1499, %v1515
    %v1532 = vsub.f32 %v1500, %v1516
    %v1533 = vsub.f32 %v1501, %v1517
    %v1534 = vsub.f32 %v1502, %v1518
    %v1535 = vsub.f32 %v1503, %v1519
    %v1536 = vsub.f32 %v1504, %v1520
    %v1537 = vsub.f32 %v1505, %v1521
    %v1538 = vsub.f32 %v1506, %v1522
    %v1539 = vsub.f32 %v1507, %v1523
    %v1540 = vsub.f32 %v1508, %v1524
    %v1541 = vsub.f32 %v1509, %v1525
    %v1542 = vmax.f32 %v1526, 0.0
    %v1543 = vmax.f32 %v1527, 0.0
    %v1544 = vmax.f32 %v1528, 0.0
    %v1545 = vmax.f32 %v1529, 0.0
    %v1546 = vmax.f32 %v1530, 0.0
    %v1547 = vmax.f32 %v1531, 0.0
    %v1548 = vmax.f32 %v1532, 0.0
    %v1549 = vmax.f32 %v1533, 0.0
    %v1550 = vmax.f32 %v1534, 0.0
    %v1551 = vmax.f32 %v1535, 0.0
    %v1552 = vmax.f32 %v1536, 0.0
    %v1553 = vmax.f32 %v1537, 0.0
    %v1554 = vmax.f32 %v1538, 0.0
    %v1555 = vmax.f32 %v1539, 0.0
    %v1556 = vmax.f32 %v1540, 0.0
    %v1557 = vmax.f32 %v1541, 0.0
    %v1558 = vadd.f32 %v1542, 1e-05
    %v1559 = vadd.f32 %v1543, 1e-05
    %v1560 = vadd.f32 %v1544, 1e-05
    %v1561 = vadd.f32 %v1545, 1e-05
    %v1562 = vadd.f32 %v1546, 1e-05
    %v1563 = vadd.f32 %v1547, 1e-05
    %v1564 = vadd.f32 %v1548, 1e-05
    %v1565 = vadd.f32 %v1549, 1e-05
    %v1566 = vadd.f32 %v1550, 1e-05
    %v1567 = vadd.f32 %v1551, 1e-05
    %v1568 = vadd.f32 %v1552, 1e-05
    %v1569 = vadd.f32 %v1553, 1e-05
    %v1570 = vadd.f32 %v1554, 1e-05
    %v1571 = vadd.f32 %v1555, 1e-05
    %v1572 = vadd.f32 %v1556, 1e-05
    %v1573 = vadd.f32 %v1557, 1e-05
    %v1574 = vrsqrt.pop %v1558
    %v1575 = vmul.f32 %v1574, %v1558
    %v1576 = vmul.f32 %v1575, %v1574
    %v1577 = vmul.f32 0.5, %v1576
    %v1578 = vsub.f32 1.5, %v1577
    %v1579 = vmul.f32 %v1574, %v1578
    %vm1580 = vweird.f32 %v1558
    %vm1581 = vweird.f32 %v1574
    %vm1582 = vmor %vm1580, %vm1581
    %v1583 = vsel %vm1582, %v1574, %v1579
    %v1584 = vrsqrt.pop %v1559
    %v1585 = vmul.f32 %v1584, %v1559
    %v1586 = vmul.f32 %v1585, %v1584
    %v1587 = vmul.f32 0.5, %v1586
    %v1588 = vsub.f32 1.5, %v1587
    %v1589 = vmul.f32 %v1584, %v1588
    %vm1590 = vweird.f32 %v1559
    %vm1591 = vweird.f32 %v1584
    %vm1592 = vmor %vm1590, %vm1591
    %v1593 = vsel %vm1592, %v1584, %v1589
    %v1594 = vrsqrt.pop %v1560
    %v1595 = vmul.f32 %v1594, %v1560
    %v1596 = vmul.f32 %v1595, %v1594
    %v1597 = vmul.f32 0.5, %v1596
    %v1598 = vsub.f32 1.5, %v1597
    %v1599 = vmul.f32 %v1594, %v1598
    %vm1600 = vweird.f32 %v1560
    %vm1601 = vweird.f32 %v1594
    %vm1602 = vmor %vm1600, %vm1601
    %v1603 = vsel %vm1602, %v1594, %v1599
    %v1604 = vrsqrt.pop %v1561
    %v1605 = vmul.f32 %v1604, %v1561
    %v1606 = vmul.f32 %v1605, %v1604
    %v1607 = vmul.f32 0.5, %v1606
    %v1608 = vsub.f32 1.5, %v1607
    %v1609 = vmul.f32 %v1604, %v1608
    %vm1610 = vweird.f32 %v1561
    %vm1611 = vweird.f32 %v1604
    %vm1612 = vmor %vm1610, %vm1611
    %v1613 = vsel %vm1612, %v1604, %v1609
    %v1614 = vrsqrt.pop %v1562
    %v1615 = vmul.f32 %v1614, %v1562
    %v1616 = vmul.f32 %v1615, %v1614
    %v1617 = vmul.f32 0.5, %v1616
    %v1618 = vsub.f32 1.5, %v1617
    %v1619 = vmul.f32 %v1614, %v1618
    %vm1620 = vweird.f32 %v1562
    %vm1621 = vweird.f32 %v1614
    %vm1622 = vmor %vm1620, %vm1621
    %v1623 = vsel %vm1622, %v1614, %v1619
    %v1624 = vrsqrt.pop %v1563
    %v1625 = vmul.f32 %v1624, %v1563
    %v1626 = vmul.f32 %v1625, %v1624
    %v1627 = vmul.f32 0.5, %v1626
    %v1628 = vsub.f32 1.5, %v1627
    %v1629 = vmul.f32 %v1624, %v1628
    %vm1630 = vweird.f32 %v1563
    %vm1631 = vweird.f32 %v1624
    %vm1632 = vmor %vm1630, %vm1631
    %v1633 = vsel %vm1632, %v1624, %v1629
    %v1634 = vrsqrt.pop %v1564
    %v1635 = vmul.f32 %v1634, %v1564
    %v1636 = vmul.f32 %v1635, %v1634
    %v1637 = vmul.f32 0.5, %v1636
    %v1638 = vsub.f32 1.5, %v1637
    %v1639 = vmul.f32 %v1634, %v1638
    %vm1640 = vweird.f32 %v1564
    %vm1641 = vweird.f32 %v1634
    %vm1642 = vmor %vm1640, %vm1641
    %v1643 = vsel %vm1642, %v1634, %v1639
    %v1644 = vrsqrt.pop %v1565
    %v1645 = vmul.f32 %v1644, %v1565
    %v1646 = vmul.f32 %v1645, %v1644
    %v1647 = vmul.f32 0.5, %v1646
    %v1648 = vsub.f32 1.5, %v1647
    %v1649 = vmul.f32 %v1644, %v1648
    %vm1650 = vweird.f32 %v1565
    %vm1651 = vweird.f32 %v1644
    %vm1652 = vmor %vm1650, %vm1651
    %v1653 = vsel %vm1652, %v1644, %v1649
    %v1654 = vrsqrt.pop %v1566
    %v1655 = vmul.f32 %v1654, %v1566
    %v1656 = vmul.f32 %v1655, %v1654
    %v1657 = vmul.f32 0.5, %v1656
    %v1658 = vsub.f32 1.5, %v1657
    %v1659 = vmul.f32 %v1654, %v1658
    %vm1660 = vweird.f32 %v1566
    %vm1661 = vweird.f32 %v1654
    %vm1662 = vmor %vm1660, %vm1661
    %v1663 = vsel %vm1662, %v1654, %v1659
    %v1664 = vrsqrt.pop %v1567
    %v1665 = vmul.f32 %v1664, %v1567
    %v1666 = vmul.f32 %v1665, %v1664
    %v1667 = vmul.f32 0.5, %v1666
    %v1668 = vsub.f32 1.5, %v1667
    %v1669 = vmul.f32 %v1664, %v1668
    %vm1670 = vweird.f32 %v1567
    %vm1671 = vweird.f32 %v1664
    %vm1672 = vmor %vm1670, %vm1671
    %v1673 = vsel %vm1672, %v1664, %v1669
    %v1674 = vrsqrt.pop %v1568
    %v1675 = vmul.f32 %v1674, %v1568
    %v1676 = vmul.f32 %v1675, %v1674
    %v1677 = vmul.f32 0.5, %v1676
    %v1678 = vsub.f32 1.5, %v1677
    %v1679 = vmul.f32 %v1674, %v1678
    %vm1680 = vweird.f32 %v1568
    %vm1681 = vweird.f32 %v1674
    %vm1682 = vmor %vm1680, %vm1681
    %v1683 = vsel %vm1682, %v1674, %v1679
    %v1684 = vrsqrt.pop %v1569
    %v1685 = vmul.f32 %v1684, %v1569
    %v1686 = vmul.f32 %v1685, %v1684
    %v1687 = vmul.f32 0.5, %v1686
    %v1688 = vsub.f32 1.5, %v1687
    %v1689 = vmul.f32 %v1684, %v1688
    %vm1690 = vweird.f32 %v1569
    %vm1691 = vweird.f32 %v1684
    %vm1692 = vmor %vm1690, %vm1691
    %v1693 = vsel %vm1692, %v1684, %v1689
    %v1694 = vrsqrt.pop %v1570
    %v1695 = vmul.f32 %v1694, %v1570
    %v1696 = vmul.f32 %v1695, %v1694
    %v1697 = vmul.f32 0.5, %v1696
    %v1698 = vsub.f32 1.5, %v1697
    %v1699 = vmul.f32 %v1694, %v1698
    %vm1700 = vweird.f32 %v1570
    %vm1701 = vweird.f32 %v1694
    %vm1702 = vmor %vm1700, %vm1701
    %v1703 = vsel %vm1702, %v1694, %v1699
    %v1704 = vrsqrt.pop %v1571
    %v1705 = vmul.f32 %v1704, %v1571
    %v1706 = vmul.f32 %v1705, %v1704
    %v1707 = vmul.f32 0.5, %v1706
    %v1708 = vsub.f32 1.5, %v1707
    %v1709 = vmul.f32 %v1704, %v1708
    %vm1710 = vweird.f32 %v1571
    %vm1711 = vweird.f32 %v1704
    %vm1712 = vmor %vm1710, %vm1711
    %v1713 = vsel %vm1712, %v1704, %v1709
    %v1714 = vrsqrt.pop %v1572
    %v1715 = vmul.f32 %v1714, %v1572
    %v1716 = vmul.f32 %v1715, %v1714
    %v1717 = vmul.f32 0.5, %v1716
    %v1718 = vsub.f32 1.5, %v1717
    %v1719 = vmul.f32 %v1714, %v1718
    %vm1720 = vweird.f32 %v1572
    %vm1721 = vweird.f32 %v1714
    %vm1722 = vmor %vm1720, %vm1721
    %v1723 = vsel %vm1722, %v1714, %v1719
    %v1724 = vrsqrt.pop %v1573
    %v1725 = vmul.f32 %v1724, %v1573
    %v1726 = vmul.f32 %v1725, %v1724
    %v1727 = vmul.f32 0.5, %v1726
    %v1728 = vsub.f32 1.5, %v1727
    %v1729 = vmul.f32 %v1724, %v1728
    %vm1730 = vweird.f32 %v1573
    %vm1731 = vweird.f32 %v1724
    %vm1732 = vmor %vm1730, %vm1731
    %v1733 = vsel %vm1732, %v1724, %v1729
    %v1734 = vsub.f32 %v1213, %v1478
    %v1735 = vsub.f32 %v1311, %v1478
    %v1736 = vsub.f32 %v1215, %v1479
    %v1737 = vsub.f32 %v1313, %v1479
    %v1738 = vsub.f32 %v1218, %v1480
    %v1739 = vsub.f32 %v1316, %v1480
    %v1740 = vsub.f32 %v1220, %v1481
    %v1741 = vsub.f32 %v1318, %v1481
    %v1742 = vsub.f32 %v1223, %v1482
    %v1743 = vsub.f32 %v1321, %v1482
    %v1744 = vsub.f32 %v1225, %v1483
    %v1745 = vsub.f32 %v1323, %v1483
    %v1746 = vsub.f32 %v1228, %v1484
    %v1747 = vsub.f32 %v1326, %v1484
    %v1748 = vsub.f32 %v1230, %v1485
    %v1749 = vsub.f32 %v1328, %v1485
    %v1750 = vsub.f32 %v1233, %v1486
    %v1751 = vsub.f32 %v1331, %v1486
    %v1752 = vsub.f32 %v1235, %v1487
    %v1753 = vsub.f32 %v1333, %v1487
    %v1754 = vsub.f32 %v1238, %v1488
    %v1755 = vsub.f32 %v1336, %v1488
    %v1756 = vsub.f32 %v1240, %v1489
    %v1757 = vsub.f32 %v1338, %v1489
    %v1758 = vsub.f32 %v1243, %v1490
    %v1759 = vsub.f32 %v1341, %v1490
    %v1760 = vsub.f32 %v1245, %v1491
    %v1761 = vsub.f32 %v1343, %v1491
    %v1762 = vsub.f32 %v1248, %v1492
    %v1763 = vsub.f32 %v1346, %v1492
    %v1764 = vsub.f32 %v1250, %v1493
    %v1765 = vsub.f32 %v1348, %v1493
    %v1766 = vmul.f32 %v1734, %v1583
    %v1767 = vmul.f32 %v1735, %v1583
    %v1768 = vmul.f32 %v1736, %v1593
    %v1769 = vmul.f32 %v1737, %v1593
    %v1770 = vmul.f32 %v1738, %v1603
    %v1771 = vmul.f32 %v1739, %v1603
    %v1772 = vmul.f32 %v1740, %v1613
    %v1773 = vmul.f32 %v1741, %v1613
    %v1774 = vmul.f32 %v1742, %v1623
    %v1775 = vmul.f32 %v1743, %v1623
    %v1776 = vmul.f32 %v1744, %v1633
    %v1777 = vmul.f32 %v1745, %v1633
    %v1778 = vmul.f32 %v1746, %v1643
    %v1779 = vmul.f32 %v1747, %v1643
    %v1780 = vmul.f32 %v1748, %v1653
    %v1781 = vmul.f32 %v1749, %v1653
    %v1782 = vmul.f32 %v1750, %v1663
    %v1783 = vmul.f32 %v1751, %v1663
    %v1784 = vmul.f32 %v1752, %v1673
    %v1785 = vmul.f32 %v1753, %v1673
    %v1786 = vmul.f32 %v1754, %v1683
    %v1787 = vmul.f32 %v1755, %v1683
    %v1788 = vmul.f32 %v1756, %v1693
    %v1789 = vmul.f32 %v1757, %v1693
    %v1790 = vmul.f32 %v1758, %v1703
    %v1791 = vmul.f32 %v1759, %v1703
    %v1792 = vmul.f32 %v1760, %v1713
    %v1793 = vmul.f32 %v1761, %v1713
    %v1794 = vmul.f32 %v1762, %v1723
    %v1795 = vmul.f32 %v1763, %v1723
    %v1796 = vmul.f32 %v1764, %v1733
    %v1797 = vmul.f32 %v1765, %v1733
    %s1798 = scalar_lea.vmem %s6, 1
    %v1799 = vld [vmem:[%s1798] ss:$8 sm:$0x3]
    %v1801 = vperm.slane %v1799, 0
    %v1802 = vperm.slane %v1799, 1
    %v1805 = vmul.f32 %v1766, %v1801
    %v1806 = vmul.f32 %v1767, %v1802
    %v1807 = vmul.f32 %v1768, %v1801
    %v1808 = vmul.f32 %v1769, %v1802
    %v1809 = vmul.f32 %v1770, %v1801
    %v1810 = vmul.f32 %v1771, %v1802
    %v1811 = vmul.f32 %v1772, %v1801
    %v1812 = vmul.f32 %v1773, %v1802
    %v1813 = vmul.f32 %v1774, %v1801
    %v1814 = vmul.f32 %v1775, %v1802
    %v1815 = vmul.f32 %v1776, %v1801
    %v1816 = vmul.f32 %v1777, %v1802
    %v1817 = vmul.f32 %v1778, %v1801
    %v1818 = vmul.f32 %v1779, %v1802
    %v1819 = vmul.f32 %v1780, %v1801
    %v1820 = vmul.f32 %v1781, %v1802
    %v1821 = vmul.f32 %v1782, %v1801
    %v1822 = vmul.f32 %v1783, %v1802
    %v1823 = vmul.f32 %v1784, %v1801
    %v1824 = vmul.f32 %v1785, %v1802
    %v1825 = vmul.f32 %v1786, %v1801
    %v1826 = vmul.f32 %v1787, %v1802
    %v1827 = vmul.f32 %v1788, %v1801
    %v1828 = vmul.f32 %v1789, %v1802
    %v1829 = vmul.f32 %v1790, %v1801
    %v1830 = vmul.f32 %v1791, %v1802
    %v1831 = vmul.f32 %v1792, %v1801
    %v1832 = vmul.f32 %v1793, %v1802
    %v1833 = vmul.f32 %v1794, %v1801
    %v1834 = vmul.f32 %v1795, %v1802
    %v1835 = vmul.f32 %v1796, %v1801
    %v1836 = vmul.f32 %v1797, %v1802
    %s1837 = scalar_lea.vmem %s7, 1
    %v1838 = vld [vmem:[%s1837] ss:$8 sm:$0x3]
    %v1840 = vperm.slane %v1838, 0
    %v1841 = vperm.slane %v1838, 1
    %v1844 = vadd.f32 %v1805, %v1840
    %v1845 = vadd.f32 %v1806, %v1841
    %v1846 = vadd.f32 %v1807, %v1840
    %v1847 = vadd.f32 %v1808, %v1841
    %v1848 = vadd.f32 %v1809, %v1840
    %v1849 = vadd.f32 %v1810, %v1841
    %v1850 = vadd.f32 %v1811, %v1840
    %v1851 = vadd.f32 %v1812, %v1841
    %v1852 = vadd.f32 %v1813, %v1840
    %v1853 = vadd.f32 %v1814, %v1841
    %v1854 = vadd.f32 %v1815, %v1840
    %v1855 = vadd.f32 %v1816, %v1841
    %v1856 = vadd.f32 %v1817, %v1840
    %v1857 = vadd.f32 %v1818, %v1841
    %v1858 = vadd.f32 %v1819, %v1840
    %v1859 = vadd.f32 %v1820, %v1841
    %v1860 = vadd.f32 %v1821, %v1840
    %v1861 = vadd.f32 %v1822, %v1841
    %v1862 = vadd.f32 %v1823, %v1840
    %v1863 = vadd.f32 %v1824, %v1841
    %v1864 = vadd.f32 %v1825, %v1840
    %v1865 = vadd.f32 %v1826, %v1841
    %v1866 = vadd.f32 %v1827, %v1840
    %v1867 = vadd.f32 %v1828, %v1841
    %v1868 = vadd.f32 %v1829, %v1840
    %v1869 = vadd.f32 %v1830, %v1841
    %v1870 = vadd.f32 %v1831, %v1840
    %v1871 = vadd.f32 %v1832, %v1841
    %v1872 = vadd.f32 %v1833, %v1840
    %v1873 = vadd.f32 %v1834, %v1841
    %v1874 = vadd.f32 %v1835, %v1840
    %v1875 = vadd.f32 %v1836, %v1841
    %v1876 = vmax.f32 %v1844, 0.0
    %v1877 = vmax.f32 %v1845, 0.0
    %v1878 = vmax.f32 %v1846, 0.0
    %v1879 = vmax.f32 %v1847, 0.0
    %v1880 = vmax.f32 %v1848, 0.0
    %v1881 = vmax.f32 %v1849, 0.0
    %v1882 = vmax.f32 %v1850, 0.0
    %v1883 = vmax.f32 %v1851, 0.0
    %v1884 = vmax.f32 %v1852, 0.0
    %v1885 = vmax.f32 %v1853, 0.0
    %v1886 = vmax.f32 %v1854, 0.0
    %v1887 = vmax.f32 %v1855, 0.0
    %v1888 = vmax.f32 %v1856, 0.0
    %v1889 = vmax.f32 %v1857, 0.0
    %v1890 = vmax.f32 %v1858, 0.0
    %v1891 = vmax.f32 %v1859, 0.0
    %v1892 = vmax.f32 %v1860, 0.0
    %v1893 = vmax.f32 %v1861, 0.0
    %v1894 = vmax.f32 %v1862, 0.0
    %v1895 = vmax.f32 %v1863, 0.0
    %v1896 = vmax.f32 %v1864, 0.0
    %v1897 = vmax.f32 %v1865, 0.0
    %v1898 = vmax.f32 %v1866, 0.0
    %v1899 = vmax.f32 %v1867, 0.0
    %v1900 = vmax.f32 %v1868, 0.0
    %v1901 = vmax.f32 %v1869, 0.0
    %v1902 = vmax.f32 %v1870, 0.0
    %v1903 = vmax.f32 %v1871, 0.0
    %v1904 = vmax.f32 %v1872, 0.0
    %v1905 = vmax.f32 %v1873, 0.0
    %v1906 = vmax.f32 %v1874, 0.0
    %v1907 = vmax.f32 %v1875, 0.0
    %v1908 = vpack.c.bf16 %v1878, %v1876
    %v1909 = vpack.c.bf16 %v1879, %v1877
    %v1910 = vpack.c.bf16 %v1882, %v1880
    %v1911 = vpack.c.bf16 %v1883, %v1881
    %v1912 = vpack.c.bf16 %v1886, %v1884
    %v1913 = vpack.c.bf16 %v1887, %v1885
    %v1914 = vpack.c.bf16 %v1890, %v1888
    %v1915 = vpack.c.bf16 %v1891, %v1889
    %v1916 = vpack.c.bf16 %v1894, %v1892
    %v1917 = vpack.c.bf16 %v1895, %v1893
    %v1918 = vpack.c.bf16 %v1898, %v1896
    %v1919 = vpack.c.bf16 %v1899, %v1897
    %v1920 = vpack.c.bf16 %v1902, %v1900
    %v1921 = vpack.c.bf16 %v1903, %v1901
    %v1922 = vpack.c.bf16 %v1906, %v1904
    %v1923 = vpack.c.bf16 %v1907, %v1905
    %s1924 = scalar_lea.vmem [#allocation4], 256
    %v1925 = vld [vmem:[%s1924] sm:$0xff]
    %v1926 = vld [vmem:[%s1924 + $0x8] sm:$0xff]
    %v1927 = vld [vmem:[%s1924 + $0x10] sm:$0xff]
    %v1928 = vld [vmem:[%s1924 + $0x18] sm:$0xff]
    %v1929 = vld [vmem:[%s1924 + $0x20] sm:$0xff]
    %v1930 = vld [vmem:[%s1924 + $0x28] sm:$0xff]
    %v1931 = vld [vmem:[%s1924 + $0x30] sm:$0xff]
    %v1932 = vld [vmem:[%s1924 + $0x38] sm:$0xff]
    %v1933 = vld [vmem:[%s1924 + $0x40] sm:$0xff]
    %v1934 = vld [vmem:[%s1924 + $0x48] sm:$0xff]
    %v1935 = vld [vmem:[%s1924 + $0x50] sm:$0xff]
    %v1936 = vld [vmem:[%s1924 + $0x58] sm:$0xff]
    %v1937 = vld [vmem:[%s1924 + $0x60] sm:$0xff]
    %v1938 = vld [vmem:[%s1924 + $0x68] sm:$0xff]
    %v1939 = vld [vmem:[%s1924 + $0x70] sm:$0xff]
    %v1940 = vld [vmem:[%s1924 + $0x78] sm:$0xff]
    %v1941 = vld [vmem:[%s1924 + $0x80] sm:$0xff]
    %v1942 = vld [vmem:[%s1924 + $0x88] sm:$0xff]
    %v1943 = vld [vmem:[%s1924 + $0x90] sm:$0xff]
    %v1944 = vld [vmem:[%s1924 + $0x98] sm:$0xff]
    %v1945 = vld [vmem:[%s1924 + $0xa0] sm:$0xff]
    %v1946 = vld [vmem:[%s1924 + $0xa8] sm:$0xff]
    %v1947 = vld [vmem:[%s1924 + $0xb0] sm:$0xff]
    %v1948 = vld [vmem:[%s1924 + $0xb8] sm:$0xff]
    %v1949 = vld [vmem:[%s1924 + $0xc0] sm:$0xff]
    %v1950 = vld [vmem:[%s1924 + $0xc8] sm:$0xff]
    %v1951 = vld [vmem:[%s1924 + $0xd0] sm:$0xff]
    %v1952 = vld [vmem:[%s1924 + $0xd8] sm:$0xff]
    %v1953 = vld [vmem:[%s1924 + $0xe0] sm:$0xff]
    %v1954 = vld [vmem:[%s1924 + $0xe8] sm:$0xff]
    %v1955 = vld [vmem:[%s1924 + $0xf0] sm:$0xff]
    %v1956 = vld [vmem:[%s1924 + $0xf8] sm:$0xff]
    %s1957 = scalar_lea.vmem %s5, 2
    %v1958 = vld [vmem:[%s1957] ss:$8 sm:$0x3]
    %v1960 = vperm.slane %v1958, 0
    %v1961 = vperm.slane %v1958, 1
    %v1996 = vunpack.c.l.b16 %v1925
    %v1997 = vunpack.c.h.b16 %v1925
    %v1998 = vunpack.c.l.b16 %v1926
    %v1999 = vunpack.c.h.b16 %v1926
    %v2000 = vunpack.c.l.b16 %v1927
    %v2001 = vunpack.c.h.b16 %v1927
    %v2002 = vunpack.c.l.b16 %v1928
    %v2003 = vunpack.c.h.b16 %v1928
    %v2004 = vunpack.c.l.b16 %v1929
    %v2005 = vunpack.c.h.b16 %v1929
    %v2006 = vunpack.c.l.b16 %v1930
    %v2007 = vunpack.c.h.b16 %v1930
    %v2008 = vunpack.c.l.b16 %v1931
    %v2009 = vunpack.c.h.b16 %v1931
    %v2010 = vunpack.c.l.b16 %v1932
    %v2011 = vunpack.c.h.b16 %v1932
    %v2012 = vunpack.c.l.b16 %v1933
    %v2013 = vunpack.c.h.b16 %v1933
    %v2014 = vunpack.c.l.b16 %v1934
    %v2015 = vunpack.c.h.b16 %v1934
    %v2016 = vunpack.c.l.b16 %v1935
    %v2017 = vunpack.c.h.b16 %v1935
    %v2018 = vunpack.c.l.b16 %v1936
    %v2019 = vunpack.c.h.b16 %v1936
    %v2020 = vunpack.c.l.b16 %v1937
    %v2021 = vunpack.c.h.b16 %v1937
    %v2022 = vunpack.c.l.b16 %v1938
    %v2023 = vunpack.c.h.b16 %v1938
    %v2024 = vunpack.c.l.b16 %v1939
    %v2025 = vunpack.c.h.b16 %v1939
    %v2026 = vunpack.c.l.b16 %v1940
    %v2027 = vunpack.c.h.b16 %v1940
    %v2028 = vunpack.c.l.b16 %v1941
    %v2029 = vunpack.c.h.b16 %v1941
    %v2030 = vunpack.c.l.b16 %v1942
    %v2031 = vunpack.c.h.b16 %v1942
    %v2032 = vunpack.c.l.b16 %v1943
    %v2033 = vunpack.c.h.b16 %v1943
    %v2034 = vunpack.c.l.b16 %v1944
    %v2035 = vunpack.c.h.b16 %v1944
    %v2036 = vunpack.c.l.b16 %v1945
    %v2037 = vunpack.c.h.b16 %v1945
    %v2038 = vunpack.c.l.b16 %v1946
    %v2039 = vunpack.c.h.b16 %v1946
    %v2040 = vunpack.c.l.b16 %v1947
    %v2041 = vunpack.c.h.b16 %v1947
    %v2042 = vunpack.c.l.b16 %v1948
    %v2043 = vunpack.c.h.b16 %v1948
    %v2044 = vunpack.c.l.b16 %v1949
    %v2045 = vunpack.c.h.b16 %v1949
    %v2046 = vunpack.c.l.b16 %v1950
    %v2047 = vunpack.c.h.b16 %v1950
    %v2048 = vunpack.c.l.b16 %v1951
    %v2049 = vunpack.c.h.b16 %v1951
    %v2050 = vunpack.c.l.b16 %v1952
    %v2051 = vunpack.c.h.b16 %v1952
    %v2052 = vunpack.c.l.b16 %v1953
    %v2053 = vunpack.c.h.b16 %v1953
    %v2054 = vunpack.c.l.b16 %v1954
    %v2055 = vunpack.c.h.b16 %v1954
    %v2056 = vunpack.c.l.b16 %v1955
    %v2057 = vunpack.c.h.b16 %v1955
    %v2058 = vunpack.c.l.b16 %v1956
    %v2059 = vunpack.c.h.b16 %v1956
    %v2060 = vpack.c.b16 %v1998, %v1996
    %v2061 = vpack.c.b16 %v1999, %v1997
    %v2062 = vpack.c.b16 %v2002, %v2000
    %v2063 = vpack.c.b16 %v2003, %v2001
    %v2064 = vpack.c.b16 %v2006, %v2004
    %v2065 = vpack.c.b16 %v2007, %v2005
    %v2066 = vpack.c.b16 %v2010, %v2008
    %v2067 = vpack.c.b16 %v2011, %v2009
    %v2068 = vpack.c.b16 %v2014, %v2012
    %v2069 = vpack.c.b16 %v2015, %v2013
    %v2070 = vpack.c.b16 %v2018, %v2016
    %v2071 = vpack.c.b16 %v2019, %v2017
    %v2072 = vpack.c.b16 %v2022, %v2020
    %v2073 = vpack.c.b16 %v2023, %v2021
    %v2074 = vpack.c.b16 %v2026, %v2024
    %v2075 = vpack.c.b16 %v2027, %v2025
    %v2076 = vpack.c.b16 %v2030, %v2028
    %v2077 = vpack.c.b16 %v2031, %v2029
    %v2078 = vpack.c.b16 %v2034, %v2032
    %v2079 = vpack.c.b16 %v2035, %v2033
    %v2080 = vpack.c.b16 %v2038, %v2036
    %v2081 = vpack.c.b16 %v2039, %v2037
    %v2082 = vpack.c.b16 %v2042, %v2040
    %v2083 = vpack.c.b16 %v2043, %v2041
    %v2084 = vpack.c.b16 %v2046, %v2044
    %v2085 = vpack.c.b16 %v2047, %v2045
    %v2086 = vpack.c.b16 %v2050, %v2048
    %v2087 = vpack.c.b16 %v2051, %v2049
    %v2088 = vpack.c.b16 %v2054, %v2052
    %v2089 = vpack.c.b16 %v2055, %v2053
    %v2090 = vpack.c.b16 %v2058, %v2056
    %v2091 = vpack.c.b16 %v2059, %v2057
    %2124 = vmatpush.bf16.msra.mxu0 %v2074
    %2125 = vmatpush.bf16.msra.mxu0 %v2072
    %2126 = vmatpush.bf16.msra.mxu0 %v2070
    %2127 = vmatpush.bf16.msra.mxu0 %v2068
    %2128 = vmatpush.bf16.msra.mxu0 %v2066
    %2129 = vmatpush.bf16.msra.mxu0 %v2064
    %2130 = vmatpush.bf16.msra.mxu0 %v2062
    %2131 = vmatpush.bf16.msra.mxu0 %v2060
    %2132 = vmatmul.bf16.gmra.mxu0 %v1908
    %v2133 = vpop.f32.mrf.mxu0
    %v2134 = vadd.f32 %v1960, %v2133
    %v2135 = vpop.f32.mrf.mxu0
    %v2136 = vadd.f32 %v1960, %v2135
    %2137 = vmatmul.bf16.gmra.mxu0 %v1910
    %v2138 = vpop.f32.mrf.mxu0
    %v2139 = vadd.f32 %v1960, %v2138
    %v2140 = vpop.f32.mrf.mxu0
    %v2141 = vadd.f32 %v1960, %v2140
    %2142 = vmatmul.bf16.gmra.mxu0 %v1912
    %v2143 = vpop.f32.mrf.mxu0
    %v2144 = vadd.f32 %v1960, %v2143
    %v2145 = vpop.f32.mrf.mxu0
    %v2146 = vadd.f32 %v1960, %v2145
    %2147 = vmatmul.bf16.gmra.mxu0 %v1914
    %v2148 = vpop.f32.mrf.mxu0
    %v2149 = vadd.f32 %v1960, %v2148
    %v2150 = vpop.f32.mrf.mxu0
    %v2151 = vadd.f32 %v1960, %v2150
    %2152 = vmatmul.bf16.gmra.mxu0 %v1916
    %v2153 = vpop.f32.mrf.mxu0
    %v2154 = vadd.f32 %v1960, %v2153
    %v2155 = vpop.f32.mrf.mxu0
    %v2156 = vadd.f32 %v1960, %v2155
    %2157 = vmatmul.bf16.gmra.mxu0 %v1918
    %v2158 = vpop.f32.mrf.mxu0
    %v2159 = vadd.f32 %v1960, %v2158
    %v2160 = vpop.f32.mrf.mxu0
    %v2161 = vadd.f32 %v1960, %v2160
    %2162 = vmatmul.bf16.gmra.mxu0 %v1920
    %v2163 = vpop.f32.mrf.mxu0
    %v2164 = vadd.f32 %v1960, %v2163
    %v2165 = vpop.f32.mrf.mxu0
    %v2166 = vadd.f32 %v1960, %v2165
    %2167 = vmatmul.bf16.gmra.mxu0 %v1922
    %v2168 = vpop.f32.mrf.mxu0
    %v2169 = vadd.f32 %v1960, %v2168
    %v2170 = vpop.f32.mrf.mxu0
    %v2171 = vadd.f32 %v1960, %v2170
    %2172 = vdwg.mxu0
    %2173 = vmatpush.bf16.msra.mxu0 %v2090
    %2174 = vmatpush.bf16.msra.mxu0 %v2088
    %2175 = vmatpush.bf16.msra.mxu0 %v2086
    %2176 = vmatpush.bf16.msra.mxu0 %v2084
    %2177 = vmatpush.bf16.msra.mxu0 %v2082
    %2178 = vmatpush.bf16.msra.mxu0 %v2080
    %2179 = vmatpush.bf16.msra.mxu0 %v2078
    %2180 = vmatpush.bf16.msra.mxu0 %v2076
    %2181 = vmatmul.bf16.gmra.mxu0 %v1909
    %v2182 = vpop.f32.mrf.mxu0
    %v2183 = vadd.f32 %v2134, %v2182
    %v2184 = vpop.f32.mrf.mxu0
    %v2185 = vadd.f32 %v2136, %v2184
    %2186 = vmatmul.bf16.gmra.mxu0 %v1911
    %v2187 = vpop.f32.mrf.mxu0
    %v2188 = vadd.f32 %v2139, %v2187
    %v2189 = vpop.f32.mrf.mxu0
    %v2190 = vadd.f32 %v2141, %v2189
    %2191 = vmatmul.bf16.gmra.mxu0 %v1913
    %v2192 = vpop.f32.mrf.mxu0
    %v2193 = vadd.f32 %v2144, %v2192
    %v2194 = vpop.f32.mrf.mxu0
    %v2195 = vadd.f32 %v2146, %v2194
    %2196 = vmatmul.bf16.gmra.mxu0 %v1915
    %v2197 = vpop.f32.mrf.mxu0
    %v2198 = vadd.f32 %v2149, %v2197
    %v2199 = vpop.f32.mrf.mxu0
    %v2200 = vadd.f32 %v2151, %v2199
    %2201 = vmatmul.bf16.gmra.mxu0 %v1917
    %v2202 = vpop.f32.mrf.mxu0
    %v2203 = vadd.f32 %v2154, %v2202
    %v2204 = vpop.f32.mrf.mxu0
    %v2205 = vadd.f32 %v2156, %v2204
    %2206 = vmatmul.bf16.gmra.mxu0 %v1919
    %v2207 = vpop.f32.mrf.mxu0
    %v2208 = vadd.f32 %v2159, %v2207
    %v2209 = vpop.f32.mrf.mxu0
    %v2210 = vadd.f32 %v2161, %v2209
    %2211 = vmatmul.bf16.gmra.mxu0 %v1921
    %v2212 = vpop.f32.mrf.mxu0
    %v2213 = vadd.f32 %v2164, %v2212
    %v2214 = vpop.f32.mrf.mxu0
    %v2215 = vadd.f32 %v2166, %v2214
    %2216 = vmatmul.bf16.gmra.mxu0 %v1923
    %v2217 = vpop.f32.mrf.mxu0
    %v2218 = vadd.f32 %v2169, %v2217
    %v2219 = vpop.f32.mrf.mxu0
    %v2220 = vadd.f32 %v2171, %v2219
    %2221 = vdwg.mxu0
    %2222 = vmatpush.bf16.msra.mxu0 %v2075
    %2223 = vmatpush.bf16.msra.mxu0 %v2073
    %2224 = vmatpush.bf16.msra.mxu0 %v2071
    %2225 = vmatpush.bf16.msra.mxu0 %v2069
    %2226 = vmatpush.bf16.msra.mxu0 %v2067
    %2227 = vmatpush.bf16.msra.mxu0 %v2065
    %2228 = vmatpush.bf16.msra.mxu0 %v2063
    %2229 = vmatpush.bf16.msra.mxu0 %v2061
    %2230 = vmatmul.bf16.gmra.mxu0 %v1908
    %v2231 = vpop.f32.mrf.mxu0
    %v2232 = vadd.f32 %v1961, %v2231
    %v2233 = vpop.f32.mrf.mxu0
    %v2234 = vadd.f32 %v1961, %v2233
    %2235 = vmatmul.bf16.gmra.mxu0 %v1910
    %v2236 = vpop.f32.mrf.mxu0
    %v2237 = vadd.f32 %v1961, %v2236
    %v2238 = vpop.f32.mrf.mxu0
    %v2239 = vadd.f32 %v1961, %v2238
    %2240 = vmatmul.bf16.gmra.mxu0 %v1912
    %v2241 = vpop.f32.mrf.mxu0
    %v2242 = vadd.f32 %v1961, %v2241
    %v2243 = vpop.f32.mrf.mxu0
    %v2244 = vadd.f32 %v1961, %v2243
    %2245 = vmatmul.bf16.gmra.mxu0 %v1914
    %v2246 = vpop.f32.mrf.mxu0
    %v2247 = vadd.f32 %v1961, %v2246
    %v2248 = vpop.f32.mrf.mxu0
    %v2249 = vadd.f32 %v1961, %v2248
    %2250 = vmatmul.bf16.gmra.mxu0 %v1916
    %v2251 = vpop.f32.mrf.mxu0
    %v2252 = vadd.f32 %v1961, %v2251
    %v2253 = vpop.f32.mrf.mxu0
    %v2254 = vadd.f32 %v1961, %v2253
    %2255 = vmatmul.bf16.gmra.mxu0 %v1918
    %v2256 = vpop.f32.mrf.mxu0
    %v2257 = vadd.f32 %v1961, %v2256
    %v2258 = vpop.f32.mrf.mxu0
    %v2259 = vadd.f32 %v1961, %v2258
    %2260 = vmatmul.bf16.gmra.mxu0 %v1920
    %v2261 = vpop.f32.mrf.mxu0
    %v2262 = vadd.f32 %v1961, %v2261
    %v2263 = vpop.f32.mrf.mxu0
    %v2264 = vadd.f32 %v1961, %v2263
    %2265 = vmatmul.bf16.gmra.mxu0 %v1922
    %v2266 = vpop.f32.mrf.mxu0
    %v2267 = vadd.f32 %v1961, %v2266
    %v2268 = vpop.f32.mrf.mxu0
    %v2269 = vadd.f32 %v1961, %v2268
    %2270 = vdwg.mxu0
    %2271 = vmatpush.bf16.msra.mxu0 %v2091
    %2272 = vmatpush.bf16.msra.mxu0 %v2089
    %2273 = vmatpush.bf16.msra.mxu0 %v2087
    %2274 = vmatpush.bf16.msra.mxu0 %v2085
    %2275 = vmatpush.bf16.msra.mxu0 %v2083
    %2276 = vmatpush.bf16.msra.mxu0 %v2081
    %2277 = vmatpush.bf16.msra.mxu0 %v2079
    %2278 = vmatpush.bf16.msra.mxu0 %v2077
    %2279 = vmatmul.bf16.gmra.mxu0 %v1909
    %v2280 = vpop.f32.mrf.mxu0
    %v2281 = vadd.f32 %v2232, %v2280
    %v2282 = vpop.f32.mrf.mxu0
    %v2283 = vadd.f32 %v2234, %v2282
    %2284 = vmatmul.bf16.gmra.mxu0 %v1911
    %v2285 = vpop.f32.mrf.mxu0
    %v2286 = vadd.f32 %v2237, %v2285
    %v2287 = vpop.f32.mrf.mxu0
    %v2288 = vadd.f32 %v2239, %v2287
    %2289 = vmatmul.bf16.gmra.mxu0 %v1913
    %v2290 = vpop.f32.mrf.mxu0
    %v2291 = vadd.f32 %v2242, %v2290
    %v2292 = vpop.f32.mrf.mxu0
    %v2293 = vadd.f32 %v2244, %v2292
    %2294 = vmatmul.bf16.gmra.mxu0 %v1915
    %v2295 = vpop.f32.mrf.mxu0
    %v2296 = vadd.f32 %v2247, %v2295
    %v2297 = vpop.f32.mrf.mxu0
    %v2298 = vadd.f32 %v2249, %v2297
    %2299 = vmatmul.bf16.gmra.mxu0 %v1917
    %v2300 = vpop.f32.mrf.mxu0
    %v2301 = vadd.f32 %v2252, %v2300
    %v2302 = vpop.f32.mrf.mxu0
    %v2303 = vadd.f32 %v2254, %v2302
    %2304 = vmatmul.bf16.gmra.mxu0 %v1919
    %v2305 = vpop.f32.mrf.mxu0
    %v2306 = vadd.f32 %v2257, %v2305
    %v2307 = vpop.f32.mrf.mxu0
    %v2308 = vadd.f32 %v2259, %v2307
    %2309 = vmatmul.bf16.gmra.mxu0 %v1921
    %v2310 = vpop.f32.mrf.mxu0
    %v2311 = vadd.f32 %v2262, %v2310
    %v2312 = vpop.f32.mrf.mxu0
    %v2313 = vadd.f32 %v2264, %v2312
    %2314 = vmatmul.bf16.gmra.mxu0 %v1923
    %v2315 = vpop.f32.mrf.mxu0
    %v2316 = vadd.f32 %v2267, %v2315
    %v2317 = vpop.f32.mrf.mxu0
    %v2318 = vadd.f32 %v2269, %v2317
    %2319 = vdwg.mxu0
    %v2320 = vadd.f32 %v2183, %v2281
    %2321 = vadd.xlane.f32.xlu0 %v2320
    %v2322 = vpop.xlane.xlu0 %2321
    %v2323 = vadd.f32 %v2185, %v2283
    %2324 = vadd.xlane.f32.xlu0 %v2323
    %v2325 = vpop.xlane.xlu0 %2324
    %v2326 = vadd.f32 %v2188, %v2286
    %2327 = vadd.xlane.f32.xlu0 %v2326
    %v2328 = vpop.xlane.xlu0 %2327
    %v2329 = vadd.f32 %v2190, %v2288
    %2330 = vadd.xlane.f32.xlu0 %v2329
    %v2331 = vpop.xlane.xlu0 %2330
    %v2332 = vadd.f32 %v2193, %v2291
    %2333 = vadd.xlane.f32.xlu0 %v2332
    %v2334 = vpop.xlane.xlu0 %2333
    %v2335 = vadd.f32 %v2195, %v2293
    %2336 = vadd.xlane.f32.xlu0 %v2335
    %v2337 = vpop.xlane.xlu0 %2336
    %v2338 = vadd.f32 %v2198, %v2296
    %2339 = vadd.xlane.f32.xlu0 %v2338
    %v2340 = vpop.xlane.xlu0 %2339
    %v2341 = vadd.f32 %v2200, %v2298
    %2342 = vadd.xlane.f32.xlu0 %v2341
    %v2343 = vpop.xlane.xlu0 %2342
    %v2344 = vadd.f32 %v2203, %v2301
    %2345 = vadd.xlane.f32.xlu0 %v2344
    %v2346 = vpop.xlane.xlu0 %2345
    %v2347 = vadd.f32 %v2205, %v2303
    %2348 = vadd.xlane.f32.xlu0 %v2347
    %v2349 = vpop.xlane.xlu0 %2348
    %v2350 = vadd.f32 %v2208, %v2306
    %2351 = vadd.xlane.f32.xlu0 %v2350
    %v2352 = vpop.xlane.xlu0 %2351
    %v2353 = vadd.f32 %v2210, %v2308
    %2354 = vadd.xlane.f32.xlu0 %v2353
    %v2355 = vpop.xlane.xlu0 %2354
    %v2356 = vadd.f32 %v2213, %v2311
    %2357 = vadd.xlane.f32.xlu0 %v2356
    %v2358 = vpop.xlane.xlu0 %2357
    %v2359 = vadd.f32 %v2215, %v2313
    %2360 = vadd.xlane.f32.xlu0 %v2359
    %v2361 = vpop.xlane.xlu0 %2360
    %v2362 = vadd.f32 %v2218, %v2316
    %2363 = vadd.xlane.f32.xlu0 %v2362
    %v2364 = vpop.xlane.xlu0 %2363
    %v2365 = vadd.f32 %v2220, %v2318
    %2366 = vadd.xlane.f32.xlu0 %v2365
    %v2367 = vpop.xlane.xlu0 %2366
    %v2368 = vmul.f32 %v2183, %v2183
    %v2369 = vmul.f32 %v2281, %v2281
    %v2370 = vmul.f32 %v2185, %v2185
    %v2371 = vmul.f32 %v2283, %v2283
    %v2372 = vmul.f32 %v2188, %v2188
    %v2373 = vmul.f32 %v2286, %v2286
    %v2374 = vmul.f32 %v2190, %v2190
    %v2375 = vmul.f32 %v2288, %v2288
    %v2376 = vmul.f32 %v2193, %v2193
    %v2377 = vmul.f32 %v2291, %v2291
    %v2378 = vmul.f32 %v2195, %v2195
    %v2379 = vmul.f32 %v2293, %v2293
    %v2380 = vmul.f32 %v2198, %v2198
    %v2381 = vmul.f32 %v2296, %v2296
    %v2382 = vmul.f32 %v2200, %v2200
    %v2383 = vmul.f32 %v2298, %v2298
    %v2384 = vmul.f32 %v2203, %v2203
    %v2385 = vmul.f32 %v2301, %v2301
    %v2386 = vmul.f32 %v2205, %v2205
    %v2387 = vmul.f32 %v2303, %v2303
    %v2388 = vmul.f32 %v2208, %v2208
    %v2389 = vmul.f32 %v2306, %v2306
    %v2390 = vmul.f32 %v2210, %v2210
    %v2391 = vmul.f32 %v2308, %v2308
    %v2392 = vmul.f32 %v2213, %v2213
    %v2393 = vmul.f32 %v2311, %v2311
    %v2394 = vmul.f32 %v2215, %v2215
    %v2395 = vmul.f32 %v2313, %v2313
    %v2396 = vmul.f32 %v2218, %v2218
    %v2397 = vmul.f32 %v2316, %v2316
    %v2398 = vmul.f32 %v2220, %v2220
    %v2399 = vmul.f32 %v2318, %v2318
    %v2400 = vadd.f32 %v2368, %v2369
    %2401 = vadd.xlane.f32.xlu0 %v2400
    %v2402 = vpop.xlane.xlu0 %2401
    %v2403 = vadd.f32 %v2370, %v2371
    %2404 = vadd.xlane.f32.xlu0 %v2403
    %v2405 = vpop.xlane.xlu0 %2404
    %v2406 = vadd.f32 %v2372, %v2373
    %2407 = vadd.xlane.f32.xlu0 %v2406
    %v2408 = vpop.xlane.xlu0 %2407
    %v2409 = vadd.f32 %v2374, %v2375
    %2410 = vadd.xlane.f32.xlu0 %v2409
    %v2411 = vpop.xlane.xlu0 %2410
    %v2412 = vadd.f32 %v2376, %v2377
    %2413 = vadd.xlane.f32.xlu0 %v2412
    %v2414 = vpop.xlane.xlu0 %2413
    %v2415 = vadd.f32 %v2378, %v2379
    %2416 = vadd.xlane.f32.xlu0 %v2415
    %v2417 = vpop.xlane.xlu0 %2416
    %v2418 = vadd.f32 %v2380, %v2381
    %2419 = vadd.xlane.f32.xlu0 %v2418
    %v2420 = vpop.xlane.xlu0 %2419
    %v2421 = vadd.f32 %v2382, %v2383
    %2422 = vadd.xlane.f32.xlu0 %v2421
    %v2423 = vpop.xlane.xlu0 %2422
    %v2424 = vadd.f32 %v2384, %v2385
    %2425 = vadd.xlane.f32.xlu0 %v2424
    %v2426 = vpop.xlane.xlu0 %2425
    %v2427 = vadd.f32 %v2386, %v2387
    %2428 = vadd.xlane.f32.xlu0 %v2427
    %v2429 = vpop.xlane.xlu0 %2428
    %v2430 = vadd.f32 %v2388, %v2389
    %2431 = vadd.xlane.f32.xlu0 %v2430
    %v2432 = vpop.xlane.xlu0 %2431
    %v2433 = vadd.f32 %v2390, %v2391
    %2434 = vadd.xlane.f32.xlu0 %v2433
    %v2435 = vpop.xlane.xlu0 %2434
    %v2436 = vadd.f32 %v2392, %v2393
    %2437 = vadd.xlane.f32.xlu0 %v2436
    %v2438 = vpop.xlane.xlu0 %2437
    %v2439 = vadd.f32 %v2394, %v2395
    %2440 = vadd.xlane.f32.xlu0 %v2439
    %v2441 = vpop.xlane.xlu0 %2440
    %v2442 = vadd.f32 %v2396, %v2397
    %2443 = vadd.xlane.f32.xlu0 %v2442
    %v2444 = vpop.xlane.xlu0 %2443
    %v2445 = vadd.f32 %v2398, %v2399
    %2446 = vadd.xlane.f32.xlu0 %v2445
    %v2447 = vpop.xlane.xlu0 %2446
    %v2448 = vmul.f32 %v2322, 0.00390625
    %v2449 = vmul.f32 %v2325, 0.00390625
    %v2450 = vmul.f32 %v2328, 0.00390625
    %v2451 = vmul.f32 %v2331, 0.00390625
    %v2452 = vmul.f32 %v2334, 0.00390625
    %v2453 = vmul.f32 %v2337, 0.00390625
    %v2454 = vmul.f32 %v2340, 0.00390625
    %v2455 = vmul.f32 %v2343, 0.00390625
    %v2456 = vmul.f32 %v2346, 0.00390625
    %v2457 = vmul.f32 %v2349, 0.00390625
    %v2458 = vmul.f32 %v2352, 0.00390625
    %v2459 = vmul.f32 %v2355, 0.00390625
    %v2460 = vmul.f32 %v2358, 0.00390625
    %v2461 = vmul.f32 %v2361, 0.00390625
    %v2462 = vmul.f32 %v2364, 0.00390625
    %v2463 = vmul.f32 %v2367, 0.00390625
    %v2464 = vmul.f32 %v2402, 0.00390625
    %v2465 = vmul.f32 %v2405, 0.00390625
    %v2466 = vmul.f32 %v2408, 0.00390625
    %v2467 = vmul.f32 %v2411, 0.00390625
    %v2468 = vmul.f32 %v2414, 0.00390625
    %v2469 = vmul.f32 %v2417, 0.00390625
    %v2470 = vmul.f32 %v2420, 0.00390625
    %v2471 = vmul.f32 %v2423, 0.00390625
    %v2472 = vmul.f32 %v2426, 0.00390625
    %v2473 = vmul.f32 %v2429, 0.00390625
    %v2474 = vmul.f32 %v2432, 0.00390625
    %v2475 = vmul.f32 %v2435, 0.00390625
    %v2476 = vmul.f32 %v2438, 0.00390625
    %v2477 = vmul.f32 %v2441, 0.00390625
    %v2478 = vmul.f32 %v2444, 0.00390625
    %v2479 = vmul.f32 %v2447, 0.00390625
    %v2480 = vmul.f32 %v2448, %v2448
    %v2481 = vmul.f32 %v2449, %v2449
    %v2482 = vmul.f32 %v2450, %v2450
    %v2483 = vmul.f32 %v2451, %v2451
    %v2484 = vmul.f32 %v2452, %v2452
    %v2485 = vmul.f32 %v2453, %v2453
    %v2486 = vmul.f32 %v2454, %v2454
    %v2487 = vmul.f32 %v2455, %v2455
    %v2488 = vmul.f32 %v2456, %v2456
    %v2489 = vmul.f32 %v2457, %v2457
    %v2490 = vmul.f32 %v2458, %v2458
    %v2491 = vmul.f32 %v2459, %v2459
    %v2492 = vmul.f32 %v2460, %v2460
    %v2493 = vmul.f32 %v2461, %v2461
    %v2494 = vmul.f32 %v2462, %v2462
    %v2495 = vmul.f32 %v2463, %v2463
    %v2496 = vsub.f32 %v2464, %v2480
    %v2497 = vsub.f32 %v2465, %v2481
    %v2498 = vsub.f32 %v2466, %v2482
    %v2499 = vsub.f32 %v2467, %v2483
    %v2500 = vsub.f32 %v2468, %v2484
    %v2501 = vsub.f32 %v2469, %v2485
    %v2502 = vsub.f32 %v2470, %v2486
    %v2503 = vsub.f32 %v2471, %v2487
    %v2504 = vsub.f32 %v2472, %v2488
    %v2505 = vsub.f32 %v2473, %v2489
    %v2506 = vsub.f32 %v2474, %v2490
    %v2507 = vsub.f32 %v2475, %v2491
    %v2508 = vsub.f32 %v2476, %v2492
    %v2509 = vsub.f32 %v2477, %v2493
    %v2510 = vsub.f32 %v2478, %v2494
    %v2511 = vsub.f32 %v2479, %v2495
    %v2512 = vmax.f32 %v2496, 0.0
    %v2513 = vmax.f32 %v2497, 0.0
    %v2514 = vmax.f32 %v2498, 0.0
    %v2515 = vmax.f32 %v2499, 0.0
    %v2516 = vmax.f32 %v2500, 0.0
    %v2517 = vmax.f32 %v2501, 0.0
    %v2518 = vmax.f32 %v2502, 0.0
    %v2519 = vmax.f32 %v2503, 0.0
    %v2520 = vmax.f32 %v2504, 0.0
    %v2521 = vmax.f32 %v2505, 0.0
    %v2522 = vmax.f32 %v2506, 0.0
    %v2523 = vmax.f32 %v2507, 0.0
    %v2524 = vmax.f32 %v2508, 0.0
    %v2525 = vmax.f32 %v2509, 0.0
    %v2526 = vmax.f32 %v2510, 0.0
    %v2527 = vmax.f32 %v2511, 0.0
    %v2528 = vadd.f32 %v2512, 1e-05
    %v2529 = vadd.f32 %v2513, 1e-05
    %v2530 = vadd.f32 %v2514, 1e-05
    %v2531 = vadd.f32 %v2515, 1e-05
    %v2532 = vadd.f32 %v2516, 1e-05
    %v2533 = vadd.f32 %v2517, 1e-05
    %v2534 = vadd.f32 %v2518, 1e-05
    %v2535 = vadd.f32 %v2519, 1e-05
    %v2536 = vadd.f32 %v2520, 1e-05
    %v2537 = vadd.f32 %v2521, 1e-05
    %v2538 = vadd.f32 %v2522, 1e-05
    %v2539 = vadd.f32 %v2523, 1e-05
    %v2540 = vadd.f32 %v2524, 1e-05
    %v2541 = vadd.f32 %v2525, 1e-05
    %v2542 = vadd.f32 %v2526, 1e-05
    %v2543 = vadd.f32 %v2527, 1e-05
    %v2544 = vrsqrt.pop %v2528
    %v2545 = vmul.f32 %v2544, %v2528
    %v2546 = vmul.f32 %v2545, %v2544
    %v2547 = vmul.f32 0.5, %v2546
    %v2548 = vsub.f32 1.5, %v2547
    %v2549 = vmul.f32 %v2544, %v2548
    %vm2550 = vweird.f32 %v2528
    %vm2551 = vweird.f32 %v2544
    %vm2552 = vmor %vm2550, %vm2551
    %v2553 = vsel %vm2552, %v2544, %v2549
    %v2554 = vrsqrt.pop %v2529
    %v2555 = vmul.f32 %v2554, %v2529
    %v2556 = vmul.f32 %v2555, %v2554
    %v2557 = vmul.f32 0.5, %v2556
    %v2558 = vsub.f32 1.5, %v2557
    %v2559 = vmul.f32 %v2554, %v2558
    %vm2560 = vweird.f32 %v2529
    %vm2561 = vweird.f32 %v2554
    %vm2562 = vmor %vm2560, %vm2561
    %v2563 = vsel %vm2562, %v2554, %v2559
    %v2564 = vrsqrt.pop %v2530
    %v2565 = vmul.f32 %v2564, %v2530
    %v2566 = vmul.f32 %v2565, %v2564
    %v2567 = vmul.f32 0.5, %v2566
    %v2568 = vsub.f32 1.5, %v2567
    %v2569 = vmul.f32 %v2564, %v2568
    %vm2570 = vweird.f32 %v2530
    %vm2571 = vweird.f32 %v2564
    %vm2572 = vmor %vm2570, %vm2571
    %v2573 = vsel %vm2572, %v2564, %v2569
    %v2574 = vrsqrt.pop %v2531
    %v2575 = vmul.f32 %v2574, %v2531
    %v2576 = vmul.f32 %v2575, %v2574
    %v2577 = vmul.f32 0.5, %v2576
    %v2578 = vsub.f32 1.5, %v2577
    %v2579 = vmul.f32 %v2574, %v2578
    %vm2580 = vweird.f32 %v2531
    %vm2581 = vweird.f32 %v2574
    %vm2582 = vmor %vm2580, %vm2581
    %v2583 = vsel %vm2582, %v2574, %v2579
    %v2584 = vrsqrt.pop %v2532
    %v2585 = vmul.f32 %v2584, %v2532
    %v2586 = vmul.f32 %v2585, %v2584
    %v2587 = vmul.f32 0.5, %v2586
    %v2588 = vsub.f32 1.5, %v2587
    %v2589 = vmul.f32 %v2584, %v2588
    %vm2590 = vweird.f32 %v2532
    %vm2591 = vweird.f32 %v2584
    %vm2592 = vmor %vm2590, %vm2591
    %v2593 = vsel %vm2592, %v2584, %v2589
    %v2594 = vrsqrt.pop %v2533
    %v2595 = vmul.f32 %v2594, %v2533
    %v2596 = vmul.f32 %v2595, %v2594
    %v2597 = vmul.f32 0.5, %v2596
    %v2598 = vsub.f32 1.5, %v2597
    %v2599 = vmul.f32 %v2594, %v2598
    %vm2600 = vweird.f32 %v2533
    %vm2601 = vweird.f32 %v2594
    %vm2602 = vmor %vm2600, %vm2601
    %v2603 = vsel %vm2602, %v2594, %v2599
    %v2604 = vrsqrt.pop %v2534
    %v2605 = vmul.f32 %v2604, %v2534
    %v2606 = vmul.f32 %v2605, %v2604
    %v2607 = vmul.f32 0.5, %v2606
    %v2608 = vsub.f32 1.5, %v2607
    %v2609 = vmul.f32 %v2604, %v2608
    %vm2610 = vweird.f32 %v2534
    %vm2611 = vweird.f32 %v2604
    %vm2612 = vmor %vm2610, %vm2611
    %v2613 = vsel %vm2612, %v2604, %v2609
    %v2614 = vrsqrt.pop %v2535
    %v2615 = vmul.f32 %v2614, %v2535
    %v2616 = vmul.f32 %v2615, %v2614
    %v2617 = vmul.f32 0.5, %v2616
    %v2618 = vsub.f32 1.5, %v2617
    %v2619 = vmul.f32 %v2614, %v2618
    %vm2620 = vweird.f32 %v2535
    %vm2621 = vweird.f32 %v2614
    %vm2622 = vmor %vm2620, %vm2621
    %v2623 = vsel %vm2622, %v2614, %v2619
    %v2624 = vrsqrt.pop %v2536
    %v2625 = vmul.f32 %v2624, %v2536
    %v2626 = vmul.f32 %v2625, %v2624
    %v2627 = vmul.f32 0.5, %v2626
    %v2628 = vsub.f32 1.5, %v2627
    %v2629 = vmul.f32 %v2624, %v2628
    %vm2630 = vweird.f32 %v2536
    %vm2631 = vweird.f32 %v2624
    %vm2632 = vmor %vm2630, %vm2631
    %v2633 = vsel %vm2632, %v2624, %v2629
    %v2634 = vrsqrt.pop %v2537
    %v2635 = vmul.f32 %v2634, %v2537
    %v2636 = vmul.f32 %v2635, %v2634
    %v2637 = vmul.f32 0.5, %v2636
    %v2638 = vsub.f32 1.5, %v2637
    %v2639 = vmul.f32 %v2634, %v2638
    %vm2640 = vweird.f32 %v2537
    %vm2641 = vweird.f32 %v2634
    %vm2642 = vmor %vm2640, %vm2641
    %v2643 = vsel %vm2642, %v2634, %v2639
    %v2644 = vrsqrt.pop %v2538
    %v2645 = vmul.f32 %v2644, %v2538
    %v2646 = vmul.f32 %v2645, %v2644
    %v2647 = vmul.f32 0.5, %v2646
    %v2648 = vsub.f32 1.5, %v2647
    %v2649 = vmul.f32 %v2644, %v2648
    %vm2650 = vweird.f32 %v2538
    %vm2651 = vweird.f32 %v2644
    %vm2652 = vmor %vm2650, %vm2651
    %v2653 = vsel %vm2652, %v2644, %v2649
    %v2654 = vrsqrt.pop %v2539
    %v2655 = vmul.f32 %v2654, %v2539
    %v2656 = vmul.f32 %v2655, %v2654
    %v2657 = vmul.f32 0.5, %v2656
    %v2658 = vsub.f32 1.5, %v2657
    %v2659 = vmul.f32 %v2654, %v2658
    %vm2660 = vweird.f32 %v2539
    %vm2661 = vweird.f32 %v2654
    %vm2662 = vmor %vm2660, %vm2661
    %v2663 = vsel %vm2662, %v2654, %v2659
    %v2664 = vrsqrt.pop %v2540
    %v2665 = vmul.f32 %v2664, %v2540
    %v2666 = vmul.f32 %v2665, %v2664
    %v2667 = vmul.f32 0.5, %v2666
    %v2668 = vsub.f32 1.5, %v2667
    %v2669 = vmul.f32 %v2664, %v2668
    %vm2670 = vweird.f32 %v2540
    %vm2671 = vweird.f32 %v2664
    %vm2672 = vmor %vm2670, %vm2671
    %v2673 = vsel %vm2672, %v2664, %v2669
    %v2674 = vrsqrt.pop %v2541
    %v2675 = vmul.f32 %v2674, %v2541
    %v2676 = vmul.f32 %v2675, %v2674
    %v2677 = vmul.f32 0.5, %v2676
    %v2678 = vsub.f32 1.5, %v2677
    %v2679 = vmul.f32 %v2674, %v2678
    %vm2680 = vweird.f32 %v2541
    %vm2681 = vweird.f32 %v2674
    %vm2682 = vmor %vm2680, %vm2681
    %v2683 = vsel %vm2682, %v2674, %v2679
    %v2684 = vrsqrt.pop %v2542
    %v2685 = vmul.f32 %v2684, %v2542
    %v2686 = vmul.f32 %v2685, %v2684
    %v2687 = vmul.f32 0.5, %v2686
    %v2688 = vsub.f32 1.5, %v2687
    %v2689 = vmul.f32 %v2684, %v2688
    %vm2690 = vweird.f32 %v2542
    %vm2691 = vweird.f32 %v2684
    %vm2692 = vmor %vm2690, %vm2691
    %v2693 = vsel %vm2692, %v2684, %v2689
    %v2694 = vrsqrt.pop %v2543
    %v2695 = vmul.f32 %v2694, %v2543
    %v2696 = vmul.f32 %v2695, %v2694
    %v2697 = vmul.f32 0.5, %v2696
    %v2698 = vsub.f32 1.5, %v2697
    %v2699 = vmul.f32 %v2694, %v2698
    %vm2700 = vweird.f32 %v2543
    %vm2701 = vweird.f32 %v2694
    %vm2702 = vmor %vm2700, %vm2701
    %v2703 = vsel %vm2702, %v2694, %v2699
    %v2704 = vsub.f32 %v2183, %v2448
    %v2705 = vsub.f32 %v2281, %v2448
    %v2706 = vsub.f32 %v2185, %v2449
    %v2707 = vsub.f32 %v2283, %v2449
    %v2708 = vsub.f32 %v2188, %v2450
    %v2709 = vsub.f32 %v2286, %v2450
    %v2710 = vsub.f32 %v2190, %v2451
    %v2711 = vsub.f32 %v2288, %v2451
    %v2712 = vsub.f32 %v2193, %v2452
    %v2713 = vsub.f32 %v2291, %v2452
    %v2714 = vsub.f32 %v2195, %v2453
    %v2715 = vsub.f32 %v2293, %v2453
    %v2716 = vsub.f32 %v2198, %v2454
    %v2717 = vsub.f32 %v2296, %v2454
    %v2718 = vsub.f32 %v2200, %v2455
    %v2719 = vsub.f32 %v2298, %v2455
    %v2720 = vsub.f32 %v2203, %v2456
    %v2721 = vsub.f32 %v2301, %v2456
    %v2722 = vsub.f32 %v2205, %v2457
    %v2723 = vsub.f32 %v2303, %v2457
    %v2724 = vsub.f32 %v2208, %v2458
    %v2725 = vsub.f32 %v2306, %v2458
    %v2726 = vsub.f32 %v2210, %v2459
    %v2727 = vsub.f32 %v2308, %v2459
    %v2728 = vsub.f32 %v2213, %v2460
    %v2729 = vsub.f32 %v2311, %v2460
    %v2730 = vsub.f32 %v2215, %v2461
    %v2731 = vsub.f32 %v2313, %v2461
    %v2732 = vsub.f32 %v2218, %v2462
    %v2733 = vsub.f32 %v2316, %v2462
    %v2734 = vsub.f32 %v2220, %v2463
    %v2735 = vsub.f32 %v2318, %v2463
    %v2736 = vmul.f32 %v2704, %v2553
    %v2737 = vmul.f32 %v2705, %v2553
    %v2738 = vmul.f32 %v2706, %v2563
    %v2739 = vmul.f32 %v2707, %v2563
    %v2740 = vmul.f32 %v2708, %v2573
    %v2741 = vmul.f32 %v2709, %v2573
    %v2742 = vmul.f32 %v2710, %v2583
    %v2743 = vmul.f32 %v2711, %v2583
    %v2744 = vmul.f32 %v2712, %v2593
    %v2745 = vmul.f32 %v2713, %v2593
    %v2746 = vmul.f32 %v2714, %v2603
    %v2747 = vmul.f32 %v2715, %v2603
    %v2748 = vmul.f32 %v2716, %v2613
    %v2749 = vmul.f32 %v2717, %v2613
    %v2750 = vmul.f32 %v2718, %v2623
    %v2751 = vmul.f32 %v2719, %v2623
    %v2752 = vmul.f32 %v2720, %v2633
    %v2753 = vmul.f32 %v2721, %v2633
    %v2754 = vmul.f32 %v2722, %v2643
    %v2755 = vmul.f32 %v2723, %v2643
    %v2756 = vmul.f32 %v2724, %v2653
    %v2757 = vmul.f32 %v2725, %v2653
    %v2758 = vmul.f32 %v2726, %v2663
    %v2759 = vmul.f32 %v2727, %v2663
    %v2760 = vmul.f32 %v2728, %v2673
    %v2761 = vmul.f32 %v2729, %v2673
    %v2762 = vmul.f32 %v2730, %v2683
    %v2763 = vmul.f32 %v2731, %v2683
    %v2764 = vmul.f32 %v2732, %v2693
    %v2765 = vmul.f32 %v2733, %v2693
    %v2766 = vmul.f32 %v2734, %v2703
    %v2767 = vmul.f32 %v2735, %v2703
    %s2768 = scalar_lea.vmem %s6, 2
    %v2769 = vld [vmem:[%s2768] ss:$8 sm:$0x3]
    %v2771 = vperm.slane %v2769, 0
    %v2772 = vperm.slane %v2769, 1
    %v2775 = vmul.f32 %v2736, %v2771
    %v2776 = vmul.f32 %v2737, %v2772
    %v2777 = vmul.f32 %v2738, %v2771
    %v2778 = vmul.f32 %v2739, %v2772
    %v2779 = vmul.f32 %v2740, %v2771
    %v2780 = vmul.f32 %v2741, %v2772
    %v2781 = vmul.f32 %v2742, %v2771
    %v2782 = vmul.f32 %v2743, %v2772
    %v2783 = vmul.f32 %v2744, %v2771
    %v2784 = vmul.f32 %v2745, %v2772
    %v2785 = vmul.f32 %v2746, %v2771
    %v2786 = vmul.f32 %v2747, %v2772
    %v2787 = vmul.f32 %v2748, %v2771
    %v2788 = vmul.f32 %v2749, %v2772
    %v2789 = vmul.f32 %v2750, %v2771
    %v2790 = vmul.f32 %v2751, %v2772
    %v2791 = vmul.f32 %v2752, %v2771
    %v2792 = vmul.f32 %v2753, %v2772
    %v2793 = vmul.f32 %v2754, %v2771
    %v2794 = vmul.f32 %v2755, %v2772
    %v2795 = vmul.f32 %v2756, %v2771
    %v2796 = vmul.f32 %v2757, %v2772
    %v2797 = vmul.f32 %v2758, %v2771
    %v2798 = vmul.f32 %v2759, %v2772
    %v2799 = vmul.f32 %v2760, %v2771
    %v2800 = vmul.f32 %v2761, %v2772
    %v2801 = vmul.f32 %v2762, %v2771
    %v2802 = vmul.f32 %v2763, %v2772
    %v2803 = vmul.f32 %v2764, %v2771
    %v2804 = vmul.f32 %v2765, %v2772
    %v2805 = vmul.f32 %v2766, %v2771
    %v2806 = vmul.f32 %v2767, %v2772
    %s2807 = scalar_lea.vmem %s7, 2
    %v2808 = vld [vmem:[%s2807] ss:$8 sm:$0x3]
    %v2810 = vperm.slane %v2808, 0
    %v2811 = vperm.slane %v2808, 1
    %v2814 = vadd.f32 %v2775, %v2810
    %v2815 = vadd.f32 %v2776, %v2811
    %v2816 = vadd.f32 %v2777, %v2810
    %v2817 = vadd.f32 %v2778, %v2811
    %v2818 = vadd.f32 %v2779, %v2810
    %v2819 = vadd.f32 %v2780, %v2811
    %v2820 = vadd.f32 %v2781, %v2810
    %v2821 = vadd.f32 %v2782, %v2811
    %v2822 = vadd.f32 %v2783, %v2810
    %v2823 = vadd.f32 %v2784, %v2811
    %v2824 = vadd.f32 %v2785, %v2810
    %v2825 = vadd.f32 %v2786, %v2811
    %v2826 = vadd.f32 %v2787, %v2810
    %v2827 = vadd.f32 %v2788, %v2811
    %v2828 = vadd.f32 %v2789, %v2810
    %v2829 = vadd.f32 %v2790, %v2811
    %v2830 = vadd.f32 %v2791, %v2810
    %v2831 = vadd.f32 %v2792, %v2811
    %v2832 = vadd.f32 %v2793, %v2810
    %v2833 = vadd.f32 %v2794, %v2811
    %v2834 = vadd.f32 %v2795, %v2810
    %v2835 = vadd.f32 %v2796, %v2811
    %v2836 = vadd.f32 %v2797, %v2810
    %v2837 = vadd.f32 %v2798, %v2811
    %v2838 = vadd.f32 %v2799, %v2810
    %v2839 = vadd.f32 %v2800, %v2811
    %v2840 = vadd.f32 %v2801, %v2810
    %v2841 = vadd.f32 %v2802, %v2811
    %v2842 = vadd.f32 %v2803, %v2810
    %v2843 = vadd.f32 %v2804, %v2811
    %v2844 = vadd.f32 %v2805, %v2810
    %v2845 = vadd.f32 %v2806, %v2811
    %v2846 = vmax.f32 %v2814, 0.0
    %v2847 = vmax.f32 %v2815, 0.0
    %v2848 = vmax.f32 %v2816, 0.0
    %v2849 = vmax.f32 %v2817, 0.0
    %v2850 = vmax.f32 %v2818, 0.0
    %v2851 = vmax.f32 %v2819, 0.0
    %v2852 = vmax.f32 %v2820, 0.0
    %v2853 = vmax.f32 %v2821, 0.0
    %v2854 = vmax.f32 %v2822, 0.0
    %v2855 = vmax.f32 %v2823, 0.0
    %v2856 = vmax.f32 %v2824, 0.0
    %v2857 = vmax.f32 %v2825, 0.0
    %v2858 = vmax.f32 %v2826, 0.0
    %v2859 = vmax.f32 %v2827, 0.0
    %v2860 = vmax.f32 %v2828, 0.0
    %v2861 = vmax.f32 %v2829, 0.0
    %v2862 = vmax.f32 %v2830, 0.0
    %v2863 = vmax.f32 %v2831, 0.0
    %v2864 = vmax.f32 %v2832, 0.0
    %v2865 = vmax.f32 %v2833, 0.0
    %v2866 = vmax.f32 %v2834, 0.0
    %v2867 = vmax.f32 %v2835, 0.0
    %v2868 = vmax.f32 %v2836, 0.0
    %v2869 = vmax.f32 %v2837, 0.0
    %v2870 = vmax.f32 %v2838, 0.0
    %v2871 = vmax.f32 %v2839, 0.0
    %v2872 = vmax.f32 %v2840, 0.0
    %v2873 = vmax.f32 %v2841, 0.0
    %v2874 = vmax.f32 %v2842, 0.0
    %v2875 = vmax.f32 %v2843, 0.0
    %v2876 = vmax.f32 %v2844, 0.0
    %v2877 = vmax.f32 %v2845, 0.0
    %v2878 = vpack.c.bf16 %v2848, %v2846
    %v2879 = vpack.c.bf16 %v2849, %v2847
    %v2880 = vpack.c.bf16 %v2852, %v2850
    %v2881 = vpack.c.bf16 %v2853, %v2851
    %v2882 = vpack.c.bf16 %v2856, %v2854
    %v2883 = vpack.c.bf16 %v2857, %v2855
    %v2884 = vpack.c.bf16 %v2860, %v2858
    %v2885 = vpack.c.bf16 %v2861, %v2859
    %v2886 = vpack.c.bf16 %v2864, %v2862
    %v2887 = vpack.c.bf16 %v2865, %v2863
    %v2888 = vpack.c.bf16 %v2868, %v2866
    %v2889 = vpack.c.bf16 %v2869, %v2867
    %v2890 = vpack.c.bf16 %v2872, %v2870
    %v2891 = vpack.c.bf16 %v2873, %v2871
    %v2892 = vpack.c.bf16 %v2876, %v2874
    %v2893 = vpack.c.bf16 %v2877, %v2875
    %s2894 = scalar_lea.vmem [#allocation4], 512
    %v2895 = vld [vmem:[%s2894] sm:$0xff]
    %v2896 = vld [vmem:[%s2894 + $0x8] sm:$0xff]
    %v2897 = vld [vmem:[%s2894 + $0x10] sm:$0xff]
    %v2898 = vld [vmem:[%s2894 + $0x18] sm:$0xff]
    %v2899 = vld [vmem:[%s2894 + $0x20] sm:$0xff]
    %v2900 = vld [vmem:[%s2894 + $0x28] sm:$0xff]
    %v2901 = vld [vmem:[%s2894 + $0x30] sm:$0xff]
    %v2902 = vld [vmem:[%s2894 + $0x38] sm:$0xff]
    %v2903 = vld [vmem:[%s2894 + $0x40] sm:$0xff]
    %v2904 = vld [vmem:[%s2894 + $0x48] sm:$0xff]
    %v2905 = vld [vmem:[%s2894 + $0x50] sm:$0xff]
    %v2906 = vld [vmem:[%s2894 + $0x58] sm:$0xff]
    %v2907 = vld [vmem:[%s2894 + $0x60] sm:$0xff]
    %v2908 = vld [vmem:[%s2894 + $0x68] sm:$0xff]
    %v2909 = vld [vmem:[%s2894 + $0x70] sm:$0xff]
    %v2910 = vld [vmem:[%s2894 + $0x78] sm:$0xff]
    %v2911 = vld [vmem:[%s2894 + $0x80] sm:$0xff]
    %v2912 = vld [vmem:[%s2894 + $0x88] sm:$0xff]
    %v2913 = vld [vmem:[%s2894 + $0x90] sm:$0xff]
    %v2914 = vld [vmem:[%s2894 + $0x98] sm:$0xff]
    %v2915 = vld [vmem:[%s2894 + $0xa0] sm:$0xff]
    %v2916 = vld [vmem:[%s2894 + $0xa8] sm:$0xff]
    %v2917 = vld [vmem:[%s2894 + $0xb0] sm:$0xff]
    %v2918 = vld [vmem:[%s2894 + $0xb8] sm:$0xff]
    %v2919 = vld [vmem:[%s2894 + $0xc0] sm:$0xff]
    %v2920 = vld [vmem:[%s2894 + $0xc8] sm:$0xff]
    %v2921 = vld [vmem:[%s2894 + $0xd0] sm:$0xff]
    %v2922 = vld [vmem:[%s2894 + $0xd8] sm:$0xff]
    %v2923 = vld [vmem:[%s2894 + $0xe0] sm:$0xff]
    %v2924 = vld [vmem:[%s2894 + $0xe8] sm:$0xff]
    %v2925 = vld [vmem:[%s2894 + $0xf0] sm:$0xff]
    %v2926 = vld [vmem:[%s2894 + $0xf8] sm:$0xff]
    %s2927 = scalar_lea.vmem %s5, 3
    %v2928 = vld [vmem:[%s2927] ss:$8 sm:$0x3]
    %v2930 = vperm.slane %v2928, 0
    %v2931 = vperm.slane %v2928, 1
    %v2966 = vunpack.c.l.b16 %v2895
    %v2967 = vunpack.c.h.b16 %v2895
    %v2968 = vunpack.c.l.b16 %v2896
    %v2969 = vunpack.c.h.b16 %v2896
    %v2970 = vunpack.c.l.b16 %v2897
    %v2971 = vunpack.c.h.b16 %v2897
    %v2972 = vunpack.c.l.b16 %v2898
    %v2973 = vunpack.c.h.b16 %v2898
    %v2974 = vunpack.c.l.b16 %v2899
    %v2975 = vunpack.c.h.b16 %v2899
    %v2976 = vunpack.c.l.b16 %v2900
    %v2977 = vunpack.c.h.b16 %v2900
    %v2978 = vunpack.c.l.b16 %v2901
    %v2979 = vunpack.c.h.b16 %v2901
    %v2980 = vunpack.c.l.b16 %v2902
    %v2981 = vunpack.c.h.b16 %v2902
    %v2982 = vunpack.c.l.b16 %v2903
    %v2983 = vunpack.c.h.b16 %v2903
    %v2984 = vunpack.c.l.b16 %v2904
    %v2985 = vunpack.c.h.b16 %v2904
    %v2986 = vunpack.c.l.b16 %v2905
    %v2987 = vunpack.c.h.b16 %v2905
    %v2988 = vunpack.c.l.b16 %v2906
    %v2989 = vunpack.c.h.b16 %v2906
    %v2990 = vunpack.c.l.b16 %v2907
    %v2991 = vunpack.c.h.b16 %v2907
    %v2992 = vunpack.c.l.b16 %v2908
    %v2993 = vunpack.c.h.b16 %v2908
    %v2994 = vunpack.c.l.b16 %v2909
    %v2995 = vunpack.c.h.b16 %v2909
    %v2996 = vunpack.c.l.b16 %v2910
    %v2997 = vunpack.c.h.b16 %v2910
    %v2998 = vunpack.c.l.b16 %v2911
    %v2999 = vunpack.c.h.b16 %v2911
    %v3000 = vunpack.c.l.b16 %v2912
    %v3001 = vunpack.c.h.b16 %v2912
    %v3002 = vunpack.c.l.b16 %v2913
    %v3003 = vunpack.c.h.b16 %v2913
    %v3004 = vunpack.c.l.b16 %v2914
    %v3005 = vunpack.c.h.b16 %v2914
    %v3006 = vunpack.c.l.b16 %v2915
    %v3007 = vunpack.c.h.b16 %v2915
    %v3008 = vunpack.c.l.b16 %v2916
    %v3009 = vunpack.c.h.b16 %v2916
    %v3010 = vunpack.c.l.b16 %v2917
    %v3011 = vunpack.c.h.b16 %v2917
    %v3012 = vunpack.c.l.b16 %v2918
    %v3013 = vunpack.c.h.b16 %v2918
    %v3014 = vunpack.c.l.b16 %v2919
    %v3015 = vunpack.c.h.b16 %v2919
    %v3016 = vunpack.c.l.b16 %v2920
    %v3017 = vunpack.c.h.b16 %v2920
    %v3018 = vunpack.c.l.b16 %v2921
    %v3019 = vunpack.c.h.b16 %v2921
    %v3020 = vunpack.c.l.b16 %v2922
    %v3021 = vunpack.c.h.b16 %v2922
    %v3022 = vunpack.c.l.b16 %v2923
    %v3023 = vunpack.c.h.b16 %v2923
    %v3024 = vunpack.c.l.b16 %v2924
    %v3025 = vunpack.c.h.b16 %v2924
    %v3026 = vunpack.c.l.b16 %v2925
    %v3027 = vunpack.c.h.b16 %v2925
    %v3028 = vunpack.c.l.b16 %v2926
    %v3029 = vunpack.c.h.b16 %v2926
    %v3030 = vpack.c.b16 %v2968, %v2966
    %v3031 = vpack.c.b16 %v2969, %v2967
    %v3032 = vpack.c.b16 %v2972, %v2970
    %v3033 = vpack.c.b16 %v2973, %v2971
    %v3034 = vpack.c.b16 %v2976, %v2974
    %v3035 = vpack.c.b16 %v2977, %v2975
    %v3036 = vpack.c.b16 %v2980, %v2978
    %v3037 = vpack.c.b16 %v2981, %v2979
    %v3038 = vpack.c.b16 %v2984, %v2982
    %v3039 = vpack.c.b16 %v2985, %v2983
    %v3040 = vpack.c.b16 %v2988, %v2986
    %v3041 = vpack.c.b16 %v2989, %v2987
    %v3042 = vpack.c.b16 %v2992, %v2990
    %v3043 = vpack.c.b16 %v2993, %v2991
    %v3044 = vpack.c.b16 %v2996, %v2994
    %v3045 = vpack.c.b16 %v2997, %v2995
    %v3046 = vpack.c.b16 %v3000, %v2998
    %v3047 = vpack.c.b16 %v3001, %v2999
    %v3048 = vpack.c.b16 %v3004, %v3002
    %v3049 = vpack.c.b16 %v3005, %v3003
    %v3050 = vpack.c.b16 %v3008, %v3006
    %v3051 = vpack.c.b16 %v3009, %v3007
    %v3052 = vpack.c.b16 %v3012, %v3010
    %v3053 = vpack.c.b16 %v3013, %v3011
    %v3054 = vpack.c.b16 %v3016, %v3014
    %v3055 = vpack.c.b16 %v3017, %v3015
    %v3056 = vpack.c.b16 %v3020, %v3018
    %v3057 = vpack.c.b16 %v3021, %v3019
    %v3058 = vpack.c.b16 %v3024, %v3022
    %v3059 = vpack.c.b16 %v3025, %v3023
    %v3060 = vpack.c.b16 %v3028, %v3026
    %v3061 = vpack.c.b16 %v3029, %v3027
    %3094 = vmatpush.bf16.msra.mxu0 %v3044
    %3095 = vmatpush.bf16.msra.mxu0 %v3042
    %3096 = vmatpush.bf16.msra.mxu0 %v3040
    %3097 = vmatpush.bf16.msra.mxu0 %v3038
    %3098 = vmatpush.bf16.msra.mxu0 %v3036
    %3099 = vmatpush.bf16.msra.mxu0 %v3034
    %3100 = vmatpush.bf16.msra.mxu0 %v3032
    %3101 = vmatpush.bf16.msra.mxu0 %v3030
    %3102 = vmatmul.bf16.gmra.mxu0 %v2878
    %v3103 = vpop.f32.mrf.mxu0
    %v3104 = vadd.f32 %v2930, %v3103
    %v3105 = vpop.f32.mrf.mxu0
    %v3106 = vadd.f32 %v2930, %v3105
    %3107 = vmatmul.bf16.gmra.mxu0 %v2880
    %v3108 = vpop.f32.mrf.mxu0
    %v3109 = vadd.f32 %v2930, %v3108
    %v3110 = vpop.f32.mrf.mxu0
    %v3111 = vadd.f32 %v2930, %v3110
    %3112 = vmatmul.bf16.gmra.mxu0 %v2882
    %v3113 = vpop.f32.mrf.mxu0
    %v3114 = vadd.f32 %v2930, %v3113
    %v3115 = vpop.f32.mrf.mxu0
    %v3116 = vadd.f32 %v2930, %v3115
    %3117 = vmatmul.bf16.gmra.mxu0 %v2884
    %v3118 = vpop.f32.mrf.mxu0
    %v3119 = vadd.f32 %v2930, %v3118
    %v3120 = vpop.f32.mrf.mxu0
    %v3121 = vadd.f32 %v2930, %v3120
    %3122 = vmatmul.bf16.gmra.mxu0 %v2886
    %v3123 = vpop.f32.mrf.mxu0
    %v3124 = vadd.f32 %v2930, %v3123
    %v3125 = vpop.f32.mrf.mxu0
    %v3126 = vadd.f32 %v2930, %v3125
    %3127 = vmatmul.bf16.gmra.mxu0 %v2888
    %v3128 = vpop.f32.mrf.mxu0
    %v3129 = vadd.f32 %v2930, %v3128
    %v3130 = vpop.f32.mrf.mxu0
    %v3131 = vadd.f32 %v2930, %v3130
    %3132 = vmatmul.bf16.gmra.mxu0 %v2890
    %v3133 = vpop.f32.mrf.mxu0
    %v3134 = vadd.f32 %v2930, %v3133
    %v3135 = vpop.f32.mrf.mxu0
    %v3136 = vadd.f32 %v2930, %v3135
    %3137 = vmatmul.bf16.gmra.mxu0 %v2892
    %v3138 = vpop.f32.mrf.mxu0
    %v3139 = vadd.f32 %v2930, %v3138
    %v3140 = vpop.f32.mrf.mxu0
    %v3141 = vadd.f32 %v2930, %v3140
    %3142 = vdwg.mxu0
    %3143 = vmatpush.bf16.msra.mxu0 %v3060
    %3144 = vmatpush.bf16.msra.mxu0 %v3058
    %3145 = vmatpush.bf16.msra.mxu0 %v3056
    %3146 = vmatpush.bf16.msra.mxu0 %v3054
    %3147 = vmatpush.bf16.msra.mxu0 %v3052
    %3148 = vmatpush.bf16.msra.mxu0 %v3050
    %3149 = vmatpush.bf16.msra.mxu0 %v3048
    %3150 = vmatpush.bf16.msra.mxu0 %v3046
    %3151 = vmatmul.bf16.gmra.mxu0 %v2879
    %v3152 = vpop.f32.mrf.mxu0
    %v3153 = vadd.f32 %v3104, %v3152
    %v3154 = vpop.f32.mrf.mxu0
    %v3155 = vadd.f32 %v3106, %v3154
    %3156 = vmatmul.bf16.gmra.mxu0 %v2881
    %v3157 = vpop.f32.mrf.mxu0
    %v3158 = vadd.f32 %v3109, %v3157
    %v3159 = vpop.f32.mrf.mxu0
    %v3160 = vadd.f32 %v3111, %v3159
    %3161 = vmatmul.bf16.gmra.mxu0 %v2883
    %v3162 = vpop.f32.mrf.mxu0
    %v3163 = vadd.f32 %v3114, %v3162
    %v3164 = vpop.f32.mrf.mxu0
    %v3165 = vadd.f32 %v3116, %v3164
    %3166 = vmatmul.bf16.gmra.mxu0 %v2885
    %v3167 = vpop.f32.mrf.mxu0
    %v3168 = vadd.f32 %v3119, %v3167
    %v3169 = vpop.f32.mrf.mxu0
    %v3170 = vadd.f32 %v3121, %v3169
    %3171 = vmatmul.bf16.gmra.mxu0 %v2887
    %v3172 = vpop.f32.mrf.mxu0
    %v3173 = vadd.f32 %v3124, %v3172
    %v3174 = vpop.f32.mrf.mxu0
    %v3175 = vadd.f32 %v3126, %v3174
    %3176 = vmatmul.bf16.gmra.mxu0 %v2889
    %v3177 = vpop.f32.mrf.mxu0
    %v3178 = vadd.f32 %v3129, %v3177
    %v3179 = vpop.f32.mrf.mxu0
    %v3180 = vadd.f32 %v3131, %v3179
    %3181 = vmatmul.bf16.gmra.mxu0 %v2891
    %v3182 = vpop.f32.mrf.mxu0
    %v3183 = vadd.f32 %v3134, %v3182
    %v3184 = vpop.f32.mrf.mxu0
    %v3185 = vadd.f32 %v3136, %v3184
    %3186 = vmatmul.bf16.gmra.mxu0 %v2893
    %v3187 = vpop.f32.mrf.mxu0
    %v3188 = vadd.f32 %v3139, %v3187
    %v3189 = vpop.f32.mrf.mxu0
    %v3190 = vadd.f32 %v3141, %v3189
    %3191 = vdwg.mxu0
    %3192 = vmatpush.bf16.msra.mxu0 %v3045
    %3193 = vmatpush.bf16.msra.mxu0 %v3043
    %3194 = vmatpush.bf16.msra.mxu0 %v3041
    %3195 = vmatpush.bf16.msra.mxu0 %v3039
    %3196 = vmatpush.bf16.msra.mxu0 %v3037
    %3197 = vmatpush.bf16.msra.mxu0 %v3035
    %3198 = vmatpush.bf16.msra.mxu0 %v3033
    %3199 = vmatpush.bf16.msra.mxu0 %v3031
    %3200 = vmatmul.bf16.gmra.mxu0 %v2878
    %v3201 = vpop.f32.mrf.mxu0
    %v3202 = vadd.f32 %v2931, %v3201
    %v3203 = vpop.f32.mrf.mxu0
    %v3204 = vadd.f32 %v2931, %v3203
    %3205 = vmatmul.bf16.gmra.mxu0 %v2880
    %v3206 = vpop.f32.mrf.mxu0
    %v3207 = vadd.f32 %v2931, %v3206
    %v3208 = vpop.f32.mrf.mxu0
    %v3209 = vadd.f32 %v2931, %v3208
    %3210 = vmatmul.bf16.gmra.mxu0 %v2882
    %v3211 = vpop.f32.mrf.mxu0
    %v3212 = vadd.f32 %v2931, %v3211
    %v3213 = vpop.f32.mrf.mxu0
    %v3214 = vadd.f32 %v2931, %v3213
    %3215 = vmatmul.bf16.gmra.mxu0 %v2884
    %v3216 = vpop.f32.mrf.mxu0
    %v3217 = vadd.f32 %v2931, %v3216
    %v3218 = vpop.f32.mrf.mxu0
    %v3219 = vadd.f32 %v2931, %v3218
    %3220 = vmatmul.bf16.gmra.mxu0 %v2886
    %v3221 = vpop.f32.mrf.mxu0
    %v3222 = vadd.f32 %v2931, %v3221
    %v3223 = vpop.f32.mrf.mxu0
    %v3224 = vadd.f32 %v2931, %v3223
    %3225 = vmatmul.bf16.gmra.mxu0 %v2888
    %v3226 = vpop.f32.mrf.mxu0
    %v3227 = vadd.f32 %v2931, %v3226
    %v3228 = vpop.f32.mrf.mxu0
    %v3229 = vadd.f32 %v2931, %v3228
    %3230 = vmatmul.bf16.gmra.mxu0 %v2890
    %v3231 = vpop.f32.mrf.mxu0
    %v3232 = vadd.f32 %v2931, %v3231
    %v3233 = vpop.f32.mrf.mxu0
    %v3234 = vadd.f32 %v2931, %v3233
    %3235 = vmatmul.bf16.gmra.mxu0 %v2892
    %v3236 = vpop.f32.mrf.mxu0
    %v3237 = vadd.f32 %v2931, %v3236
    %v3238 = vpop.f32.mrf.mxu0
    %v3239 = vadd.f32 %v2931, %v3238
    %3240 = vdwg.mxu0
    %3241 = vmatpush.bf16.msra.mxu0 %v3061
    %3242 = vmatpush.bf16.msra.mxu0 %v3059
    %3243 = vmatpush.bf16.msra.mxu0 %v3057
    %3244 = vmatpush.bf16.msra.mxu0 %v3055
    %3245 = vmatpush.bf16.msra.mxu0 %v3053
    %3246 = vmatpush.bf16.msra.mxu0 %v3051
    %3247 = vmatpush.bf16.msra.mxu0 %v3049
    %3248 = vmatpush.bf16.msra.mxu0 %v3047
    %3249 = vmatmul.bf16.gmra.mxu0 %v2879
    %v3250 = vpop.f32.mrf.mxu0
    %v3251 = vadd.f32 %v3202, %v3250
    %v3252 = vpop.f32.mrf.mxu0
    %v3253 = vadd.f32 %v3204, %v3252
    %3254 = vmatmul.bf16.gmra.mxu0 %v2881
    %v3255 = vpop.f32.mrf.mxu0
    %v3256 = vadd.f32 %v3207, %v3255
    %v3257 = vpop.f32.mrf.mxu0
    %v3258 = vadd.f32 %v3209, %v3257
    %3259 = vmatmul.bf16.gmra.mxu0 %v2883
    %v3260 = vpop.f32.mrf.mxu0
    %v3261 = vadd.f32 %v3212, %v3260
    %v3262 = vpop.f32.mrf.mxu0
    %v3263 = vadd.f32 %v3214, %v3262
    %3264 = vmatmul.bf16.gmra.mxu0 %v2885
    %v3265 = vpop.f32.mrf.mxu0
    %v3266 = vadd.f32 %v3217, %v3265
    %v3267 = vpop.f32.mrf.mxu0
    %v3268 = vadd.f32 %v3219, %v3267
    %3269 = vmatmul.bf16.gmra.mxu0 %v2887
    %v3270 = vpop.f32.mrf.mxu0
    %v3271 = vadd.f32 %v3222, %v3270
    %v3272 = vpop.f32.mrf.mxu0
    %v3273 = vadd.f32 %v3224, %v3272
    %3274 = vmatmul.bf16.gmra.mxu0 %v2889
    %v3275 = vpop.f32.mrf.mxu0
    %v3276 = vadd.f32 %v3227, %v3275
    %v3277 = vpop.f32.mrf.mxu0
    %v3278 = vadd.f32 %v3229, %v3277
    %3279 = vmatmul.bf16.gmra.mxu0 %v2891
    %v3280 = vpop.f32.mrf.mxu0
    %v3281 = vadd.f32 %v3232, %v3280
    %v3282 = vpop.f32.mrf.mxu0
    %v3283 = vadd.f32 %v3234, %v3282
    %3284 = vmatmul.bf16.gmra.mxu0 %v2893
    %v3285 = vpop.f32.mrf.mxu0
    %v3286 = vadd.f32 %v3237, %v3285
    %v3287 = vpop.f32.mrf.mxu0
    %v3288 = vadd.f32 %v3239, %v3287
    %3289 = vdwg.mxu0
    %v3290 = vadd.f32 %v3153, %v3251
    %3291 = vadd.xlane.f32.xlu0 %v3290
    %v3292 = vpop.xlane.xlu0 %3291
    %v3293 = vadd.f32 %v3155, %v3253
    %3294 = vadd.xlane.f32.xlu0 %v3293
    %v3295 = vpop.xlane.xlu0 %3294
    %v3296 = vadd.f32 %v3158, %v3256
    %3297 = vadd.xlane.f32.xlu0 %v3296
    %v3298 = vpop.xlane.xlu0 %3297
    %v3299 = vadd.f32 %v3160, %v3258
    %3300 = vadd.xlane.f32.xlu0 %v3299
    %v3301 = vpop.xlane.xlu0 %3300
    %v3302 = vadd.f32 %v3163, %v3261
    %3303 = vadd.xlane.f32.xlu0 %v3302
    %v3304 = vpop.xlane.xlu0 %3303
    %v3305 = vadd.f32 %v3165, %v3263
    %3306 = vadd.xlane.f32.xlu0 %v3305
    %v3307 = vpop.xlane.xlu0 %3306
    %v3308 = vadd.f32 %v3168, %v3266
    %3309 = vadd.xlane.f32.xlu0 %v3308
    %v3310 = vpop.xlane.xlu0 %3309
    %v3311 = vadd.f32 %v3170, %v3268
    %3312 = vadd.xlane.f32.xlu0 %v3311
    %v3313 = vpop.xlane.xlu0 %3312
    %v3314 = vadd.f32 %v3173, %v3271
    %3315 = vadd.xlane.f32.xlu0 %v3314
    %v3316 = vpop.xlane.xlu0 %3315
    %v3317 = vadd.f32 %v3175, %v3273
    %3318 = vadd.xlane.f32.xlu0 %v3317
    %v3319 = vpop.xlane.xlu0 %3318
    %v3320 = vadd.f32 %v3178, %v3276
    %3321 = vadd.xlane.f32.xlu0 %v3320
    %v3322 = vpop.xlane.xlu0 %3321
    %v3323 = vadd.f32 %v3180, %v3278
    %3324 = vadd.xlane.f32.xlu0 %v3323
    %v3325 = vpop.xlane.xlu0 %3324
    %v3326 = vadd.f32 %v3183, %v3281
    %3327 = vadd.xlane.f32.xlu0 %v3326
    %v3328 = vpop.xlane.xlu0 %3327
    %v3329 = vadd.f32 %v3185, %v3283
    %3330 = vadd.xlane.f32.xlu0 %v3329
    %v3331 = vpop.xlane.xlu0 %3330
    %v3332 = vadd.f32 %v3188, %v3286
    %3333 = vadd.xlane.f32.xlu0 %v3332
    %v3334 = vpop.xlane.xlu0 %3333
    %v3335 = vadd.f32 %v3190, %v3288
    %3336 = vadd.xlane.f32.xlu0 %v3335
    %v3337 = vpop.xlane.xlu0 %3336
    %v3338 = vmul.f32 %v3153, %v3153
    %v3339 = vmul.f32 %v3251, %v3251
    %v3340 = vmul.f32 %v3155, %v3155
    %v3341 = vmul.f32 %v3253, %v3253
    %v3342 = vmul.f32 %v3158, %v3158
    %v3343 = vmul.f32 %v3256, %v3256
    %v3344 = vmul.f32 %v3160, %v3160
    %v3345 = vmul.f32 %v3258, %v3258
    %v3346 = vmul.f32 %v3163, %v3163
    %v3347 = vmul.f32 %v3261, %v3261
    %v3348 = vmul.f32 %v3165, %v3165
    %v3349 = vmul.f32 %v3263, %v3263
    %v3350 = vmul.f32 %v3168, %v3168
    %v3351 = vmul.f32 %v3266, %v3266
    %v3352 = vmul.f32 %v3170, %v3170
    %v3353 = vmul.f32 %v3268, %v3268
    %v3354 = vmul.f32 %v3173, %v3173
    %v3355 = vmul.f32 %v3271, %v3271
    %v3356 = vmul.f32 %v3175, %v3175
    %v3357 = vmul.f32 %v3273, %v3273
    %v3358 = vmul.f32 %v3178, %v3178
    %v3359 = vmul.f32 %v3276, %v3276
    %v3360 = vmul.f32 %v3180, %v3180
    %v3361 = vmul.f32 %v3278, %v3278
    %v3362 = vmul.f32 %v3183, %v3183
    %v3363 = vmul.f32 %v3281, %v3281
    %v3364 = vmul.f32 %v3185, %v3185
    %v3365 = vmul.f32 %v3283, %v3283
    %v3366 = vmul.f32 %v3188, %v3188
    %v3367 = vmul.f32 %v3286, %v3286
    %v3368 = vmul.f32 %v3190, %v3190
    %v3369 = vmul.f32 %v3288, %v3288
    %v3370 = vadd.f32 %v3338, %v3339
    %3371 = vadd.xlane.f32.xlu0 %v3370
    %v3372 = vpop.xlane.xlu0 %3371
    %v3373 = vadd.f32 %v3340, %v3341
    %3374 = vadd.xlane.f32.xlu0 %v3373
    %v3375 = vpop.xlane.xlu0 %3374
    %v3376 = vadd.f32 %v3342, %v3343
    %3377 = vadd.xlane.f32.xlu0 %v3376
    %v3378 = vpop.xlane.xlu0 %3377
    %v3379 = vadd.f32 %v3344, %v3345
    %3380 = vadd.xlane.f32.xlu0 %v3379
    %v3381 = vpop.xlane.xlu0 %3380
    %v3382 = vadd.f32 %v3346, %v3347
    %3383 = vadd.xlane.f32.xlu0 %v3382
    %v3384 = vpop.xlane.xlu0 %3383
    %v3385 = vadd.f32 %v3348, %v3349
    %3386 = vadd.xlane.f32.xlu0 %v3385
    %v3387 = vpop.xlane.xlu0 %3386
    %v3388 = vadd.f32 %v3350, %v3351
    %3389 = vadd.xlane.f32.xlu0 %v3388
    %v3390 = vpop.xlane.xlu0 %3389
    %v3391 = vadd.f32 %v3352, %v3353
    %3392 = vadd.xlane.f32.xlu0 %v3391
    %v3393 = vpop.xlane.xlu0 %3392
    %v3394 = vadd.f32 %v3354, %v3355
    %3395 = vadd.xlane.f32.xlu0 %v3394
    %v3396 = vpop.xlane.xlu0 %3395
    %v3397 = vadd.f32 %v3356, %v3357
    %3398 = vadd.xlane.f32.xlu0 %v3397
    %v3399 = vpop.xlane.xlu0 %3398
    %v3400 = vadd.f32 %v3358, %v3359
    %3401 = vadd.xlane.f32.xlu0 %v3400
    %v3402 = vpop.xlane.xlu0 %3401
    %v3403 = vadd.f32 %v3360, %v3361
    %3404 = vadd.xlane.f32.xlu0 %v3403
    %v3405 = vpop.xlane.xlu0 %3404
    %v3406 = vadd.f32 %v3362, %v3363
    %3407 = vadd.xlane.f32.xlu0 %v3406
    %v3408 = vpop.xlane.xlu0 %3407
    %v3409 = vadd.f32 %v3364, %v3365
    %3410 = vadd.xlane.f32.xlu0 %v3409
    %v3411 = vpop.xlane.xlu0 %3410
    %v3412 = vadd.f32 %v3366, %v3367
    %3413 = vadd.xlane.f32.xlu0 %v3412
    %v3414 = vpop.xlane.xlu0 %3413
    %v3415 = vadd.f32 %v3368, %v3369
    %3416 = vadd.xlane.f32.xlu0 %v3415
    %v3417 = vpop.xlane.xlu0 %3416
    %v3418 = vmul.f32 %v3292, 0.00390625
    %v3419 = vmul.f32 %v3295, 0.00390625
    %v3420 = vmul.f32 %v3298, 0.00390625
    %v3421 = vmul.f32 %v3301, 0.00390625
    %v3422 = vmul.f32 %v3304, 0.00390625
    %v3423 = vmul.f32 %v3307, 0.00390625
    %v3424 = vmul.f32 %v3310, 0.00390625
    %v3425 = vmul.f32 %v3313, 0.00390625
    %v3426 = vmul.f32 %v3316, 0.00390625
    %v3427 = vmul.f32 %v3319, 0.00390625
    %v3428 = vmul.f32 %v3322, 0.00390625
    %v3429 = vmul.f32 %v3325, 0.00390625
    %v3430 = vmul.f32 %v3328, 0.00390625
    %v3431 = vmul.f32 %v3331, 0.00390625
    %v3432 = vmul.f32 %v3334, 0.00390625
    %v3433 = vmul.f32 %v3337, 0.00390625
    %v3434 = vmul.f32 %v3372, 0.00390625
    %v3435 = vmul.f32 %v3375, 0.00390625
    %v3436 = vmul.f32 %v3378, 0.00390625
    %v3437 = vmul.f32 %v3381, 0.00390625
    %v3438 = vmul.f32 %v3384, 0.00390625
    %v3439 = vmul.f32 %v3387, 0.00390625
    %v3440 = vmul.f32 %v3390, 0.00390625
    %v3441 = vmul.f32 %v3393, 0.00390625
    %v3442 = vmul.f32 %v3396, 0.00390625
    %v3443 = vmul.f32 %v3399, 0.00390625
    %v3444 = vmul.f32 %v3402, 0.00390625
    %v3445 = vmul.f32 %v3405, 0.00390625
    %v3446 = vmul.f32 %v3408, 0.00390625
    %v3447 = vmul.f32 %v3411, 0.00390625
    %v3448 = vmul.f32 %v3414, 0.00390625
    %v3449 = vmul.f32 %v3417, 0.00390625
    %v3450 = vmul.f32 %v3418, %v3418
    %v3451 = vmul.f32 %v3419, %v3419
    %v3452 = vmul.f32 %v3420, %v3420
    %v3453 = vmul.f32 %v3421, %v3421
    %v3454 = vmul.f32 %v3422, %v3422
    %v3455 = vmul.f32 %v3423, %v3423
    %v3456 = vmul.f32 %v3424, %v3424
    %v3457 = vmul.f32 %v3425, %v3425
    %v3458 = vmul.f32 %v3426, %v3426
    %v3459 = vmul.f32 %v3427, %v3427
    %v3460 = vmul.f32 %v3428, %v3428
    %v3461 = vmul.f32 %v3429, %v3429
    %v3462 = vmul.f32 %v3430, %v3430
    %v3463 = vmul.f32 %v3431, %v3431
    %v3464 = vmul.f32 %v3432, %v3432
    %v3465 = vmul.f32 %v3433, %v3433
    %v3466 = vsub.f32 %v3434, %v3450
    %v3467 = vsub.f32 %v3435, %v3451
    %v3468 = vsub.f32 %v3436, %v3452
    %v3469 = vsub.f32 %v3437, %v3453
    %v3470 = vsub.f32 %v3438, %v3454
    %v3471 = vsub.f32 %v3439, %v3455
    %v3472 = vsub.f32 %v3440, %v3456
    %v3473 = vsub.f32 %v3441, %v3457
    %v3474 = vsub.f32 %v3442, %v3458
    %v3475 = vsub.f32 %v3443, %v3459
    %v3476 = vsub.f32 %v3444, %v3460
    %v3477 = vsub.f32 %v3445, %v3461
    %v3478 = vsub.f32 %v3446, %v3462
    %v3479 = vsub.f32 %v3447, %v3463
    %v3480 = vsub.f32 %v3448, %v3464
    %v3481 = vsub.f32 %v3449, %v3465
    %v3482 = vmax.f32 %v3466, 0.0
    %v3483 = vmax.f32 %v3467, 0.0
    %v3484 = vmax.f32 %v3468, 0.0
    %v3485 = vmax.f32 %v3469, 0.0
    %v3486 = vmax.f32 %v3470, 0.0
    %v3487 = vmax.f32 %v3471, 0.0
    %v3488 = vmax.f32 %v3472, 0.0
    %v3489 = vmax.f32 %v3473, 0.0
    %v3490 = vmax.f32 %v3474, 0.0
    %v3491 = vmax.f32 %v3475, 0.0
    %v3492 = vmax.f32 %v3476, 0.0
    %v3493 = vmax.f32 %v3477, 0.0
    %v3494 = vmax.f32 %v3478, 0.0
    %v3495 = vmax.f32 %v3479, 0.0
    %v3496 = vmax.f32 %v3480, 0.0
    %v3497 = vmax.f32 %v3481, 0.0
    %v3498 = vadd.f32 %v3482, 1e-05
    %v3499 = vadd.f32 %v3483, 1e-05
    %v3500 = vadd.f32 %v3484, 1e-05
    %v3501 = vadd.f32 %v3485, 1e-05
    %v3502 = vadd.f32 %v3486, 1e-05
    %v3503 = vadd.f32 %v3487, 1e-05
    %v3504 = vadd.f32 %v3488, 1e-05
    %v3505 = vadd.f32 %v3489, 1e-05
    %v3506 = vadd.f32 %v3490, 1e-05
    %v3507 = vadd.f32 %v3491, 1e-05
    %v3508 = vadd.f32 %v3492, 1e-05
    %v3509 = vadd.f32 %v3493, 1e-05
    %v3510 = vadd.f32 %v3494, 1e-05
    %v3511 = vadd.f32 %v3495, 1e-05
    %v3512 = vadd.f32 %v3496, 1e-05
    %v3513 = vadd.f32 %v3497, 1e-05
    %v3514 = vrsqrt.pop %v3498
    %v3515 = vmul.f32 %v3514, %v3498
    %v3516 = vmul.f32 %v3515, %v3514
    %v3517 = vmul.f32 0.5, %v3516
    %v3518 = vsub.f32 1.5, %v3517
    %v3519 = vmul.f32 %v3514, %v3518
    %vm3520 = vweird.f32 %v3498
    %vm3521 = vweird.f32 %v3514
    %vm3522 = vmor %vm3520, %vm3521
    %v3523 = vsel %vm3522, %v3514, %v3519
    %v3524 = vrsqrt.pop %v3499
    %v3525 = vmul.f32 %v3524, %v3499
    %v3526 = vmul.f32 %v3525, %v3524
    %v3527 = vmul.f32 0.5, %v3526
    %v3528 = vsub.f32 1.5, %v3527
    %v3529 = vmul.f32 %v3524, %v3528
    %vm3530 = vweird.f32 %v3499
    %vm3531 = vweird.f32 %v3524
    %vm3532 = vmor %vm3530, %vm3531
    %v3533 = vsel %vm3532, %v3524, %v3529
    %v3534 = vrsqrt.pop %v3500
    %v3535 = vmul.f32 %v3534, %v3500
    %v3536 = vmul.f32 %v3535, %v3534
    %v3537 = vmul.f32 0.5, %v3536
    %v3538 = vsub.f32 1.5, %v3537
    %v3539 = vmul.f32 %v3534, %v3538
    %vm3540 = vweird.f32 %v3500
    %vm3541 = vweird.f32 %v3534
    %vm3542 = vmor %vm3540, %vm3541
    %v3543 = vsel %vm3542, %v3534, %v3539
    %v3544 = vrsqrt.pop %v3501
    %v3545 = vmul.f32 %v3544, %v3501
    %v3546 = vmul.f32 %v3545, %v3544
    %v3547 = vmul.f32 0.5, %v3546
    %v3548 = vsub.f32 1.5, %v3547
    %v3549 = vmul.f32 %v3544, %v3548
    %vm3550 = vweird.f32 %v3501
    %vm3551 = vweird.f32 %v3544
    %vm3552 = vmor %vm3550, %vm3551
    %v3553 = vsel %vm3552, %v3544, %v3549
    %v3554 = vrsqrt.pop %v3502
    %v3555 = vmul.f32 %v3554, %v3502
    %v3556 = vmul.f32 %v3555, %v3554
    %v3557 = vmul.f32 0.5, %v3556
    %v3558 = vsub.f32 1.5, %v3557
    %v3559 = vmul.f32 %v3554, %v3558
    %vm3560 = vweird.f32 %v3502
    %vm3561 = vweird.f32 %v3554
    %vm3562 = vmor %vm3560, %vm3561
    %v3563 = vsel %vm3562, %v3554, %v3559
    %v3564 = vrsqrt.pop %v3503
    %v3565 = vmul.f32 %v3564, %v3503
    %v3566 = vmul.f32 %v3565, %v3564
    %v3567 = vmul.f32 0.5, %v3566
    %v3568 = vsub.f32 1.5, %v3567
    %v3569 = vmul.f32 %v3564, %v3568
    %vm3570 = vweird.f32 %v3503
    %vm3571 = vweird.f32 %v3564
    %vm3572 = vmor %vm3570, %vm3571
    %v3573 = vsel %vm3572, %v3564, %v3569
    %v3574 = vrsqrt.pop %v3504
    %v3575 = vmul.f32 %v3574, %v3504
    %v3576 = vmul.f32 %v3575, %v3574
    %v3577 = vmul.f32 0.5, %v3576
    %v3578 = vsub.f32 1.5, %v3577
    %v3579 = vmul.f32 %v3574, %v3578
    %vm3580 = vweird.f32 %v3504
    %vm3581 = vweird.f32 %v3574
    %vm3582 = vmor %vm3580, %vm3581
    %v3583 = vsel %vm3582, %v3574, %v3579
    %v3584 = vrsqrt.pop %v3505
    %v3585 = vmul.f32 %v3584, %v3505
    %v3586 = vmul.f32 %v3585, %v3584
    %v3587 = vmul.f32 0.5, %v3586
    %v3588 = vsub.f32 1.5, %v3587
    %v3589 = vmul.f32 %v3584, %v3588
    %vm3590 = vweird.f32 %v3505
    %vm3591 = vweird.f32 %v3584
    %vm3592 = vmor %vm3590, %vm3591
    %v3593 = vsel %vm3592, %v3584, %v3589
    %v3594 = vrsqrt.pop %v3506
    %v3595 = vmul.f32 %v3594, %v3506
    %v3596 = vmul.f32 %v3595, %v3594
    %v3597 = vmul.f32 0.5, %v3596
    %v3598 = vsub.f32 1.5, %v3597
    %v3599 = vmul.f32 %v3594, %v3598
    %vm3600 = vweird.f32 %v3506
    %vm3601 = vweird.f32 %v3594
    %vm3602 = vmor %vm3600, %vm3601
    %v3603 = vsel %vm3602, %v3594, %v3599
    %v3604 = vrsqrt.pop %v3507
    %v3605 = vmul.f32 %v3604, %v3507
    %v3606 = vmul.f32 %v3605, %v3604
    %v3607 = vmul.f32 0.5, %v3606
    %v3608 = vsub.f32 1.5, %v3607
    %v3609 = vmul.f32 %v3604, %v3608
    %vm3610 = vweird.f32 %v3507
    %vm3611 = vweird.f32 %v3604
    %vm3612 = vmor %vm3610, %vm3611
    %v3613 = vsel %vm3612, %v3604, %v3609
    %v3614 = vrsqrt.pop %v3508
    %v3615 = vmul.f32 %v3614, %v3508
    %v3616 = vmul.f32 %v3615, %v3614
    %v3617 = vmul.f32 0.5, %v3616
    %v3618 = vsub.f32 1.5, %v3617
    %v3619 = vmul.f32 %v3614, %v3618
    %vm3620 = vweird.f32 %v3508
    %vm3621 = vweird.f32 %v3614
    %vm3622 = vmor %vm3620, %vm3621
    %v3623 = vsel %vm3622, %v3614, %v3619
    %v3624 = vrsqrt.pop %v3509
    %v3625 = vmul.f32 %v3624, %v3509
    %v3626 = vmul.f32 %v3625, %v3624
    %v3627 = vmul.f32 0.5, %v3626
    %v3628 = vsub.f32 1.5, %v3627
    %v3629 = vmul.f32 %v3624, %v3628
    %vm3630 = vweird.f32 %v3509
    %vm3631 = vweird.f32 %v3624
    %vm3632 = vmor %vm3630, %vm3631
    %v3633 = vsel %vm3632, %v3624, %v3629
    %v3634 = vrsqrt.pop %v3510
    %v3635 = vmul.f32 %v3634, %v3510
    %v3636 = vmul.f32 %v3635, %v3634
    %v3637 = vmul.f32 0.5, %v3636
    %v3638 = vsub.f32 1.5, %v3637
    %v3639 = vmul.f32 %v3634, %v3638
    %vm3640 = vweird.f32 %v3510
    %vm3641 = vweird.f32 %v3634
    %vm3642 = vmor %vm3640, %vm3641
    %v3643 = vsel %vm3642, %v3634, %v3639
    %v3644 = vrsqrt.pop %v3511
    %v3645 = vmul.f32 %v3644, %v3511
    %v3646 = vmul.f32 %v3645, %v3644
    %v3647 = vmul.f32 0.5, %v3646
    %v3648 = vsub.f32 1.5, %v3647
    %v3649 = vmul.f32 %v3644, %v3648
    %vm3650 = vweird.f32 %v3511
    %vm3651 = vweird.f32 %v3644
    %vm3652 = vmor %vm3650, %vm3651
    %v3653 = vsel %vm3652, %v3644, %v3649
    %v3654 = vrsqrt.pop %v3512
    %v3655 = vmul.f32 %v3654, %v3512
    %v3656 = vmul.f32 %v3655, %v3654
    %v3657 = vmul.f32 0.5, %v3656
    %v3658 = vsub.f32 1.5, %v3657
    %v3659 = vmul.f32 %v3654, %v3658
    %vm3660 = vweird.f32 %v3512
    %vm3661 = vweird.f32 %v3654
    %vm3662 = vmor %vm3660, %vm3661
    %v3663 = vsel %vm3662, %v3654, %v3659
    %v3664 = vrsqrt.pop %v3513
    %v3665 = vmul.f32 %v3664, %v3513
    %v3666 = vmul.f32 %v3665, %v3664
    %v3667 = vmul.f32 0.5, %v3666
    %v3668 = vsub.f32 1.5, %v3667
    %v3669 = vmul.f32 %v3664, %v3668
    %vm3670 = vweird.f32 %v3513
    %vm3671 = vweird.f32 %v3664
    %vm3672 = vmor %vm3670, %vm3671
    %v3673 = vsel %vm3672, %v3664, %v3669
    %v3674 = vsub.f32 %v3153, %v3418
    %v3675 = vsub.f32 %v3251, %v3418
    %v3676 = vsub.f32 %v3155, %v3419
    %v3677 = vsub.f32 %v3253, %v3419
    %v3678 = vsub.f32 %v3158, %v3420
    %v3679 = vsub.f32 %v3256, %v3420
    %v3680 = vsub.f32 %v3160, %v3421
    %v3681 = vsub.f32 %v3258, %v3421
    %v3682 = vsub.f32 %v3163, %v3422
    %v3683 = vsub.f32 %v3261, %v3422
    %v3684 = vsub.f32 %v3165, %v3423
    %v3685 = vsub.f32 %v3263, %v3423
    %v3686 = vsub.f32 %v3168, %v3424
    %v3687 = vsub.f32 %v3266, %v3424
    %v3688 = vsub.f32 %v3170, %v3425
    %v3689 = vsub.f32 %v3268, %v3425
    %v3690 = vsub.f32 %v3173, %v3426
    %v3691 = vsub.f32 %v3271, %v3426
    %v3692 = vsub.f32 %v3175, %v3427
    %v3693 = vsub.f32 %v3273, %v3427
    %v3694 = vsub.f32 %v3178, %v3428
    %v3695 = vsub.f32 %v3276, %v3428
    %v3696 = vsub.f32 %v3180, %v3429
    %v3697 = vsub.f32 %v3278, %v3429
    %v3698 = vsub.f32 %v3183, %v3430
    %v3699 = vsub.f32 %v3281, %v3430
    %v3700 = vsub.f32 %v3185, %v3431
    %v3701 = vsub.f32 %v3283, %v3431
    %v3702 = vsub.f32 %v3188, %v3432
    %v3703 = vsub.f32 %v3286, %v3432
    %v3704 = vsub.f32 %v3190, %v3433
    %v3705 = vsub.f32 %v3288, %v3433
    %v3706 = vmul.f32 %v3674, %v3523
    %v3707 = vmul.f32 %v3675, %v3523
    %v3708 = vmul.f32 %v3676, %v3533
    %v3709 = vmul.f32 %v3677, %v3533
    %v3710 = vmul.f32 %v3678, %v3543
    %v3711 = vmul.f32 %v3679, %v3543
    %v3712 = vmul.f32 %v3680, %v3553
    %v3713 = vmul.f32 %v3681, %v3553
    %v3714 = vmul.f32 %v3682, %v3563
    %v3715 = vmul.f32 %v3683, %v3563
    %v3716 = vmul.f32 %v3684, %v3573
    %v3717 = vmul.f32 %v3685, %v3573
    %v3718 = vmul.f32 %v3686, %v3583
    %v3719 = vmul.f32 %v3687, %v3583
    %v3720 = vmul.f32 %v3688, %v3593
    %v3721 = vmul.f32 %v3689, %v3593
    %v3722 = vmul.f32 %v3690, %v3603
    %v3723 = vmul.f32 %v3691, %v3603
    %v3724 = vmul.f32 %v3692, %v3613
    %v3725 = vmul.f32 %v3693, %v3613
    %v3726 = vmul.f32 %v3694, %v3623
    %v3727 = vmul.f32 %v3695, %v3623
    %v3728 = vmul.f32 %v3696, %v3633
    %v3729 = vmul.f32 %v3697, %v3633
    %v3730 = vmul.f32 %v3698, %v3643
    %v3731 = vmul.f32 %v3699, %v3643
    %v3732 = vmul.f32 %v3700, %v3653
    %v3733 = vmul.f32 %v3701, %v3653
    %v3734 = vmul.f32 %v3702, %v3663
    %v3735 = vmul.f32 %v3703, %v3663
    %v3736 = vmul.f32 %v3704, %v3673
    %v3737 = vmul.f32 %v3705, %v3673
    %s3738 = scalar_lea.vmem %s6, 3
    %v3739 = vld [vmem:[%s3738] ss:$8 sm:$0x3]
    %v3741 = vperm.slane %v3739, 0
    %v3742 = vperm.slane %v3739, 1
    %v3745 = vmul.f32 %v3706, %v3741
    %v3746 = vmul.f32 %v3707, %v3742
    %v3747 = vmul.f32 %v3708, %v3741
    %v3748 = vmul.f32 %v3709, %v3742
    %v3749 = vmul.f32 %v3710, %v3741
    %v3750 = vmul.f32 %v3711, %v3742
    %v3751 = vmul.f32 %v3712, %v3741
    %v3752 = vmul.f32 %v3713, %v3742
    %v3753 = vmul.f32 %v3714, %v3741
    %v3754 = vmul.f32 %v3715, %v3742
    %v3755 = vmul.f32 %v3716, %v3741
    %v3756 = vmul.f32 %v3717, %v3742
    %v3757 = vmul.f32 %v3718, %v3741
    %v3758 = vmul.f32 %v3719, %v3742
    %v3759 = vmul.f32 %v3720, %v3741
    %v3760 = vmul.f32 %v3721, %v3742
    %v3761 = vmul.f32 %v3722, %v3741
    %v3762 = vmul.f32 %v3723, %v3742
    %v3763 = vmul.f32 %v3724, %v3741
    %v3764 = vmul.f32 %v3725, %v3742
    %v3765 = vmul.f32 %v3726, %v3741
    %v3766 = vmul.f32 %v3727, %v3742
    %v3767 = vmul.f32 %v3728, %v3741
    %v3768 = vmul.f32 %v3729, %v3742
    %v3769 = vmul.f32 %v3730, %v3741
    %v3770 = vmul.f32 %v3731, %v3742
    %v3771 = vmul.f32 %v3732, %v3741
    %v3772 = vmul.f32 %v3733, %v3742
    %v3773 = vmul.f32 %v3734, %v3741
    %v3774 = vmul.f32 %v3735, %v3742
    %v3775 = vmul.f32 %v3736, %v3741
    %v3776 = vmul.f32 %v3737, %v3742
    %s3777 = scalar_lea.vmem %s7, 3
    %v3778 = vld [vmem:[%s3777] ss:$8 sm:$0x3]
    %v3780 = vperm.slane %v3778, 0
    %v3781 = vperm.slane %v3778, 1
    %v3784 = vadd.f32 %v3745, %v3780
    %v3785 = vadd.f32 %v3746, %v3781
    %v3786 = vadd.f32 %v3747, %v3780
    %v3787 = vadd.f32 %v3748, %v3781
    %v3788 = vadd.f32 %v3749, %v3780
    %v3789 = vadd.f32 %v3750, %v3781
    %v3790 = vadd.f32 %v3751, %v3780
    %v3791 = vadd.f32 %v3752, %v3781
    %v3792 = vadd.f32 %v3753, %v3780
    %v3793 = vadd.f32 %v3754, %v3781
    %v3794 = vadd.f32 %v3755, %v3780
    %v3795 = vadd.f32 %v3756, %v3781
    %v3796 = vadd.f32 %v3757, %v3780
    %v3797 = vadd.f32 %v3758, %v3781
    %v3798 = vadd.f32 %v3759, %v3780
    %v3799 = vadd.f32 %v3760, %v3781
    %v3800 = vadd.f32 %v3761, %v3780
    %v3801 = vadd.f32 %v3762, %v3781
    %v3802 = vadd.f32 %v3763, %v3780
    %v3803 = vadd.f32 %v3764, %v3781
    %v3804 = vadd.f32 %v3765, %v3780
    %v3805 = vadd.f32 %v3766, %v3781
    %v3806 = vadd.f32 %v3767, %v3780
    %v3807 = vadd.f32 %v3768, %v3781
    %v3808 = vadd.f32 %v3769, %v3780
    %v3809 = vadd.f32 %v3770, %v3781
    %v3810 = vadd.f32 %v3771, %v3780
    %v3811 = vadd.f32 %v3772, %v3781
    %v3812 = vadd.f32 %v3773, %v3780
    %v3813 = vadd.f32 %v3774, %v3781
    %v3814 = vadd.f32 %v3775, %v3780
    %v3815 = vadd.f32 %v3776, %v3781
    %v3816 = vmax.f32 %v3784, 0.0
    %v3817 = vmax.f32 %v3785, 0.0
    %v3818 = vmax.f32 %v3786, 0.0
    %v3819 = vmax.f32 %v3787, 0.0
    %v3820 = vmax.f32 %v3788, 0.0
    %v3821 = vmax.f32 %v3789, 0.0
    %v3822 = vmax.f32 %v3790, 0.0
    %v3823 = vmax.f32 %v3791, 0.0
    %v3824 = vmax.f32 %v3792, 0.0
    %v3825 = vmax.f32 %v3793, 0.0
    %v3826 = vmax.f32 %v3794, 0.0
    %v3827 = vmax.f32 %v3795, 0.0
    %v3828 = vmax.f32 %v3796, 0.0
    %v3829 = vmax.f32 %v3797, 0.0
    %v3830 = vmax.f32 %v3798, 0.0
    %v3831 = vmax.f32 %v3799, 0.0
    %v3832 = vmax.f32 %v3800, 0.0
    %v3833 = vmax.f32 %v3801, 0.0
    %v3834 = vmax.f32 %v3802, 0.0
    %v3835 = vmax.f32 %v3803, 0.0
    %v3836 = vmax.f32 %v3804, 0.0
    %v3837 = vmax.f32 %v3805, 0.0
    %v3838 = vmax.f32 %v3806, 0.0
    %v3839 = vmax.f32 %v3807, 0.0
    %v3840 = vmax.f32 %v3808, 0.0
    %v3841 = vmax.f32 %v3809, 0.0
    %v3842 = vmax.f32 %v3810, 0.0
    %v3843 = vmax.f32 %v3811, 0.0
    %v3844 = vmax.f32 %v3812, 0.0
    %v3845 = vmax.f32 %v3813, 0.0
    %v3846 = vmax.f32 %v3814, 0.0
    %v3847 = vmax.f32 %v3815, 0.0
    %v3848 = vpack.c.bf16 %v3818, %v3816
    %v3849 = vpack.c.bf16 %v3819, %v3817
    %v3850 = vpack.c.bf16 %v3822, %v3820
    %v3851 = vpack.c.bf16 %v3823, %v3821
    %v3852 = vpack.c.bf16 %v3826, %v3824
    %v3853 = vpack.c.bf16 %v3827, %v3825
    %v3854 = vpack.c.bf16 %v3830, %v3828
    %v3855 = vpack.c.bf16 %v3831, %v3829
    %v3856 = vpack.c.bf16 %v3834, %v3832
    %v3857 = vpack.c.bf16 %v3835, %v3833
    %v3858 = vpack.c.bf16 %v3838, %v3836
    %v3859 = vpack.c.bf16 %v3839, %v3837
    %v3860 = vpack.c.bf16 %v3842, %v3840
    %v3861 = vpack.c.bf16 %v3843, %v3841
    %v3862 = vpack.c.bf16 %v3846, %v3844
    %v3863 = vpack.c.bf16 %v3847, %v3845
    %v3864 = vld [vmem:[#allocation6] sm:$0xff]
    %v3865 = vld [vmem:[#allocation6 + $0x8] sm:$0xff]
    %v3866 = vld [vmem:[#allocation6 + $0x10] sm:$0xff]
    %v3867 = vld [vmem:[#allocation6 + $0x18] sm:$0xff]
    %v3868 = vld [vmem:[#allocation6 + $0x20] sm:$0xff]
    %v3869 = vld [vmem:[#allocation6 + $0x28] sm:$0xff]
    %v3870 = vld [vmem:[#allocation6 + $0x30] sm:$0xff]
    %v3871 = vld [vmem:[#allocation6 + $0x38] sm:$0xff]
    %v3872 = vld [vmem:[#allocation6 + $0x40] sm:$0xff]
    %v3873 = vld [vmem:[#allocation6 + $0x48] sm:$0xff]
    %v3874 = vld [vmem:[#allocation6 + $0x50] sm:$0xff]
    %v3875 = vld [vmem:[#allocation6 + $0x58] sm:$0xff]
    %v3876 = vld [vmem:[#allocation6 + $0x60] sm:$0xff]
    %v3877 = vld [vmem:[#allocation6 + $0x68] sm:$0xff]
    %v3878 = vld [vmem:[#allocation6 + $0x70] sm:$0xff]
    %v3879 = vld [vmem:[#allocation6 + $0x78] sm:$0xff]
    %v3880 = vld [vmem:[#allocation6 + $0x80] sm:$0xff]
    %v3881 = vld [vmem:[#allocation6 + $0x88] sm:$0xff]
    %v3882 = vld [vmem:[#allocation6 + $0x90] sm:$0xff]
    %v3883 = vld [vmem:[#allocation6 + $0x98] sm:$0xff]
    %v3884 = vld [vmem:[#allocation6 + $0xa0] sm:$0xff]
    %v3885 = vld [vmem:[#allocation6 + $0xa8] sm:$0xff]
    %v3886 = vld [vmem:[#allocation6 + $0xb0] sm:$0xff]
    %v3887 = vld [vmem:[#allocation6 + $0xb8] sm:$0xff]
    %v3888 = vld [vmem:[#allocation6 + $0xc0] sm:$0xff]
    %v3889 = vld [vmem:[#allocation6 + $0xc8] sm:$0xff]
    %v3890 = vld [vmem:[#allocation6 + $0xd0] sm:$0xff]
    %v3891 = vld [vmem:[#allocation6 + $0xd8] sm:$0xff]
    %v3892 = vld [vmem:[#allocation6 + $0xe0] sm:$0xff]
    %v3893 = vld [vmem:[#allocation6 + $0xe8] sm:$0xff]
    %v3894 = vld [vmem:[#allocation6 + $0xf0] sm:$0xff]
    %v3895 = vld [vmem:[#allocation6 + $0xf8] sm:$0xff]
    %v3896 = vld [vmem:[#allocation7] sm:$0xff]
    %v3897 = vld [vmem:[#allocation7 + $0x8] sm:$0xff]
    %v3898 = vld [vmem:[#allocation7 + $0x10] sm:$0xff]
    %v3899 = vld [vmem:[#allocation7 + $0x18] sm:$0xff]
    %v3900 = vld [vmem:[#allocation7 + $0x20] sm:$0xff]
    %v3901 = vld [vmem:[#allocation7 + $0x28] sm:$0xff]
    %v3902 = vld [vmem:[#allocation7 + $0x30] sm:$0xff]
    %v3903 = vld [vmem:[#allocation7 + $0x38] sm:$0xff]
    %v3904 = vld [vmem:[#allocation7 + $0x40] sm:$0xff]
    %v3905 = vld [vmem:[#allocation7 + $0x48] sm:$0xff]
    %v3906 = vld [vmem:[#allocation7 + $0x50] sm:$0xff]
    %v3907 = vld [vmem:[#allocation7 + $0x58] sm:$0xff]
    %v3908 = vld [vmem:[#allocation7 + $0x60] sm:$0xff]
    %v3909 = vld [vmem:[#allocation7 + $0x68] sm:$0xff]
    %v3910 = vld [vmem:[#allocation7 + $0x70] sm:$0xff]
    %v3911 = vld [vmem:[#allocation7 + $0x78] sm:$0xff]
    %v3928 = vunpack.c.l.b16 %v3896
    %v3929 = vunpack.c.h.b16 %v3896
    %v3930 = vunpack.c.l.b16 %v3897
    %v3931 = vunpack.c.h.b16 %v3897
    %v3932 = vunpack.c.l.b16 %v3898
    %v3933 = vunpack.c.h.b16 %v3898
    %v3934 = vunpack.c.l.b16 %v3899
    %v3935 = vunpack.c.h.b16 %v3899
    %v3936 = vunpack.c.l.b16 %v3900
    %v3937 = vunpack.c.h.b16 %v3900
    %v3938 = vunpack.c.l.b16 %v3901
    %v3939 = vunpack.c.h.b16 %v3901
    %v3940 = vunpack.c.l.b16 %v3902
    %v3941 = vunpack.c.h.b16 %v3902
    %v3942 = vunpack.c.l.b16 %v3903
    %v3943 = vunpack.c.h.b16 %v3903
    %v3944 = vunpack.c.l.b16 %v3904
    %v3945 = vunpack.c.h.b16 %v3904
    %v3946 = vunpack.c.l.b16 %v3905
    %v3947 = vunpack.c.h.b16 %v3905
    %v3948 = vunpack.c.l.b16 %v3906
    %v3949 = vunpack.c.h.b16 %v3906
    %v3950 = vunpack.c.l.b16 %v3907
    %v3951 = vunpack.c.h.b16 %v3907
    %v3952 = vunpack.c.l.b16 %v3908
    %v3953 = vunpack.c.h.b16 %v3908
    %v3954 = vunpack.c.l.b16 %v3909
    %v3955 = vunpack.c.h.b16 %v3909
    %v3956 = vunpack.c.l.b16 %v3910
    %v3957 = vunpack.c.h.b16 %v3910
    %v3958 = vunpack.c.l.b16 %v3911
    %v3959 = vunpack.c.h.b16 %v3911
    %v3960 = vpack.c.b16 %v3930, %v3928
    %v3961 = vpack.c.b16 %v3931, %v3929
    %v3962 = vpack.c.b16 %v3934, %v3932
    %v3963 = vpack.c.b16 %v3935, %v3933
    %v3964 = vpack.c.b16 %v3938, %v3936
    %v3965 = vpack.c.b16 %v3939, %v3937
    %v3966 = vpack.c.b16 %v3942, %v3940
    %v3967 = vpack.c.b16 %v3943, %v3941
    %v3968 = vpack.c.b16 %v3946, %v3944
    %v3969 = vpack.c.b16 %v3947, %v3945
    %v3970 = vpack.c.b16 %v3950, %v3948
    %v3971 = vpack.c.b16 %v3951, %v3949
    %v3972 = vpack.c.b16 %v3954, %v3952
    %v3973 = vpack.c.b16 %v3955, %v3953
    %v3974 = vpack.c.b16 %v3958, %v3956
    %v3975 = vpack.c.b16 %v3959, %v3957
    %3992 = vmatpush.bf16.msra.mxu0 %v3974
    %3993 = vmatpush.bf16.msra.mxu0 %v3972
    %3994 = vmatpush.bf16.msra.mxu0 %v3970
    %3995 = vmatpush.bf16.msra.mxu0 %v3968
    %3996 = vmatpush.bf16.msra.mxu0 %v3966
    %3997 = vmatpush.bf16.msra.mxu0 %v3964
    %3998 = vmatpush.bf16.msra.mxu0 %v3962
    %3999 = vmatpush.bf16.msra.mxu0 %v3960
    %4000 = vmatmul.bf16.gmra.mxu0 %v189
    %v4001 = vpop.f32.mrf.mxu0
    %v4002 = vadd.f32 0.0, %v4001
    %v4003 = vpop.f32.mrf.mxu0
    %v4004 = vadd.f32 0.0, %v4003
    %4005 = vmatmul.bf16.gmra.mxu0 %v190
    %v4006 = vpop.f32.mrf.mxu0
    %v4007 = vadd.f32 0.0, %v4006
    %v4008 = vpop.f32.mrf.mxu0
    %v4009 = vadd.f32 0.0, %v4008
    %4010 = vmatmul.bf16.gmra.mxu0 %v191
    %v4011 = vpop.f32.mrf.mxu0
    %v4012 = vadd.f32 0.0, %v4011
    %v4013 = vpop.f32.mrf.mxu0
    %v4014 = vadd.f32 0.0, %v4013
    %4015 = vmatmul.bf16.gmra.mxu0 %v192
    %v4016 = vpop.f32.mrf.mxu0
    %v4017 = vadd.f32 0.0, %v4016
    %v4018 = vpop.f32.mrf.mxu0
    %v4019 = vadd.f32 0.0, %v4018
    %4020 = vmatmul.bf16.gmra.mxu0 %v193
    %v4021 = vpop.f32.mrf.mxu0
    %v4022 = vadd.f32 0.0, %v4021
    %v4023 = vpop.f32.mrf.mxu0
    %v4024 = vadd.f32 0.0, %v4023
    %4025 = vmatmul.bf16.gmra.mxu0 %v194
    %v4026 = vpop.f32.mrf.mxu0
    %v4027 = vadd.f32 0.0, %v4026
    %v4028 = vpop.f32.mrf.mxu0
    %v4029 = vadd.f32 0.0, %v4028
    %4030 = vmatmul.bf16.gmra.mxu0 %v195
    %v4031 = vpop.f32.mrf.mxu0
    %v4032 = vadd.f32 0.0, %v4031
    %v4033 = vpop.f32.mrf.mxu0
    %v4034 = vadd.f32 0.0, %v4033
    %4035 = vmatmul.bf16.gmra.mxu0 %v196
    %v4036 = vpop.f32.mrf.mxu0
    %v4037 = vadd.f32 0.0, %v4036
    %v4038 = vpop.f32.mrf.mxu0
    %v4039 = vadd.f32 0.0, %v4038
    %4040 = vdwg.mxu0
    %4041 = vmatpush.bf16.msra.mxu0 %v3975
    %4042 = vmatpush.bf16.msra.mxu0 %v3973
    %4043 = vmatpush.bf16.msra.mxu0 %v3971
    %4044 = vmatpush.bf16.msra.mxu0 %v3969
    %4045 = vmatpush.bf16.msra.mxu0 %v3967
    %4046 = vmatpush.bf16.msra.mxu0 %v3965
    %4047 = vmatpush.bf16.msra.mxu0 %v3963
    %4048 = vmatpush.bf16.msra.mxu0 %v3961
    %4049 = vmatmul.bf16.gmra.mxu0 %v189
    %v4050 = vpop.f32.mrf.mxu0
    %v4051 = vadd.f32 0.0, %v4050
    %v4052 = vpop.f32.mrf.mxu0
    %v4053 = vadd.f32 0.0, %v4052
    %4054 = vmatmul.bf16.gmra.mxu0 %v190
    %v4055 = vpop.f32.mrf.mxu0
    %v4056 = vadd.f32 0.0, %v4055
    %v4057 = vpop.f32.mrf.mxu0
    %v4058 = vadd.f32 0.0, %v4057
    %4059 = vmatmul.bf16.gmra.mxu0 %v191
    %v4060 = vpop.f32.mrf.mxu0
    %v4061 = vadd.f32 0.0, %v4060
    %v4062 = vpop.f32.mrf.mxu0
    %v4063 = vadd.f32 0.0, %v4062
    %4064 = vmatmul.bf16.gmra.mxu0 %v192
    %v4065 = vpop.f32.mrf.mxu0
    %v4066 = vadd.f32 0.0, %v4065
    %v4067 = vpop.f32.mrf.mxu0
    %v4068 = vadd.f32 0.0, %v4067
    %4069 = vmatmul.bf16.gmra.mxu0 %v193
    %v4070 = vpop.f32.mrf.mxu0
    %v4071 = vadd.f32 0.0, %v4070
    %v4072 = vpop.f32.mrf.mxu0
    %v4073 = vadd.f32 0.0, %v4072
    %4074 = vmatmul.bf16.gmra.mxu0 %v194
    %v4075 = vpop.f32.mrf.mxu0
    %v4076 = vadd.f32 0.0, %v4075
    %v4077 = vpop.f32.mrf.mxu0
    %v4078 = vadd.f32 0.0, %v4077
    %4079 = vmatmul.bf16.gmra.mxu0 %v195
    %v4080 = vpop.f32.mrf.mxu0
    %v4081 = vadd.f32 0.0, %v4080
    %v4082 = vpop.f32.mrf.mxu0
    %v4083 = vadd.f32 0.0, %v4082
    %4084 = vmatmul.bf16.gmra.mxu0 %v196
    %v4085 = vpop.f32.mrf.mxu0
    %v4086 = vadd.f32 0.0, %v4085
    %v4087 = vpop.f32.mrf.mxu0
    %v4088 = vadd.f32 0.0, %v4087
    %4089 = vdwg.mxu0
    %v4122 = vunpack.c.l.b16 %v3864
    %v4123 = vunpack.c.h.b16 %v3864
    %v4124 = vunpack.c.l.b16 %v3865
    %v4125 = vunpack.c.h.b16 %v3865
    %v4126 = vunpack.c.l.b16 %v3866
    %v4127 = vunpack.c.h.b16 %v3866
    %v4128 = vunpack.c.l.b16 %v3867
    %v4129 = vunpack.c.h.b16 %v3867
    %v4130 = vunpack.c.l.b16 %v3868
    %v4131 = vunpack.c.h.b16 %v3868
    %v4132 = vunpack.c.l.b16 %v3869
    %v4133 = vunpack.c.h.b16 %v3869
    %v4134 = vunpack.c.l.b16 %v3870
    %v4135 = vunpack.c.h.b16 %v3870
    %v4136 = vunpack.c.l.b16 %v3871
    %v4137 = vunpack.c.h.b16 %v3871
    %v4138 = vunpack.c.l.b16 %v3872
    %v4139 = vunpack.c.h.b16 %v3872
    %v4140 = vunpack.c.l.b16 %v3873
    %v4141 = vunpack.c.h.b16 %v3873
    %v4142 = vunpack.c.l.b16 %v3874
    %v4143 = vunpack.c.h.b16 %v3874
    %v4144 = vunpack.c.l.b16 %v3875
    %v4145 = vunpack.c.h.b16 %v3875
    %v4146 = vunpack.c.l.b16 %v3876
    %v4147 = vunpack.c.h.b16 %v3876
    %v4148 = vunpack.c.l.b16 %v3877
    %v4149 = vunpack.c.h.b16 %v3877
    %v4150 = vunpack.c.l.b16 %v3878
    %v4151 = vunpack.c.h.b16 %v3878
    %v4152 = vunpack.c.l.b16 %v3879
    %v4153 = vunpack.c.h.b16 %v3879
    %v4154 = vunpack.c.l.b16 %v3880
    %v4155 = vunpack.c.h.b16 %v3880
    %v4156 = vunpack.c.l.b16 %v3881
    %v4157 = vunpack.c.h.b16 %v3881
    %v4158 = vunpack.c.l.b16 %v3882
    %v4159 = vunpack.c.h.b16 %v3882
    %v4160 = vunpack.c.l.b16 %v3883
    %v4161 = vunpack.c.h.b16 %v3883
    %v4162 = vunpack.c.l.b16 %v3884
    %v4163 = vunpack.c.h.b16 %v3884
    %v4164 = vunpack.c.l.b16 %v3885
    %v4165 = vunpack.c.h.b16 %v3885
    %v4166 = vunpack.c.l.b16 %v3886
    %v4167 = vunpack.c.h.b16 %v3886
    %v4168 = vunpack.c.l.b16 %v3887
    %v4169 = vunpack.c.h.b16 %v3887
    %v4170 = vunpack.c.l.b16 %v3888
    %v4171 = vunpack.c.h.b16 %v3888
    %v4172 = vunpack.c.l.b16 %v3889
    %v4173 = vunpack.c.h.b16 %v3889
    %v4174 = vunpack.c.l.b16 %v3890
    %v4175 = vunpack.c.h.b16 %v3890
    %v4176 = vunpack.c.l.b16 %v3891
    %v4177 = vunpack.c.h.b16 %v3891
    %v4178 = vunpack.c.l.b16 %v3892
    %v4179 = vunpack.c.h.b16 %v3892
    %v4180 = vunpack.c.l.b16 %v3893
    %v4181 = vunpack.c.h.b16 %v3893
    %v4182 = vunpack.c.l.b16 %v3894
    %v4183 = vunpack.c.h.b16 %v3894
    %v4184 = vunpack.c.l.b16 %v3895
    %v4185 = vunpack.c.h.b16 %v3895
    %v4186 = vpack.c.b16 %v4124, %v4122
    %v4187 = vpack.c.b16 %v4125, %v4123
    %v4188 = vpack.c.b16 %v4128, %v4126
    %v4189 = vpack.c.b16 %v4129, %v4127
    %v4190 = vpack.c.b16 %v4132, %v4130
    %v4191 = vpack.c.b16 %v4133, %v4131
    %v4192 = vpack.c.b16 %v4136, %v4134
    %v4193 = vpack.c.b16 %v4137, %v4135
    %v4194 = vpack.c.b16 %v4140, %v4138
    %v4195 = vpack.c.b16 %v4141, %v4139
    %v4196 = vpack.c.b16 %v4144, %v4142
    %v4197 = vpack.c.b16 %v4145, %v4143
    %v4198 = vpack.c.b16 %v4148, %v4146
    %v4199 = vpack.c.b16 %v4149, %v4147
    %v4200 = vpack.c.b16 %v4152, %v4150
    %v4201 = vpack.c.b16 %v4153, %v4151
    %v4202 = vpack.c.b16 %v4156, %v4154
    %v4203 = vpack.c.b16 %v4157, %v4155
    %v4204 = vpack.c.b16 %v4160, %v4158
    %v4205 = vpack.c.b16 %v4161, %v4159
    %v4206 = vpack.c.b16 %v4164, %v4162
    %v4207 = vpack.c.b16 %v4165, %v4163
    %v4208 = vpack.c.b16 %v4168, %v4166
    %v4209 = vpack.c.b16 %v4169, %v4167
    %v4210 = vpack.c.b16 %v4172, %v4170
    %v4211 = vpack.c.b16 %v4173, %v4171
    %v4212 = vpack.c.b16 %v4176, %v4174
    %v4213 = vpack.c.b16 %v4177, %v4175
    %v4214 = vpack.c.b16 %v4180, %v4178
    %v4215 = vpack.c.b16 %v4181, %v4179
    %v4216 = vpack.c.b16 %v4184, %v4182
    %v4217 = vpack.c.b16 %v4185, %v4183
    %4250 = vmatpush.bf16.msra.mxu0 %v4200
    %4251 = vmatpush.bf16.msra.mxu0 %v4198
    %4252 = vmatpush.bf16.msra.mxu0 %v4196
    %4253 = vmatpush.bf16.msra.mxu0 %v4194
    %4254 = vmatpush.bf16.msra.mxu0 %v4192
    %4255 = vmatpush.bf16.msra.mxu0 %v4190
    %4256 = vmatpush.bf16.msra.mxu0 %v4188
    %4257 = vmatpush.bf16.msra.mxu0 %v4186
    %4258 = vmatmul.bf16.gmra.mxu0 %v3848
    %v4259 = vpop.f32.mrf.mxu0
    %v4260 = vadd.f32 %v4002, %v4259
    %v4261 = vpop.f32.mrf.mxu0
    %v4262 = vadd.f32 %v4004, %v4261
    %4263 = vmatmul.bf16.gmra.mxu0 %v3850
    %v4264 = vpop.f32.mrf.mxu0
    %v4265 = vadd.f32 %v4007, %v4264
    %v4266 = vpop.f32.mrf.mxu0
    %v4267 = vadd.f32 %v4009, %v4266
    %4268 = vmatmul.bf16.gmra.mxu0 %v3852
    %v4269 = vpop.f32.mrf.mxu0
    %v4270 = vadd.f32 %v4012, %v4269
    %v4271 = vpop.f32.mrf.mxu0
    %v4272 = vadd.f32 %v4014, %v4271
    %4273 = vmatmul.bf16.gmra.mxu0 %v3854
    %v4274 = vpop.f32.mrf.mxu0
    %v4275 = vadd.f32 %v4017, %v4274
    %v4276 = vpop.f32.mrf.mxu0
    %v4277 = vadd.f32 %v4019, %v4276
    %4278 = vmatmul.bf16.gmra.mxu0 %v3856
    %v4279 = vpop.f32.mrf.mxu0
    %v4280 = vadd.f32 %v4022, %v4279
    %v4281 = vpop.f32.mrf.mxu0
    %v4282 = vadd.f32 %v4024, %v4281
    %4283 = vmatmul.bf16.gmra.mxu0 %v3858
    %v4284 = vpop.f32.mrf.mxu0
    %v4285 = vadd.f32 %v4027, %v4284
    %v4286 = vpop.f32.mrf.mxu0
    %v4287 = vadd.f32 %v4029, %v4286
    %4288 = vmatmul.bf16.gmra.mxu0 %v3860
    %v4289 = vpop.f32.mrf.mxu0
    %v4290 = vadd.f32 %v4032, %v4289
    %v4291 = vpop.f32.mrf.mxu0
    %v4292 = vadd.f32 %v4034, %v4291
    %4293 = vmatmul.bf16.gmra.mxu0 %v3862
    %v4294 = vpop.f32.mrf.mxu0
    %v4295 = vadd.f32 %v4037, %v4294
    %v4296 = vpop.f32.mrf.mxu0
    %v4297 = vadd.f32 %v4039, %v4296
    %4298 = vdwg.mxu0
    %4299 = vmatpush.bf16.msra.mxu0 %v4216
    %4300 = vmatpush.bf16.msra.mxu0 %v4214
    %4301 = vmatpush.bf16.msra.mxu0 %v4212
    %4302 = vmatpush.bf16.msra.mxu0 %v4210
    %4303 = vmatpush.bf16.msra.mxu0 %v4208
    %4304 = vmatpush.bf16.msra.mxu0 %v4206
    %4305 = vmatpush.bf16.msra.mxu0 %v4204
    %4306 = vmatpush.bf16.msra.mxu0 %v4202
    %4307 = vmatmul.bf16.gmra.mxu0 %v3849
    %v4308 = vpop.f32.mrf.mxu0
    %v4309 = vadd.f32 %v4260, %v4308
    %v4310 = vpop.f32.mrf.mxu0
    %v4311 = vadd.f32 %v4262, %v4310
    %4312 = vmatmul.bf16.gmra.mxu0 %v3851
    %v4313 = vpop.f32.mrf.mxu0
    %v4314 = vadd.f32 %v4265, %v4313
    %v4315 = vpop.f32.mrf.mxu0
    %v4316 = vadd.f32 %v4267, %v4315
    %4317 = vmatmul.bf16.gmra.mxu0 %v3853
    %v4318 = vpop.f32.mrf.mxu0
    %v4319 = vadd.f32 %v4270, %v4318
    %v4320 = vpop.f32.mrf.mxu0
    %v4321 = vadd.f32 %v4272, %v4320
    %4322 = vmatmul.bf16.gmra.mxu0 %v3855
    %v4323 = vpop.f32.mrf.mxu0
    %v4324 = vadd.f32 %v4275, %v4323
    %v4325 = vpop.f32.mrf.mxu0
    %v4326 = vadd.f32 %v4277, %v4325
    %4327 = vmatmul.bf16.gmra.mxu0 %v3857
    %v4328 = vpop.f32.mrf.mxu0
    %v4329 = vadd.f32 %v4280, %v4328
    %v4330 = vpop.f32.mrf.mxu0
    %v4331 = vadd.f32 %v4282, %v4330
    %4332 = vmatmul.bf16.gmra.mxu0 %v3859
    %v4333 = vpop.f32.mrf.mxu0
    %v4334 = vadd.f32 %v4285, %v4333
    %v4335 = vpop.f32.mrf.mxu0
    %v4336 = vadd.f32 %v4287, %v4335
    %4337 = vmatmul.bf16.gmra.mxu0 %v3861
    %v4338 = vpop.f32.mrf.mxu0
    %v4339 = vadd.f32 %v4290, %v4338
    %v4340 = vpop.f32.mrf.mxu0
    %v4341 = vadd.f32 %v4292, %v4340
    %4342 = vmatmul.bf16.gmra.mxu0 %v3863
    %v4343 = vpop.f32.mrf.mxu0
    %v4344 = vadd.f32 %v4295, %v4343
    %v4345 = vpop.f32.mrf.mxu0
    %v4346 = vadd.f32 %v4297, %v4345
    %4347 = vdwg.mxu0
    %4348 = vmatpush.bf16.msra.mxu0 %v4201
    %4349 = vmatpush.bf16.msra.mxu0 %v4199
    %4350 = vmatpush.bf16.msra.mxu0 %v4197
    %4351 = vmatpush.bf16.msra.mxu0 %v4195
    %4352 = vmatpush.bf16.msra.mxu0 %v4193
    %4353 = vmatpush.bf16.msra.mxu0 %v4191
    %4354 = vmatpush.bf16.msra.mxu0 %v4189
    %4355 = vmatpush.bf16.msra.mxu0 %v4187
    %4356 = vmatmul.bf16.gmra.mxu0 %v3848
    %v4357 = vpop.f32.mrf.mxu0
    %v4358 = vadd.f32 %v4051, %v4357
    %v4359 = vpop.f32.mrf.mxu0
    %v4360 = vadd.f32 %v4053, %v4359
    %4361 = vmatmul.bf16.gmra.mxu0 %v3850
    %v4362 = vpop.f32.mrf.mxu0
    %v4363 = vadd.f32 %v4056, %v4362
    %v4364 = vpop.f32.mrf.mxu0
    %v4365 = vadd.f32 %v4058, %v4364
    %4366 = vmatmul.bf16.gmra.mxu0 %v3852
    %v4367 = vpop.f32.mrf.mxu0
    %v4368 = vadd.f32 %v4061, %v4367
    %v4369 = vpop.f32.mrf.mxu0
    %v4370 = vadd.f32 %v4063, %v4369
    %4371 = vmatmul.bf16.gmra.mxu0 %v3854
    %v4372 = vpop.f32.mrf.mxu0
    %v4373 = vadd.f32 %v4066, %v4372
    %v4374 = vpop.f32.mrf.mxu0
    %v4375 = vadd.f32 %v4068, %v4374
    %4376 = vmatmul.bf16.gmra.mxu0 %v3856
    %v4377 = vpop.f32.mrf.mxu0
    %v4378 = vadd.f32 %v4071, %v4377
    %v4379 = vpop.f32.mrf.mxu0
    %v4380 = vadd.f32 %v4073, %v4379
    %4381 = vmatmul.bf16.gmra.mxu0 %v3858
    %v4382 = vpop.f32.mrf.mxu0
    %v4383 = vadd.f32 %v4076, %v4382
    %v4384 = vpop.f32.mrf.mxu0
    %v4385 = vadd.f32 %v4078, %v4384
    %4386 = vmatmul.bf16.gmra.mxu0 %v3860
    %v4387 = vpop.f32.mrf.mxu0
    %v4388 = vadd.f32 %v4081, %v4387
    %v4389 = vpop.f32.mrf.mxu0
    %v4390 = vadd.f32 %v4083, %v4389
    %4391 = vmatmul.bf16.gmra.mxu0 %v3862
    %v4392 = vpop.f32.mrf.mxu0
    %v4393 = vadd.f32 %v4086, %v4392
    %v4394 = vpop.f32.mrf.mxu0
    %v4395 = vadd.f32 %v4088, %v4394
    %4396 = vdwg.mxu0
    %4397 = vmatpush.bf16.msra.mxu0 %v4217
    %4398 = vmatpush.bf16.msra.mxu0 %v4215
    %4399 = vmatpush.bf16.msra.mxu0 %v4213
    %4400 = vmatpush.bf16.msra.mxu0 %v4211
    %4401 = vmatpush.bf16.msra.mxu0 %v4209
    %4402 = vmatpush.bf16.msra.mxu0 %v4207
    %4403 = vmatpush.bf16.msra.mxu0 %v4205
    %4404 = vmatpush.bf16.msra.mxu0 %v4203
    %4405 = vmatmul.bf16.gmra.mxu0 %v3849
    %v4406 = vpop.f32.mrf.mxu0
    %v4407 = vadd.f32 %v4358, %v4406
    %v4408 = vpop.f32.mrf.mxu0
    %v4409 = vadd.f32 %v4360, %v4408
    %4410 = vmatmul.bf16.gmra.mxu0 %v3851
    %v4411 = vpop.f32.mrf.mxu0
    %v4412 = vadd.f32 %v4363, %v4411
    %v4413 = vpop.f32.mrf.mxu0
    %v4414 = vadd.f32 %v4365, %v4413
    %4415 = vmatmul.bf16.gmra.mxu0 %v3853
    %v4416 = vpop.f32.mrf.mxu0
    %v4417 = vadd.f32 %v4368, %v4416
    %v4418 = vpop.f32.mrf.mxu0
    %v4419 = vadd.f32 %v4370, %v4418
    %4420 = vmatmul.bf16.gmra.mxu0 %v3855
    %v4421 = vpop.f32.mrf.mxu0
    %v4422 = vadd.f32 %v4373, %v4421
    %v4423 = vpop.f32.mrf.mxu0
    %v4424 = vadd.f32 %v4375, %v4423
    %4425 = vmatmul.bf16.gmra.mxu0 %v3857
    %v4426 = vpop.f32.mrf.mxu0
    %v4427 = vadd.f32 %v4378, %v4426
    %v4428 = vpop.f32.mrf.mxu0
    %v4429 = vadd.f32 %v4380, %v4428
    %4430 = vmatmul.bf16.gmra.mxu0 %v3859
    %v4431 = vpop.f32.mrf.mxu0
    %v4432 = vadd.f32 %v4383, %v4431
    %v4433 = vpop.f32.mrf.mxu0
    %v4434 = vadd.f32 %v4385, %v4433
    %4435 = vmatmul.bf16.gmra.mxu0 %v3861
    %v4436 = vpop.f32.mrf.mxu0
    %v4437 = vadd.f32 %v4388, %v4436
    %v4438 = vpop.f32.mrf.mxu0
    %v4439 = vadd.f32 %v4390, %v4438
    %4440 = vmatmul.bf16.gmra.mxu0 %v3863
    %v4441 = vpop.f32.mrf.mxu0
    %v4442 = vadd.f32 %v4393, %v4441
    %v4443 = vpop.f32.mrf.mxu0
    %v4444 = vadd.f32 %v4395, %v4443
    %4445 = vdwg.mxu0
    %s4446 = scalar_lea.vmem %s5, 4
    %v4447 = vld [vmem:[%s4446] ss:$8 sm:$0x3]
    %v4449 = vperm.slane %v4447, 0
    %v4450 = vperm.slane %v4447, 1
    %v4453 = vadd.f32 %v4309, %v4449
    %v4454 = vadd.f32 %v4407, %v4450
    %v4455 = vadd.f32 %v4311, %v4449
    %v4456 = vadd.f32 %v4409, %v4450
    %v4457 = vadd.f32 %v4314, %v4449
    %v4458 = vadd.f32 %v4412, %v4450
    %v4459 = vadd.f32 %v4316, %v4449
    %v4460 = vadd.f32 %v4414, %v4450
    %v4461 = vadd.f32 %v4319, %v4449
    %v4462 = vadd.f32 %v4417, %v4450
    %v4463 = vadd.f32 %v4321, %v4449
    %v4464 = vadd.f32 %v4419, %v4450
    %v4465 = vadd.f32 %v4324, %v4449
    %v4466 = vadd.f32 %v4422, %v4450
    %v4467 = vadd.f32 %v4326, %v4449
    %v4468 = vadd.f32 %v4424, %v4450
    %v4469 = vadd.f32 %v4329, %v4449
    %v4470 = vadd.f32 %v4427, %v4450
    %v4471 = vadd.f32 %v4331, %v4449
    %v4472 = vadd.f32 %v4429, %v4450
    %v4473 = vadd.f32 %v4334, %v4449
    %v4474 = vadd.f32 %v4432, %v4450
    %v4475 = vadd.f32 %v4336, %v4449
    %v4476 = vadd.f32 %v4434, %v4450
    %v4477 = vadd.f32 %v4339, %v4449
    %v4478 = vadd.f32 %v4437, %v4450
    %v4479 = vadd.f32 %v4341, %v4449
    %v4480 = vadd.f32 %v4439, %v4450
    %v4481 = vadd.f32 %v4344, %v4449
    %v4482 = vadd.f32 %v4442, %v4450
    %v4483 = vadd.f32 %v4346, %v4449
    %v4484 = vadd.f32 %v4444, %v4450
    %v4485 = vadd.f32 %v4453, %v4454
    %4486 = vadd.xlane.f32.xlu0 %v4485
    %v4487 = vpop.xlane.xlu0 %4486
    %v4488 = vadd.f32 %v4455, %v4456
    %4489 = vadd.xlane.f32.xlu0 %v4488
    %v4490 = vpop.xlane.xlu0 %4489
    %v4491 = vadd.f32 %v4457, %v4458
    %4492 = vadd.xlane.f32.xlu0 %v4491
    %v4493 = vpop.xlane.xlu0 %4492
    %v4494 = vadd.f32 %v4459, %v4460
    %4495 = vadd.xlane.f32.xlu0 %v4494
    %v4496 = vpop.xlane.xlu0 %4495
    %v4497 = vadd.f32 %v4461, %v4462
    %4498 = vadd.xlane.f32.xlu0 %v4497
    %v4499 = vpop.xlane.xlu0 %4498
    %v4500 = vadd.f32 %v4463, %v4464
    %4501 = vadd.xlane.f32.xlu0 %v4500
    %v4502 = vpop.xlane.xlu0 %4501
    %v4503 = vadd.f32 %v4465, %v4466
    %4504 = vadd.xlane.f32.xlu0 %v4503
    %v4505 = vpop.xlane.xlu0 %4504
    %v4506 = vadd.f32 %v4467, %v4468
    %4507 = vadd.xlane.f32.xlu0 %v4506
    %v4508 = vpop.xlane.xlu0 %4507
    %v4509 = vadd.f32 %v4469, %v4470
    %4510 = vadd.xlane.f32.xlu0 %v4509
    %v4511 = vpop.xlane.xlu0 %4510
    %v4512 = vadd.f32 %v4471, %v4472
    %4513 = vadd.xlane.f32.xlu0 %v4512
    %v4514 = vpop.xlane.xlu0 %4513
    %v4515 = vadd.f32 %v4473, %v4474
    %4516 = vadd.xlane.f32.xlu0 %v4515
    %v4517 = vpop.xlane.xlu0 %4516
    %v4518 = vadd.f32 %v4475, %v4476
    %4519 = vadd.xlane.f32.xlu0 %v4518
    %v4520 = vpop.xlane.xlu0 %4519
    %v4521 = vadd.f32 %v4477, %v4478
    %4522 = vadd.xlane.f32.xlu0 %v4521
    %v4523 = vpop.xlane.xlu0 %4522
    %v4524 = vadd.f32 %v4479, %v4480
    %4525 = vadd.xlane.f32.xlu0 %v4524
    %v4526 = vpop.xlane.xlu0 %4525
    %v4527 = vadd.f32 %v4481, %v4482
    %4528 = vadd.xlane.f32.xlu0 %v4527
    %v4529 = vpop.xlane.xlu0 %4528
    %v4530 = vadd.f32 %v4483, %v4484
    %4531 = vadd.xlane.f32.xlu0 %v4530
    %v4532 = vpop.xlane.xlu0 %4531
    %v4533 = vmul.f32 %v4453, %v4453
    %v4534 = vmul.f32 %v4454, %v4454
    %v4535 = vmul.f32 %v4455, %v4455
    %v4536 = vmul.f32 %v4456, %v4456
    %v4537 = vmul.f32 %v4457, %v4457
    %v4538 = vmul.f32 %v4458, %v4458
    %v4539 = vmul.f32 %v4459, %v4459
    %v4540 = vmul.f32 %v4460, %v4460
    %v4541 = vmul.f32 %v4461, %v4461
    %v4542 = vmul.f32 %v4462, %v4462
    %v4543 = vmul.f32 %v4463, %v4463
    %v4544 = vmul.f32 %v4464, %v4464
    %v4545 = vmul.f32 %v4465, %v4465
    %v4546 = vmul.f32 %v4466, %v4466
    %v4547 = vmul.f32 %v4467, %v4467
    %v4548 = vmul.f32 %v4468, %v4468
    %v4549 = vmul.f32 %v4469, %v4469
    %v4550 = vmul.f32 %v4470, %v4470
    %v4551 = vmul.f32 %v4471, %v4471
    %v4552 = vmul.f32 %v4472, %v4472
    %v4553 = vmul.f32 %v4473, %v4473
    %v4554 = vmul.f32 %v4474, %v4474
    %v4555 = vmul.f32 %v4475, %v4475
    %v4556 = vmul.f32 %v4476, %v4476
    %v4557 = vmul.f32 %v4477, %v4477
    %v4558 = vmul.f32 %v4478, %v4478
    %v4559 = vmul.f32 %v4479, %v4479
    %v4560 = vmul.f32 %v4480, %v4480
    %v4561 = vmul.f32 %v4481, %v4481
    %v4562 = vmul.f32 %v4482, %v4482
    %v4563 = vmul.f32 %v4483, %v4483
    %v4564 = vmul.f32 %v4484, %v4484
    %v4565 = vadd.f32 %v4533, %v4534
    %4566 = vadd.xlane.f32.xlu0 %v4565
    %v4567 = vpop.xlane.xlu0 %4566
    %v4568 = vadd.f32 %v4535, %v4536
    %4569 = vadd.xlane.f32.xlu0 %v4568
    %v4570 = vpop.xlane.xlu0 %4569
    %v4571 = vadd.f32 %v4537, %v4538
    %4572 = vadd.xlane.f32.xlu0 %v4571
    %v4573 = vpop.xlane.xlu0 %4572
    %v4574 = vadd.f32 %v4539, %v4540
    %4575 = vadd.xlane.f32.xlu0 %v4574
    %v4576 = vpop.xlane.xlu0 %4575
    %v4577 = vadd.f32 %v4541, %v4542
    %4578 = vadd.xlane.f32.xlu0 %v4577
    %v4579 = vpop.xlane.xlu0 %4578
    %v4580 = vadd.f32 %v4543, %v4544
    %4581 = vadd.xlane.f32.xlu0 %v4580
    %v4582 = vpop.xlane.xlu0 %4581
    %v4583 = vadd.f32 %v4545, %v4546
    %4584 = vadd.xlane.f32.xlu0 %v4583
    %v4585 = vpop.xlane.xlu0 %4584
    %v4586 = vadd.f32 %v4547, %v4548
    %4587 = vadd.xlane.f32.xlu0 %v4586
    %v4588 = vpop.xlane.xlu0 %4587
    %v4589 = vadd.f32 %v4549, %v4550
    %4590 = vadd.xlane.f32.xlu0 %v4589
    %v4591 = vpop.xlane.xlu0 %4590
    %v4592 = vadd.f32 %v4551, %v4552
    %4593 = vadd.xlane.f32.xlu0 %v4592
    %v4594 = vpop.xlane.xlu0 %4593
    %v4595 = vadd.f32 %v4553, %v4554
    %4596 = vadd.xlane.f32.xlu0 %v4595
    %v4597 = vpop.xlane.xlu0 %4596
    %v4598 = vadd.f32 %v4555, %v4556
    %4599 = vadd.xlane.f32.xlu0 %v4598
    %v4600 = vpop.xlane.xlu0 %4599
    %v4601 = vadd.f32 %v4557, %v4558
    %4602 = vadd.xlane.f32.xlu0 %v4601
    %v4603 = vpop.xlane.xlu0 %4602
    %v4604 = vadd.f32 %v4559, %v4560
    %4605 = vadd.xlane.f32.xlu0 %v4604
    %v4606 = vpop.xlane.xlu0 %4605
    %v4607 = vadd.f32 %v4561, %v4562
    %4608 = vadd.xlane.f32.xlu0 %v4607
    %v4609 = vpop.xlane.xlu0 %4608
    %v4610 = vadd.f32 %v4563, %v4564
    %4611 = vadd.xlane.f32.xlu0 %v4610
    %v4612 = vpop.xlane.xlu0 %4611
    %v4613 = vmul.f32 %v4487, 0.00390625
    %v4614 = vmul.f32 %v4490, 0.00390625
    %v4615 = vmul.f32 %v4493, 0.00390625
    %v4616 = vmul.f32 %v4496, 0.00390625
    %v4617 = vmul.f32 %v4499, 0.00390625
    %v4618 = vmul.f32 %v4502, 0.00390625
    %v4619 = vmul.f32 %v4505, 0.00390625
    %v4620 = vmul.f32 %v4508, 0.00390625
    %v4621 = vmul.f32 %v4511, 0.00390625
    %v4622 = vmul.f32 %v4514, 0.00390625
    %v4623 = vmul.f32 %v4517, 0.00390625
    %v4624 = vmul.f32 %v4520, 0.00390625
    %v4625 = vmul.f32 %v4523, 0.00390625
    %v4626 = vmul.f32 %v4526, 0.00390625
    %v4627 = vmul.f32 %v4529, 0.00390625
    %v4628 = vmul.f32 %v4532, 0.00390625
    %v4629 = vmul.f32 %v4567, 0.00390625
    %v4630 = vmul.f32 %v4570, 0.00390625
    %v4631 = vmul.f32 %v4573, 0.00390625
    %v4632 = vmul.f32 %v4576, 0.00390625
    %v4633 = vmul.f32 %v4579, 0.00390625
    %v4634 = vmul.f32 %v4582, 0.00390625
    %v4635 = vmul.f32 %v4585, 0.00390625
    %v4636 = vmul.f32 %v4588, 0.00390625
    %v4637 = vmul.f32 %v4591, 0.00390625
    %v4638 = vmul.f32 %v4594, 0.00390625
    %v4639 = vmul.f32 %v4597, 0.00390625
    %v4640 = vmul.f32 %v4600, 0.00390625
    %v4641 = vmul.f32 %v4603, 0.00390625
    %v4642 = vmul.f32 %v4606, 0.00390625
    %v4643 = vmul.f32 %v4609, 0.00390625
    %v4644 = vmul.f32 %v4612, 0.00390625
    %v4645 = vmul.f32 %v4613, %v4613
    %v4646 = vmul.f32 %v4614, %v4614
    %v4647 = vmul.f32 %v4615, %v4615
    %v4648 = vmul.f32 %v4616, %v4616
    %v4649 = vmul.f32 %v4617, %v4617
    %v4650 = vmul.f32 %v4618, %v4618
    %v4651 = vmul.f32 %v4619, %v4619
    %v4652 = vmul.f32 %v4620, %v4620
    %v4653 = vmul.f32 %v4621, %v4621
    %v4654 = vmul.f32 %v4622, %v4622
    %v4655 = vmul.f32 %v4623, %v4623
    %v4656 = vmul.f32 %v4624, %v4624
    %v4657 = vmul.f32 %v4625, %v4625
    %v4658 = vmul.f32 %v4626, %v4626
    %v4659 = vmul.f32 %v4627, %v4627
    %v4660 = vmul.f32 %v4628, %v4628
    %v4661 = vsub.f32 %v4629, %v4645
    %v4662 = vsub.f32 %v4630, %v4646
    %v4663 = vsub.f32 %v4631, %v4647
    %v4664 = vsub.f32 %v4632, %v4648
    %v4665 = vsub.f32 %v4633, %v4649
    %v4666 = vsub.f32 %v4634, %v4650
    %v4667 = vsub.f32 %v4635, %v4651
    %v4668 = vsub.f32 %v4636, %v4652
    %v4669 = vsub.f32 %v4637, %v4653
    %v4670 = vsub.f32 %v4638, %v4654
    %v4671 = vsub.f32 %v4639, %v4655
    %v4672 = vsub.f32 %v4640, %v4656
    %v4673 = vsub.f32 %v4641, %v4657
    %v4674 = vsub.f32 %v4642, %v4658
    %v4675 = vsub.f32 %v4643, %v4659
    %v4676 = vsub.f32 %v4644, %v4660
    %v4677 = vmax.f32 %v4661, 0.0
    %v4678 = vmax.f32 %v4662, 0.0
    %v4679 = vmax.f32 %v4663, 0.0
    %v4680 = vmax.f32 %v4664, 0.0
    %v4681 = vmax.f32 %v4665, 0.0
    %v4682 = vmax.f32 %v4666, 0.0
    %v4683 = vmax.f32 %v4667, 0.0
    %v4684 = vmax.f32 %v4668, 0.0
    %v4685 = vmax.f32 %v4669, 0.0
    %v4686 = vmax.f32 %v4670, 0.0
    %v4687 = vmax.f32 %v4671, 0.0
    %v4688 = vmax.f32 %v4672, 0.0
    %v4689 = vmax.f32 %v4673, 0.0
    %v4690 = vmax.f32 %v4674, 0.0
    %v4691 = vmax.f32 %v4675, 0.0
    %v4692 = vmax.f32 %v4676, 0.0
    %v4693 = vadd.f32 %v4677, 1e-05
    %v4694 = vadd.f32 %v4678, 1e-05
    %v4695 = vadd.f32 %v4679, 1e-05
    %v4696 = vadd.f32 %v4680, 1e-05
    %v4697 = vadd.f32 %v4681, 1e-05
    %v4698 = vadd.f32 %v4682, 1e-05
    %v4699 = vadd.f32 %v4683, 1e-05
    %v4700 = vadd.f32 %v4684, 1e-05
    %v4701 = vadd.f32 %v4685, 1e-05
    %v4702 = vadd.f32 %v4686, 1e-05
    %v4703 = vadd.f32 %v4687, 1e-05
    %v4704 = vadd.f32 %v4688, 1e-05
    %v4705 = vadd.f32 %v4689, 1e-05
    %v4706 = vadd.f32 %v4690, 1e-05
    %v4707 = vadd.f32 %v4691, 1e-05
    %v4708 = vadd.f32 %v4692, 1e-05
    %v4709 = vrsqrt.pop %v4693
    %v4710 = vmul.f32 %v4709, %v4693
    %v4711 = vmul.f32 %v4710, %v4709
    %v4712 = vmul.f32 0.5, %v4711
    %v4713 = vsub.f32 1.5, %v4712
    %v4714 = vmul.f32 %v4709, %v4713
    %vm4715 = vweird.f32 %v4693
    %vm4716 = vweird.f32 %v4709
    %vm4717 = vmor %vm4715, %vm4716
    %v4718 = vsel %vm4717, %v4709, %v4714
    %v4719 = vrsqrt.pop %v4694
    %v4720 = vmul.f32 %v4719, %v4694
    %v4721 = vmul.f32 %v4720, %v4719
    %v4722 = vmul.f32 0.5, %v4721
    %v4723 = vsub.f32 1.5, %v4722
    %v4724 = vmul.f32 %v4719, %v4723
    %vm4725 = vweird.f32 %v4694
    %vm4726 = vweird.f32 %v4719
    %vm4727 = vmor %vm4725, %vm4726
    %v4728 = vsel %vm4727, %v4719, %v4724
    %v4729 = vrsqrt.pop %v4695
    %v4730 = vmul.f32 %v4729, %v4695
    %v4731 = vmul.f32 %v4730, %v4729
    %v4732 = vmul.f32 0.5, %v4731
    %v4733 = vsub.f32 1.5, %v4732
    %v4734 = vmul.f32 %v4729, %v4733
    %vm4735 = vweird.f32 %v4695
    %vm4736 = vweird.f32 %v4729
    %vm4737 = vmor %vm4735, %vm4736
    %v4738 = vsel %vm4737, %v4729, %v4734
    %v4739 = vrsqrt.pop %v4696
    %v4740 = vmul.f32 %v4739, %v4696
    %v4741 = vmul.f32 %v4740, %v4739
    %v4742 = vmul.f32 0.5, %v4741
    %v4743 = vsub.f32 1.5, %v4742
    %v4744 = vmul.f32 %v4739, %v4743
    %vm4745 = vweird.f32 %v4696
    %vm4746 = vweird.f32 %v4739
    %vm4747 = vmor %vm4745, %vm4746
    %v4748 = vsel %vm4747, %v4739, %v4744
    %v4749 = vrsqrt.pop %v4697
    %v4750 = vmul.f32 %v4749, %v4697
    %v4751 = vmul.f32 %v4750, %v4749
    %v4752 = vmul.f32 0.5, %v4751
    %v4753 = vsub.f32 1.5, %v4752
    %v4754 = vmul.f32 %v4749, %v4753
    %vm4755 = vweird.f32 %v4697
    %vm4756 = vweird.f32 %v4749
    %vm4757 = vmor %vm4755, %vm4756
    %v4758 = vsel %vm4757, %v4749, %v4754
    %v4759 = vrsqrt.pop %v4698
    %v4760 = vmul.f32 %v4759, %v4698
    %v4761 = vmul.f32 %v4760, %v4759
    %v4762 = vmul.f32 0.5, %v4761
    %v4763 = vsub.f32 1.5, %v4762
    %v4764 = vmul.f32 %v4759, %v4763
    %vm4765 = vweird.f32 %v4698
    %vm4766 = vweird.f32 %v4759
    %vm4767 = vmor %vm4765, %vm4766
    %v4768 = vsel %vm4767, %v4759, %v4764
    %v4769 = vrsqrt.pop %v4699
    %v4770 = vmul.f32 %v4769, %v4699
    %v4771 = vmul.f32 %v4770, %v4769
    %v4772 = vmul.f32 0.5, %v4771
    %v4773 = vsub.f32 1.5, %v4772
    %v4774 = vmul.f32 %v4769, %v4773
    %vm4775 = vweird.f32 %v4699
    %vm4776 = vweird.f32 %v4769
    %vm4777 = vmor %vm4775, %vm4776
    %v4778 = vsel %vm4777, %v4769, %v4774
    %v4779 = vrsqrt.pop %v4700
    %v4780 = vmul.f32 %v4779, %v4700
    %v4781 = vmul.f32 %v4780, %v4779
    %v4782 = vmul.f32 0.5, %v4781
    %v4783 = vsub.f32 1.5, %v4782
    %v4784 = vmul.f32 %v4779, %v4783
    %vm4785 = vweird.f32 %v4700
    %vm4786 = vweird.f32 %v4779
    %vm4787 = vmor %vm4785, %vm4786
    %v4788 = vsel %vm4787, %v4779, %v4784
    %v4789 = vrsqrt.pop %v4701
    %v4790 = vmul.f32 %v4789, %v4701
    %v4791 = vmul.f32 %v4790, %v4789
    %v4792 = vmul.f32 0.5, %v4791
    %v4793 = vsub.f32 1.5, %v4792
    %v4794 = vmul.f32 %v4789, %v4793
    %vm4795 = vweird.f32 %v4701
    %vm4796 = vweird.f32 %v4789
    %vm4797 = vmor %vm4795, %vm4796
    %v4798 = vsel %vm4797, %v4789, %v4794
    %v4799 = vrsqrt.pop %v4702
    %v4800 = vmul.f32 %v4799, %v4702
    %v4801 = vmul.f32 %v4800, %v4799
    %v4802 = vmul.f32 0.5, %v4801
    %v4803 = vsub.f32 1.5, %v4802
    %v4804 = vmul.f32 %v4799, %v4803
    %vm4805 = vweird.f32 %v4702
    %vm4806 = vweird.f32 %v4799
    %vm4807 = vmor %vm4805, %vm4806
    %v4808 = vsel %vm4807, %v4799, %v4804
    %v4809 = vrsqrt.pop %v4703
    %v4810 = vmul.f32 %v4809, %v4703
    %v4811 = vmul.f32 %v4810, %v4809
    %v4812 = vmul.f32 0.5, %v4811
    %v4813 = vsub.f32 1.5, %v4812
    %v4814 = vmul.f32 %v4809, %v4813
    %vm4815 = vweird.f32 %v4703
    %vm4816 = vweird.f32 %v4809
    %vm4817 = vmor %vm4815, %vm4816
    %v4818 = vsel %vm4817, %v4809, %v4814
    %v4819 = vrsqrt.pop %v4704
    %v4820 = vmul.f32 %v4819, %v4704
    %v4821 = vmul.f32 %v4820, %v4819
    %v4822 = vmul.f32 0.5, %v4821
    %v4823 = vsub.f32 1.5, %v4822
    %v4824 = vmul.f32 %v4819, %v4823
    %vm4825 = vweird.f32 %v4704
    %vm4826 = vweird.f32 %v4819
    %vm4827 = vmor %vm4825, %vm4826
    %v4828 = vsel %vm4827, %v4819, %v4824
    %v4829 = vrsqrt.pop %v4705
    %v4830 = vmul.f32 %v4829, %v4705
    %v4831 = vmul.f32 %v4830, %v4829
    %v4832 = vmul.f32 0.5, %v4831
    %v4833 = vsub.f32 1.5, %v4832
    %v4834 = vmul.f32 %v4829, %v4833
    %vm4835 = vweird.f32 %v4705
    %vm4836 = vweird.f32 %v4829
    %vm4837 = vmor %vm4835, %vm4836
    %v4838 = vsel %vm4837, %v4829, %v4834
    %v4839 = vrsqrt.pop %v4706
    %v4840 = vmul.f32 %v4839, %v4706
    %v4841 = vmul.f32 %v4840, %v4839
    %v4842 = vmul.f32 0.5, %v4841
    %v4843 = vsub.f32 1.5, %v4842
    %v4844 = vmul.f32 %v4839, %v4843
    %vm4845 = vweird.f32 %v4706
    %vm4846 = vweird.f32 %v4839
    %vm4847 = vmor %vm4845, %vm4846
    %v4848 = vsel %vm4847, %v4839, %v4844
    %v4849 = vrsqrt.pop %v4707
    %v4850 = vmul.f32 %v4849, %v4707
    %v4851 = vmul.f32 %v4850, %v4849
    %v4852 = vmul.f32 0.5, %v4851
    %v4853 = vsub.f32 1.5, %v4852
    %v4854 = vmul.f32 %v4849, %v4853
    %vm4855 = vweird.f32 %v4707
    %vm4856 = vweird.f32 %v4849
    %vm4857 = vmor %vm4855, %vm4856
    %v4858 = vsel %vm4857, %v4849, %v4854
    %v4859 = vrsqrt.pop %v4708
    %v4860 = vmul.f32 %v4859, %v4708
    %v4861 = vmul.f32 %v4860, %v4859
    %v4862 = vmul.f32 0.5, %v4861
    %v4863 = vsub.f32 1.5, %v4862
    %v4864 = vmul.f32 %v4859, %v4863
    %vm4865 = vweird.f32 %v4708
    %vm4866 = vweird.f32 %v4859
    %vm4867 = vmor %vm4865, %vm4866
    %v4868 = vsel %vm4867, %v4859, %v4864
    %v4869 = vsub.f32 %v4453, %v4613
    %v4870 = vsub.f32 %v4454, %v4613
    %v4871 = vsub.f32 %v4455, %v4614
    %v4872 = vsub.f32 %v4456, %v4614
    %v4873 = vsub.f32 %v4457, %v4615
    %v4874 = vsub.f32 %v4458, %v4615
    %v4875 = vsub.f32 %v4459, %v4616
    %v4876 = vsub.f32 %v4460, %v4616
    %v4877 = vsub.f32 %v4461, %v4617
    %v4878 = vsub.f32 %v4462, %v4617
    %v4879 = vsub.f32 %v4463, %v4618
    %v4880 = vsub.f32 %v4464, %v4618
    %v4881 = vsub.f32 %v4465, %v4619
    %v4882 = vsub.f32 %v4466, %v4619
    %v4883 = vsub.f32 %v4467, %v4620
    %v4884 = vsub.f32 %v4468, %v4620
    %v4885 = vsub.f32 %v4469, %v4621
    %v4886 = vsub.f32 %v4470, %v4621
    %v4887 = vsub.f32 %v4471, %v4622
    %v4888 = vsub.f32 %v4472, %v4622
    %v4889 = vsub.f32 %v4473, %v4623
    %v4890 = vsub.f32 %v4474, %v4623
    %v4891 = vsub.f32 %v4475, %v4624
    %v4892 = vsub.f32 %v4476, %v4624
    %v4893 = vsub.f32 %v4477, %v4625
    %v4894 = vsub.f32 %v4478, %v4625
    %v4895 = vsub.f32 %v4479, %v4626
    %v4896 = vsub.f32 %v4480, %v4626
    %v4897 = vsub.f32 %v4481, %v4627
    %v4898 = vsub.f32 %v4482, %v4627
    %v4899 = vsub.f32 %v4483, %v4628
    %v4900 = vsub.f32 %v4484, %v4628
    %v4901 = vmul.f32 %v4869, %v4718
    %v4902 = vmul.f32 %v4870, %v4718
    %v4903 = vmul.f32 %v4871, %v4728
    %v4904 = vmul.f32 %v4872, %v4728
    %v4905 = vmul.f32 %v4873, %v4738
    %v4906 = vmul.f32 %v4874, %v4738
    %v4907 = vmul.f32 %v4875, %v4748
    %v4908 = vmul.f32 %v4876, %v4748
    %v4909 = vmul.f32 %v4877, %v4758
    %v4910 = vmul.f32 %v4878, %v4758
    %v4911 = vmul.f32 %v4879, %v4768
    %v4912 = vmul.f32 %v4880, %v4768
    %v4913 = vmul.f32 %v4881, %v4778
    %v4914 = vmul.f32 %v4882, %v4778
    %v4915 = vmul.f32 %v4883, %v4788
    %v4916 = vmul.f32 %v4884, %v4788
    %v4917 = vmul.f32 %v4885, %v4798
    %v4918 = vmul.f32 %v4886, %v4798
    %v4919 = vmul.f32 %v4887, %v4808
    %v4920 = vmul.f32 %v4888, %v4808
    %v4921 = vmul.f32 %v4889, %v4818
    %v4922 = vmul.f32 %v4890, %v4818
    %v4923 = vmul.f32 %v4891, %v4828
    %v4924 = vmul.f32 %v4892, %v4828
    %v4925 = vmul.f32 %v4893, %v4838
    %v4926 = vmul.f32 %v4894, %v4838
    %v4927 = vmul.f32 %v4895, %v4848
    %v4928 = vmul.f32 %v4896, %v4848
    %v4929 = vmul.f32 %v4897, %v4858
    %v4930 = vmul.f32 %v4898, %v4858
    %v4931 = vmul.f32 %v4899, %v4868
    %v4932 = vmul.f32 %v4900, %v4868
    %s4933 = scalar_lea.vmem %s6, 4
    %v4934 = vld [vmem:[%s4933] ss:$8 sm:$0x3]
    %v4936 = vperm.slane %v4934, 0
    %v4937 = vperm.slane %v4934, 1
    %v4940 = vmul.f32 %v4901, %v4936
    %v4941 = vmul.f32 %v4902, %v4937
    %v4942 = vmul.f32 %v4903, %v4936
    %v4943 = vmul.f32 %v4904, %v4937
    %v4944 = vmul.f32 %v4905, %v4936
    %v4945 = vmul.f32 %v4906, %v4937
    %v4946 = vmul.f32 %v4907, %v4936
    %v4947 = vmul.f32 %v4908, %v4937
    %v4948 = vmul.f32 %v4909, %v4936
    %v4949 = vmul.f32 %v4910, %v4937
    %v4950 = vmul.f32 %v4911, %v4936
    %v4951 = vmul.f32 %v4912, %v4937
    %v4952 = vmul.f32 %v4913, %v4936
    %v4953 = vmul.f32 %v4914, %v4937
    %v4954 = vmul.f32 %v4915, %v4936
    %v4955 = vmul.f32 %v4916, %v4937
    %v4956 = vmul.f32 %v4917, %v4936
    %v4957 = vmul.f32 %v4918, %v4937
    %v4958 = vmul.f32 %v4919, %v4936
    %v4959 = vmul.f32 %v4920, %v4937
    %v4960 = vmul.f32 %v4921, %v4936
    %v4961 = vmul.f32 %v4922, %v4937
    %v4962 = vmul.f32 %v4923, %v4936
    %v4963 = vmul.f32 %v4924, %v4937
    %v4964 = vmul.f32 %v4925, %v4936
    %v4965 = vmul.f32 %v4926, %v4937
    %v4966 = vmul.f32 %v4927, %v4936
    %v4967 = vmul.f32 %v4928, %v4937
    %v4968 = vmul.f32 %v4929, %v4936
    %v4969 = vmul.f32 %v4930, %v4937
    %v4970 = vmul.f32 %v4931, %v4936
    %v4971 = vmul.f32 %v4932, %v4937
    %s4972 = scalar_lea.vmem %s7, 4
    %v4973 = vld [vmem:[%s4972] ss:$8 sm:$0x3]
    %v4975 = vperm.slane %v4973, 0
    %v4976 = vperm.slane %v4973, 1
    %v4979 = vadd.f32 %v4940, %v4975
    %v4980 = vadd.f32 %v4941, %v4976
    %v4981 = vadd.f32 %v4942, %v4975
    %v4982 = vadd.f32 %v4943, %v4976
    %v4983 = vadd.f32 %v4944, %v4975
    %v4984 = vadd.f32 %v4945, %v4976
    %v4985 = vadd.f32 %v4946, %v4975
    %v4986 = vadd.f32 %v4947, %v4976
    %v4987 = vadd.f32 %v4948, %v4975
    %v4988 = vadd.f32 %v4949, %v4976
    %v4989 = vadd.f32 %v4950, %v4975
    %v4990 = vadd.f32 %v4951, %v4976
    %v4991 = vadd.f32 %v4952, %v4975
    %v4992 = vadd.f32 %v4953, %v4976
    %v4993 = vadd.f32 %v4954, %v4975
    %v4994 = vadd.f32 %v4955, %v4976
    %v4995 = vadd.f32 %v4956, %v4975
    %v4996 = vadd.f32 %v4957, %v4976
    %v4997 = vadd.f32 %v4958, %v4975
    %v4998 = vadd.f32 %v4959, %v4976
    %v4999 = vadd.f32 %v4960, %v4975
    %v5000 = vadd.f32 %v4961, %v4976
    %v5001 = vadd.f32 %v4962, %v4975
    %v5002 = vadd.f32 %v4963, %v4976
    %v5003 = vadd.f32 %v4964, %v4975
    %v5004 = vadd.f32 %v4965, %v4976
    %v5005 = vadd.f32 %v4966, %v4975
    %v5006 = vadd.f32 %v4967, %v4976
    %v5007 = vadd.f32 %v4968, %v4975
    %v5008 = vadd.f32 %v4969, %v4976
    %v5009 = vadd.f32 %v4970, %v4975
    %v5010 = vadd.f32 %v4971, %v4976
    %v5011 = vmax.f32 %v4979, 0.0
    %v5012 = vmax.f32 %v4980, 0.0
    %v5013 = vmax.f32 %v4981, 0.0
    %v5014 = vmax.f32 %v4982, 0.0
    %v5015 = vmax.f32 %v4983, 0.0
    %v5016 = vmax.f32 %v4984, 0.0
    %v5017 = vmax.f32 %v4985, 0.0
    %v5018 = vmax.f32 %v4986, 0.0
    %v5019 = vmax.f32 %v4987, 0.0
    %v5020 = vmax.f32 %v4988, 0.0
    %v5021 = vmax.f32 %v4989, 0.0
    %v5022 = vmax.f32 %v4990, 0.0
    %v5023 = vmax.f32 %v4991, 0.0
    %v5024 = vmax.f32 %v4992, 0.0
    %v5025 = vmax.f32 %v4993, 0.0
    %v5026 = vmax.f32 %v4994, 0.0
    %v5027 = vmax.f32 %v4995, 0.0
    %v5028 = vmax.f32 %v4996, 0.0
    %v5029 = vmax.f32 %v4997, 0.0
    %v5030 = vmax.f32 %v4998, 0.0
    %v5031 = vmax.f32 %v4999, 0.0
    %v5032 = vmax.f32 %v5000, 0.0
    %v5033 = vmax.f32 %v5001, 0.0
    %v5034 = vmax.f32 %v5002, 0.0
    %v5035 = vmax.f32 %v5003, 0.0
    %v5036 = vmax.f32 %v5004, 0.0
    %v5037 = vmax.f32 %v5005, 0.0
    %v5038 = vmax.f32 %v5006, 0.0
    %v5039 = vmax.f32 %v5007, 0.0
    %v5040 = vmax.f32 %v5008, 0.0
    %v5041 = vmax.f32 %v5009, 0.0
    %v5042 = vmax.f32 %v5010, 0.0
    %v5043 = vpack.c.bf16 %v5013, %v5011
    %v5044 = vpack.c.bf16 %v5014, %v5012
    %v5045 = vpack.c.bf16 %v5017, %v5015
    %v5046 = vpack.c.bf16 %v5018, %v5016
    %v5047 = vpack.c.bf16 %v5021, %v5019
    %v5048 = vpack.c.bf16 %v5022, %v5020
    %v5049 = vpack.c.bf16 %v5025, %v5023
    %v5050 = vpack.c.bf16 %v5026, %v5024
    %v5051 = vpack.c.bf16 %v5029, %v5027
    %v5052 = vpack.c.bf16 %v5030, %v5028
    %v5053 = vpack.c.bf16 %v5033, %v5031
    %v5054 = vpack.c.bf16 %v5034, %v5032
    %v5055 = vpack.c.bf16 %v5037, %v5035
    %v5056 = vpack.c.bf16 %v5038, %v5036
    %v5057 = vpack.c.bf16 %v5041, %v5039
    %v5058 = vpack.c.bf16 %v5042, %v5040
    %s5059 = scalar_lea.vmem [#allocation4], 768
    %v5060 = vld [vmem:[%s5059] sm:$0xff]
    %v5061 = vld [vmem:[%s5059 + $0x8] sm:$0xff]
    %v5062 = vld [vmem:[%s5059 + $0x10] sm:$0xff]
    %v5063 = vld [vmem:[%s5059 + $0x18] sm:$0xff]
    %v5064 = vld [vmem:[%s5059 + $0x20] sm:$0xff]
    %v5065 = vld [vmem:[%s5059 + $0x28] sm:$0xff]
    %v5066 = vld [vmem:[%s5059 + $0x30] sm:$0xff]
    %v5067 = vld [vmem:[%s5059 + $0x38] sm:$0xff]
    %v5068 = vld [vmem:[%s5059 + $0x40] sm:$0xff]
    %v5069 = vld [vmem:[%s5059 + $0x48] sm:$0xff]
    %v5070 = vld [vmem:[%s5059 + $0x50] sm:$0xff]
    %v5071 = vld [vmem:[%s5059 + $0x58] sm:$0xff]
    %v5072 = vld [vmem:[%s5059 + $0x60] sm:$0xff]
    %v5073 = vld [vmem:[%s5059 + $0x68] sm:$0xff]
    %v5074 = vld [vmem:[%s5059 + $0x70] sm:$0xff]
    %v5075 = vld [vmem:[%s5059 + $0x78] sm:$0xff]
    %v5076 = vld [vmem:[%s5059 + $0x80] sm:$0xff]
    %v5077 = vld [vmem:[%s5059 + $0x88] sm:$0xff]
    %v5078 = vld [vmem:[%s5059 + $0x90] sm:$0xff]
    %v5079 = vld [vmem:[%s5059 + $0x98] sm:$0xff]
    %v5080 = vld [vmem:[%s5059 + $0xa0] sm:$0xff]
    %v5081 = vld [vmem:[%s5059 + $0xa8] sm:$0xff]
    %v5082 = vld [vmem:[%s5059 + $0xb0] sm:$0xff]
    %v5083 = vld [vmem:[%s5059 + $0xb8] sm:$0xff]
    %v5084 = vld [vmem:[%s5059 + $0xc0] sm:$0xff]
    %v5085 = vld [vmem:[%s5059 + $0xc8] sm:$0xff]
    %v5086 = vld [vmem:[%s5059 + $0xd0] sm:$0xff]
    %v5087 = vld [vmem:[%s5059 + $0xd8] sm:$0xff]
    %v5088 = vld [vmem:[%s5059 + $0xe0] sm:$0xff]
    %v5089 = vld [vmem:[%s5059 + $0xe8] sm:$0xff]
    %v5090 = vld [vmem:[%s5059 + $0xf0] sm:$0xff]
    %v5091 = vld [vmem:[%s5059 + $0xf8] sm:$0xff]
    %s5092 = scalar_lea.vmem %s5, 5
    %v5093 = vld [vmem:[%s5092] ss:$8 sm:$0x3]
    %v5095 = vperm.slane %v5093, 0
    %v5096 = vperm.slane %v5093, 1
    %v5131 = vunpack.c.l.b16 %v5060
    %v5132 = vunpack.c.h.b16 %v5060
    %v5133 = vunpack.c.l.b16 %v5061
    %v5134 = vunpack.c.h.b16 %v5061
    %v5135 = vunpack.c.l.b16 %v5062
    %v5136 = vunpack.c.h.b16 %v5062
    %v5137 = vunpack.c.l.b16 %v5063
    %v5138 = vunpack.c.h.b16 %v5063
    %v5139 = vunpack.c.l.b16 %v5064
    %v5140 = vunpack.c.h.b16 %v5064
    %v5141 = vunpack.c.l.b16 %v5065
    %v5142 = vunpack.c.h.b16 %v5065
    %v5143 = vunpack.c.l.b16 %v5066
    %v5144 = vunpack.c.h.b16 %v5066
    %v5145 = vunpack.c.l.b16 %v5067
    %v5146 = vunpack.c.h.b16 %v5067
    %v5147 = vunpack.c.l.b16 %v5068
    %v5148 = vunpack.c.h.b16 %v5068
    %v5149 = vunpack.c.l.b16 %v5069
    %v5150 = vunpack.c.h.b16 %v5069
    %v5151 = vunpack.c.l.b16 %v5070
    %v5152 = vunpack.c.h.b16 %v5070
    %v5153 = vunpack.c.l.b16 %v5071
    %v5154 = vunpack.c.h.b16 %v5071
    %v5155 = vunpack.c.l.b16 %v5072
    %v5156 = vunpack.c.h.b16 %v5072
    %v5157 = vunpack.c.l.b16 %v5073
    %v5158 = vunpack.c.h.b16 %v5073
    %v5159 = vunpack.c.l.b16 %v5074
    %v5160 = vunpack.c.h.b16 %v5074
    %v5161 = vunpack.c.l.b16 %v5075
    %v5162 = vunpack.c.h.b16 %v5075
    %v5163 = vunpack.c.l.b16 %v5076
    %v5164 = vunpack.c.h.b16 %v5076
    %v5165 = vunpack.c.l.b16 %v5077
    %v5166 = vunpack.c.h.b16 %v5077
    %v5167 = vunpack.c.l.b16 %v5078
    %v5168 = vunpack.c.h.b16 %v5078
    %v5169 = vunpack.c.l.b16 %v5079
    %v5170 = vunpack.c.h.b16 %v5079
    %v5171 = vunpack.c.l.b16 %v5080
    %v5172 = vunpack.c.h.b16 %v5080
    %v5173 = vunpack.c.l.b16 %v5081
    %v5174 = vunpack.c.h.b16 %v5081
    %v5175 = vunpack.c.l.b16 %v5082
    %v5176 = vunpack.c.h.b16 %v5082
    %v5177 = vunpack.c.l.b16 %v5083
    %v5178 = vunpack.c.h.b16 %v5083
    %v5179 = vunpack.c.l.b16 %v5084
    %v5180 = vunpack.c.h.b16 %v5084
    %v5181 = vunpack.c.l.b16 %v5085
    %v5182 = vunpack.c.h.b16 %v5085
    %v5183 = vunpack.c.l.b16 %v5086
    %v5184 = vunpack.c.h.b16 %v5086
    %v5185 = vunpack.c.l.b16 %v5087
    %v5186 = vunpack.c.h.b16 %v5087
    %v5187 = vunpack.c.l.b16 %v5088
    %v5188 = vunpack.c.h.b16 %v5088
    %v5189 = vunpack.c.l.b16 %v5089
    %v5190 = vunpack.c.h.b16 %v5089
    %v5191 = vunpack.c.l.b16 %v5090
    %v5192 = vunpack.c.h.b16 %v5090
    %v5193 = vunpack.c.l.b16 %v5091
    %v5194 = vunpack.c.h.b16 %v5091
    %v5195 = vpack.c.b16 %v5133, %v5131
    %v5196 = vpack.c.b16 %v5134, %v5132
    %v5197 = vpack.c.b16 %v5137, %v5135
    %v5198 = vpack.c.b16 %v5138, %v5136
    %v5199 = vpack.c.b16 %v5141, %v5139
    %v5200 = vpack.c.b16 %v5142, %v5140
    %v5201 = vpack.c.b16 %v5145, %v5143
    %v5202 = vpack.c.b16 %v5146, %v5144
    %v5203 = vpack.c.b16 %v5149, %v5147
    %v5204 = vpack.c.b16 %v5150, %v5148
    %v5205 = vpack.c.b16 %v5153, %v5151
    %v5206 = vpack.c.b16 %v5154, %v5152
    %v5207 = vpack.c.b16 %v5157, %v5155
    %v5208 = vpack.c.b16 %v5158, %v5156
    %v5209 = vpack.c.b16 %v5161, %v5159
    %v5210 = vpack.c.b16 %v5162, %v5160
    %v5211 = vpack.c.b16 %v5165, %v5163
    %v5212 = vpack.c.b16 %v5166, %v5164
    %v5213 = vpack.c.b16 %v5169, %v5167
    %v5214 = vpack.c.b16 %v5170, %v5168
    %v5215 = vpack.c.b16 %v5173, %v5171
    %v5216 = vpack.c.b16 %v5174, %v5172
    %v5217 = vpack.c.b16 %v5177, %v5175
    %v5218 = vpack.c.b16 %v5178, %v5176
    %v5219 = vpack.c.b16 %v5181, %v5179
    %v5220 = vpack.c.b16 %v5182, %v5180
    %v5221 = vpack.c.b16 %v5185, %v5183
    %v5222 = vpack.c.b16 %v5186, %v5184
    %v5223 = vpack.c.b16 %v5189, %v5187
    %v5224 = vpack.c.b16 %v5190, %v5188
    %v5225 = vpack.c.b16 %v5193, %v5191
    %v5226 = vpack.c.b16 %v5194, %v5192
    %5259 = vmatpush.bf16.msra.mxu0 %v5209
    %5260 = vmatpush.bf16.msra.mxu0 %v5207
    %5261 = vmatpush.bf16.msra.mxu0 %v5205
    %5262 = vmatpush.bf16.msra.mxu0 %v5203
    %5263 = vmatpush.bf16.msra.mxu0 %v5201
    %5264 = vmatpush.bf16.msra.mxu0 %v5199
    %5265 = vmatpush.bf16.msra.mxu0 %v5197
    %5266 = vmatpush.bf16.msra.mxu0 %v5195
    %5267 = vmatmul.bf16.gmra.mxu0 %v5043
    %v5268 = vpop.f32.mrf.mxu0
    %v5269 = vadd.f32 %v5095, %v5268
    %v5270 = vpop.f32.mrf.mxu0
    %v5271 = vadd.f32 %v5095, %v5270
    %5272 = vmatmul.bf16.gmra.mxu0 %v5045
    %v5273 = vpop.f32.mrf.mxu0
    %v5274 = vadd.f32 %v5095, %v5273
    %v5275 = vpop.f32.mrf.mxu0
    %v5276 = vadd.f32 %v5095, %v5275
    %5277 = vmatmul.bf16.gmra.mxu0 %v5047
    %v5278 = vpop.f32.mrf.mxu0
    %v5279 = vadd.f32 %v5095, %v5278
    %v5280 = vpop.f32.mrf.mxu0
    %v5281 = vadd.f32 %v5095, %v5280
    %5282 = vmatmul.bf16.gmra.mxu0 %v5049
    %v5283 = vpop.f32.mrf.mxu0
    %v5284 = vadd.f32 %v5095, %v5283
    %v5285 = vpop.f32.mrf.mxu0
    %v5286 = vadd.f32 %v5095, %v5285
    %5287 = vmatmul.bf16.gmra.mxu0 %v5051
    %v5288 = vpop.f32.mrf.mxu0
    %v5289 = vadd.f32 %v5095, %v5288
    %v5290 = vpop.f32.mrf.mxu0
    %v5291 = vadd.f32 %v5095, %v5290
    %5292 = vmatmul.bf16.gmra.mxu0 %v5053
    %v5293 = vpop.f32.mrf.mxu0
    %v5294 = vadd.f32 %v5095, %v5293
    %v5295 = vpop.f32.mrf.mxu0
    %v5296 = vadd.f32 %v5095, %v5295
    %5297 = vmatmul.bf16.gmra.mxu0 %v5055
    %v5298 = vpop.f32.mrf.mxu0
    %v5299 = vadd.f32 %v5095, %v5298
    %v5300 = vpop.f32.mrf.mxu0
    %v5301 = vadd.f32 %v5095, %v5300
    %5302 = vmatmul.bf16.gmra.mxu0 %v5057
    %v5303 = vpop.f32.mrf.mxu0
    %v5304 = vadd.f32 %v5095, %v5303
    %v5305 = vpop.f32.mrf.mxu0
    %v5306 = vadd.f32 %v5095, %v5305
    %5307 = vdwg.mxu0
    %5308 = vmatpush.bf16.msra.mxu0 %v5225
    %5309 = vmatpush.bf16.msra.mxu0 %v5223
    %5310 = vmatpush.bf16.msra.mxu0 %v5221
    %5311 = vmatpush.bf16.msra.mxu0 %v5219
    %5312 = vmatpush.bf16.msra.mxu0 %v5217
    %5313 = vmatpush.bf16.msra.mxu0 %v5215
    %5314 = vmatpush.bf16.msra.mxu0 %v5213
    %5315 = vmatpush.bf16.msra.mxu0 %v5211
    %5316 = vmatmul.bf16.gmra.mxu0 %v5044
    %v5317 = vpop.f32.mrf.mxu0
    %v5318 = vadd.f32 %v5269, %v5317
    %v5319 = vpop.f32.mrf.mxu0
    %v5320 = vadd.f32 %v5271, %v5319
    %5321 = vmatmul.bf16.gmra.mxu0 %v5046
    %v5322 = vpop.f32.mrf.mxu0
    %v5323 = vadd.f32 %v5274, %v5322
    %v5324 = vpop.f32.mrf.mxu0
    %v5325 = vadd.f32 %v5276, %v5324
    %5326 = vmatmul.bf16.gmra.mxu0 %v5048
    %v5327 = vpop.f32.mrf.mxu0
    %v5328 = vadd.f32 %v5279, %v5327
    %v5329 = vpop.f32.mrf.mxu0
    %v5330 = vadd.f32 %v5281, %v5329
    %5331 = vmatmul.bf16.gmra.mxu0 %v5050
    %v5332 = vpop.f32.mrf.mxu0
    %v5333 = vadd.f32 %v5284, %v5332
    %v5334 = vpop.f32.mrf.mxu0
    %v5335 = vadd.f32 %v5286, %v5334
    %5336 = vmatmul.bf16.gmra.mxu0 %v5052
    %v5337 = vpop.f32.mrf.mxu0
    %v5338 = vadd.f32 %v5289, %v5337
    %v5339 = vpop.f32.mrf.mxu0
    %v5340 = vadd.f32 %v5291, %v5339
    %5341 = vmatmul.bf16.gmra.mxu0 %v5054
    %v5342 = vpop.f32.mrf.mxu0
    %v5343 = vadd.f32 %v5294, %v5342
    %v5344 = vpop.f32.mrf.mxu0
    %v5345 = vadd.f32 %v5296, %v5344
    %5346 = vmatmul.bf16.gmra.mxu0 %v5056
    %v5347 = vpop.f32.mrf.mxu0
    %v5348 = vadd.f32 %v5299, %v5347
    %v5349 = vpop.f32.mrf.mxu0
    %v5350 = vadd.f32 %v5301, %v5349
    %5351 = vmatmul.bf16.gmra.mxu0 %v5058
    %v5352 = vpop.f32.mrf.mxu0
    %v5353 = vadd.f32 %v5304, %v5352
    %v5354 = vpop.f32.mrf.mxu0
    %v5355 = vadd.f32 %v5306, %v5354
    %5356 = vdwg.mxu0
    %5357 = vmatpush.bf16.msra.mxu0 %v5210
    %5358 = vmatpush.bf16.msra.mxu0 %v5208
    %5359 = vmatpush.bf16.msra.mxu0 %v5206
    %5360 = vmatpush.bf16.msra.mxu0 %v5204
    %5361 = vmatpush.bf16.msra.mxu0 %v5202
    %5362 = vmatpush.bf16.msra.mxu0 %v5200
    %5363 = vmatpush.bf16.msra.mxu0 %v5198
    %5364 = vmatpush.bf16.msra.mxu0 %v5196
    %5365 = vmatmul.bf16.gmra.mxu0 %v5043
    %v5366 = vpop.f32.mrf.mxu0
    %v5367 = vadd.f32 %v5096, %v5366
    %v5368 = vpop.f32.mrf.mxu0
    %v5369 = vadd.f32 %v5096, %v5368
    %5370 = vmatmul.bf16.gmra.mxu0 %v5045
    %v5371 = vpop.f32.mrf.mxu0
    %v5372 = vadd.f32 %v5096, %v5371
    %v5373 = vpop.f32.mrf.mxu0
    %v5374 = vadd.f32 %v5096, %v5373
    %5375 = vmatmul.bf16.gmra.mxu0 %v5047
    %v5376 = vpop.f32.mrf.mxu0
    %v5377 = vadd.f32 %v5096, %v5376
    %v5378 = vpop.f32.mrf.mxu0
    %v5379 = vadd.f32 %v5096, %v5378
    %5380 = vmatmul.bf16.gmra.mxu0 %v5049
    %v5381 = vpop.f32.mrf.mxu0
    %v5382 = vadd.f32 %v5096, %v5381
    %v5383 = vpop.f32.mrf.mxu0
    %v5384 = vadd.f32 %v5096, %v5383
    %5385 = vmatmul.bf16.gmra.mxu0 %v5051
    %v5386 = vpop.f32.mrf.mxu0
    %v5387 = vadd.f32 %v5096, %v5386
    %v5388 = vpop.f32.mrf.mxu0
    %v5389 = vadd.f32 %v5096, %v5388
    %5390 = vmatmul.bf16.gmra.mxu0 %v5053
    %v5391 = vpop.f32.mrf.mxu0
    %v5392 = vadd.f32 %v5096, %v5391
    %v5393 = vpop.f32.mrf.mxu0
    %v5394 = vadd.f32 %v5096, %v5393
    %5395 = vmatmul.bf16.gmra.mxu0 %v5055
    %v5396 = vpop.f32.mrf.mxu0
    %v5397 = vadd.f32 %v5096, %v5396
    %v5398 = vpop.f32.mrf.mxu0
    %v5399 = vadd.f32 %v5096, %v5398
    %5400 = vmatmul.bf16.gmra.mxu0 %v5057
    %v5401 = vpop.f32.mrf.mxu0
    %v5402 = vadd.f32 %v5096, %v5401
    %v5403 = vpop.f32.mrf.mxu0
    %v5404 = vadd.f32 %v5096, %v5403
    %5405 = vdwg.mxu0
    %5406 = vmatpush.bf16.msra.mxu0 %v5226
    %5407 = vmatpush.bf16.msra.mxu0 %v5224
    %5408 = vmatpush.bf16.msra.mxu0 %v5222
    %5409 = vmatpush.bf16.msra.mxu0 %v5220
    %5410 = vmatpush.bf16.msra.mxu0 %v5218
    %5411 = vmatpush.bf16.msra.mxu0 %v5216
    %5412 = vmatpush.bf16.msra.mxu0 %v5214
    %5413 = vmatpush.bf16.msra.mxu0 %v5212
    %5414 = vmatmul.bf16.gmra.mxu0 %v5044
    %v5415 = vpop.f32.mrf.mxu0
    %v5416 = vadd.f32 %v5367, %v5415
    %v5417 = vpop.f32.mrf.mxu0
    %v5418 = vadd.f32 %v5369, %v5417
    %5419 = vmatmul.bf16.gmra.mxu0 %v5046
    %v5420 = vpop.f32.mrf.mxu0
    %v5421 = vadd.f32 %v5372, %v5420
    %v5422 = vpop.f32.mrf.mxu0
    %v5423 = vadd.f32 %v5374, %v5422
    %5424 = vmatmul.bf16.gmra.mxu0 %v5048
    %v5425 = vpop.f32.mrf.mxu0
    %v5426 = vadd.f32 %v5377, %v5425
    %v5427 = vpop.f32.mrf.mxu0
    %v5428 = vadd.f32 %v5379, %v5427
    %5429 = vmatmul.bf16.gmra.mxu0 %v5050
    %v5430 = vpop.f32.mrf.mxu0
    %v5431 = vadd.f32 %v5382, %v5430
    %v5432 = vpop.f32.mrf.mxu0
    %v5433 = vadd.f32 %v5384, %v5432
    %5434 = vmatmul.bf16.gmra.mxu0 %v5052
    %v5435 = vpop.f32.mrf.mxu0
    %v5436 = vadd.f32 %v5387, %v5435
    %v5437 = vpop.f32.mrf.mxu0
    %v5438 = vadd.f32 %v5389, %v5437
    %5439 = vmatmul.bf16.gmra.mxu0 %v5054
    %v5440 = vpop.f32.mrf.mxu0
    %v5441 = vadd.f32 %v5392, %v5440
    %v5442 = vpop.f32.mrf.mxu0
    %v5443 = vadd.f32 %v5394, %v5442
    %5444 = vmatmul.bf16.gmra.mxu0 %v5056
    %v5445 = vpop.f32.mrf.mxu0
    %v5446 = vadd.f32 %v5397, %v5445
    %v5447 = vpop.f32.mrf.mxu0
    %v5448 = vadd.f32 %v5399, %v5447
    %5449 = vmatmul.bf16.gmra.mxu0 %v5058
    %v5450 = vpop.f32.mrf.mxu0
    %v5451 = vadd.f32 %v5402, %v5450
    %v5452 = vpop.f32.mrf.mxu0
    %v5453 = vadd.f32 %v5404, %v5452
    %5454 = vdwg.mxu0
    %v5455 = vadd.f32 %v5318, %v5416
    %5456 = vadd.xlane.f32.xlu0 %v5455
    %v5457 = vpop.xlane.xlu0 %5456
    %v5458 = vadd.f32 %v5320, %v5418
    %5459 = vadd.xlane.f32.xlu0 %v5458
    %v5460 = vpop.xlane.xlu0 %5459
    %v5461 = vadd.f32 %v5323, %v5421
    %5462 = vadd.xlane.f32.xlu0 %v5461
    %v5463 = vpop.xlane.xlu0 %5462
    %v5464 = vadd.f32 %v5325, %v5423
    %5465 = vadd.xlane.f32.xlu0 %v5464
    %v5466 = vpop.xlane.xlu0 %5465
    %v5467 = vadd.f32 %v5328, %v5426
    %5468 = vadd.xlane.f32.xlu0 %v5467
    %v5469 = vpop.xlane.xlu0 %5468
    %v5470 = vadd.f32 %v5330, %v5428
    %5471 = vadd.xlane.f32.xlu0 %v5470
    %v5472 = vpop.xlane.xlu0 %5471
    %v5473 = vadd.f32 %v5333, %v5431
    %5474 = vadd.xlane.f32.xlu0 %v5473
    %v5475 = vpop.xlane.xlu0 %5474
    %v5476 = vadd.f32 %v5335, %v5433
    %5477 = vadd.xlane.f32.xlu0 %v5476
    %v5478 = vpop.xlane.xlu0 %5477
    %v5479 = vadd.f32 %v5338, %v5436
    %5480 = vadd.xlane.f32.xlu0 %v5479
    %v5481 = vpop.xlane.xlu0 %5480
    %v5482 = vadd.f32 %v5340, %v5438
    %5483 = vadd.xlane.f32.xlu0 %v5482
    %v5484 = vpop.xlane.xlu0 %5483
    %v5485 = vadd.f32 %v5343, %v5441
    %5486 = vadd.xlane.f32.xlu0 %v5485
    %v5487 = vpop.xlane.xlu0 %5486
    %v5488 = vadd.f32 %v5345, %v5443
    %5489 = vadd.xlane.f32.xlu0 %v5488
    %v5490 = vpop.xlane.xlu0 %5489
    %v5491 = vadd.f32 %v5348, %v5446
    %5492 = vadd.xlane.f32.xlu0 %v5491
    %v5493 = vpop.xlane.xlu0 %5492
    %v5494 = vadd.f32 %v5350, %v5448
    %5495 = vadd.xlane.f32.xlu0 %v5494
    %v5496 = vpop.xlane.xlu0 %5495
    %v5497 = vadd.f32 %v5353, %v5451
    %5498 = vadd.xlane.f32.xlu0 %v5497
    %v5499 = vpop.xlane.xlu0 %5498
    %v5500 = vadd.f32 %v5355, %v5453
    %5501 = vadd.xlane.f32.xlu0 %v5500
    %v5502 = vpop.xlane.xlu0 %5501
    %v5503 = vmul.f32 %v5318, %v5318
    %v5504 = vmul.f32 %v5416, %v5416
    %v5505 = vmul.f32 %v5320, %v5320
    %v5506 = vmul.f32 %v5418, %v5418
    %v5507 = vmul.f32 %v5323, %v5323
    %v5508 = vmul.f32 %v5421, %v5421
    %v5509 = vmul.f32 %v5325, %v5325
    %v5510 = vmul.f32 %v5423, %v5423
    %v5511 = vmul.f32 %v5328, %v5328
    %v5512 = vmul.f32 %v5426, %v5426
    %v5513 = vmul.f32 %v5330, %v5330
    %v5514 = vmul.f32 %v5428, %v5428
    %v5515 = vmul.f32 %v5333, %v5333
    %v5516 = vmul.f32 %v5431, %v5431
    %v5517 = vmul.f32 %v5335, %v5335
    %v5518 = vmul.f32 %v5433, %v5433
    %v5519 = vmul.f32 %v5338, %v5338
    %v5520 = vmul.f32 %v5436, %v5436
    %v5521 = vmul.f32 %v5340, %v5340
    %v5522 = vmul.f32 %v5438, %v5438
    %v5523 = vmul.f32 %v5343, %v5343
    %v5524 = vmul.f32 %v5441, %v5441
    %v5525 = vmul.f32 %v5345, %v5345
    %v5526 = vmul.f32 %v5443, %v5443
    %v5527 = vmul.f32 %v5348, %v5348
    %v5528 = vmul.f32 %v5446, %v5446
    %v5529 = vmul.f32 %v5350, %v5350
    %v5530 = vmul.f32 %v5448, %v5448
    %v5531 = vmul.f32 %v5353, %v5353
    %v5532 = vmul.f32 %v5451, %v5451
    %v5533 = vmul.f32 %v5355, %v5355
    %v5534 = vmul.f32 %v5453, %v5453
    %v5535 = vadd.f32 %v5503, %v5504
    %5536 = vadd.xlane.f32.xlu0 %v5535
    %v5537 = vpop.xlane.xlu0 %5536
    %v5538 = vadd.f32 %v5505, %v5506
    %5539 = vadd.xlane.f32.xlu0 %v5538
    %v5540 = vpop.xlane.xlu0 %5539
    %v5541 = vadd.f32 %v5507, %v5508
    %5542 = vadd.xlane.f32.xlu0 %v5541
    %v5543 = vpop.xlane.xlu0 %5542
    %v5544 = vadd.f32 %v5509, %v5510
    %5545 = vadd.xlane.f32.xlu0 %v5544
    %v5546 = vpop.xlane.xlu0 %5545
    %v5547 = vadd.f32 %v5511, %v5512
    %5548 = vadd.xlane.f32.xlu0 %v5547
    %v5549 = vpop.xlane.xlu0 %5548
    %v5550 = vadd.f32 %v5513, %v5514
    %5551 = vadd.xlane.f32.xlu0 %v5550
    %v5552 = vpop.xlane.xlu0 %5551
    %v5553 = vadd.f32 %v5515, %v5516
    %5554 = vadd.xlane.f32.xlu0 %v5553
    %v5555 = vpop.xlane.xlu0 %5554
    %v5556 = vadd.f32 %v5517, %v5518
    %5557 = vadd.xlane.f32.xlu0 %v5556
    %v5558 = vpop.xlane.xlu0 %5557
    %v5559 = vadd.f32 %v5519, %v5520
    %5560 = vadd.xlane.f32.xlu0 %v5559
    %v5561 = vpop.xlane.xlu0 %5560
    %v5562 = vadd.f32 %v5521, %v5522
    %5563 = vadd.xlane.f32.xlu0 %v5562
    %v5564 = vpop.xlane.xlu0 %5563
    %v5565 = vadd.f32 %v5523, %v5524
    %5566 = vadd.xlane.f32.xlu0 %v5565
    %v5567 = vpop.xlane.xlu0 %5566
    %v5568 = vadd.f32 %v5525, %v5526
    %5569 = vadd.xlane.f32.xlu0 %v5568
    %v5570 = vpop.xlane.xlu0 %5569
    %v5571 = vadd.f32 %v5527, %v5528
    %5572 = vadd.xlane.f32.xlu0 %v5571
    %v5573 = vpop.xlane.xlu0 %5572
    %v5574 = vadd.f32 %v5529, %v5530
    %5575 = vadd.xlane.f32.xlu0 %v5574
    %v5576 = vpop.xlane.xlu0 %5575
    %v5577 = vadd.f32 %v5531, %v5532
    %5578 = vadd.xlane.f32.xlu0 %v5577
    %v5579 = vpop.xlane.xlu0 %5578
    %v5580 = vadd.f32 %v5533, %v5534
    %5581 = vadd.xlane.f32.xlu0 %v5580
    %v5582 = vpop.xlane.xlu0 %5581
    %v5583 = vmul.f32 %v5457, 0.00390625
    %v5584 = vmul.f32 %v5460, 0.00390625
    %v5585 = vmul.f32 %v5463, 0.00390625
    %v5586 = vmul.f32 %v5466, 0.00390625
    %v5587 = vmul.f32 %v5469, 0.00390625
    %v5588 = vmul.f32 %v5472, 0.00390625
    %v5589 = vmul.f32 %v5475, 0.00390625
    %v5590 = vmul.f32 %v5478, 0.00390625
    %v5591 = vmul.f32 %v5481, 0.00390625
    %v5592 = vmul.f32 %v5484, 0.00390625
    %v5593 = vmul.f32 %v5487, 0.00390625
    %v5594 = vmul.f32 %v5490, 0.00390625
    %v5595 = vmul.f32 %v5493, 0.00390625
    %v5596 = vmul.f32 %v5496, 0.00390625
    %v5597 = vmul.f32 %v5499, 0.00390625
    %v5598 = vmul.f32 %v5502, 0.00390625
    %v5599 = vmul.f32 %v5537, 0.00390625
    %v5600 = vmul.f32 %v5540, 0.00390625
    %v5601 = vmul.f32 %v5543, 0.00390625
    %v5602 = vmul.f32 %v5546, 0.00390625
    %v5603 = vmul.f32 %v5549, 0.00390625
    %v5604 = vmul.f32 %v5552, 0.00390625
    %v5605 = vmul.f32 %v5555, 0.00390625
    %v5606 = vmul.f32 %v5558, 0.00390625
    %v5607 = vmul.f32 %v5561, 0.00390625
    %v5608 = vmul.f32 %v5564, 0.00390625
    %v5609 = vmul.f32 %v5567, 0.00390625
    %v5610 = vmul.f32 %v5570, 0.00390625
    %v5611 = vmul.f32 %v5573, 0.00390625
    %v5612 = vmul.f32 %v5576, 0.00390625
    %v5613 = vmul.f32 %v5579, 0.00390625
    %v5614 = vmul.f32 %v5582, 0.00390625
    %v5615 = vmul.f32 %v5583, %v5583
    %v5616 = vmul.f32 %v5584, %v5584
    %v5617 = vmul.f32 %v5585, %v5585
    %v5618 = vmul.f32 %v5586, %v5586
    %v5619 = vmul.f32 %v5587, %v5587
    %v5620 = vmul.f32 %v5588, %v5588
    %v5621 = vmul.f32 %v5589, %v5589
    %v5622 = vmul.f32 %v5590, %v5590
    %v5623 = vmul.f32 %v5591, %v5591
    %v5624 = vmul.f32 %v5592, %v5592
    %v5625 = vmul.f32 %v5593, %v5593
    %v5626 = vmul.f32 %v5594, %v5594
    %v5627 = vmul.f32 %v5595, %v5595
    %v5628 = vmul.f32 %v5596, %v5596
    %v5629 = vmul.f32 %v5597, %v5597
    %v5630 = vmul.f32 %v5598, %v5598
    %v5631 = vsub.f32 %v5599, %v5615
    %v5632 = vsub.f32 %v5600, %v5616
    %v5633 = vsub.f32 %v5601, %v5617
    %v5634 = vsub.f32 %v5602, %v5618
    %v5635 = vsub.f32 %v5603, %v5619
    %v5636 = vsub.f32 %v5604, %v5620
    %v5637 = vsub.f32 %v5605, %v5621
    %v5638 = vsub.f32 %v5606, %v5622
    %v5639 = vsub.f32 %v5607, %v5623
    %v5640 = vsub.f32 %v5608, %v5624
    %v5641 = vsub.f32 %v5609, %v5625
    %v5642 = vsub.f32 %v5610, %v5626
    %v5643 = vsub.f32 %v5611, %v5627
    %v5644 = vsub.f32 %v5612, %v5628
    %v5645 = vsub.f32 %v5613, %v5629
    %v5646 = vsub.f32 %v5614, %v5630
    %v5647 = vmax.f32 %v5631, 0.0
    %v5648 = vmax.f32 %v5632, 0.0
    %v5649 = vmax.f32 %v5633, 0.0
    %v5650 = vmax.f32 %v5634, 0.0
    %v5651 = vmax.f32 %v5635, 0.0
    %v5652 = vmax.f32 %v5636, 0.0
    %v5653 = vmax.f32 %v5637, 0.0
    %v5654 = vmax.f32 %v5638, 0.0
    %v5655 = vmax.f32 %v5639, 0.0
    %v5656 = vmax.f32 %v5640, 0.0
    %v5657 = vmax.f32 %v5641, 0.0
    %v5658 = vmax.f32 %v5642, 0.0
    %v5659 = vmax.f32 %v5643, 0.0
    %v5660 = vmax.f32 %v5644, 0.0
    %v5661 = vmax.f32 %v5645, 0.0
    %v5662 = vmax.f32 %v5646, 0.0
    %v5663 = vadd.f32 %v5647, 1e-05
    %v5664 = vadd.f32 %v5648, 1e-05
    %v5665 = vadd.f32 %v5649, 1e-05
    %v5666 = vadd.f32 %v5650, 1e-05
    %v5667 = vadd.f32 %v5651, 1e-05
    %v5668 = vadd.f32 %v5652, 1e-05
    %v5669 = vadd.f32 %v5653, 1e-05
    %v5670 = vadd.f32 %v5654, 1e-05
    %v5671 = vadd.f32 %v5655, 1e-05
    %v5672 = vadd.f32 %v5656, 1e-05
    %v5673 = vadd.f32 %v5657, 1e-05
    %v5674 = vadd.f32 %v5658, 1e-05
    %v5675 = vadd.f32 %v5659, 1e-05
    %v5676 = vadd.f32 %v5660, 1e-05
    %v5677 = vadd.f32 %v5661, 1e-05
    %v5678 = vadd.f32 %v5662, 1e-05
    %v5679 = vrsqrt.pop %v5663
    %v5680 = vmul.f32 %v5679, %v5663
    %v5681 = vmul.f32 %v5680, %v5679
    %v5682 = vmul.f32 0.5, %v5681
    %v5683 = vsub.f32 1.5, %v5682
    %v5684 = vmul.f32 %v5679, %v5683
    %vm5685 = vweird.f32 %v5663
    %vm5686 = vweird.f32 %v5679
    %vm5687 = vmor %vm5685, %vm5686
    %v5688 = vsel %vm5687, %v5679, %v5684
    %v5689 = vrsqrt.pop %v5664
    %v5690 = vmul.f32 %v5689, %v5664
    %v5691 = vmul.f32 %v5690, %v5689
    %v5692 = vmul.f32 0.5, %v5691
    %v5693 = vsub.f32 1.5, %v5692
    %v5694 = vmul.f32 %v5689, %v5693
    %vm5695 = vweird.f32 %v5664
    %vm5696 = vweird.f32 %v5689
    %vm5697 = vmor %vm5695, %vm5696
    %v5698 = vsel %vm5697, %v5689, %v5694
    %v5699 = vrsqrt.pop %v5665
    %v5700 = vmul.f32 %v5699, %v5665
    %v5701 = vmul.f32 %v5700, %v5699
    %v5702 = vmul.f32 0.5, %v5701
    %v5703 = vsub.f32 1.5, %v5702
    %v5704 = vmul.f32 %v5699, %v5703
    %vm5705 = vweird.f32 %v5665
    %vm5706 = vweird.f32 %v5699
    %vm5707 = vmor %vm5705, %vm5706
    %v5708 = vsel %vm5707, %v5699, %v5704
    %v5709 = vrsqrt.pop %v5666
    %v5710 = vmul.f32 %v5709, %v5666
    %v5711 = vmul.f32 %v5710, %v5709
    %v5712 = vmul.f32 0.5, %v5711
    %v5713 = vsub.f32 1.5, %v5712
    %v5714 = vmul.f32 %v5709, %v5713
    %vm5715 = vweird.f32 %v5666
    %vm5716 = vweird.f32 %v5709
    %vm5717 = vmor %vm5715, %vm5716
    %v5718 = vsel %vm5717, %v5709, %v5714
    %v5719 = vrsqrt.pop %v5667
    %v5720 = vmul.f32 %v5719, %v5667
    %v5721 = vmul.f32 %v5720, %v5719
    %v5722 = vmul.f32 0.5, %v5721
    %v5723 = vsub.f32 1.5, %v5722
    %v5724 = vmul.f32 %v5719, %v5723
    %vm5725 = vweird.f32 %v5667
    %vm5726 = vweird.f32 %v5719
    %vm5727 = vmor %vm5725, %vm5726
    %v5728 = vsel %vm5727, %v5719, %v5724
    %v5729 = vrsqrt.pop %v5668
    %v5730 = vmul.f32 %v5729, %v5668
    %v5731 = vmul.f32 %v5730, %v5729
    %v5732 = vmul.f32 0.5, %v5731
    %v5733 = vsub.f32 1.5, %v5732
    %v5734 = vmul.f32 %v5729, %v5733
    %vm5735 = vweird.f32 %v5668
    %vm5736 = vweird.f32 %v5729
    %vm5737 = vmor %vm5735, %vm5736
    %v5738 = vsel %vm5737, %v5729, %v5734
    %v5739 = vrsqrt.pop %v5669
    %v5740 = vmul.f32 %v5739, %v5669
    %v5741 = vmul.f32 %v5740, %v5739
    %v5742 = vmul.f32 0.5, %v5741
    %v5743 = vsub.f32 1.5, %v5742
    %v5744 = vmul.f32 %v5739, %v5743
    %vm5745 = vweird.f32 %v5669
    %vm5746 = vweird.f32 %v5739
    %vm5747 = vmor %vm5745, %vm5746
    %v5748 = vsel %vm5747, %v5739, %v5744
    %v5749 = vrsqrt.pop %v5670
    %v5750 = vmul.f32 %v5749, %v5670
    %v5751 = vmul.f32 %v5750, %v5749
    %v5752 = vmul.f32 0.5, %v5751
    %v5753 = vsub.f32 1.5, %v5752
    %v5754 = vmul.f32 %v5749, %v5753
    %vm5755 = vweird.f32 %v5670
    %vm5756 = vweird.f32 %v5749
    %vm5757 = vmor %vm5755, %vm5756
    %v5758 = vsel %vm5757, %v5749, %v5754
    %v5759 = vrsqrt.pop %v5671
    %v5760 = vmul.f32 %v5759, %v5671
    %v5761 = vmul.f32 %v5760, %v5759
    %v5762 = vmul.f32 0.5, %v5761
    %v5763 = vsub.f32 1.5, %v5762
    %v5764 = vmul.f32 %v5759, %v5763
    %vm5765 = vweird.f32 %v5671
    %vm5766 = vweird.f32 %v5759
    %vm5767 = vmor %vm5765, %vm5766
    %v5768 = vsel %vm5767, %v5759, %v5764
    %v5769 = vrsqrt.pop %v5672
    %v5770 = vmul.f32 %v5769, %v5672
    %v5771 = vmul.f32 %v5770, %v5769
    %v5772 = vmul.f32 0.5, %v5771
    %v5773 = vsub.f32 1.5, %v5772
    %v5774 = vmul.f32 %v5769, %v5773
    %vm5775 = vweird.f32 %v5672
    %vm5776 = vweird.f32 %v5769
    %vm5777 = vmor %vm5775, %vm5776
    %v5778 = vsel %vm5777, %v5769, %v5774
    %v5779 = vrsqrt.pop %v5673
    %v5780 = vmul.f32 %v5779, %v5673
    %v5781 = vmul.f32 %v5780, %v5779
    %v5782 = vmul.f32 0.5, %v5781
    %v5783 = vsub.f32 1.5, %v5782
    %v5784 = vmul.f32 %v5779, %v5783
    %vm5785 = vweird.f32 %v5673
    %vm5786 = vweird.f32 %v5779
    %vm5787 = vmor %vm5785, %vm5786
    %v5788 = vsel %vm5787, %v5779, %v5784
    %v5789 = vrsqrt.pop %v5674
    %v5790 = vmul.f32 %v5789, %v5674
    %v5791 = vmul.f32 %v5790, %v5789
    %v5792 = vmul.f32 0.5, %v5791
    %v5793 = vsub.f32 1.5, %v5792
    %v5794 = vmul.f32 %v5789, %v5793
    %vm5795 = vweird.f32 %v5674
    %vm5796 = vweird.f32 %v5789
    %vm5797 = vmor %vm5795, %vm5796
    %v5798 = vsel %vm5797, %v5789, %v5794
    %v5799 = vrsqrt.pop %v5675
    %v5800 = vmul.f32 %v5799, %v5675
    %v5801 = vmul.f32 %v5800, %v5799
    %v5802 = vmul.f32 0.5, %v5801
    %v5803 = vsub.f32 1.5, %v5802
    %v5804 = vmul.f32 %v5799, %v5803
    %vm5805 = vweird.f32 %v5675
    %vm5806 = vweird.f32 %v5799
    %vm5807 = vmor %vm5805, %vm5806
    %v5808 = vsel %vm5807, %v5799, %v5804
    %v5809 = vrsqrt.pop %v5676
    %v5810 = vmul.f32 %v5809, %v5676
    %v5811 = vmul.f32 %v5810, %v5809
    %v5812 = vmul.f32 0.5, %v5811
    %v5813 = vsub.f32 1.5, %v5812
    %v5814 = vmul.f32 %v5809, %v5813
    %vm5815 = vweird.f32 %v5676
    %vm5816 = vweird.f32 %v5809
    %vm5817 = vmor %vm5815, %vm5816
    %v5818 = vsel %vm5817, %v5809, %v5814
    %v5819 = vrsqrt.pop %v5677
    %v5820 = vmul.f32 %v5819, %v5677
    %v5821 = vmul.f32 %v5820, %v5819
    %v5822 = vmul.f32 0.5, %v5821
    %v5823 = vsub.f32 1.5, %v5822
    %v5824 = vmul.f32 %v5819, %v5823
    %vm5825 = vweird.f32 %v5677
    %vm5826 = vweird.f32 %v5819
    %vm5827 = vmor %vm5825, %vm5826
    %v5828 = vsel %vm5827, %v5819, %v5824
    %v5829 = vrsqrt.pop %v5678
    %v5830 = vmul.f32 %v5829, %v5678
    %v5831 = vmul.f32 %v5830, %v5829
    %v5832 = vmul.f32 0.5, %v5831
    %v5833 = vsub.f32 1.5, %v5832
    %v5834 = vmul.f32 %v5829, %v5833
    %vm5835 = vweird.f32 %v5678
    %vm5836 = vweird.f32 %v5829
    %vm5837 = vmor %vm5835, %vm5836
    %v5838 = vsel %vm5837, %v5829, %v5834
    %v5839 = vsub.f32 %v5318, %v5583
    %v5840 = vsub.f32 %v5416, %v5583
    %v5841 = vsub.f32 %v5320, %v5584
    %v5842 = vsub.f32 %v5418, %v5584
    %v5843 = vsub.f32 %v5323, %v5585
    %v5844 = vsub.f32 %v5421, %v5585
    %v5845 = vsub.f32 %v5325, %v5586
    %v5846 = vsub.f32 %v5423, %v5586
    %v5847 = vsub.f32 %v5328, %v5587
    %v5848 = vsub.f32 %v5426, %v5587
    %v5849 = vsub.f32 %v5330, %v5588
    %v5850 = vsub.f32 %v5428, %v5588
    %v5851 = vsub.f32 %v5333, %v5589
    %v5852 = vsub.f32 %v5431, %v5589
    %v5853 = vsub.f32 %v5335, %v5590
    %v5854 = vsub.f32 %v5433, %v5590
    %v5855 = vsub.f32 %v5338, %v5591
    %v5856 = vsub.f32 %v5436, %v5591
    %v5857 = vsub.f32 %v5340, %v5592
    %v5858 = vsub.f32 %v5438, %v5592
    %v5859 = vsub.f32 %v5343, %v5593
    %v5860 = vsub.f32 %v5441, %v5593
    %v5861 = vsub.f32 %v5345, %v5594
    %v5862 = vsub.f32 %v5443, %v5594
    %v5863 = vsub.f32 %v5348, %v5595
    %v5864 = vsub.f32 %v5446, %v5595
    %v5865 = vsub.f32 %v5350, %v5596
    %v5866 = vsub.f32 %v5448, %v5596
    %v5867 = vsub.f32 %v5353, %v5597
    %v5868 = vsub.f32 %v5451, %v5597
    %v5869 = vsub.f32 %v5355, %v5598
    %v5870 = vsub.f32 %v5453, %v5598
    %v5871 = vmul.f32 %v5839, %v5688
    %v5872 = vmul.f32 %v5840, %v5688
    %v5873 = vmul.f32 %v5841, %v5698
    %v5874 = vmul.f32 %v5842, %v5698
    %v5875 = vmul.f32 %v5843, %v5708
    %v5876 = vmul.f32 %v5844, %v5708
    %v5877 = vmul.f32 %v5845, %v5718
    %v5878 = vmul.f32 %v5846, %v5718
    %v5879 = vmul.f32 %v5847, %v5728
    %v5880 = vmul.f32 %v5848, %v5728
    %v5881 = vmul.f32 %v5849, %v5738
    %v5882 = vmul.f32 %v5850, %v5738
    %v5883 = vmul.f32 %v5851, %v5748
    %v5884 = vmul.f32 %v5852, %v5748
    %v5885 = vmul.f32 %v5853, %v5758
    %v5886 = vmul.f32 %v5854, %v5758
    %v5887 = vmul.f32 %v5855, %v5768
    %v5888 = vmul.f32 %v5856, %v5768
    %v5889 = vmul.f32 %v5857, %v5778
    %v5890 = vmul.f32 %v5858, %v5778
    %v5891 = vmul.f32 %v5859, %v5788
    %v5892 = vmul.f32 %v5860, %v5788
    %v5893 = vmul.f32 %v5861, %v5798
    %v5894 = vmul.f32 %v5862, %v5798
    %v5895 = vmul.f32 %v5863, %v5808
    %v5896 = vmul.f32 %v5864, %v5808
    %v5897 = vmul.f32 %v5865, %v5818
    %v5898 = vmul.f32 %v5866, %v5818
    %v5899 = vmul.f32 %v5867, %v5828
    %v5900 = vmul.f32 %v5868, %v5828
    %v5901 = vmul.f32 %v5869, %v5838
    %v5902 = vmul.f32 %v5870, %v5838
    %s5903 = scalar_lea.vmem %s6, 5
    %v5904 = vld [vmem:[%s5903] ss:$8 sm:$0x3]
    %v5906 = vperm.slane %v5904, 0
    %v5907 = vperm.slane %v5904, 1
    %v5910 = vmul.f32 %v5871, %v5906
    %v5911 = vmul.f32 %v5872, %v5907
    %v5912 = vmul.f32 %v5873, %v5906
    %v5913 = vmul.f32 %v5874, %v5907
    %v5914 = vmul.f32 %v5875, %v5906
    %v5915 = vmul.f32 %v5876, %v5907
    %v5916 = vmul.f32 %v5877, %v5906
    %v5917 = vmul.f32 %v5878, %v5907
    %v5918 = vmul.f32 %v5879, %v5906
    %v5919 = vmul.f32 %v5880, %v5907
    %v5920 = vmul.f32 %v5881, %v5906
    %v5921 = vmul.f32 %v5882, %v5907
    %v5922 = vmul.f32 %v5883, %v5906
    %v5923 = vmul.f32 %v5884, %v5907
    %v5924 = vmul.f32 %v5885, %v5906
    %v5925 = vmul.f32 %v5886, %v5907
    %v5926 = vmul.f32 %v5887, %v5906
    %v5927 = vmul.f32 %v5888, %v5907
    %v5928 = vmul.f32 %v5889, %v5906
    %v5929 = vmul.f32 %v5890, %v5907
    %v5930 = vmul.f32 %v5891, %v5906
    %v5931 = vmul.f32 %v5892, %v5907
    %v5932 = vmul.f32 %v5893, %v5906
    %v5933 = vmul.f32 %v5894, %v5907
    %v5934 = vmul.f32 %v5895, %v5906
    %v5935 = vmul.f32 %v5896, %v5907
    %v5936 = vmul.f32 %v5897, %v5906
    %v5937 = vmul.f32 %v5898, %v5907
    %v5938 = vmul.f32 %v5899, %v5906
    %v5939 = vmul.f32 %v5900, %v5907
    %v5940 = vmul.f32 %v5901, %v5906
    %v5941 = vmul.f32 %v5902, %v5907
    %s5942 = scalar_lea.vmem %s7, 5
    %v5943 = vld [vmem:[%s5942] ss:$8 sm:$0x3]
    %v5945 = vperm.slane %v5943, 0
    %v5946 = vperm.slane %v5943, 1
    %v5949 = vadd.f32 %v5910, %v5945
    %v5950 = vadd.f32 %v5911, %v5946
    %v5951 = vadd.f32 %v5912, %v5945
    %v5952 = vadd.f32 %v5913, %v5946
    %v5953 = vadd.f32 %v5914, %v5945
    %v5954 = vadd.f32 %v5915, %v5946
    %v5955 = vadd.f32 %v5916, %v5945
    %v5956 = vadd.f32 %v5917, %v5946
    %v5957 = vadd.f32 %v5918, %v5945
    %v5958 = vadd.f32 %v5919, %v5946
    %v5959 = vadd.f32 %v5920, %v5945
    %v5960 = vadd.f32 %v5921, %v5946
    %v5961 = vadd.f32 %v5922, %v5945
    %v5962 = vadd.f32 %v5923, %v5946
    %v5963 = vadd.f32 %v5924, %v5945
    %v5964 = vadd.f32 %v5925, %v5946
    %v5965 = vadd.f32 %v5926, %v5945
    %v5966 = vadd.f32 %v5927, %v5946
    %v5967 = vadd.f32 %v5928, %v5945
    %v5968 = vadd.f32 %v5929, %v5946
    %v5969 = vadd.f32 %v5930, %v5945
    %v5970 = vadd.f32 %v5931, %v5946
    %v5971 = vadd.f32 %v5932, %v5945
    %v5972 = vadd.f32 %v5933, %v5946
    %v5973 = vadd.f32 %v5934, %v5945
    %v5974 = vadd.f32 %v5935, %v5946
    %v5975 = vadd.f32 %v5936, %v5945
    %v5976 = vadd.f32 %v5937, %v5946
    %v5977 = vadd.f32 %v5938, %v5945
    %v5978 = vadd.f32 %v5939, %v5946
    %v5979 = vadd.f32 %v5940, %v5945
    %v5980 = vadd.f32 %v5941, %v5946
    %v5981 = vmax.f32 %v5949, 0.0
    %v5982 = vmax.f32 %v5950, 0.0
    %v5983 = vmax.f32 %v5951, 0.0
    %v5984 = vmax.f32 %v5952, 0.0
    %v5985 = vmax.f32 %v5953, 0.0
    %v5986 = vmax.f32 %v5954, 0.0
    %v5987 = vmax.f32 %v5955, 0.0
    %v5988 = vmax.f32 %v5956, 0.0
    %v5989 = vmax.f32 %v5957, 0.0
    %v5990 = vmax.f32 %v5958, 0.0
    %v5991 = vmax.f32 %v5959, 0.0
    %v5992 = vmax.f32 %v5960, 0.0
    %v5993 = vmax.f32 %v5961, 0.0
    %v5994 = vmax.f32 %v5962, 0.0
    %v5995 = vmax.f32 %v5963, 0.0
    %v5996 = vmax.f32 %v5964, 0.0
    %v5997 = vmax.f32 %v5965, 0.0
    %v5998 = vmax.f32 %v5966, 0.0
    %v5999 = vmax.f32 %v5967, 0.0
    %v6000 = vmax.f32 %v5968, 0.0
    %v6001 = vmax.f32 %v5969, 0.0
    %v6002 = vmax.f32 %v5970, 0.0
    %v6003 = vmax.f32 %v5971, 0.0
    %v6004 = vmax.f32 %v5972, 0.0
    %v6005 = vmax.f32 %v5973, 0.0
    %v6006 = vmax.f32 %v5974, 0.0
    %v6007 = vmax.f32 %v5975, 0.0
    %v6008 = vmax.f32 %v5976, 0.0
    %v6009 = vmax.f32 %v5977, 0.0
    %v6010 = vmax.f32 %v5978, 0.0
    %v6011 = vmax.f32 %v5979, 0.0
    %v6012 = vmax.f32 %v5980, 0.0
    %v6013 = vpack.c.bf16 %v5983, %v5981
    %v6014 = vpack.c.bf16 %v5984, %v5982
    %v6015 = vpack.c.bf16 %v5987, %v5985
    %v6016 = vpack.c.bf16 %v5988, %v5986
    %v6017 = vpack.c.bf16 %v5991, %v5989
    %v6018 = vpack.c.bf16 %v5992, %v5990
    %v6019 = vpack.c.bf16 %v5995, %v5993
    %v6020 = vpack.c.bf16 %v5996, %v5994
    %v6021 = vpack.c.bf16 %v5999, %v5997
    %v6022 = vpack.c.bf16 %v6000, %v5998
    %v6023 = vpack.c.bf16 %v6003, %v6001
    %v6024 = vpack.c.bf16 %v6004, %v6002
    %v6025 = vpack.c.bf16 %v6007, %v6005
    %v6026 = vpack.c.bf16 %v6008, %v6006
    %v6027 = vpack.c.bf16 %v6011, %v6009
    %v6028 = vpack.c.bf16 %v6012, %v6010
    %s6029 = scalar_lea.vmem [#allocation4], 1024
    %v6030 = vld [vmem:[%s6029] sm:$0xff]
    %v6031 = vld [vmem:[%s6029 + $0x8] sm:$0xff]
    %v6032 = vld [vmem:[%s6029 + $0x10] sm:$0xff]
    %v6033 = vld [vmem:[%s6029 + $0x18] sm:$0xff]
    %v6034 = vld [vmem:[%s6029 + $0x20] sm:$0xff]
    %v6035 = vld [vmem:[%s6029 + $0x28] sm:$0xff]
    %v6036 = vld [vmem:[%s6029 + $0x30] sm:$0xff]
    %v6037 = vld [vmem:[%s6029 + $0x38] sm:$0xff]
    %v6038 = vld [vmem:[%s6029 + $0x40] sm:$0xff]
    %v6039 = vld [vmem:[%s6029 + $0x48] sm:$0xff]
    %v6040 = vld [vmem:[%s6029 + $0x50] sm:$0xff]
    %v6041 = vld [vmem:[%s6029 + $0x58] sm:$0xff]
    %v6042 = vld [vmem:[%s6029 + $0x60] sm:$0xff]
    %v6043 = vld [vmem:[%s6029 + $0x68] sm:$0xff]
    %v6044 = vld [vmem:[%s6029 + $0x70] sm:$0xff]
    %v6045 = vld [vmem:[%s6029 + $0x78] sm:$0xff]
    %v6046 = vld [vmem:[%s6029 + $0x80] sm:$0xff]
    %v6047 = vld [vmem:[%s6029 + $0x88] sm:$0xff]
    %v6048 = vld [vmem:[%s6029 + $0x90] sm:$0xff]
    %v6049 = vld [vmem:[%s6029 + $0x98] sm:$0xff]
    %v6050 = vld [vmem:[%s6029 + $0xa0] sm:$0xff]
    %v6051 = vld [vmem:[%s6029 + $0xa8] sm:$0xff]
    %v6052 = vld [vmem:[%s6029 + $0xb0] sm:$0xff]
    %v6053 = vld [vmem:[%s6029 + $0xb8] sm:$0xff]
    %v6054 = vld [vmem:[%s6029 + $0xc0] sm:$0xff]
    %v6055 = vld [vmem:[%s6029 + $0xc8] sm:$0xff]
    %v6056 = vld [vmem:[%s6029 + $0xd0] sm:$0xff]
    %v6057 = vld [vmem:[%s6029 + $0xd8] sm:$0xff]
    %v6058 = vld [vmem:[%s6029 + $0xe0] sm:$0xff]
    %v6059 = vld [vmem:[%s6029 + $0xe8] sm:$0xff]
    %v6060 = vld [vmem:[%s6029 + $0xf0] sm:$0xff]
    %v6061 = vld [vmem:[%s6029 + $0xf8] sm:$0xff]
    %s6062 = scalar_lea.vmem %s5, 6
    %v6063 = vld [vmem:[%s6062] ss:$8 sm:$0x3]
    %v6065 = vperm.slane %v6063, 0
    %v6066 = vperm.slane %v6063, 1
    %v6101 = vunpack.c.l.b16 %v6030
    %v6102 = vunpack.c.h.b16 %v6030
    %v6103 = vunpack.c.l.b16 %v6031
    %v6104 = vunpack.c.h.b16 %v6031
    %v6105 = vunpack.c.l.b16 %v6032
    %v6106 = vunpack.c.h.b16 %v6032
    %v6107 = vunpack.c.l.b16 %v6033
    %v6108 = vunpack.c.h.b16 %v6033
    %v6109 = vunpack.c.l.b16 %v6034
    %v6110 = vunpack.c.h.b16 %v6034
    %v6111 = vunpack.c.l.b16 %v6035
    %v6112 = vunpack.c.h.b16 %v6035
    %v6113 = vunpack.c.l.b16 %v6036
    %v6114 = vunpack.c.h.b16 %v6036
    %v6115 = vunpack.c.l.b16 %v6037
    %v6116 = vunpack.c.h.b16 %v6037
    %v6117 = vunpack.c.l.b16 %v6038
    %v6118 = vunpack.c.h.b16 %v6038
    %v6119 = vunpack.c.l.b16 %v6039
    %v6120 = vunpack.c.h.b16 %v6039
    %v6121 = vunpack.c.l.b16 %v6040
    %v6122 = vunpack.c.h.b16 %v6040
    %v6123 = vunpack.c.l.b16 %v6041
    %v6124 = vunpack.c.h.b16 %v6041
    %v6125 = vunpack.c.l.b16 %v6042
    %v6126 = vunpack.c.h.b16 %v6042
    %v6127 = vunpack.c.l.b16 %v6043
    %v6128 = vunpack.c.h.b16 %v6043
    %v6129 = vunpack.c.l.b16 %v6044
    %v6130 = vunpack.c.h.b16 %v6044
    %v6131 = vunpack.c.l.b16 %v6045
    %v6132 = vunpack.c.h.b16 %v6045
    %v6133 = vunpack.c.l.b16 %v6046
    %v6134 = vunpack.c.h.b16 %v6046
    %v6135 = vunpack.c.l.b16 %v6047
    %v6136 = vunpack.c.h.b16 %v6047
    %v6137 = vunpack.c.l.b16 %v6048
    %v6138 = vunpack.c.h.b16 %v6048
    %v6139 = vunpack.c.l.b16 %v6049
    %v6140 = vunpack.c.h.b16 %v6049
    %v6141 = vunpack.c.l.b16 %v6050
    %v6142 = vunpack.c.h.b16 %v6050
    %v6143 = vunpack.c.l.b16 %v6051
    %v6144 = vunpack.c.h.b16 %v6051
    %v6145 = vunpack.c.l.b16 %v6052
    %v6146 = vunpack.c.h.b16 %v6052
    %v6147 = vunpack.c.l.b16 %v6053
    %v6148 = vunpack.c.h.b16 %v6053
    %v6149 = vunpack.c.l.b16 %v6054
    %v6150 = vunpack.c.h.b16 %v6054
    %v6151 = vunpack.c.l.b16 %v6055
    %v6152 = vunpack.c.h.b16 %v6055
    %v6153 = vunpack.c.l.b16 %v6056
    %v6154 = vunpack.c.h.b16 %v6056
    %v6155 = vunpack.c.l.b16 %v6057
    %v6156 = vunpack.c.h.b16 %v6057
    %v6157 = vunpack.c.l.b16 %v6058
    %v6158 = vunpack.c.h.b16 %v6058
    %v6159 = vunpack.c.l.b16 %v6059
    %v6160 = vunpack.c.h.b16 %v6059
    %v6161 = vunpack.c.l.b16 %v6060
    %v6162 = vunpack.c.h.b16 %v6060
    %v6163 = vunpack.c.l.b16 %v6061
    %v6164 = vunpack.c.h.b16 %v6061
    %v6165 = vpack.c.b16 %v6103, %v6101
    %v6166 = vpack.c.b16 %v6104, %v6102
    %v6167 = vpack.c.b16 %v6107, %v6105
    %v6168 = vpack.c.b16 %v6108, %v6106
    %v6169 = vpack.c.b16 %v6111, %v6109
    %v6170 = vpack.c.b16 %v6112, %v6110
    %v6171 = vpack.c.b16 %v6115, %v6113
    %v6172 = vpack.c.b16 %v6116, %v6114
    %v6173 = vpack.c.b16 %v6119, %v6117
    %v6174 = vpack.c.b16 %v6120, %v6118
    %v6175 = vpack.c.b16 %v6123, %v6121
    %v6176 = vpack.c.b16 %v6124, %v6122
    %v6177 = vpack.c.b16 %v6127, %v6125
    %v6178 = vpack.c.b16 %v6128, %v6126
    %v6179 = vpack.c.b16 %v6131, %v6129
    %v6180 = vpack.c.b16 %v6132, %v6130
    %v6181 = vpack.c.b16 %v6135, %v6133
    %v6182 = vpack.c.b16 %v6136, %v6134
    %v6183 = vpack.c.b16 %v6139, %v6137
    %v6184 = vpack.c.b16 %v6140, %v6138
    %v6185 = vpack.c.b16 %v6143, %v6141
    %v6186 = vpack.c.b16 %v6144, %v6142
    %v6187 = vpack.c.b16 %v6147, %v6145
    %v6188 = vpack.c.b16 %v6148, %v6146
    %v6189 = vpack.c.b16 %v6151, %v6149
    %v6190 = vpack.c.b16 %v6152, %v6150
    %v6191 = vpack.c.b16 %v6155, %v6153
    %v6192 = vpack.c.b16 %v6156, %v6154
    %v6193 = vpack.c.b16 %v6159, %v6157
    %v6194 = vpack.c.b16 %v6160, %v6158
    %v6195 = vpack.c.b16 %v6163, %v6161
    %v6196 = vpack.c.b16 %v6164, %v6162
    %6229 = vmatpush.bf16.msra.mxu0 %v6179
    %6230 = vmatpush.bf16.msra.mxu0 %v6177
    %6231 = vmatpush.bf16.msra.mxu0 %v6175
    %6232 = vmatpush.bf16.msra.mxu0 %v6173
    %6233 = vmatpush.bf16.msra.mxu0 %v6171
    %6234 = vmatpush.bf16.msra.mxu0 %v6169
    %6235 = vmatpush.bf16.msra.mxu0 %v6167
    %6236 = vmatpush.bf16.msra.mxu0 %v6165
    %6237 = vmatmul.bf16.gmra.mxu0 %v6013
    %v6238 = vpop.f32.mrf.mxu0
    %v6239 = vadd.f32 %v6065, %v6238
    %v6240 = vpop.f32.mrf.mxu0
    %v6241 = vadd.f32 %v6065, %v6240
    %6242 = vmatmul.bf16.gmra.mxu0 %v6015
    %v6243 = vpop.f32.mrf.mxu0
    %v6244 = vadd.f32 %v6065, %v6243
    %v6245 = vpop.f32.mrf.mxu0
    %v6246 = vadd.f32 %v6065, %v6245
    %6247 = vmatmul.bf16.gmra.mxu0 %v6017
    %v6248 = vpop.f32.mrf.mxu0
    %v6249 = vadd.f32 %v6065, %v6248
    %v6250 = vpop.f32.mrf.mxu0
    %v6251 = vadd.f32 %v6065, %v6250
    %6252 = vmatmul.bf16.gmra.mxu0 %v6019
    %v6253 = vpop.f32.mrf.mxu0
    %v6254 = vadd.f32 %v6065, %v6253
    %v6255 = vpop.f32.mrf.mxu0
    %v6256 = vadd.f32 %v6065, %v6255
    %6257 = vmatmul.bf16.gmra.mxu0 %v6021
    %v6258 = vpop.f32.mrf.mxu0
    %v6259 = vadd.f32 %v6065, %v6258
    %v6260 = vpop.f32.mrf.mxu0
    %v6261 = vadd.f32 %v6065, %v6260
    %6262 = vmatmul.bf16.gmra.mxu0 %v6023
    %v6263 = vpop.f32.mrf.mxu0
    %v6264 = vadd.f32 %v6065, %v6263
    %v6265 = vpop.f32.mrf.mxu0
    %v6266 = vadd.f32 %v6065, %v6265
    %6267 = vmatmul.bf16.gmra.mxu0 %v6025
    %v6268 = vpop.f32.mrf.mxu0
    %v6269 = vadd.f32 %v6065, %v6268
    %v6270 = vpop.f32.mrf.mxu0
    %v6271 = vadd.f32 %v6065, %v6270
    %6272 = vmatmul.bf16.gmra.mxu0 %v6027
    %v6273 = vpop.f32.mrf.mxu0
    %v6274 = vadd.f32 %v6065, %v6273
    %v6275 = vpop.f32.mrf.mxu0
    %v6276 = vadd.f32 %v6065, %v6275
    %6277 = vdwg.mxu0
    %6278 = vmatpush.bf16.msra.mxu0 %v6195
    %6279 = vmatpush.bf16.msra.mxu0 %v6193
    %6280 = vmatpush.bf16.msra.mxu0 %v6191
    %6281 = vmatpush.bf16.msra.mxu0 %v6189
    %6282 = vmatpush.bf16.msra.mxu0 %v6187
    %6283 = vmatpush.bf16.msra.mxu0 %v6185
    %6284 = vmatpush.bf16.msra.mxu0 %v6183
    %6285 = vmatpush.bf16.msra.mxu0 %v6181
    %6286 = vmatmul.bf16.gmra.mxu0 %v6014
    %v6287 = vpop.f32.mrf.mxu0
    %v6288 = vadd.f32 %v6239, %v6287
    %v6289 = vpop.f32.mrf.mxu0
    %v6290 = vadd.f32 %v6241, %v6289
    %6291 = vmatmul.bf16.gmra.mxu0 %v6016
    %v6292 = vpop.f32.mrf.mxu0
    %v6293 = vadd.f32 %v6244, %v6292
    %v6294 = vpop.f32.mrf.mxu0
    %v6295 = vadd.f32 %v6246, %v6294
    %6296 = vmatmul.bf16.gmra.mxu0 %v6018
    %v6297 = vpop.f32.mrf.mxu0
    %v6298 = vadd.f32 %v6249, %v6297
    %v6299 = vpop.f32.mrf.mxu0
    %v6300 = vadd.f32 %v6251, %v6299
    %6301 = vmatmul.bf16.gmra.mxu0 %v6020
    %v6302 = vpop.f32.mrf.mxu0
    %v6303 = vadd.f32 %v6254, %v6302
    %v6304 = vpop.f32.mrf.mxu0
    %v6305 = vadd.f32 %v6256, %v6304
    %6306 = vmatmul.bf16.gmra.mxu0 %v6022
    %v6307 = vpop.f32.mrf.mxu0
    %v6308 = vadd.f32 %v6259, %v6307
    %v6309 = vpop.f32.mrf.mxu0
    %v6310 = vadd.f32 %v6261, %v6309
    %6311 = vmatmul.bf16.gmra.mxu0 %v6024
    %v6312 = vpop.f32.mrf.mxu0
    %v6313 = vadd.f32 %v6264, %v6312
    %v6314 = vpop.f32.mrf.mxu0
    %v6315 = vadd.f32 %v6266, %v6314
    %6316 = vmatmul.bf16.gmra.mxu0 %v6026
    %v6317 = vpop.f32.mrf.mxu0
    %v6318 = vadd.f32 %v6269, %v6317
    %v6319 = vpop.f32.mrf.mxu0
    %v6320 = vadd.f32 %v6271, %v6319
    %6321 = vmatmul.bf16.gmra.mxu0 %v6028
    %v6322 = vpop.f32.mrf.mxu0
    %v6323 = vadd.f32 %v6274, %v6322
    %v6324 = vpop.f32.mrf.mxu0
    %v6325 = vadd.f32 %v6276, %v6324
    %6326 = vdwg.mxu0
    %6327 = vmatpush.bf16.msra.mxu0 %v6180
    %6328 = vmatpush.bf16.msra.mxu0 %v6178
    %6329 = vmatpush.bf16.msra.mxu0 %v6176
    %6330 = vmatpush.bf16.msra.mxu0 %v6174
    %6331 = vmatpush.bf16.msra.mxu0 %v6172
    %6332 = vmatpush.bf16.msra.mxu0 %v6170
    %6333 = vmatpush.bf16.msra.mxu0 %v6168
    %6334 = vmatpush.bf16.msra.mxu0 %v6166
    %6335 = vmatmul.bf16.gmra.mxu0 %v6013
    %v6336 = vpop.f32.mrf.mxu0
    %v6337 = vadd.f32 %v6066, %v6336
    %v6338 = vpop.f32.mrf.mxu0
    %v6339 = vadd.f32 %v6066, %v6338
    %6340 = vmatmul.bf16.gmra.mxu0 %v6015
    %v6341 = vpop.f32.mrf.mxu0
    %v6342 = vadd.f32 %v6066, %v6341
    %v6343 = vpop.f32.mrf.mxu0
    %v6344 = vadd.f32 %v6066, %v6343
    %6345 = vmatmul.bf16.gmra.mxu0 %v6017
    %v6346 = vpop.f32.mrf.mxu0
    %v6347 = vadd.f32 %v6066, %v6346
    %v6348 = vpop.f32.mrf.mxu0
    %v6349 = vadd.f32 %v6066, %v6348
    %6350 = vmatmul.bf16.gmra.mxu0 %v6019
    %v6351 = vpop.f32.mrf.mxu0
    %v6352 = vadd.f32 %v6066, %v6351
    %v6353 = vpop.f32.mrf.mxu0
    %v6354 = vadd.f32 %v6066, %v6353
    %6355 = vmatmul.bf16.gmra.mxu0 %v6021
    %v6356 = vpop.f32.mrf.mxu0
    %v6357 = vadd.f32 %v6066, %v6356
    %v6358 = vpop.f32.mrf.mxu0
    %v6359 = vadd.f32 %v6066, %v6358
    %6360 = vmatmul.bf16.gmra.mxu0 %v6023
    %v6361 = vpop.f32.mrf.mxu0
    %v6362 = vadd.f32 %v6066, %v6361
    %v6363 = vpop.f32.mrf.mxu0
    %v6364 = vadd.f32 %v6066, %v6363
    %6365 = vmatmul.bf16.gmra.mxu0 %v6025
    %v6366 = vpop.f32.mrf.mxu0
    %v6367 = vadd.f32 %v6066, %v6366
    %v6368 = vpop.f32.mrf.mxu0
    %v6369 = vadd.f32 %v6066, %v6368
    %6370 = vmatmul.bf16.gmra.mxu0 %v6027
    %v6371 = vpop.f32.mrf.mxu0
    %v6372 = vadd.f32 %v6066, %v6371
    %v6373 = vpop.f32.mrf.mxu0
    %v6374 = vadd.f32 %v6066, %v6373
    %6375 = vdwg.mxu0
    %6376 = vmatpush.bf16.msra.mxu0 %v6196
    %6377 = vmatpush.bf16.msra.mxu0 %v6194
    %6378 = vmatpush.bf16.msra.mxu0 %v6192
    %6379 = vmatpush.bf16.msra.mxu0 %v6190
    %6380 = vmatpush.bf16.msra.mxu0 %v6188
    %6381 = vmatpush.bf16.msra.mxu0 %v6186
    %6382 = vmatpush.bf16.msra.mxu0 %v6184
    %6383 = vmatpush.bf16.msra.mxu0 %v6182
    %6384 = vmatmul.bf16.gmra.mxu0 %v6014
    %v6385 = vpop.f32.mrf.mxu0
    %v6386 = vadd.f32 %v6337, %v6385
    %v6387 = vpop.f32.mrf.mxu0
    %v6388 = vadd.f32 %v6339, %v6387
    %6389 = vmatmul.bf16.gmra.mxu0 %v6016
    %v6390 = vpop.f32.mrf.mxu0
    %v6391 = vadd.f32 %v6342, %v6390
    %v6392 = vpop.f32.mrf.mxu0
    %v6393 = vadd.f32 %v6344, %v6392
    %6394 = vmatmul.bf16.gmra.mxu0 %v6018
    %v6395 = vpop.f32.mrf.mxu0
    %v6396 = vadd.f32 %v6347, %v6395
    %v6397 = vpop.f32.mrf.mxu0
    %v6398 = vadd.f32 %v6349, %v6397
    %6399 = vmatmul.bf16.gmra.mxu0 %v6020
    %v6400 = vpop.f32.mrf.mxu0
    %v6401 = vadd.f32 %v6352, %v6400
    %v6402 = vpop.f32.mrf.mxu0
    %v6403 = vadd.f32 %v6354, %v6402
    %6404 = vmatmul.bf16.gmra.mxu0 %v6022
    %v6405 = vpop.f32.mrf.mxu0
    %v6406 = vadd.f32 %v6357, %v6405
    %v6407 = vpop.f32.mrf.mxu0
    %v6408 = vadd.f32 %v6359, %v6407
    %6409 = vmatmul.bf16.gmra.mxu0 %v6024
    %v6410 = vpop.f32.mrf.mxu0
    %v6411 = vadd.f32 %v6362, %v6410
    %v6412 = vpop.f32.mrf.mxu0
    %v6413 = vadd.f32 %v6364, %v6412
    %6414 = vmatmul.bf16.gmra.mxu0 %v6026
    %v6415 = vpop.f32.mrf.mxu0
    %v6416 = vadd.f32 %v6367, %v6415
    %v6417 = vpop.f32.mrf.mxu0
    %v6418 = vadd.f32 %v6369, %v6417
    %6419 = vmatmul.bf16.gmra.mxu0 %v6028
    %v6420 = vpop.f32.mrf.mxu0
    %v6421 = vadd.f32 %v6372, %v6420
    %v6422 = vpop.f32.mrf.mxu0
    %v6423 = vadd.f32 %v6374, %v6422
    %6424 = vdwg.mxu0
    %v6425 = vadd.f32 %v6288, %v6386
    %6426 = vadd.xlane.f32.xlu0 %v6425
    %v6427 = vpop.xlane.xlu0 %6426
    %v6428 = vadd.f32 %v6290, %v6388
    %6429 = vadd.xlane.f32.xlu0 %v6428
    %v6430 = vpop.xlane.xlu0 %6429
    %v6431 = vadd.f32 %v6293, %v6391
    %6432 = vadd.xlane.f32.xlu0 %v6431
    %v6433 = vpop.xlane.xlu0 %6432
    %v6434 = vadd.f32 %v6295, %v6393
    %6435 = vadd.xlane.f32.xlu0 %v6434
    %v6436 = vpop.xlane.xlu0 %6435
    %v6437 = vadd.f32 %v6298, %v6396
    %6438 = vadd.xlane.f32.xlu0 %v6437
    %v6439 = vpop.xlane.xlu0 %6438
    %v6440 = vadd.f32 %v6300, %v6398
    %6441 = vadd.xlane.f32.xlu0 %v6440
    %v6442 = vpop.xlane.xlu0 %6441
    %v6443 = vadd.f32 %v6303, %v6401
    %6444 = vadd.xlane.f32.xlu0 %v6443
    %v6445 = vpop.xlane.xlu0 %6444
    %v6446 = vadd.f32 %v6305, %v6403
    %6447 = vadd.xlane.f32.xlu0 %v6446
    %v6448 = vpop.xlane.xlu0 %6447
    %v6449 = vadd.f32 %v6308, %v6406
    %6450 = vadd.xlane.f32.xlu0 %v6449
    %v6451 = vpop.xlane.xlu0 %6450
    %v6452 = vadd.f32 %v6310, %v6408
    %6453 = vadd.xlane.f32.xlu0 %v6452
    %v6454 = vpop.xlane.xlu0 %6453
    %v6455 = vadd.f32 %v6313, %v6411
    %6456 = vadd.xlane.f32.xlu0 %v6455
    %v6457 = vpop.xlane.xlu0 %6456
    %v6458 = vadd.f32 %v6315, %v6413
    %6459 = vadd.xlane.f32.xlu0 %v6458
    %v6460 = vpop.xlane.xlu0 %6459
    %v6461 = vadd.f32 %v6318, %v6416
    %6462 = vadd.xlane.f32.xlu0 %v6461
    %v6463 = vpop.xlane.xlu0 %6462
    %v6464 = vadd.f32 %v6320, %v6418
    %6465 = vadd.xlane.f32.xlu0 %v6464
    %v6466 = vpop.xlane.xlu0 %6465
    %v6467 = vadd.f32 %v6323, %v6421
    %6468 = vadd.xlane.f32.xlu0 %v6467
    %v6469 = vpop.xlane.xlu0 %6468
    %v6470 = vadd.f32 %v6325, %v6423
    %6471 = vadd.xlane.f32.xlu0 %v6470
    %v6472 = vpop.xlane.xlu0 %6471
    %v6473 = vmul.f32 %v6288, %v6288
    %v6474 = vmul.f32 %v6386, %v6386
    %v6475 = vmul.f32 %v6290, %v6290
    %v6476 = vmul.f32 %v6388, %v6388
    %v6477 = vmul.f32 %v6293, %v6293
    %v6478 = vmul.f32 %v6391, %v6391
    %v6479 = vmul.f32 %v6295, %v6295
    %v6480 = vmul.f32 %v6393, %v6393
    %v6481 = vmul.f32 %v6298, %v6298
    %v6482 = vmul.f32 %v6396, %v6396
    %v6483 = vmul.f32 %v6300, %v6300
    %v6484 = vmul.f32 %v6398, %v6398
    %v6485 = vmul.f32 %v6303, %v6303
    %v6486 = vmul.f32 %v6401, %v6401
    %v6487 = vmul.f32 %v6305, %v6305
    %v6488 = vmul.f32 %v6403, %v6403
    %v6489 = vmul.f32 %v6308, %v6308
    %v6490 = vmul.f32 %v6406, %v6406
    %v6491 = vmul.f32 %v6310, %v6310
    %v6492 = vmul.f32 %v6408, %v6408
    %v6493 = vmul.f32 %v6313, %v6313
    %v6494 = vmul.f32 %v6411, %v6411
    %v6495 = vmul.f32 %v6315, %v6315
    %v6496 = vmul.f32 %v6413, %v6413
    %v6497 = vmul.f32 %v6318, %v6318
    %v6498 = vmul.f32 %v6416, %v6416
    %v6499 = vmul.f32 %v6320, %v6320
    %v6500 = vmul.f32 %v6418, %v6418
    %v6501 = vmul.f32 %v6323, %v6323
    %v6502 = vmul.f32 %v6421, %v6421
    %v6503 = vmul.f32 %v6325, %v6325
    %v6504 = vmul.f32 %v6423, %v6423
    %v6505 = vadd.f32 %v6473, %v6474
    %6506 = vadd.xlane.f32.xlu0 %v6505
    %v6507 = vpop.xlane.xlu0 %6506
    %v6508 = vadd.f32 %v6475, %v6476
    %6509 = vadd.xlane.f32.xlu0 %v6508
    %v6510 = vpop.xlane.xlu0 %6509
    %v6511 = vadd.f32 %v6477, %v6478
    %6512 = vadd.xlane.f32.xlu0 %v6511
    %v6513 = vpop.xlane.xlu0 %6512
    %v6514 = vadd.f32 %v6479, %v6480
    %6515 = vadd.xlane.f32.xlu0 %v6514
    %v6516 = vpop.xlane.xlu0 %6515
    %v6517 = vadd.f32 %v6481, %v6482
    %6518 = vadd.xlane.f32.xlu0 %v6517
    %v6519 = vpop.xlane.xlu0 %6518
    %v6520 = vadd.f32 %v6483, %v6484
    %6521 = vadd.xlane.f32.xlu0 %v6520
    %v6522 = vpop.xlane.xlu0 %6521
    %v6523 = vadd.f32 %v6485, %v6486
    %6524 = vadd.xlane.f32.xlu0 %v6523
    %v6525 = vpop.xlane.xlu0 %6524
    %v6526 = vadd.f32 %v6487, %v6488
    %6527 = vadd.xlane.f32.xlu0 %v6526
    %v6528 = vpop.xlane.xlu0 %6527
    %v6529 = vadd.f32 %v6489, %v6490
    %6530 = vadd.xlane.f32.xlu0 %v6529
    %v6531 = vpop.xlane.xlu0 %6530
    %v6532 = vadd.f32 %v6491, %v6492
    %6533 = vadd.xlane.f32.xlu0 %v6532
    %v6534 = vpop.xlane.xlu0 %6533
    %v6535 = vadd.f32 %v6493, %v6494
    %6536 = vadd.xlane.f32.xlu0 %v6535
    %v6537 = vpop.xlane.xlu0 %6536
    %v6538 = vadd.f32 %v6495, %v6496
    %6539 = vadd.xlane.f32.xlu0 %v6538
    %v6540 = vpop.xlane.xlu0 %6539
    %v6541 = vadd.f32 %v6497, %v6498
    %6542 = vadd.xlane.f32.xlu0 %v6541
    %v6543 = vpop.xlane.xlu0 %6542
    %v6544 = vadd.f32 %v6499, %v6500
    %6545 = vadd.xlane.f32.xlu0 %v6544
    %v6546 = vpop.xlane.xlu0 %6545
    %v6547 = vadd.f32 %v6501, %v6502
    %6548 = vadd.xlane.f32.xlu0 %v6547
    %v6549 = vpop.xlane.xlu0 %6548
    %v6550 = vadd.f32 %v6503, %v6504
    %6551 = vadd.xlane.f32.xlu0 %v6550
    %v6552 = vpop.xlane.xlu0 %6551
    %v6553 = vmul.f32 %v6427, 0.00390625
    %v6554 = vmul.f32 %v6430, 0.00390625
    %v6555 = vmul.f32 %v6433, 0.00390625
    %v6556 = vmul.f32 %v6436, 0.00390625
    %v6557 = vmul.f32 %v6439, 0.00390625
    %v6558 = vmul.f32 %v6442, 0.00390625
    %v6559 = vmul.f32 %v6445, 0.00390625
    %v6560 = vmul.f32 %v6448, 0.00390625
    %v6561 = vmul.f32 %v6451, 0.00390625
    %v6562 = vmul.f32 %v6454, 0.00390625
    %v6563 = vmul.f32 %v6457, 0.00390625
    %v6564 = vmul.f32 %v6460, 0.00390625
    %v6565 = vmul.f32 %v6463, 0.00390625
    %v6566 = vmul.f32 %v6466, 0.00390625
    %v6567 = vmul.f32 %v6469, 0.00390625
    %v6568 = vmul.f32 %v6472, 0.00390625
    %v6569 = vmul.f32 %v6507, 0.00390625
    %v6570 = vmul.f32 %v6510, 0.00390625
    %v6571 = vmul.f32 %v6513, 0.00390625
    %v6572 = vmul.f32 %v6516, 0.00390625
    %v6573 = vmul.f32 %v6519, 0.00390625
    %v6574 = vmul.f32 %v6522, 0.00390625
    %v6575 = vmul.f32 %v6525, 0.00390625
    %v6576 = vmul.f32 %v6528, 0.00390625
    %v6577 = vmul.f32 %v6531, 0.00390625
    %v6578 = vmul.f32 %v6534, 0.00390625
    %v6579 = vmul.f32 %v6537, 0.00390625
    %v6580 = vmul.f32 %v6540, 0.00390625
    %v6581 = vmul.f32 %v6543, 0.00390625
    %v6582 = vmul.f32 %v6546, 0.00390625
    %v6583 = vmul.f32 %v6549, 0.00390625
    %v6584 = vmul.f32 %v6552, 0.00390625
    %v6585 = vmul.f32 %v6553, %v6553
    %v6586 = vmul.f32 %v6554, %v6554
    %v6587 = vmul.f32 %v6555, %v6555
    %v6588 = vmul.f32 %v6556, %v6556
    %v6589 = vmul.f32 %v6557, %v6557
    %v6590 = vmul.f32 %v6558, %v6558
    %v6591 = vmul.f32 %v6559, %v6559
    %v6592 = vmul.f32 %v6560, %v6560
    %v6593 = vmul.f32 %v6561, %v6561
    %v6594 = vmul.f32 %v6562, %v6562
    %v6595 = vmul.f32 %v6563, %v6563
    %v6596 = vmul.f32 %v6564, %v6564
    %v6597 = vmul.f32 %v6565, %v6565
    %v6598 = vmul.f32 %v6566, %v6566
    %v6599 = vmul.f32 %v6567, %v6567
    %v6600 = vmul.f32 %v6568, %v6568
    %v6601 = vsub.f32 %v6569, %v6585
    %v6602 = vsub.f32 %v6570, %v6586
    %v6603 = vsub.f32 %v6571, %v6587
    %v6604 = vsub.f32 %v6572, %v6588
    %v6605 = vsub.f32 %v6573, %v6589
    %v6606 = vsub.f32 %v6574, %v6590
    %v6607 = vsub.f32 %v6575, %v6591
    %v6608 = vsub.f32 %v6576, %v6592
    %v6609 = vsub.f32 %v6577, %v6593
    %v6610 = vsub.f32 %v6578, %v6594
    %v6611 = vsub.f32 %v6579, %v6595
    %v6612 = vsub.f32 %v6580, %v6596
    %v6613 = vsub.f32 %v6581, %v6597
    %v6614 = vsub.f32 %v6582, %v6598
    %v6615 = vsub.f32 %v6583, %v6599
    %v6616 = vsub.f32 %v6584, %v6600
    %v6617 = vmax.f32 %v6601, 0.0
    %v6618 = vmax.f32 %v6602, 0.0
    %v6619 = vmax.f32 %v6603, 0.0
    %v6620 = vmax.f32 %v6604, 0.0
    %v6621 = vmax.f32 %v6605, 0.0
    %v6622 = vmax.f32 %v6606, 0.0
    %v6623 = vmax.f32 %v6607, 0.0
    %v6624 = vmax.f32 %v6608, 0.0
    %v6625 = vmax.f32 %v6609, 0.0
    %v6626 = vmax.f32 %v6610, 0.0
    %v6627 = vmax.f32 %v6611, 0.0
    %v6628 = vmax.f32 %v6612, 0.0
    %v6629 = vmax.f32 %v6613, 0.0
    %v6630 = vmax.f32 %v6614, 0.0
    %v6631 = vmax.f32 %v6615, 0.0
    %v6632 = vmax.f32 %v6616, 0.0
    %v6633 = vadd.f32 %v6617, 1e-05
    %v6634 = vadd.f32 %v6618, 1e-05
    %v6635 = vadd.f32 %v6619, 1e-05
    %v6636 = vadd.f32 %v6620, 1e-05
    %v6637 = vadd.f32 %v6621, 1e-05
    %v6638 = vadd.f32 %v6622, 1e-05
    %v6639 = vadd.f32 %v6623, 1e-05
    %v6640 = vadd.f32 %v6624, 1e-05
    %v6641 = vadd.f32 %v6625, 1e-05
    %v6642 = vadd.f32 %v6626, 1e-05
    %v6643 = vadd.f32 %v6627, 1e-05
    %v6644 = vadd.f32 %v6628, 1e-05
    %v6645 = vadd.f32 %v6629, 1e-05
    %v6646 = vadd.f32 %v6630, 1e-05
    %v6647 = vadd.f32 %v6631, 1e-05
    %v6648 = vadd.f32 %v6632, 1e-05
    %v6649 = vrsqrt.pop %v6633
    %v6650 = vmul.f32 %v6649, %v6633
    %v6651 = vmul.f32 %v6650, %v6649
    %v6652 = vmul.f32 0.5, %v6651
    %v6653 = vsub.f32 1.5, %v6652
    %v6654 = vmul.f32 %v6649, %v6653
    %vm6655 = vweird.f32 %v6633
    %vm6656 = vweird.f32 %v6649
    %vm6657 = vmor %vm6655, %vm6656
    %v6658 = vsel %vm6657, %v6649, %v6654
    %v6659 = vrsqrt.pop %v6634
    %v6660 = vmul.f32 %v6659, %v6634
    %v6661 = vmul.f32 %v6660, %v6659
    %v6662 = vmul.f32 0.5, %v6661
    %v6663 = vsub.f32 1.5, %v6662
    %v6664 = vmul.f32 %v6659, %v6663
    %vm6665 = vweird.f32 %v6634
    %vm6666 = vweird.f32 %v6659
    %vm6667 = vmor %vm6665, %vm6666
    %v6668 = vsel %vm6667, %v6659, %v6664
    %v6669 = vrsqrt.pop %v6635
    %v6670 = vmul.f32 %v6669, %v6635
    %v6671 = vmul.f32 %v6670, %v6669
    %v6672 = vmul.f32 0.5, %v6671
    %v6673 = vsub.f32 1.5, %v6672
    %v6674 = vmul.f32 %v6669, %v6673
    %vm6675 = vweird.f32 %v6635
    %vm6676 = vweird.f32 %v6669
    %vm6677 = vmor %vm6675, %vm6676
    %v6678 = vsel %vm6677, %v6669, %v6674
    %v6679 = vrsqrt.pop %v6636
    %v6680 = vmul.f32 %v6679, %v6636
    %v6681 = vmul.f32 %v6680, %v6679
    %v6682 = vmul.f32 0.5, %v6681
    %v6683 = vsub.f32 1.5, %v6682
    %v6684 = vmul.f32 %v6679, %v6683
    %vm6685 = vweird.f32 %v6636
    %vm6686 = vweird.f32 %v6679
    %vm6687 = vmor %vm6685, %vm6686
    %v6688 = vsel %vm6687, %v6679, %v6684
    %v6689 = vrsqrt.pop %v6637
    %v6690 = vmul.f32 %v6689, %v6637
    %v6691 = vmul.f32 %v6690, %v6689
    %v6692 = vmul.f32 0.5, %v6691
    %v6693 = vsub.f32 1.5, %v6692
    %v6694 = vmul.f32 %v6689, %v6693
    %vm6695 = vweird.f32 %v6637
    %vm6696 = vweird.f32 %v6689
    %vm6697 = vmor %vm6695, %vm6696
    %v6698 = vsel %vm6697, %v6689, %v6694
    %v6699 = vrsqrt.pop %v6638
    %v6700 = vmul.f32 %v6699, %v6638
    %v6701 = vmul.f32 %v6700, %v6699
    %v6702 = vmul.f32 0.5, %v6701
    %v6703 = vsub.f32 1.5, %v6702
    %v6704 = vmul.f32 %v6699, %v6703
    %vm6705 = vweird.f32 %v6638
    %vm6706 = vweird.f32 %v6699
    %vm6707 = vmor %vm6705, %vm6706
    %v6708 = vsel %vm6707, %v6699, %v6704
    %v6709 = vrsqrt.pop %v6639
    %v6710 = vmul.f32 %v6709, %v6639
    %v6711 = vmul.f32 %v6710, %v6709
    %v6712 = vmul.f32 0.5, %v6711
    %v6713 = vsub.f32 1.5, %v6712
    %v6714 = vmul.f32 %v6709, %v6713
    %vm6715 = vweird.f32 %v6639
    %vm6716 = vweird.f32 %v6709
    %vm6717 = vmor %vm6715, %vm6716
    %v6718 = vsel %vm6717, %v6709, %v6714
    %v6719 = vrsqrt.pop %v6640
    %v6720 = vmul.f32 %v6719, %v6640
    %v6721 = vmul.f32 %v6720, %v6719
    %v6722 = vmul.f32 0.5, %v6721
    %v6723 = vsub.f32 1.5, %v6722
    %v6724 = vmul.f32 %v6719, %v6723
    %vm6725 = vweird.f32 %v6640
    %vm6726 = vweird.f32 %v6719
    %vm6727 = vmor %vm6725, %vm6726
    %v6728 = vsel %vm6727, %v6719, %v6724
    %v6729 = vrsqrt.pop %v6641
    %v6730 = vmul.f32 %v6729, %v6641
    %v6731 = vmul.f32 %v6730, %v6729
    %v6732 = vmul.f32 0.5, %v6731
    %v6733 = vsub.f32 1.5, %v6732
    %v6734 = vmul.f32 %v6729, %v6733
    %vm6735 = vweird.f32 %v6641
    %vm6736 = vweird.f32 %v6729
    %vm6737 = vmor %vm6735, %vm6736
    %v6738 = vsel %vm6737, %v6729, %v6734
    %v6739 = vrsqrt.pop %v6642
    %v6740 = vmul.f32 %v6739, %v6642
    %v6741 = vmul.f32 %v6740, %v6739
    %v6742 = vmul.f32 0.5, %v6741
    %v6743 = vsub.f32 1.5, %v6742
    %v6744 = vmul.f32 %v6739, %v6743
    %vm6745 = vweird.f32 %v6642
    %vm6746 = vweird.f32 %v6739
    %vm6747 = vmor %vm6745, %vm6746
    %v6748 = vsel %vm6747, %v6739, %v6744
    %v6749 = vrsqrt.pop %v6643
    %v6750 = vmul.f32 %v6749, %v6643
    %v6751 = vmul.f32 %v6750, %v6749
    %v6752 = vmul.f32 0.5, %v6751
    %v6753 = vsub.f32 1.5, %v6752
    %v6754 = vmul.f32 %v6749, %v6753
    %vm6755 = vweird.f32 %v6643
    %vm6756 = vweird.f32 %v6749
    %vm6757 = vmor %vm6755, %vm6756
    %v6758 = vsel %vm6757, %v6749, %v6754
    %v6759 = vrsqrt.pop %v6644
    %v6760 = vmul.f32 %v6759, %v6644
    %v6761 = vmul.f32 %v6760, %v6759
    %v6762 = vmul.f32 0.5, %v6761
    %v6763 = vsub.f32 1.5, %v6762
    %v6764 = vmul.f32 %v6759, %v6763
    %vm6765 = vweird.f32 %v6644
    %vm6766 = vweird.f32 %v6759
    %vm6767 = vmor %vm6765, %vm6766
    %v6768 = vsel %vm6767, %v6759, %v6764
    %v6769 = vrsqrt.pop %v6645
    %v6770 = vmul.f32 %v6769, %v6645
    %v6771 = vmul.f32 %v6770, %v6769
    %v6772 = vmul.f32 0.5, %v6771
    %v6773 = vsub.f32 1.5, %v6772
    %v6774 = vmul.f32 %v6769, %v6773
    %vm6775 = vweird.f32 %v6645
    %vm6776 = vweird.f32 %v6769
    %vm6777 = vmor %vm6775, %vm6776
    %v6778 = vsel %vm6777, %v6769, %v6774
    %v6779 = vrsqrt.pop %v6646
    %v6780 = vmul.f32 %v6779, %v6646
    %v6781 = vmul.f32 %v6780, %v6779
    %v6782 = vmul.f32 0.5, %v6781
    %v6783 = vsub.f32 1.5, %v6782
    %v6784 = vmul.f32 %v6779, %v6783
    %vm6785 = vweird.f32 %v6646
    %vm6786 = vweird.f32 %v6779
    %vm6787 = vmor %vm6785, %vm6786
    %v6788 = vsel %vm6787, %v6779, %v6784
    %v6789 = vrsqrt.pop %v6647
    %v6790 = vmul.f32 %v6789, %v6647
    %v6791 = vmul.f32 %v6790, %v6789
    %v6792 = vmul.f32 0.5, %v6791
    %v6793 = vsub.f32 1.5, %v6792
    %v6794 = vmul.f32 %v6789, %v6793
    %vm6795 = vweird.f32 %v6647
    %vm6796 = vweird.f32 %v6789
    %vm6797 = vmor %vm6795, %vm6796
    %v6798 = vsel %vm6797, %v6789, %v6794
    %v6799 = vrsqrt.pop %v6648
    %v6800 = vmul.f32 %v6799, %v6648
    %v6801 = vmul.f32 %v6800, %v6799
    %v6802 = vmul.f32 0.5, %v6801
    %v6803 = vsub.f32 1.5, %v6802
    %v6804 = vmul.f32 %v6799, %v6803
    %vm6805 = vweird.f32 %v6648
    %vm6806 = vweird.f32 %v6799
    %vm6807 = vmor %vm6805, %vm6806
    %v6808 = vsel %vm6807, %v6799, %v6804
    %v6809 = vsub.f32 %v6288, %v6553
    %v6810 = vsub.f32 %v6386, %v6553
    %v6811 = vsub.f32 %v6290, %v6554
    %v6812 = vsub.f32 %v6388, %v6554
    %v6813 = vsub.f32 %v6293, %v6555
    %v6814 = vsub.f32 %v6391, %v6555
    %v6815 = vsub.f32 %v6295, %v6556
    %v6816 = vsub.f32 %v6393, %v6556
    %v6817 = vsub.f32 %v6298, %v6557
    %v6818 = vsub.f32 %v6396, %v6557
    %v6819 = vsub.f32 %v6300, %v6558
    %v6820 = vsub.f32 %v6398, %v6558
    %v6821 = vsub.f32 %v6303, %v6559
    %v6822 = vsub.f32 %v6401, %v6559
    %v6823 = vsub.f32 %v6305, %v6560
    %v6824 = vsub.f32 %v6403, %v6560
    %v6825 = vsub.f32 %v6308, %v6561
    %v6826 = vsub.f32 %v6406, %v6561
    %v6827 = vsub.f32 %v6310, %v6562
    %v6828 = vsub.f32 %v6408, %v6562
    %v6829 = vsub.f32 %v6313, %v6563
    %v6830 = vsub.f32 %v6411, %v6563
    %v6831 = vsub.f32 %v6315, %v6564
    %v6832 = vsub.f32 %v6413, %v6564
    %v6833 = vsub.f32 %v6318, %v6565
    %v6834 = vsub.f32 %v6416, %v6565
    %v6835 = vsub.f32 %v6320, %v6566
    %v6836 = vsub.f32 %v6418, %v6566
    %v6837 = vsub.f32 %v6323, %v6567
    %v6838 = vsub.f32 %v6421, %v6567
    %v6839 = vsub.f32 %v6325, %v6568
    %v6840 = vsub.f32 %v6423, %v6568
    %v6841 = vmul.f32 %v6809, %v6658
    %v6842 = vmul.f32 %v6810, %v6658
    %v6843 = vmul.f32 %v6811, %v6668
    %v6844 = vmul.f32 %v6812, %v6668
    %v6845 = vmul.f32 %v6813, %v6678
    %v6846 = vmul.f32 %v6814, %v6678
    %v6847 = vmul.f32 %v6815, %v6688
    %v6848 = vmul.f32 %v6816, %v6688
    %v6849 = vmul.f32 %v6817, %v6698
    %v6850 = vmul.f32 %v6818, %v6698
    %v6851 = vmul.f32 %v6819, %v6708
    %v6852 = vmul.f32 %v6820, %v6708
    %v6853 = vmul.f32 %v6821, %v6718
    %v6854 = vmul.f32 %v6822, %v6718
    %v6855 = vmul.f32 %v6823, %v6728
    %v6856 = vmul.f32 %v6824, %v6728
    %v6857 = vmul.f32 %v6825, %v6738
    %v6858 = vmul.f32 %v6826, %v6738
    %v6859 = vmul.f32 %v6827, %v6748
    %v6860 = vmul.f32 %v6828, %v6748
    %v6861 = vmul.f32 %v6829, %v6758
    %v6862 = vmul.f32 %v6830, %v6758
    %v6863 = vmul.f32 %v6831, %v6768
    %v6864 = vmul.f32 %v6832, %v6768
    %v6865 = vmul.f32 %v6833, %v6778
    %v6866 = vmul.f32 %v6834, %v6778
    %v6867 = vmul.f32 %v6835, %v6788
    %v6868 = vmul.f32 %v6836, %v6788
    %v6869 = vmul.f32 %v6837, %v6798
    %v6870 = vmul.f32 %v6838, %v6798
    %v6871 = vmul.f32 %v6839, %v6808
    %v6872 = vmul.f32 %v6840, %v6808
    %s6873 = scalar_lea.vmem %s6, 6
    %v6874 = vld [vmem:[%s6873] ss:$8 sm:$0x3]
    %v6876 = vperm.slane %v6874, 0
    %v6877 = vperm.slane %v6874, 1
    %v6880 = vmul.f32 %v6841, %v6876
    %v6881 = vmul.f32 %v6842, %v6877
    %v6882 = vmul.f32 %v6843, %v6876
    %v6883 = vmul.f32 %v6844, %v6877
    %v6884 = vmul.f32 %v6845, %v6876
    %v6885 = vmul.f32 %v6846, %v6877
    %v6886 = vmul.f32 %v6847, %v6876
    %v6887 = vmul.f32 %v6848, %v6877
    %v6888 = vmul.f32 %v6849, %v6876
    %v6889 = vmul.f32 %v6850, %v6877
    %v6890 = vmul.f32 %v6851, %v6876
    %v6891 = vmul.f32 %v6852, %v6877
    %v6892 = vmul.f32 %v6853, %v6876
    %v6893 = vmul.f32 %v6854, %v6877
    %v6894 = vmul.f32 %v6855, %v6876
    %v6895 = vmul.f32 %v6856, %v6877
    %v6896 = vmul.f32 %v6857, %v6876
    %v6897 = vmul.f32 %v6858, %v6877
    %v6898 = vmul.f32 %v6859, %v6876
    %v6899 = vmul.f32 %v6860, %v6877
    %v6900 = vmul.f32 %v6861, %v6876
    %v6901 = vmul.f32 %v6862, %v6877
    %v6902 = vmul.f32 %v6863, %v6876
    %v6903 = vmul.f32 %v6864, %v6877
    %v6904 = vmul.f32 %v6865, %v6876
    %v6905 = vmul.f32 %v6866, %v6877
    %v6906 = vmul.f32 %v6867, %v6876
    %v6907 = vmul.f32 %v6868, %v6877
    %v6908 = vmul.f32 %v6869, %v6876
    %v6909 = vmul.f32 %v6870, %v6877
    %v6910 = vmul.f32 %v6871, %v6876
    %v6911 = vmul.f32 %v6872, %v6877
    %s6912 = scalar_lea.vmem %s7, 6
    %v6913 = vld [vmem:[%s6912] ss:$8 sm:$0x3]
    %v6915 = vperm.slane %v6913, 0
    %v6916 = vperm.slane %v6913, 1
    %v6919 = vadd.f32 %v6880, %v6915
    %v6920 = vadd.f32 %v6881, %v6916
    %v6921 = vadd.f32 %v6882, %v6915
    %v6922 = vadd.f32 %v6883, %v6916
    %v6923 = vadd.f32 %v6884, %v6915
    %v6924 = vadd.f32 %v6885, %v6916
    %v6925 = vadd.f32 %v6886, %v6915
    %v6926 = vadd.f32 %v6887, %v6916
    %v6927 = vadd.f32 %v6888, %v6915
    %v6928 = vadd.f32 %v6889, %v6916
    %v6929 = vadd.f32 %v6890, %v6915
    %v6930 = vadd.f32 %v6891, %v6916
    %v6931 = vadd.f32 %v6892, %v6915
    %v6932 = vadd.f32 %v6893, %v6916
    %v6933 = vadd.f32 %v6894, %v6915
    %v6934 = vadd.f32 %v6895, %v6916
    %v6935 = vadd.f32 %v6896, %v6915
    %v6936 = vadd.f32 %v6897, %v6916
    %v6937 = vadd.f32 %v6898, %v6915
    %v6938 = vadd.f32 %v6899, %v6916
    %v6939 = vadd.f32 %v6900, %v6915
    %v6940 = vadd.f32 %v6901, %v6916
    %v6941 = vadd.f32 %v6902, %v6915
    %v6942 = vadd.f32 %v6903, %v6916
    %v6943 = vadd.f32 %v6904, %v6915
    %v6944 = vadd.f32 %v6905, %v6916
    %v6945 = vadd.f32 %v6906, %v6915
    %v6946 = vadd.f32 %v6907, %v6916
    %v6947 = vadd.f32 %v6908, %v6915
    %v6948 = vadd.f32 %v6909, %v6916
    %v6949 = vadd.f32 %v6910, %v6915
    %v6950 = vadd.f32 %v6911, %v6916
    %v6951 = vmax.f32 %v6919, 0.0
    %v6952 = vmax.f32 %v6920, 0.0
    %v6953 = vmax.f32 %v6921, 0.0
    %v6954 = vmax.f32 %v6922, 0.0
    %v6955 = vmax.f32 %v6923, 0.0
    %v6956 = vmax.f32 %v6924, 0.0
    %v6957 = vmax.f32 %v6925, 0.0
    %v6958 = vmax.f32 %v6926, 0.0
    %v6959 = vmax.f32 %v6927, 0.0
    %v6960 = vmax.f32 %v6928, 0.0
    %v6961 = vmax.f32 %v6929, 0.0
    %v6962 = vmax.f32 %v6930, 0.0
    %v6963 = vmax.f32 %v6931, 0.0
    %v6964 = vmax.f32 %v6932, 0.0
    %v6965 = vmax.f32 %v6933, 0.0
    %v6966 = vmax.f32 %v6934, 0.0
    %v6967 = vmax.f32 %v6935, 0.0
    %v6968 = vmax.f32 %v6936, 0.0
    %v6969 = vmax.f32 %v6937, 0.0
    %v6970 = vmax.f32 %v6938, 0.0
    %v6971 = vmax.f32 %v6939, 0.0
    %v6972 = vmax.f32 %v6940, 0.0
    %v6973 = vmax.f32 %v6941, 0.0
    %v6974 = vmax.f32 %v6942, 0.0
    %v6975 = vmax.f32 %v6943, 0.0
    %v6976 = vmax.f32 %v6944, 0.0
    %v6977 = vmax.f32 %v6945, 0.0
    %v6978 = vmax.f32 %v6946, 0.0
    %v6979 = vmax.f32 %v6947, 0.0
    %v6980 = vmax.f32 %v6948, 0.0
    %v6981 = vmax.f32 %v6949, 0.0
    %v6982 = vmax.f32 %v6950, 0.0
    %v6983 = vpack.c.bf16 %v6953, %v6951
    %v6984 = vpack.c.bf16 %v6954, %v6952
    %v6985 = vpack.c.bf16 %v6957, %v6955
    %v6986 = vpack.c.bf16 %v6958, %v6956
    %v6987 = vpack.c.bf16 %v6961, %v6959
    %v6988 = vpack.c.bf16 %v6962, %v6960
    %v6989 = vpack.c.bf16 %v6965, %v6963
    %v6990 = vpack.c.bf16 %v6966, %v6964
    %v6991 = vpack.c.bf16 %v6969, %v6967
    %v6992 = vpack.c.bf16 %v6970, %v6968
    %v6993 = vpack.c.bf16 %v6973, %v6971
    %v6994 = vpack.c.bf16 %v6974, %v6972
    %v6995 = vpack.c.bf16 %v6977, %v6975
    %v6996 = vpack.c.bf16 %v6978, %v6976
    %v6997 = vpack.c.bf16 %v6981, %v6979
    %v6998 = vpack.c.bf16 %v6982, %v6980
    %s6999 = scalar_lea.vmem [#allocation4], 1280
    %v7000 = vld [vmem:[%s6999] sm:$0xff]
    %v7001 = vld [vmem:[%s6999 + $0x8] sm:$0xff]
    %v7002 = vld [vmem:[%s6999 + $0x10] sm:$0xff]
    %v7003 = vld [vmem:[%s6999 + $0x18] sm:$0xff]
    %v7004 = vld [vmem:[%s6999 + $0x20] sm:$0xff]
    %v7005 = vld [vmem:[%s6999 + $0x28] sm:$0xff]
    %v7006 = vld [vmem:[%s6999 + $0x30] sm:$0xff]
    %v7007 = vld [vmem:[%s6999 + $0x38] sm:$0xff]
    %v7008 = vld [vmem:[%s6999 + $0x40] sm:$0xff]
    %v7009 = vld [vmem:[%s6999 + $0x48] sm:$0xff]
    %v7010 = vld [vmem:[%s6999 + $0x50] sm:$0xff]
    %v7011 = vld [vmem:[%s6999 + $0x58] sm:$0xff]
    %v7012 = vld [vmem:[%s6999 + $0x60] sm:$0xff]
    %v7013 = vld [vmem:[%s6999 + $0x68] sm:$0xff]
    %v7014 = vld [vmem:[%s6999 + $0x70] sm:$0xff]
    %v7015 = vld [vmem:[%s6999 + $0x78] sm:$0xff]
    %v7016 = vld [vmem:[%s6999 + $0x80] sm:$0xff]
    %v7017 = vld [vmem:[%s6999 + $0x88] sm:$0xff]
    %v7018 = vld [vmem:[%s6999 + $0x90] sm:$0xff]
    %v7019 = vld [vmem:[%s6999 + $0x98] sm:$0xff]
    %v7020 = vld [vmem:[%s6999 + $0xa0] sm:$0xff]
    %v7021 = vld [vmem:[%s6999 + $0xa8] sm:$0xff]
    %v7022 = vld [vmem:[%s6999 + $0xb0] sm:$0xff]
    %v7023 = vld [vmem:[%s6999 + $0xb8] sm:$0xff]
    %v7024 = vld [vmem:[%s6999 + $0xc0] sm:$0xff]
    %v7025 = vld [vmem:[%s6999 + $0xc8] sm:$0xff]
    %v7026 = vld [vmem:[%s6999 + $0xd0] sm:$0xff]
    %v7027 = vld [vmem:[%s6999 + $0xd8] sm:$0xff]
    %v7028 = vld [vmem:[%s6999 + $0xe0] sm:$0xff]
    %v7029 = vld [vmem:[%s6999 + $0xe8] sm:$0xff]
    %v7030 = vld [vmem:[%s6999 + $0xf0] sm:$0xff]
    %v7031 = vld [vmem:[%s6999 + $0xf8] sm:$0xff]
    %s7032 = scalar_lea.vmem %s5, 7
    %v7033 = vld [vmem:[%s7032] ss:$8 sm:$0x3]
    %v7035 = vperm.slane %v7033, 0
    %v7036 = vperm.slane %v7033, 1
    %v7071 = vunpack.c.l.b16 %v7000
    %v7072 = vunpack.c.h.b16 %v7000
    %v7073 = vunpack.c.l.b16 %v7001
    %v7074 = vunpack.c.h.b16 %v7001
    %v7075 = vunpack.c.l.b16 %v7002
    %v7076 = vunpack.c.h.b16 %v7002
    %v7077 = vunpack.c.l.b16 %v7003
    %v7078 = vunpack.c.h.b16 %v7003
    %v7079 = vunpack.c.l.b16 %v7004
    %v7080 = vunpack.c.h.b16 %v7004
    %v7081 = vunpack.c.l.b16 %v7005
    %v7082 = vunpack.c.h.b16 %v7005
    %v7083 = vunpack.c.l.b16 %v7006
    %v7084 = vunpack.c.h.b16 %v7006
    %v7085 = vunpack.c.l.b16 %v7007
    %v7086 = vunpack.c.h.b16 %v7007
    %v7087 = vunpack.c.l.b16 %v7008
    %v7088 = vunpack.c.h.b16 %v7008
    %v7089 = vunpack.c.l.b16 %v7009
    %v7090 = vunpack.c.h.b16 %v7009
    %v7091 = vunpack.c.l.b16 %v7010
    %v7092 = vunpack.c.h.b16 %v7010
    %v7093 = vunpack.c.l.b16 %v7011
    %v7094 = vunpack.c.h.b16 %v7011
    %v7095 = vunpack.c.l.b16 %v7012
    %v7096 = vunpack.c.h.b16 %v7012
    %v7097 = vunpack.c.l.b16 %v7013
    %v7098 = vunpack.c.h.b16 %v7013
    %v7099 = vunpack.c.l.b16 %v7014
    %v7100 = vunpack.c.h.b16 %v7014
    %v7101 = vunpack.c.l.b16 %v7015
    %v7102 = vunpack.c.h.b16 %v7015
    %v7103 = vunpack.c.l.b16 %v7016
    %v7104 = vunpack.c.h.b16 %v7016
    %v7105 = vunpack.c.l.b16 %v7017
    %v7106 = vunpack.c.h.b16 %v7017
    %v7107 = vunpack.c.l.b16 %v7018
    %v7108 = vunpack.c.h.b16 %v7018
    %v7109 = vunpack.c.l.b16 %v7019
    %v7110 = vunpack.c.h.b16 %v7019
    %v7111 = vunpack.c.l.b16 %v7020
    %v7112 = vunpack.c.h.b16 %v7020
    %v7113 = vunpack.c.l.b16 %v7021
    %v7114 = vunpack.c.h.b16 %v7021
    %v7115 = vunpack.c.l.b16 %v7022
    %v7116 = vunpack.c.h.b16 %v7022
    %v7117 = vunpack.c.l.b16 %v7023
    %v7118 = vunpack.c.h.b16 %v7023
    %v7119 = vunpack.c.l.b16 %v7024
    %v7120 = vunpack.c.h.b16 %v7024
    %v7121 = vunpack.c.l.b16 %v7025
    %v7122 = vunpack.c.h.b16 %v7025
    %v7123 = vunpack.c.l.b16 %v7026
    %v7124 = vunpack.c.h.b16 %v7026
    %v7125 = vunpack.c.l.b16 %v7027
    %v7126 = vunpack.c.h.b16 %v7027
    %v7127 = vunpack.c.l.b16 %v7028
    %v7128 = vunpack.c.h.b16 %v7028
    %v7129 = vunpack.c.l.b16 %v7029
    %v7130 = vunpack.c.h.b16 %v7029
    %v7131 = vunpack.c.l.b16 %v7030
    %v7132 = vunpack.c.h.b16 %v7030
    %v7133 = vunpack.c.l.b16 %v7031
    %v7134 = vunpack.c.h.b16 %v7031
    %v7135 = vpack.c.b16 %v7073, %v7071
    %v7136 = vpack.c.b16 %v7074, %v7072
    %v7137 = vpack.c.b16 %v7077, %v7075
    %v7138 = vpack.c.b16 %v7078, %v7076
    %v7139 = vpack.c.b16 %v7081, %v7079
    %v7140 = vpack.c.b16 %v7082, %v7080
    %v7141 = vpack.c.b16 %v7085, %v7083
    %v7142 = vpack.c.b16 %v7086, %v7084
    %v7143 = vpack.c.b16 %v7089, %v7087
    %v7144 = vpack.c.b16 %v7090, %v7088
    %v7145 = vpack.c.b16 %v7093, %v7091
    %v7146 = vpack.c.b16 %v7094, %v7092
    %v7147 = vpack.c.b16 %v7097, %v7095
    %v7148 = vpack.c.b16 %v7098, %v7096
    %v7149 = vpack.c.b16 %v7101, %v7099
    %v7150 = vpack.c.b16 %v7102, %v7100
    %v7151 = vpack.c.b16 %v7105, %v7103
    %v7152 = vpack.c.b16 %v7106, %v7104
    %v7153 = vpack.c.b16 %v7109, %v7107
    %v7154 = vpack.c.b16 %v7110, %v7108
    %v7155 = vpack.c.b16 %v7113, %v7111
    %v7156 = vpack.c.b16 %v7114, %v7112
    %v7157 = vpack.c.b16 %v7117, %v7115
    %v7158 = vpack.c.b16 %v7118, %v7116
    %v7159 = vpack.c.b16 %v7121, %v7119
    %v7160 = vpack.c.b16 %v7122, %v7120
    %v7161 = vpack.c.b16 %v7125, %v7123
    %v7162 = vpack.c.b16 %v7126, %v7124
    %v7163 = vpack.c.b16 %v7129, %v7127
    %v7164 = vpack.c.b16 %v7130, %v7128
    %v7165 = vpack.c.b16 %v7133, %v7131
    %v7166 = vpack.c.b16 %v7134, %v7132
    %7199 = vmatpush.bf16.msra.mxu0 %v7149
    %7200 = vmatpush.bf16.msra.mxu0 %v7147
    %7201 = vmatpush.bf16.msra.mxu0 %v7145
    %7202 = vmatpush.bf16.msra.mxu0 %v7143
    %7203 = vmatpush.bf16.msra.mxu0 %v7141
    %7204 = vmatpush.bf16.msra.mxu0 %v7139
    %7205 = vmatpush.bf16.msra.mxu0 %v7137
    %7206 = vmatpush.bf16.msra.mxu0 %v7135
    %7207 = vmatmul.bf16.gmra.mxu0 %v6983
    %v7208 = vpop.f32.mrf.mxu0
    %v7209 = vadd.f32 %v7035, %v7208
    %v7210 = vpop.f32.mrf.mxu0
    %v7211 = vadd.f32 %v7035, %v7210
    %7212 = vmatmul.bf16.gmra.mxu0 %v6985
    %v7213 = vpop.f32.mrf.mxu0
    %v7214 = vadd.f32 %v7035, %v7213
    %v7215 = vpop.f32.mrf.mxu0
    %v7216 = vadd.f32 %v7035, %v7215
    %7217 = vmatmul.bf16.gmra.mxu0 %v6987
    %v7218 = vpop.f32.mrf.mxu0
    %v7219 = vadd.f32 %v7035, %v7218
    %v7220 = vpop.f32.mrf.mxu0
    %v7221 = vadd.f32 %v7035, %v7220
    %7222 = vmatmul.bf16.gmra.mxu0 %v6989
    %v7223 = vpop.f32.mrf.mxu0
    %v7224 = vadd.f32 %v7035, %v7223
    %v7225 = vpop.f32.mrf.mxu0
    %v7226 = vadd.f32 %v7035, %v7225
    %7227 = vmatmul.bf16.gmra.mxu0 %v6991
    %v7228 = vpop.f32.mrf.mxu0
    %v7229 = vadd.f32 %v7035, %v7228
    %v7230 = vpop.f32.mrf.mxu0
    %v7231 = vadd.f32 %v7035, %v7230
    %7232 = vmatmul.bf16.gmra.mxu0 %v6993
    %v7233 = vpop.f32.mrf.mxu0
    %v7234 = vadd.f32 %v7035, %v7233
    %v7235 = vpop.f32.mrf.mxu0
    %v7236 = vadd.f32 %v7035, %v7235
    %7237 = vmatmul.bf16.gmra.mxu0 %v6995
    %v7238 = vpop.f32.mrf.mxu0
    %v7239 = vadd.f32 %v7035, %v7238
    %v7240 = vpop.f32.mrf.mxu0
    %v7241 = vadd.f32 %v7035, %v7240
    %7242 = vmatmul.bf16.gmra.mxu0 %v6997
    %v7243 = vpop.f32.mrf.mxu0
    %v7244 = vadd.f32 %v7035, %v7243
    %v7245 = vpop.f32.mrf.mxu0
    %v7246 = vadd.f32 %v7035, %v7245
    %7247 = vdwg.mxu0
    %7248 = vmatpush.bf16.msra.mxu0 %v7165
    %7249 = vmatpush.bf16.msra.mxu0 %v7163
    %7250 = vmatpush.bf16.msra.mxu0 %v7161
    %7251 = vmatpush.bf16.msra.mxu0 %v7159
    %7252 = vmatpush.bf16.msra.mxu0 %v7157
    %7253 = vmatpush.bf16.msra.mxu0 %v7155
    %7254 = vmatpush.bf16.msra.mxu0 %v7153
    %7255 = vmatpush.bf16.msra.mxu0 %v7151
    %7256 = vmatmul.bf16.gmra.mxu0 %v6984
    %v7257 = vpop.f32.mrf.mxu0
    %v7258 = vadd.f32 %v7209, %v7257
    %v7259 = vpop.f32.mrf.mxu0
    %v7260 = vadd.f32 %v7211, %v7259
    %7261 = vmatmul.bf16.gmra.mxu0 %v6986
    %v7262 = vpop.f32.mrf.mxu0
    %v7263 = vadd.f32 %v7214, %v7262
    %v7264 = vpop.f32.mrf.mxu0
    %v7265 = vadd.f32 %v7216, %v7264
    %7266 = vmatmul.bf16.gmra.mxu0 %v6988
    %v7267 = vpop.f32.mrf.mxu0
    %v7268 = vadd.f32 %v7219, %v7267
    %v7269 = vpop.f32.mrf.mxu0
    %v7270 = vadd.f32 %v7221, %v7269
    %7271 = vmatmul.bf16.gmra.mxu0 %v6990
    %v7272 = vpop.f32.mrf.mxu0
    %v7273 = vadd.f32 %v7224, %v7272
    %v7274 = vpop.f32.mrf.mxu0
    %v7275 = vadd.f32 %v7226, %v7274
    %7276 = vmatmul.bf16.gmra.mxu0 %v6992
    %v7277 = vpop.f32.mrf.mxu0
    %v7278 = vadd.f32 %v7229, %v7277
    %v7279 = vpop.f32.mrf.mxu0
    %v7280 = vadd.f32 %v7231, %v7279
    %7281 = vmatmul.bf16.gmra.mxu0 %v6994
    %v7282 = vpop.f32.mrf.mxu0
    %v7283 = vadd.f32 %v7234, %v7282
    %v7284 = vpop.f32.mrf.mxu0
    %v7285 = vadd.f32 %v7236, %v7284
    %7286 = vmatmul.bf16.gmra.mxu0 %v6996
    %v7287 = vpop.f32.mrf.mxu0
    %v7288 = vadd.f32 %v7239, %v7287
    %v7289 = vpop.f32.mrf.mxu0
    %v7290 = vadd.f32 %v7241, %v7289
    %7291 = vmatmul.bf16.gmra.mxu0 %v6998
    %v7292 = vpop.f32.mrf.mxu0
    %v7293 = vadd.f32 %v7244, %v7292
    %v7294 = vpop.f32.mrf.mxu0
    %v7295 = vadd.f32 %v7246, %v7294
    %7296 = vdwg.mxu0
    %7297 = vmatpush.bf16.msra.mxu0 %v7150
    %7298 = vmatpush.bf16.msra.mxu0 %v7148
    %7299 = vmatpush.bf16.msra.mxu0 %v7146
    %7300 = vmatpush.bf16.msra.mxu0 %v7144
    %7301 = vmatpush.bf16.msra.mxu0 %v7142
    %7302 = vmatpush.bf16.msra.mxu0 %v7140
    %7303 = vmatpush.bf16.msra.mxu0 %v7138
    %7304 = vmatpush.bf16.msra.mxu0 %v7136
    %7305 = vmatmul.bf16.gmra.mxu0 %v6983
    %v7306 = vpop.f32.mrf.mxu0
    %v7307 = vadd.f32 %v7036, %v7306
    %v7308 = vpop.f32.mrf.mxu0
    %v7309 = vadd.f32 %v7036, %v7308
    %7310 = vmatmul.bf16.gmra.mxu0 %v6985
    %v7311 = vpop.f32.mrf.mxu0
    %v7312 = vadd.f32 %v7036, %v7311
    %v7313 = vpop.f32.mrf.mxu0
    %v7314 = vadd.f32 %v7036, %v7313
    %7315 = vmatmul.bf16.gmra.mxu0 %v6987
    %v7316 = vpop.f32.mrf.mxu0
    %v7317 = vadd.f32 %v7036, %v7316
    %v7318 = vpop.f32.mrf.mxu0
    %v7319 = vadd.f32 %v7036, %v7318
    %7320 = vmatmul.bf16.gmra.mxu0 %v6989
    %v7321 = vpop.f32.mrf.mxu0
    %v7322 = vadd.f32 %v7036, %v7321
    %v7323 = vpop.f32.mrf.mxu0
    %v7324 = vadd.f32 %v7036, %v7323
    %7325 = vmatmul.bf16.gmra.mxu0 %v6991
    %v7326 = vpop.f32.mrf.mxu0
    %v7327 = vadd.f32 %v7036, %v7326
    %v7328 = vpop.f32.mrf.mxu0
    %v7329 = vadd.f32 %v7036, %v7328
    %7330 = vmatmul.bf16.gmra.mxu0 %v6993
    %v7331 = vpop.f32.mrf.mxu0
    %v7332 = vadd.f32 %v7036, %v7331
    %v7333 = vpop.f32.mrf.mxu0
    %v7334 = vadd.f32 %v7036, %v7333
    %7335 = vmatmul.bf16.gmra.mxu0 %v6995
    %v7336 = vpop.f32.mrf.mxu0
    %v7337 = vadd.f32 %v7036, %v7336
    %v7338 = vpop.f32.mrf.mxu0
    %v7339 = vadd.f32 %v7036, %v7338
    %7340 = vmatmul.bf16.gmra.mxu0 %v6997
    %v7341 = vpop.f32.mrf.mxu0
    %v7342 = vadd.f32 %v7036, %v7341
    %v7343 = vpop.f32.mrf.mxu0
    %v7344 = vadd.f32 %v7036, %v7343
    %7345 = vdwg.mxu0
    %7346 = vmatpush.bf16.msra.mxu0 %v7166
    %7347 = vmatpush.bf16.msra.mxu0 %v7164
    %7348 = vmatpush.bf16.msra.mxu0 %v7162
    %7349 = vmatpush.bf16.msra.mxu0 %v7160
    %7350 = vmatpush.bf16.msra.mxu0 %v7158
    %7351 = vmatpush.bf16.msra.mxu0 %v7156
    %7352 = vmatpush.bf16.msra.mxu0 %v7154
    %7353 = vmatpush.bf16.msra.mxu0 %v7152
    %7354 = vmatmul.bf16.gmra.mxu0 %v6984
    %v7355 = vpop.f32.mrf.mxu0
    %v7356 = vadd.f32 %v7307, %v7355
    %v7357 = vpop.f32.mrf.mxu0
    %v7358 = vadd.f32 %v7309, %v7357
    %7359 = vmatmul.bf16.gmra.mxu0 %v6986
    %v7360 = vpop.f32.mrf.mxu0
    %v7361 = vadd.f32 %v7312, %v7360
    %v7362 = vpop.f32.mrf.mxu0
    %v7363 = vadd.f32 %v7314, %v7362
    %7364 = vmatmul.bf16.gmra.mxu0 %v6988
    %v7365 = vpop.f32.mrf.mxu0
    %v7366 = vadd.f32 %v7317, %v7365
    %v7367 = vpop.f32.mrf.mxu0
    %v7368 = vadd.f32 %v7319, %v7367
    %7369 = vmatmul.bf16.gmra.mxu0 %v6990
    %v7370 = vpop.f32.mrf.mxu0
    %v7371 = vadd.f32 %v7322, %v7370
    %v7372 = vpop.f32.mrf.mxu0
    %v7373 = vadd.f32 %v7324, %v7372
    %7374 = vmatmul.bf16.gmra.mxu0 %v6992
    %v7375 = vpop.f32.mrf.mxu0
    %v7376 = vadd.f32 %v7327, %v7375
    %v7377 = vpop.f32.mrf.mxu0
    %v7378 = vadd.f32 %v7329, %v7377
    %7379 = vmatmul.bf16.gmra.mxu0 %v6994
    %v7380 = vpop.f32.mrf.mxu0
    %v7381 = vadd.f32 %v7332, %v7380
    %v7382 = vpop.f32.mrf.mxu0
    %v7383 = vadd.f32 %v7334, %v7382
    %7384 = vmatmul.bf16.gmra.mxu0 %v6996
    %v7385 = vpop.f32.mrf.mxu0
    %v7386 = vadd.f32 %v7337, %v7385
    %v7387 = vpop.f32.mrf.mxu0
    %v7388 = vadd.f32 %v7339, %v7387
    %7389 = vmatmul.bf16.gmra.mxu0 %v6998
    %v7390 = vpop.f32.mrf.mxu0
    %v7391 = vadd.f32 %v7342, %v7390
    %v7392 = vpop.f32.mrf.mxu0
    %v7393 = vadd.f32 %v7344, %v7392
    %7394 = vdwg.mxu0
    %v7395 = vadd.f32 %v7258, %v7356
    %7396 = vadd.xlane.f32.xlu0 %v7395
    %v7397 = vpop.xlane.xlu0 %7396
    %v7398 = vadd.f32 %v7260, %v7358
    %7399 = vadd.xlane.f32.xlu0 %v7398
    %v7400 = vpop.xlane.xlu0 %7399
    %v7401 = vadd.f32 %v7263, %v7361
    %7402 = vadd.xlane.f32.xlu0 %v7401
    %v7403 = vpop.xlane.xlu0 %7402
    %v7404 = vadd.f32 %v7265, %v7363
    %7405 = vadd.xlane.f32.xlu0 %v7404
    %v7406 = vpop.xlane.xlu0 %7405
    %v7407 = vadd.f32 %v7268, %v7366
    %7408 = vadd.xlane.f32.xlu0 %v7407
    %v7409 = vpop.xlane.xlu0 %7408
    %v7410 = vadd.f32 %v7270, %v7368
    %7411 = vadd.xlane.f32.xlu0 %v7410
    %v7412 = vpop.xlane.xlu0 %7411
    %v7413 = vadd.f32 %v7273, %v7371
    %7414 = vadd.xlane.f32.xlu0 %v7413
    %v7415 = vpop.xlane.xlu0 %7414
    %v7416 = vadd.f32 %v7275, %v7373
    %7417 = vadd.xlane.f32.xlu0 %v7416
    %v7418 = vpop.xlane.xlu0 %7417
    %v7419 = vadd.f32 %v7278, %v7376
    %7420 = vadd.xlane.f32.xlu0 %v7419
    %v7421 = vpop.xlane.xlu0 %7420
    %v7422 = vadd.f32 %v7280, %v7378
    %7423 = vadd.xlane.f32.xlu0 %v7422
    %v7424 = vpop.xlane.xlu0 %7423
    %v7425 = vadd.f32 %v7283, %v7381
    %7426 = vadd.xlane.f32.xlu0 %v7425
    %v7427 = vpop.xlane.xlu0 %7426
    %v7428 = vadd.f32 %v7285, %v7383
    %7429 = vadd.xlane.f32.xlu0 %v7428
    %v7430 = vpop.xlane.xlu0 %7429
    %v7431 = vadd.f32 %v7288, %v7386
    %7432 = vadd.xlane.f32.xlu0 %v7431
    %v7433 = vpop.xlane.xlu0 %7432
    %v7434 = vadd.f32 %v7290, %v7388
    %7435 = vadd.xlane.f32.xlu0 %v7434
    %v7436 = vpop.xlane.xlu0 %7435
    %v7437 = vadd.f32 %v7293, %v7391
    %7438 = vadd.xlane.f32.xlu0 %v7437
    %v7439 = vpop.xlane.xlu0 %7438
    %v7440 = vadd.f32 %v7295, %v7393
    %7441 = vadd.xlane.f32.xlu0 %v7440
    %v7442 = vpop.xlane.xlu0 %7441
    %v7443 = vmul.f32 %v7258, %v7258
    %v7444 = vmul.f32 %v7356, %v7356
    %v7445 = vmul.f32 %v7260, %v7260
    %v7446 = vmul.f32 %v7358, %v7358
    %v7447 = vmul.f32 %v7263, %v7263
    %v7448 = vmul.f32 %v7361, %v7361
    %v7449 = vmul.f32 %v7265, %v7265
    %v7450 = vmul.f32 %v7363, %v7363
    %v7451 = vmul.f32 %v7268, %v7268
    %v7452 = vmul.f32 %v7366, %v7366
    %v7453 = vmul.f32 %v7270, %v7270
    %v7454 = vmul.f32 %v7368, %v7368
    %v7455 = vmul.f32 %v7273, %v7273
    %v7456 = vmul.f32 %v7371, %v7371
    %v7457 = vmul.f32 %v7275, %v7275
    %v7458 = vmul.f32 %v7373, %v7373
    %v7459 = vmul.f32 %v7278, %v7278
    %v7460 = vmul.f32 %v7376, %v7376
    %v7461 = vmul.f32 %v7280, %v7280
    %v7462 = vmul.f32 %v7378, %v7378
    %v7463 = vmul.f32 %v7283, %v7283
    %v7464 = vmul.f32 %v7381, %v7381
    %v7465 = vmul.f32 %v7285, %v7285
    %v7466 = vmul.f32 %v7383, %v7383
    %v7467 = vmul.f32 %v7288, %v7288
    %v7468 = vmul.f32 %v7386, %v7386
    %v7469 = vmul.f32 %v7290, %v7290
    %v7470 = vmul.f32 %v7388, %v7388
    %v7471 = vmul.f32 %v7293, %v7293
    %v7472 = vmul.f32 %v7391, %v7391
    %v7473 = vmul.f32 %v7295, %v7295
    %v7474 = vmul.f32 %v7393, %v7393
    %v7475 = vadd.f32 %v7443, %v7444
    %7476 = vadd.xlane.f32.xlu0 %v7475
    %v7477 = vpop.xlane.xlu0 %7476
    %v7478 = vadd.f32 %v7445, %v7446
    %7479 = vadd.xlane.f32.xlu0 %v7478
    %v7480 = vpop.xlane.xlu0 %7479
    %v7481 = vadd.f32 %v7447, %v7448
    %7482 = vadd.xlane.f32.xlu0 %v7481
    %v7483 = vpop.xlane.xlu0 %7482
    %v7484 = vadd.f32 %v7449, %v7450
    %7485 = vadd.xlane.f32.xlu0 %v7484
    %v7486 = vpop.xlane.xlu0 %7485
    %v7487 = vadd.f32 %v7451, %v7452
    %7488 = vadd.xlane.f32.xlu0 %v7487
    %v7489 = vpop.xlane.xlu0 %7488
    %v7490 = vadd.f32 %v7453, %v7454
    %7491 = vadd.xlane.f32.xlu0 %v7490
    %v7492 = vpop.xlane.xlu0 %7491
    %v7493 = vadd.f32 %v7455, %v7456
    %7494 = vadd.xlane.f32.xlu0 %v7493
    %v7495 = vpop.xlane.xlu0 %7494
    %v7496 = vadd.f32 %v7457, %v7458
    %7497 = vadd.xlane.f32.xlu0 %v7496
    %v7498 = vpop.xlane.xlu0 %7497
    %v7499 = vadd.f32 %v7459, %v7460
    %7500 = vadd.xlane.f32.xlu0 %v7499
    %v7501 = vpop.xlane.xlu0 %7500
    %v7502 = vadd.f32 %v7461, %v7462
    %7503 = vadd.xlane.f32.xlu0 %v7502
    %v7504 = vpop.xlane.xlu0 %7503
    %v7505 = vadd.f32 %v7463, %v7464
    %7506 = vadd.xlane.f32.xlu0 %v7505
    %v7507 = vpop.xlane.xlu0 %7506
    %v7508 = vadd.f32 %v7465, %v7466
    %7509 = vadd.xlane.f32.xlu0 %v7508
    %v7510 = vpop.xlane.xlu0 %7509
    %v7511 = vadd.f32 %v7467, %v7468
    %7512 = vadd.xlane.f32.xlu0 %v7511
    %v7513 = vpop.xlane.xlu0 %7512
    %v7514 = vadd.f32 %v7469, %v7470
    %7515 = vadd.xlane.f32.xlu0 %v7514
    %v7516 = vpop.xlane.xlu0 %7515
    %v7517 = vadd.f32 %v7471, %v7472
    %7518 = vadd.xlane.f32.xlu0 %v7517
    %v7519 = vpop.xlane.xlu0 %7518
    %v7520 = vadd.f32 %v7473, %v7474
    %7521 = vadd.xlane.f32.xlu0 %v7520
    %v7522 = vpop.xlane.xlu0 %7521
    %v7523 = vmul.f32 %v7397, 0.00390625
    %v7524 = vmul.f32 %v7400, 0.00390625
    %v7525 = vmul.f32 %v7403, 0.00390625
    %v7526 = vmul.f32 %v7406, 0.00390625
    %v7527 = vmul.f32 %v7409, 0.00390625
    %v7528 = vmul.f32 %v7412, 0.00390625
    %v7529 = vmul.f32 %v7415, 0.00390625
    %v7530 = vmul.f32 %v7418, 0.00390625
    %v7531 = vmul.f32 %v7421, 0.00390625
    %v7532 = vmul.f32 %v7424, 0.00390625
    %v7533 = vmul.f32 %v7427, 0.00390625
    %v7534 = vmul.f32 %v7430, 0.00390625
    %v7535 = vmul.f32 %v7433, 0.00390625
    %v7536 = vmul.f32 %v7436, 0.00390625
    %v7537 = vmul.f32 %v7439, 0.00390625
    %v7538 = vmul.f32 %v7442, 0.00390625
    %v7539 = vmul.f32 %v7477, 0.00390625
    %v7540 = vmul.f32 %v7480, 0.00390625
    %v7541 = vmul.f32 %v7483, 0.00390625
    %v7542 = vmul.f32 %v7486, 0.00390625
    %v7543 = vmul.f32 %v7489, 0.00390625
    %v7544 = vmul.f32 %v7492, 0.00390625
    %v7545 = vmul.f32 %v7495, 0.00390625
    %v7546 = vmul.f32 %v7498, 0.00390625
    %v7547 = vmul.f32 %v7501, 0.00390625
    %v7548 = vmul.f32 %v7504, 0.00390625
    %v7549 = vmul.f32 %v7507, 0.00390625
    %v7550 = vmul.f32 %v7510, 0.00390625
    %v7551 = vmul.f32 %v7513, 0.00390625
    %v7552 = vmul.f32 %v7516, 0.00390625
    %v7553 = vmul.f32 %v7519, 0.00390625
    %v7554 = vmul.f32 %v7522, 0.00390625
    %v7555 = vmul.f32 %v7523, %v7523
    %v7556 = vmul.f32 %v7524, %v7524
    %v7557 = vmul.f32 %v7525, %v7525
    %v7558 = vmul.f32 %v7526, %v7526
    %v7559 = vmul.f32 %v7527, %v7527
    %v7560 = vmul.f32 %v7528, %v7528
    %v7561 = vmul.f32 %v7529, %v7529
    %v7562 = vmul.f32 %v7530, %v7530
    %v7563 = vmul.f32 %v7531, %v7531
    %v7564 = vmul.f32 %v7532, %v7532
    %v7565 = vmul.f32 %v7533, %v7533
    %v7566 = vmul.f32 %v7534, %v7534
    %v7567 = vmul.f32 %v7535, %v7535
    %v7568 = vmul.f32 %v7536, %v7536
    %v7569 = vmul.f32 %v7537, %v7537
    %v7570 = vmul.f32 %v7538, %v7538
    %v7571 = vsub.f32 %v7539, %v7555
    %v7572 = vsub.f32 %v7540, %v7556
    %v7573 = vsub.f32 %v7541, %v7557
    %v7574 = vsub.f32 %v7542, %v7558
    %v7575 = vsub.f32 %v7543, %v7559
    %v7576 = vsub.f32 %v7544, %v7560
    %v7577 = vsub.f32 %v7545, %v7561
    %v7578 = vsub.f32 %v7546, %v7562
    %v7579 = vsub.f32 %v7547, %v7563
    %v7580 = vsub.f32 %v7548, %v7564
    %v7581 = vsub.f32 %v7549, %v7565
    %v7582 = vsub.f32 %v7550, %v7566
    %v7583 = vsub.f32 %v7551, %v7567
    %v7584 = vsub.f32 %v7552, %v7568
    %v7585 = vsub.f32 %v7553, %v7569
    %v7586 = vsub.f32 %v7554, %v7570
    %v7587 = vmax.f32 %v7571, 0.0
    %v7588 = vmax.f32 %v7572, 0.0
    %v7589 = vmax.f32 %v7573, 0.0
    %v7590 = vmax.f32 %v7574, 0.0
    %v7591 = vmax.f32 %v7575, 0.0
    %v7592 = vmax.f32 %v7576, 0.0
    %v7593 = vmax.f32 %v7577, 0.0
    %v7594 = vmax.f32 %v7578, 0.0
    %v7595 = vmax.f32 %v7579, 0.0
    %v7596 = vmax.f32 %v7580, 0.0
    %v7597 = vmax.f32 %v7581, 0.0
    %v7598 = vmax.f32 %v7582, 0.0
    %v7599 = vmax.f32 %v7583, 0.0
    %v7600 = vmax.f32 %v7584, 0.0
    %v7601 = vmax.f32 %v7585, 0.0
    %v7602 = vmax.f32 %v7586, 0.0
    %v7603 = vadd.f32 %v7587, 1e-05
    %v7604 = vadd.f32 %v7588, 1e-05
    %v7605 = vadd.f32 %v7589, 1e-05
    %v7606 = vadd.f32 %v7590, 1e-05
    %v7607 = vadd.f32 %v7591, 1e-05
    %v7608 = vadd.f32 %v7592, 1e-05
    %v7609 = vadd.f32 %v7593, 1e-05
    %v7610 = vadd.f32 %v7594, 1e-05
    %v7611 = vadd.f32 %v7595, 1e-05
    %v7612 = vadd.f32 %v7596, 1e-05
    %v7613 = vadd.f32 %v7597, 1e-05
    %v7614 = vadd.f32 %v7598, 1e-05
    %v7615 = vadd.f32 %v7599, 1e-05
    %v7616 = vadd.f32 %v7600, 1e-05
    %v7617 = vadd.f32 %v7601, 1e-05
    %v7618 = vadd.f32 %v7602, 1e-05
    %v7619 = vrsqrt.pop %v7603
    %v7620 = vmul.f32 %v7619, %v7603
    %v7621 = vmul.f32 %v7620, %v7619
    %v7622 = vmul.f32 0.5, %v7621
    %v7623 = vsub.f32 1.5, %v7622
    %v7624 = vmul.f32 %v7619, %v7623
    %vm7625 = vweird.f32 %v7603
    %vm7626 = vweird.f32 %v7619
    %vm7627 = vmor %vm7625, %vm7626
    %v7628 = vsel %vm7627, %v7619, %v7624
    %v7629 = vrsqrt.pop %v7604
    %v7630 = vmul.f32 %v7629, %v7604
    %v7631 = vmul.f32 %v7630, %v7629
    %v7632 = vmul.f32 0.5, %v7631
    %v7633 = vsub.f32 1.5, %v7632
    %v7634 = vmul.f32 %v7629, %v7633
    %vm7635 = vweird.f32 %v7604
    %vm7636 = vweird.f32 %v7629
    %vm7637 = vmor %vm7635, %vm7636
    %v7638 = vsel %vm7637, %v7629, %v7634
    %v7639 = vrsqrt.pop %v7605
    %v7640 = vmul.f32 %v7639, %v7605
    %v7641 = vmul.f32 %v7640, %v7639
    %v7642 = vmul.f32 0.5, %v7641
    %v7643 = vsub.f32 1.5, %v7642
    %v7644 = vmul.f32 %v7639, %v7643
    %vm7645 = vweird.f32 %v7605
    %vm7646 = vweird.f32 %v7639
    %vm7647 = vmor %vm7645, %vm7646
    %v7648 = vsel %vm7647, %v7639, %v7644
    %v7649 = vrsqrt.pop %v7606
    %v7650 = vmul.f32 %v7649, %v7606
    %v7651 = vmul.f32 %v7650, %v7649
    %v7652 = vmul.f32 0.5, %v7651
    %v7653 = vsub.f32 1.5, %v7652
    %v7654 = vmul.f32 %v7649, %v7653
    %vm7655 = vweird.f32 %v7606
    %vm7656 = vweird.f32 %v7649
    %vm7657 = vmor %vm7655, %vm7656
    %v7658 = vsel %vm7657, %v7649, %v7654
    %v7659 = vrsqrt.pop %v7607
    %v7660 = vmul.f32 %v7659, %v7607
    %v7661 = vmul.f32 %v7660, %v7659
    %v7662 = vmul.f32 0.5, %v7661
    %v7663 = vsub.f32 1.5, %v7662
    %v7664 = vmul.f32 %v7659, %v7663
    %vm7665 = vweird.f32 %v7607
    %vm7666 = vweird.f32 %v7659
    %vm7667 = vmor %vm7665, %vm7666
    %v7668 = vsel %vm7667, %v7659, %v7664
    %v7669 = vrsqrt.pop %v7608
    %v7670 = vmul.f32 %v7669, %v7608
    %v7671 = vmul.f32 %v7670, %v7669
    %v7672 = vmul.f32 0.5, %v7671
    %v7673 = vsub.f32 1.5, %v7672
    %v7674 = vmul.f32 %v7669, %v7673
    %vm7675 = vweird.f32 %v7608
    %vm7676 = vweird.f32 %v7669
    %vm7677 = vmor %vm7675, %vm7676
    %v7678 = vsel %vm7677, %v7669, %v7674
    %v7679 = vrsqrt.pop %v7609
    %v7680 = vmul.f32 %v7679, %v7609
    %v7681 = vmul.f32 %v7680, %v7679
    %v7682 = vmul.f32 0.5, %v7681
    %v7683 = vsub.f32 1.5, %v7682
    %v7684 = vmul.f32 %v7679, %v7683
    %vm7685 = vweird.f32 %v7609
    %vm7686 = vweird.f32 %v7679
    %vm7687 = vmor %vm7685, %vm7686
    %v7688 = vsel %vm7687, %v7679, %v7684
    %v7689 = vrsqrt.pop %v7610
    %v7690 = vmul.f32 %v7689, %v7610
    %v7691 = vmul.f32 %v7690, %v7689
    %v7692 = vmul.f32 0.5, %v7691
    %v7693 = vsub.f32 1.5, %v7692
    %v7694 = vmul.f32 %v7689, %v7693
    %vm7695 = vweird.f32 %v7610
    %vm7696 = vweird.f32 %v7689
    %vm7697 = vmor %vm7695, %vm7696
    %v7698 = vsel %vm7697, %v7689, %v7694
    %v7699 = vrsqrt.pop %v7611
    %v7700 = vmul.f32 %v7699, %v7611
    %v7701 = vmul.f32 %v7700, %v7699
    %v7702 = vmul.f32 0.5, %v7701
    %v7703 = vsub.f32 1.5, %v7702
    %v7704 = vmul.f32 %v7699, %v7703
    %vm7705 = vweird.f32 %v7611
    %vm7706 = vweird.f32 %v7699
    %vm7707 = vmor %vm7705, %vm7706
    %v7708 = vsel %vm7707, %v7699, %v7704
    %v7709 = vrsqrt.pop %v7612
    %v7710 = vmul.f32 %v7709, %v7612
    %v7711 = vmul.f32 %v7710, %v7709
    %v7712 = vmul.f32 0.5, %v7711
    %v7713 = vsub.f32 1.5, %v7712
    %v7714 = vmul.f32 %v7709, %v7713
    %vm7715 = vweird.f32 %v7612
    %vm7716 = vweird.f32 %v7709
    %vm7717 = vmor %vm7715, %vm7716
    %v7718 = vsel %vm7717, %v7709, %v7714
    %v7719 = vrsqrt.pop %v7613
    %v7720 = vmul.f32 %v7719, %v7613
    %v7721 = vmul.f32 %v7720, %v7719
    %v7722 = vmul.f32 0.5, %v7721
    %v7723 = vsub.f32 1.5, %v7722
    %v7724 = vmul.f32 %v7719, %v7723
    %vm7725 = vweird.f32 %v7613
    %vm7726 = vweird.f32 %v7719
    %vm7727 = vmor %vm7725, %vm7726
    %v7728 = vsel %vm7727, %v7719, %v7724
    %v7729 = vrsqrt.pop %v7614
    %v7730 = vmul.f32 %v7729, %v7614
    %v7731 = vmul.f32 %v7730, %v7729
    %v7732 = vmul.f32 0.5, %v7731
    %v7733 = vsub.f32 1.5, %v7732
    %v7734 = vmul.f32 %v7729, %v7733
    %vm7735 = vweird.f32 %v7614
    %vm7736 = vweird.f32 %v7729
    %vm7737 = vmor %vm7735, %vm7736
    %v7738 = vsel %vm7737, %v7729, %v7734
    %v7739 = vrsqrt.pop %v7615
    %v7740 = vmul.f32 %v7739, %v7615
    %v7741 = vmul.f32 %v7740, %v7739
    %v7742 = vmul.f32 0.5, %v7741
    %v7743 = vsub.f32 1.5, %v7742
    %v7744 = vmul.f32 %v7739, %v7743
    %vm7745 = vweird.f32 %v7615
    %vm7746 = vweird.f32 %v7739
    %vm7747 = vmor %vm7745, %vm7746
    %v7748 = vsel %vm7747, %v7739, %v7744
    %v7749 = vrsqrt.pop %v7616
    %v7750 = vmul.f32 %v7749, %v7616
    %v7751 = vmul.f32 %v7750, %v7749
    %v7752 = vmul.f32 0.5, %v7751
    %v7753 = vsub.f32 1.5, %v7752
    %v7754 = vmul.f32 %v7749, %v7753
    %vm7755 = vweird.f32 %v7616
    %vm7756 = vweird.f32 %v7749
    %vm7757 = vmor %vm7755, %vm7756
    %v7758 = vsel %vm7757, %v7749, %v7754
    %v7759 = vrsqrt.pop %v7617
    %v7760 = vmul.f32 %v7759, %v7617
    %v7761 = vmul.f32 %v7760, %v7759
    %v7762 = vmul.f32 0.5, %v7761
    %v7763 = vsub.f32 1.5, %v7762
    %v7764 = vmul.f32 %v7759, %v7763
    %vm7765 = vweird.f32 %v7617
    %vm7766 = vweird.f32 %v7759
    %vm7767 = vmor %vm7765, %vm7766
    %v7768 = vsel %vm7767, %v7759, %v7764
    %v7769 = vrsqrt.pop %v7618
    %v7770 = vmul.f32 %v7769, %v7618
    %v7771 = vmul.f32 %v7770, %v7769
    %v7772 = vmul.f32 0.5, %v7771
    %v7773 = vsub.f32 1.5, %v7772
    %v7774 = vmul.f32 %v7769, %v7773
    %vm7775 = vweird.f32 %v7618
    %vm7776 = vweird.f32 %v7769
    %vm7777 = vmor %vm7775, %vm7776
    %v7778 = vsel %vm7777, %v7769, %v7774
    %v7779 = vsub.f32 %v7258, %v7523
    %v7780 = vsub.f32 %v7356, %v7523
    %v7781 = vsub.f32 %v7260, %v7524
    %v7782 = vsub.f32 %v7358, %v7524
    %v7783 = vsub.f32 %v7263, %v7525
    %v7784 = vsub.f32 %v7361, %v7525
    %v7785 = vsub.f32 %v7265, %v7526
    %v7786 = vsub.f32 %v7363, %v7526
    %v7787 = vsub.f32 %v7268, %v7527
    %v7788 = vsub.f32 %v7366, %v7527
    %v7789 = vsub.f32 %v7270, %v7528
    %v7790 = vsub.f32 %v7368, %v7528
    %v7791 = vsub.f32 %v7273, %v7529
    %v7792 = vsub.f32 %v7371, %v7529
    %v7793 = vsub.f32 %v7275, %v7530
    %v7794 = vsub.f32 %v7373, %v7530
    %v7795 = vsub.f32 %v7278, %v7531
    %v7796 = vsub.f32 %v7376, %v7531
    %v7797 = vsub.f32 %v7280, %v7532
    %v7798 = vsub.f32 %v7378, %v7532
    %v7799 = vsub.f32 %v7283, %v7533
    %v7800 = vsub.f32 %v7381, %v7533
    %v7801 = vsub.f32 %v7285, %v7534
    %v7802 = vsub.f32 %v7383, %v7534
    %v7803 = vsub.f32 %v7288, %v7535
    %v7804 = vsub.f32 %v7386, %v7535
    %v7805 = vsub.f32 %v7290, %v7536
    %v7806 = vsub.f32 %v7388, %v7536
    %v7807 = vsub.f32 %v7293, %v7537
    %v7808 = vsub.f32 %v7391, %v7537
    %v7809 = vsub.f32 %v7295, %v7538
    %v7810 = vsub.f32 %v7393, %v7538
    %v7811 = vmul.f32 %v7779, %v7628
    %v7812 = vmul.f32 %v7780, %v7628
    %v7813 = vmul.f32 %v7781, %v7638
    %v7814 = vmul.f32 %v7782, %v7638
    %v7815 = vmul.f32 %v7783, %v7648
    %v7816 = vmul.f32 %v7784, %v7648
    %v7817 = vmul.f32 %v7785, %v7658
    %v7818 = vmul.f32 %v7786, %v7658
    %v7819 = vmul.f32 %v7787, %v7668
    %v7820 = vmul.f32 %v7788, %v7668
    %v7821 = vmul.f32 %v7789, %v7678
    %v7822 = vmul.f32 %v7790, %v7678
    %v7823 = vmul.f32 %v7791, %v7688
    %v7824 = vmul.f32 %v7792, %v7688
    %v7825 = vmul.f32 %v7793, %v7698
    %v7826 = vmul.f32 %v7794, %v7698
    %v7827 = vmul.f32 %v7795, %v7708
    %v7828 = vmul.f32 %v7796, %v7708
    %v7829 = vmul.f32 %v7797, %v7718
    %v7830 = vmul.f32 %v7798, %v7718
    %v7831 = vmul.f32 %v7799, %v7728
    %v7832 = vmul.f32 %v7800, %v7728
    %v7833 = vmul.f32 %v7801, %v7738
    %v7834 = vmul.f32 %v7802, %v7738
    %v7835 = vmul.f32 %v7803, %v7748
    %v7836 = vmul.f32 %v7804, %v7748
    %v7837 = vmul.f32 %v7805, %v7758
    %v7838 = vmul.f32 %v7806, %v7758
    %v7839 = vmul.f32 %v7807, %v7768
    %v7840 = vmul.f32 %v7808, %v7768
    %v7841 = vmul.f32 %v7809, %v7778
    %v7842 = vmul.f32 %v7810, %v7778
    %s7843 = scalar_lea.vmem %s6, 7
    %v7844 = vld [vmem:[%s7843] ss:$8 sm:$0x3]
    %v7846 = vperm.slane %v7844, 0
    %v7847 = vperm.slane %v7844, 1
    %v7850 = vmul.f32 %v7811, %v7846
    %v7851 = vmul.f32 %v7812, %v7847
    %v7852 = vmul.f32 %v7813, %v7846
    %v7853 = vmul.f32 %v7814, %v7847
    %v7854 = vmul.f32 %v7815, %v7846
    %v7855 = vmul.f32 %v7816, %v7847
    %v7856 = vmul.f32 %v7817, %v7846
    %v7857 = vmul.f32 %v7818, %v7847
    %v7858 = vmul.f32 %v7819, %v7846
    %v7859 = vmul.f32 %v7820, %v7847
    %v7860 = vmul.f32 %v7821, %v7846
    %v7861 = vmul.f32 %v7822, %v7847
    %v7862 = vmul.f32 %v7823, %v7846
    %v7863 = vmul.f32 %v7824, %v7847
    %v7864 = vmul.f32 %v7825, %v7846
    %v7865 = vmul.f32 %v7826, %v7847
    %v7866 = vmul.f32 %v7827, %v7846
    %v7867 = vmul.f32 %v7828, %v7847
    %v7868 = vmul.f32 %v7829, %v7846
    %v7869 = vmul.f32 %v7830, %v7847
    %v7870 = vmul.f32 %v7831, %v7846
    %v7871 = vmul.f32 %v7832, %v7847
    %v7872 = vmul.f32 %v7833, %v7846
    %v7873 = vmul.f32 %v7834, %v7847
    %v7874 = vmul.f32 %v7835, %v7846
    %v7875 = vmul.f32 %v7836, %v7847
    %v7876 = vmul.f32 %v7837, %v7846
    %v7877 = vmul.f32 %v7838, %v7847
    %v7878 = vmul.f32 %v7839, %v7846
    %v7879 = vmul.f32 %v7840, %v7847
    %v7880 = vmul.f32 %v7841, %v7846
    %v7881 = vmul.f32 %v7842, %v7847
    %s7882 = scalar_lea.vmem %s7, 7
    %v7883 = vld [vmem:[%s7882] ss:$8 sm:$0x3]
    %v7885 = vperm.slane %v7883, 0
    %v7886 = vperm.slane %v7883, 1
    %v7889 = vadd.f32 %v7850, %v7885
    %v7890 = vadd.f32 %v7851, %v7886
    %v7891 = vadd.f32 %v7852, %v7885
    %v7892 = vadd.f32 %v7853, %v7886
    %v7893 = vadd.f32 %v7854, %v7885
    %v7894 = vadd.f32 %v7855, %v7886
    %v7895 = vadd.f32 %v7856, %v7885
    %v7896 = vadd.f32 %v7857, %v7886
    %v7897 = vadd.f32 %v7858, %v7885
    %v7898 = vadd.f32 %v7859, %v7886
    %v7899 = vadd.f32 %v7860, %v7885
    %v7900 = vadd.f32 %v7861, %v7886
    %v7901 = vadd.f32 %v7862, %v7885
    %v7902 = vadd.f32 %v7863, %v7886
    %v7903 = vadd.f32 %v7864, %v7885
    %v7904 = vadd.f32 %v7865, %v7886
    %v7905 = vadd.f32 %v7866, %v7885
    %v7906 = vadd.f32 %v7867, %v7886
    %v7907 = vadd.f32 %v7868, %v7885
    %v7908 = vadd.f32 %v7869, %v7886
    %v7909 = vadd.f32 %v7870, %v7885
    %v7910 = vadd.f32 %v7871, %v7886
    %v7911 = vadd.f32 %v7872, %v7885
    %v7912 = vadd.f32 %v7873, %v7886
    %v7913 = vadd.f32 %v7874, %v7885
    %v7914 = vadd.f32 %v7875, %v7886
    %v7915 = vadd.f32 %v7876, %v7885
    %v7916 = vadd.f32 %v7877, %v7886
    %v7917 = vadd.f32 %v7878, %v7885
    %v7918 = vadd.f32 %v7879, %v7886
    %v7919 = vadd.f32 %v7880, %v7885
    %v7920 = vadd.f32 %v7881, %v7886
    %v7921 = vmax.f32 %v7889, 0.0
    %v7922 = vmax.f32 %v7890, 0.0
    %v7923 = vmax.f32 %v7891, 0.0
    %v7924 = vmax.f32 %v7892, 0.0
    %v7925 = vmax.f32 %v7893, 0.0
    %v7926 = vmax.f32 %v7894, 0.0
    %v7927 = vmax.f32 %v7895, 0.0
    %v7928 = vmax.f32 %v7896, 0.0
    %v7929 = vmax.f32 %v7897, 0.0
    %v7930 = vmax.f32 %v7898, 0.0
    %v7931 = vmax.f32 %v7899, 0.0
    %v7932 = vmax.f32 %v7900, 0.0
    %v7933 = vmax.f32 %v7901, 0.0
    %v7934 = vmax.f32 %v7902, 0.0
    %v7935 = vmax.f32 %v7903, 0.0
    %v7936 = vmax.f32 %v7904, 0.0
    %v7937 = vmax.f32 %v7905, 0.0
    %v7938 = vmax.f32 %v7906, 0.0
    %v7939 = vmax.f32 %v7907, 0.0
    %v7940 = vmax.f32 %v7908, 0.0
    %v7941 = vmax.f32 %v7909, 0.0
    %v7942 = vmax.f32 %v7910, 0.0
    %v7943 = vmax.f32 %v7911, 0.0
    %v7944 = vmax.f32 %v7912, 0.0
    %v7945 = vmax.f32 %v7913, 0.0
    %v7946 = vmax.f32 %v7914, 0.0
    %v7947 = vmax.f32 %v7915, 0.0
    %v7948 = vmax.f32 %v7916, 0.0
    %v7949 = vmax.f32 %v7917, 0.0
    %v7950 = vmax.f32 %v7918, 0.0
    %v7951 = vmax.f32 %v7919, 0.0
    %v7952 = vmax.f32 %v7920, 0.0
    %v7953 = vpack.c.bf16 %v7923, %v7921
    %v7954 = vpack.c.bf16 %v7924, %v7922
    %v7955 = vpack.c.bf16 %v7927, %v7925
    %v7956 = vpack.c.bf16 %v7928, %v7926
    %v7957 = vpack.c.bf16 %v7931, %v7929
    %v7958 = vpack.c.bf16 %v7932, %v7930
    %v7959 = vpack.c.bf16 %v7935, %v7933
    %v7960 = vpack.c.bf16 %v7936, %v7934
    %v7961 = vpack.c.bf16 %v7939, %v7937
    %v7962 = vpack.c.bf16 %v7940, %v7938
    %v7963 = vpack.c.bf16 %v7943, %v7941
    %v7964 = vpack.c.bf16 %v7944, %v7942
    %v7965 = vpack.c.bf16 %v7947, %v7945
    %v7966 = vpack.c.bf16 %v7948, %v7946
    %v7967 = vpack.c.bf16 %v7951, %v7949
    %v7968 = vpack.c.bf16 %v7952, %v7950
    %v7969 = vld [vmem:[#allocation9] sm:$0xff]
    %v7970 = vld [vmem:[#allocation9 + $0x8] sm:$0xf]
    %v7971 = vld [vmem:[#allocation9 + $0xc] sm:$0xff]
    %v7972 = vld [vmem:[#allocation9 + $0x14] sm:$0xf]
    %v7973 = vld [vmem:[#allocation9 + $0x18] sm:$0xff]
    %v7974 = vld [vmem:[#allocation9 + $0x20] sm:$0xf]
    %v7975 = vld [vmem:[#allocation9 + $0x24] sm:$0xff]
    %v7976 = vld [vmem:[#allocation9 + $0x2c] sm:$0xf]
    %v7977 = vld [vmem:[#allocation9 + $0x30] sm:$0xff]
    %v7978 = vld [vmem:[#allocation9 + $0x38] sm:$0xf]
    %v7979 = vld [vmem:[#allocation9 + $0x3c] sm:$0xff]
    %v7980 = vld [vmem:[#allocation9 + $0x44] sm:$0xf]
    %v7981 = vld [vmem:[#allocation9 + $0x48] sm:$0xff]
    %v7982 = vld [vmem:[#allocation9 + $0x50] sm:$0xf]
    %v7983 = vld [vmem:[#allocation9 + $0x54] sm:$0xff]
    %v7984 = vld [vmem:[#allocation9 + $0x5c] sm:$0xf]
    %v7985 = vld [vmem:[#allocation9 + $0x60] sm:$0xff]
    %v7986 = vld [vmem:[#allocation9 + $0x68] sm:$0xf]
    %v7987 = vld [vmem:[#allocation9 + $0x6c] sm:$0xff]
    %v7988 = vld [vmem:[#allocation9 + $0x74] sm:$0xf]
    %v7989 = vld [vmem:[#allocation9 + $0x78] sm:$0xff]
    %v7990 = vld [vmem:[#allocation9 + $0x80] sm:$0xf]
    %v7991 = vld [vmem:[#allocation9 + $0x84] sm:$0xff]
    %v7992 = vld [vmem:[#allocation9 + $0x8c] sm:$0xf]
    %v7993 = vld [vmem:[#allocation9 + $0x90] sm:$0xff]
    %v7994 = vld [vmem:[#allocation9 + $0x98] sm:$0xf]
    %v7995 = vld [vmem:[#allocation9 + $0x9c] sm:$0xff]
    %v7996 = vld [vmem:[#allocation9 + $0xa4] sm:$0xf]
    %v7997 = vld [vmem:[#allocation9 + $0xa8] sm:$0xff]
    %v7998 = vld [vmem:[#allocation9 + $0xb0] sm:$0xf]
    %v7999 = vld [vmem:[#allocation9 + $0xb4] sm:$0xff]
    %v8000 = vld [vmem:[#allocation9 + $0xbc] sm:$0xf]
    %v8001 = vld [vmem:[#allocation9 + $0xc0] sm:$0xff]
    %v8002 = vld [vmem:[#allocation9 + $0xc8] sm:$0xf]
    %v8003 = vld [vmem:[#allocation9 + $0xcc] sm:$0xff]
    %v8004 = vld [vmem:[#allocation9 + $0xd4] sm:$0xf]
    %v8005 = vld [vmem:[#allocation9 + $0xd8] sm:$0xff]
    %v8006 = vld [vmem:[#allocation9 + $0xe0] sm:$0xf]
    %v8007 = vld [vmem:[#allocation9 + $0xe4] sm:$0xff]
    %v8008 = vld [vmem:[#allocation9 + $0xec] sm:$0xf]
    %v8009 = vld [vmem:[#allocation9 + $0xf0] sm:$0xff]
    %v8010 = vld [vmem:[#allocation9 + $0xf8] sm:$0xf]
    %v8011 = vld [vmem:[#allocation9 + $0xfc] sm:$0xff]
    %v8012 = vld [vmem:[#allocation9 + $0x104] sm:$0xf]
    %v8013 = vld [vmem:[#allocation9 + $0x108] sm:$0xff]
    %v8014 = vld [vmem:[#allocation9 + $0x110] sm:$0xf]
    %v8015 = vld [vmem:[#allocation9 + $0x114] sm:$0xff]
    %v8016 = vld [vmem:[#allocation9 + $0x11c] sm:$0xf]
    %v8017 = vld [vmem:[#allocation9 + $0x120] sm:$0xff]
    %v8018 = vld [vmem:[#allocation9 + $0x128] sm:$0xf]
    %v8019 = vld [vmem:[#allocation9 + $0x12c] sm:$0xff]
    %v8020 = vld [vmem:[#allocation9 + $0x134] sm:$0xf]
    %v8021 = vld [vmem:[#allocation9 + $0x138] sm:$0xff]
    %v8022 = vld [vmem:[#allocation9 + $0x140] sm:$0xf]
    %v8023 = vld [vmem:[#allocation9 + $0x144] sm:$0xff]
    %v8024 = vld [vmem:[#allocation9 + $0x14c] sm:$0xf]
    %v8025 = vld [vmem:[#allocation9 + $0x150] sm:$0xff]
    %v8026 = vld [vmem:[#allocation9 + $0x158] sm:$0xf]
    %v8027 = vld [vmem:[#allocation9 + $0x15c] sm:$0xff]
    %v8028 = vld [vmem:[#allocation9 + $0x164] sm:$0xf]
    %v8029 = vld [vmem:[#allocation9 + $0x168] sm:$0xff]
    %v8030 = vld [vmem:[#allocation9 + $0x170] sm:$0xf]
    %v8031 = vld [vmem:[#allocation9 + $0x174] sm:$0xff]
    %v8032 = vld [vmem:[#allocation9 + $0x17c] sm:$0xf]
    %v8033 = vld [vmem:[%s9] sm:$0x7]
    %v8035 = vperm.slane %v8033, 0
    %v8036 = vperm.slane %v8033, 1
    %v8037 = vperm.slane %v8033, 2
    %v8105 = vunpack.c.l.b16 %v7969
    %v8106 = vunpack.c.h.b16 %v7969
    %v8107 = vunpack.c.l.b16 %v7970
    %v8108 = vunpack.c.l.b16 %v7971
    %v8109 = vunpack.c.h.b16 %v7971
    %v8110 = vunpack.c.l.b16 %v7972
    %v8111 = vunpack.c.l.b16 %v7973
    %v8112 = vunpack.c.h.b16 %v7973
    %v8113 = vunpack.c.l.b16 %v7974
    %v8114 = vunpack.c.l.b16 %v7975
    %v8115 = vunpack.c.h.b16 %v7975
    %v8116 = vunpack.c.l.b16 %v7976
    %v8117 = vunpack.c.l.b16 %v7977
    %v8118 = vunpack.c.h.b16 %v7977
    %v8119 = vunpack.c.l.b16 %v7978
    %v8120 = vunpack.c.l.b16 %v7979
    %v8121 = vunpack.c.h.b16 %v7979
    %v8122 = vunpack.c.l.b16 %v7980
    %v8123 = vunpack.c.l.b16 %v7981
    %v8124 = vunpack.c.h.b16 %v7981
    %v8125 = vunpack.c.l.b16 %v7982
    %v8126 = vunpack.c.l.b16 %v7983
    %v8127 = vunpack.c.h.b16 %v7983
    %v8128 = vunpack.c.l.b16 %v7984
    %v8129 = vunpack.c.l.b16 %v7985
    %v8130 = vunpack.c.h.b16 %v7985
    %v8131 = vunpack.c.l.b16 %v7986
    %v8132 = vunpack.c.l.b16 %v7987
    %v8133 = vunpack.c.h.b16 %v7987
    %v8134 = vunpack.c.l.b16 %v7988
    %v8135 = vunpack.c.l.b16 %v7989
    %v8136 = vunpack.c.h.b16 %v7989
    %v8137 = vunpack.c.l.b16 %v7990
    %v8138 = vunpack.c.l.b16 %v7991
    %v8139 = vunpack.c.h.b16 %v7991
    %v8140 = vunpack.c.l.b16 %v7992
    %v8141 = vunpack.c.l.b16 %v7993
    %v8142 = vunpack.c.h.b16 %v7993
    %v8143 = vunpack.c.l.b16 %v7994
    %v8144 = vunpack.c.l.b16 %v7995
    %v8145 = vunpack.c.h.b16 %v7995
    %v8146 = vunpack.c.l.b16 %v7996
    %v8147 = vunpack.c.l.b16 %v7997
    %v8148 = vunpack.c.h.b16 %v7997
    %v8149 = vunpack.c.l.b16 %v7998
    %v8150 = vunpack.c.l.b16 %v7999
    %v8151 = vunpack.c.h.b16 %v7999
    %v8152 = vunpack.c.l.b16 %v8000
    %v8153 = vunpack.c.l.b16 %v8001
    %v8154 = vunpack.c.h.b16 %v8001
    %v8155 = vunpack.c.l.b16 %v8002
    %v8156 = vunpack.c.l.b16 %v8003
    %v8157 = vunpack.c.h.b16 %v8003
    %v8158 = vunpack.c.l.b16 %v8004
    %v8159 = vunpack.c.l.b16 %v8005
    %v8160 = vunpack.c.h.b16 %v8005
    %v8161 = vunpack.c.l.b16 %v8006
    %v8162 = vunpack.c.l.b16 %v8007
    %v8163 = vunpack.c.h.b16 %v8007
    %v8164 = vunpack.c.l.b16 %v8008
    %v8165 = vunpack.c.l.b16 %v8009
    %v8166 = vunpack.c.h.b16 %v8009
    %v8167 = vunpack.c.l.b16 %v8010
    %v8168 = vunpack.c.l.b16 %v8011
    %v8169 = vunpack.c.h.b16 %v8011
    %v8170 = vunpack.c.l.b16 %v8012
    %v8171 = vunpack.c.l.b16 %v8013
    %v8172 = vunpack.c.h.b16 %v8013
    %v8173 = vunpack.c.l.b16 %v8014
    %v8174 = vunpack.c.l.b16 %v8015
    %v8175 = vunpack.c.h.b16 %v8015
    %v8176 = vunpack.c.l.b16 %v8016
    %v8177 = vunpack.c.l.b16 %v8017
    %v8178 = vunpack.c.h.b16 %v8017
    %v8179 = vunpack.c.l.b16 %v8018
    %v8180 = vunpack.c.l.b16 %v8019
    %v8181 = vunpack.c.h.b16 %v8019
    %v8182 = vunpack.c.l.b16 %v8020
    %v8183 = vunpack.c.l.b16 %v8021
    %v8184 = vunpack.c.h.b16 %v8021
    %v8185 = vunpack.c.l.b16 %v8022
    %v8186 = vunpack.c.l.b16 %v8023
    %v8187 = vunpack.c.h.b16 %v8023
    %v8188 = vunpack.c.l.b16 %v8024
    %v8189 = vunpack.c.l.b16 %v8025
    %v8190 = vunpack.c.h.b16 %v8025
    %v8191 = vunpack.c.l.b16 %v8026
    %v8192 = vunpack.c.l.b16 %v8027
    %v8193 = vunpack.c.h.b16 %v8027
    %v8194 = vunpack.c.l.b16 %v8028
    %v8195 = vunpack.c.l.b16 %v8029
    %v8196 = vunpack.c.h.b16 %v8029
    %v8197 = vunpack.c.l.b16 %v8030
    %v8198 = vunpack.c.l.b16 %v8031
    %v8199 = vunpack.c.h.b16 %v8031
    %v8200 = vunpack.c.l.b16 %v8032
    %v8201 = vpack.c.b16 %v8108, %v8105
    %v8202 = vpack.c.b16 %v8109, %v8106
    %v8203 = vpack.c.b16 %v8110, %v8107
    %v8204 = vpack.c.b16 %v8114, %v8111
    %v8205 = vpack.c.b16 %v8115, %v8112
    %v8206 = vpack.c.b16 %v8116, %v8113
    %v8207 = vpack.c.b16 %v8120, %v8117
    %v8208 = vpack.c.b16 %v8121, %v8118
    %v8209 = vpack.c.b16 %v8122, %v8119
    %v8210 = vpack.c.b16 %v8126, %v8123
    %v8211 = vpack.c.b16 %v8127, %v8124
    %v8212 = vpack.c.b16 %v8128, %v8125
    %v8213 = vpack.c.b16 %v8132, %v8129
    %v8214 = vpack.c.b16 %v8133, %v8130
    %v8215 = vpack.c.b16 %v8134, %v8131
    %v8216 = vpack.c.b16 %v8138, %v8135
    %v8217 = vpack.c.b16 %v8139, %v8136
    %v8218 = vpack.c.b16 %v8140, %v8137
    %v8219 = vpack.c.b16 %v8144, %v8141
    %v8220 = vpack.c.b16 %v8145, %v8142
    %v8221 = vpack.c.b16 %v8146, %v8143
    %v8222 = vpack.c.b16 %v8150, %v8147
    %v8223 = vpack.c.b16 %v8151, %v8148
    %v8224 = vpack.c.b16 %v8152, %v8149
    %v8225 = vpack.c.b16 %v8156, %v8153
    %v8226 = vpack.c.b16 %v8157, %v8154
    %v8227 = vpack.c.b16 %v8158, %v8155
    %v8228 = vpack.c.b16 %v8162, %v8159
    %v8229 = vpack.c.b16 %v8163, %v8160
    %v8230 = vpack.c.b16 %v8164, %v8161
    %v8231 = vpack.c.b16 %v8168, %v8165
    %v8232 = vpack.c.b16 %v8169, %v8166
    %v8233 = vpack.c.b16 %v8170, %v8167
    %v8234 = vpack.c.b16 %v8174, %v8171
    %v8235 = vpack.c.b16 %v8175, %v8172
    %v8236 = vpack.c.b16 %v8176, %v8173
    %v8237 = vpack.c.b16 %v8180, %v8177
    %v8238 = vpack.c.b16 %v8181, %v8178
    %v8239 = vpack.c.b16 %v8182, %v8179
    %v8240 = vpack.c.b16 %v8186, %v8183
    %v8241 = vpack.c.b16 %v8187, %v8184
    %v8242 = vpack.c.b16 %v8188, %v8185
    %v8243 = vpack.c.b16 %v8192, %v8189
    %v8244 = vpack.c.b16 %v8193, %v8190
    %v8245 = vpack.c.b16 %v8194, %v8191
    %v8246 = vpack.c.b16 %v8198, %v8195
    %v8247 = vpack.c.b16 %v8199, %v8196
    %v8248 = vpack.c.b16 %v8200, %v8197
    %8297 = vmatpush.bf16.msra.mxu0 %v8222
    %8298 = vmatpush.bf16.msra.mxu0 %v8219
    %8299 = vmatpush.bf16.msra.mxu0 %v8216
    %8300 = vmatpush.bf16.msra.mxu0 %v8213
    %8301 = vmatpush.bf16.msra.mxu0 %v8210
    %8302 = vmatpush.bf16.msra.mxu0 %v8207
    %8303 = vmatpush.bf16.msra.mxu0 %v8204
    %8304 = vmatpush.bf16.msra.mxu0 %v8201
    %8305 = vmatmul.bf16.gmra.mxu0 %v7953
    %v8306 = vpop.f32.mrf.mxu0
    %v8307 = vadd.f32 %v8035, %v8306
    %v8308 = vpop.f32.mrf.mxu0
    %v8309 = vadd.f32 %v8035, %v8308
    %8310 = vmatmul.bf16.gmra.mxu0 %v7955
    %v8311 = vpop.f32.mrf.mxu0
    %v8312 = vadd.f32 %v8035, %v8311
    %v8313 = vpop.f32.mrf.mxu0
    %v8314 = vadd.f32 %v8035, %v8313
    %8315 = vmatmul.bf16.gmra.mxu0 %v7957
    %v8316 = vpop.f32.mrf.mxu0
    %v8317 = vadd.f32 %v8035, %v8316
    %v8318 = vpop.f32.mrf.mxu0
    %v8319 = vadd.f32 %v8035, %v8318
    %8320 = vmatmul.bf16.gmra.mxu0 %v7959
    %v8321 = vpop.f32.mrf.mxu0
    %v8322 = vadd.f32 %v8035, %v8321
    %v8323 = vpop.f32.mrf.mxu0
    %v8324 = vadd.f32 %v8035, %v8323
    %8325 = vmatmul.bf16.gmra.mxu0 %v7961
    %v8326 = vpop.f32.mrf.mxu0
    %v8327 = vadd.f32 %v8035, %v8326
    %v8328 = vpop.f32.mrf.mxu0
    %v8329 = vadd.f32 %v8035, %v8328
    %8330 = vmatmul.bf16.gmra.mxu0 %v7963
    %v8331 = vpop.f32.mrf.mxu0
    %v8332 = vadd.f32 %v8035, %v8331
    %v8333 = vpop.f32.mrf.mxu0
    %v8334 = vadd.f32 %v8035, %v8333
    %8335 = vmatmul.bf16.gmra.mxu0 %v7965
    %v8336 = vpop.f32.mrf.mxu0
    %v8337 = vadd.f32 %v8035, %v8336
    %v8338 = vpop.f32.mrf.mxu0
    %v8339 = vadd.f32 %v8035, %v8338
    %8340 = vmatmul.bf16.gmra.mxu0 %v7967
    %v8341 = vpop.f32.mrf.mxu0
    %v8342 = vadd.f32 %v8035, %v8341
    %v8343 = vpop.f32.mrf.mxu0
    %v8344 = vadd.f32 %v8035, %v8343
    %8345 = vdwg.mxu0
    %8346 = vmatpush.bf16.msra.mxu0 %v8246
    %8347 = vmatpush.bf16.msra.mxu0 %v8243
    %8348 = vmatpush.bf16.msra.mxu0 %v8240
    %8349 = vmatpush.bf16.msra.mxu0 %v8237
    %8350 = vmatpush.bf16.msra.mxu0 %v8234
    %8351 = vmatpush.bf16.msra.mxu0 %v8231
    %8352 = vmatpush.bf16.msra.mxu0 %v8228
    %8353 = vmatpush.bf16.msra.mxu0 %v8225
    %8354 = vmatmul.bf16.gmra.mxu0 %v7954
    %v8355 = vpop.f32.mrf.mxu0
    %v8356 = vadd.f32 %v8307, %v8355
    %v8357 = vpop.f32.mrf.mxu0
    %v8358 = vadd.f32 %v8309, %v8357
    %8359 = vmatmul.bf16.gmra.mxu0 %v7956
    %v8360 = vpop.f32.mrf.mxu0
    %v8361 = vadd.f32 %v8312, %v8360
    %v8362 = vpop.f32.mrf.mxu0
    %v8363 = vadd.f32 %v8314, %v8362
    %8364 = vmatmul.bf16.gmra.mxu0 %v7958
    %v8365 = vpop.f32.mrf.mxu0
    %v8366 = vadd.f32 %v8317, %v8365
    %v8367 = vpop.f32.mrf.mxu0
    %v8368 = vadd.f32 %v8319, %v8367
    %8369 = vmatmul.bf16.gmra.mxu0 %v7960
    %v8370 = vpop.f32.mrf.mxu0
    %v8371 = vadd.f32 %v8322, %v8370
    %v8372 = vpop.f32.mrf.mxu0
    %v8373 = vadd.f32 %v8324, %v8372
    %8374 = vmatmul.bf16.gmra.mxu0 %v7962
    %v8375 = vpop.f32.mrf.mxu0
    %v8376 = vadd.f32 %v8327, %v8375
    %v8377 = vpop.f32.mrf.mxu0
    %v8378 = vadd.f32 %v8329, %v8377
    %8379 = vmatmul.bf16.gmra.mxu0 %v7964
    %v8380 = vpop.f32.mrf.mxu0
    %v8381 = vadd.f32 %v8332, %v8380
    %v8382 = vpop.f32.mrf.mxu0
    %v8383 = vadd.f32 %v8334, %v8382
    %8384 = vmatmul.bf16.gmra.mxu0 %v7966
    %v8385 = vpop.f32.mrf.mxu0
    %v8386 = vadd.f32 %v8337, %v8385
    %v8387 = vpop.f32.mrf.mxu0
    %v8388 = vadd.f32 %v8339, %v8387
    %8389 = vmatmul.bf16.gmra.mxu0 %v7968
    %v8390 = vpop.f32.mrf.mxu0
    %v8391 = vadd.f32 %v8342, %v8390
    %v8392 = vpop.f32.mrf.mxu0
    %v8393 = vadd.f32 %v8344, %v8392
    %8394 = vdwg.mxu0
    %8395 = vmatpush.bf16.msra.mxu0 %v8223
    %8396 = vmatpush.bf16.msra.mxu0 %v8220
    %8397 = vmatpush.bf16.msra.mxu0 %v8217
    %8398 = vmatpush.bf16.msra.mxu0 %v8214
    %8399 = vmatpush.bf16.msra.mxu0 %v8211
    %8400 = vmatpush.bf16.msra.mxu0 %v8208
    %8401 = vmatpush.bf16.msra.mxu0 %v8205
    %8402 = vmatpush.bf16.msra.mxu0 %v8202
    %8403 = vmatmul.bf16.gmra.mxu0 %v7953
    %v8404 = vpop.f32.mrf.mxu0
    %v8405 = vadd.f32 %v8036, %v8404
    %v8406 = vpop.f32.mrf.mxu0
    %v8407 = vadd.f32 %v8036, %v8406
    %8408 = vmatmul.bf16.gmra.mxu0 %v7955
    %v8409 = vpop.f32.mrf.mxu0
    %v8410 = vadd.f32 %v8036, %v8409
    %v8411 = vpop.f32.mrf.mxu0
    %v8412 = vadd.f32 %v8036, %v8411
    %8413 = vmatmul.bf16.gmra.mxu0 %v7957
    %v8414 = vpop.f32.mrf.mxu0
    %v8415 = vadd.f32 %v8036, %v8414
    %v8416 = vpop.f32.mrf.mxu0
    %v8417 = vadd.f32 %v8036, %v8416
    %8418 = vmatmul.bf16.gmra.mxu0 %v7959
    %v8419 = vpop.f32.mrf.mxu0
    %v8420 = vadd.f32 %v8036, %v8419
    %v8421 = vpop.f32.mrf.mxu0
    %v8422 = vadd.f32 %v8036, %v8421
    %8423 = vmatmul.bf16.gmra.mxu0 %v7961
    %v8424 = vpop.f32.mrf.mxu0
    %v8425 = vadd.f32 %v8036, %v8424
    %v8426 = vpop.f32.mrf.mxu0
    %v8427 = vadd.f32 %v8036, %v8426
    %8428 = vmatmul.bf16.gmra.mxu0 %v7963
    %v8429 = vpop.f32.mrf.mxu0
    %v8430 = vadd.f32 %v8036, %v8429
    %v8431 = vpop.f32.mrf.mxu0
    %v8432 = vadd.f32 %v8036, %v8431
    %8433 = vmatmul.bf16.gmra.mxu0 %v7965
    %v8434 = vpop.f32.mrf.mxu0
    %v8435 = vadd.f32 %v8036, %v8434
    %v8436 = vpop.f32.mrf.mxu0
    %v8437 = vadd.f32 %v8036, %v8436
    %8438 = vmatmul.bf16.gmra.mxu0 %v7967
    %v8439 = vpop.f32.mrf.mxu0
    %v8440 = vadd.f32 %v8036, %v8439
    %v8441 = vpop.f32.mrf.mxu0
    %v8442 = vadd.f32 %v8036, %v8441
    %8443 = vdwg.mxu0
    %8444 = vmatpush.bf16.msra.mxu0 %v8247
    %8445 = vmatpush.bf16.msra.mxu0 %v8244
    %8446 = vmatpush.bf16.msra.mxu0 %v8241
    %8447 = vmatpush.bf16.msra.mxu0 %v8238
    %8448 = vmatpush.bf16.msra.mxu0 %v8235
    %8449 = vmatpush.bf16.msra.mxu0 %v8232
    %8450 = vmatpush.bf16.msra.mxu0 %v8229
    %8451 = vmatpush.bf16.msra.mxu0 %v8226
    %8452 = vmatmul.bf16.gmra.mxu0 %v7954
    %v8453 = vpop.f32.mrf.mxu0
    %v8454 = vadd.f32 %v8405, %v8453
    %v8455 = vpop.f32.mrf.mxu0
    %v8456 = vadd.f32 %v8407, %v8455
    %8457 = vmatmul.bf16.gmra.mxu0 %v7956
    %v8458 = vpop.f32.mrf.mxu0
    %v8459 = vadd.f32 %v8410, %v8458
    %v8460 = vpop.f32.mrf.mxu0
    %v8461 = vadd.f32 %v8412, %v8460
    %8462 = vmatmul.bf16.gmra.mxu0 %v7958
    %v8463 = vpop.f32.mrf.mxu0
    %v8464 = vadd.f32 %v8415, %v8463
    %v8465 = vpop.f32.mrf.mxu0
    %v8466 = vadd.f32 %v8417, %v8465
    %8467 = vmatmul.bf16.gmra.mxu0 %v7960
    %v8468 = vpop.f32.mrf.mxu0
    %v8469 = vadd.f32 %v8420, %v8468
    %v8470 = vpop.f32.mrf.mxu0
    %v8471 = vadd.f32 %v8422, %v8470
    %8472 = vmatmul.bf16.gmra.mxu0 %v7962
    %v8473 = vpop.f32.mrf.mxu0
    %v8474 = vadd.f32 %v8425, %v8473
    %v8475 = vpop.f32.mrf.mxu0
    %v8476 = vadd.f32 %v8427, %v8475
    %8477 = vmatmul.bf16.gmra.mxu0 %v7964
    %v8478 = vpop.f32.mrf.mxu0
    %v8479 = vadd.f32 %v8430, %v8478
    %v8480 = vpop.f32.mrf.mxu0
    %v8481 = vadd.f32 %v8432, %v8480
    %8482 = vmatmul.bf16.gmra.mxu0 %v7966
    %v8483 = vpop.f32.mrf.mxu0
    %v8484 = vadd.f32 %v8435, %v8483
    %v8485 = vpop.f32.mrf.mxu0
    %v8486 = vadd.f32 %v8437, %v8485
    %8487 = vmatmul.bf16.gmra.mxu0 %v7968
    %v8488 = vpop.f32.mrf.mxu0
    %v8489 = vadd.f32 %v8440, %v8488
    %v8490 = vpop.f32.mrf.mxu0
    %v8491 = vadd.f32 %v8442, %v8490
    %8492 = vdwg.mxu0
    %8493 = vmatpush.bf16.msra.mxu0 %v8224
    %8494 = vmatpush.bf16.msra.mxu0 %v8221
    %8495 = vmatpush.bf16.msra.mxu0 %v8218
    %8496 = vmatpush.bf16.msra.mxu0 %v8215
    %8497 = vmatpush.bf16.msra.mxu0 %v8212
    %8498 = vmatpush.bf16.msra.mxu0 %v8209
    %8499 = vmatpush.bf16.msra.mxu0 %v8206
    %8500 = vmatpush.bf16.msra.mxu0 %v8203
    %8501 = vmatmul.bf16.gmra.mxu0 %v7953
    %v8502 = vpop.f32.mrf.mxu0
    %v8503 = vadd.f32 %v8037, %v8502
    %v8504 = vpop.f32.mrf.mxu0
    %v8505 = vadd.f32 %v8037, %v8504
    %8506 = vmatmul.bf16.gmra.mxu0 %v7955
    %v8507 = vpop.f32.mrf.mxu0
    %v8508 = vadd.f32 %v8037, %v8507
    %v8509 = vpop.f32.mrf.mxu0
    %v8510 = vadd.f32 %v8037, %v8509
    %8511 = vmatmul.bf16.gmra.mxu0 %v7957
    %v8512 = vpop.f32.mrf.mxu0
    %v8513 = vadd.f32 %v8037, %v8512
    %v8514 = vpop.f32.mrf.mxu0
    %v8515 = vadd.f32 %v8037, %v8514
    %8516 = vmatmul.bf16.gmra.mxu0 %v7959
    %v8517 = vpop.f32.mrf.mxu0
    %v8518 = vadd.f32 %v8037, %v8517
    %v8519 = vpop.f32.mrf.mxu0
    %v8520 = vadd.f32 %v8037, %v8519
    %8521 = vmatmul.bf16.gmra.mxu0 %v7961
    %v8522 = vpop.f32.mrf.mxu0
    %v8523 = vadd.f32 %v8037, %v8522
    %v8524 = vpop.f32.mrf.mxu0
    %v8525 = vadd.f32 %v8037, %v8524
    %8526 = vmatmul.bf16.gmra.mxu0 %v7963
    %v8527 = vpop.f32.mrf.mxu0
    %v8528 = vadd.f32 %v8037, %v8527
    %v8529 = vpop.f32.mrf.mxu0
    %v8530 = vadd.f32 %v8037, %v8529
    %8531 = vmatmul.bf16.gmra.mxu0 %v7965
    %v8532 = vpop.f32.mrf.mxu0
    %v8533 = vadd.f32 %v8037, %v8532
    %v8534 = vpop.f32.mrf.mxu0
    %v8535 = vadd.f32 %v8037, %v8534
    %8536 = vmatmul.bf16.gmra.mxu0 %v7967
    %v8537 = vpop.f32.mrf.mxu0
    %v8538 = vadd.f32 %v8037, %v8537
    %v8539 = vpop.f32.mrf.mxu0
    %v8540 = vadd.f32 %v8037, %v8539
    %8541 = vdwg.mxu0
    %8542 = vmatpush.bf16.msra.mxu0 %v8248
    %8543 = vmatpush.bf16.msra.mxu0 %v8245
    %8544 = vmatpush.bf16.msra.mxu0 %v8242
    %8545 = vmatpush.bf16.msra.mxu0 %v8239
    %8546 = vmatpush.bf16.msra.mxu0 %v8236
    %8547 = vmatpush.bf16.msra.mxu0 %v8233
    %8548 = vmatpush.bf16.msra.mxu0 %v8230
    %8549 = vmatpush.bf16.msra.mxu0 %v8227
    %8550 = vmatmul.bf16.gmra.mxu0 %v7954
    %v8551 = vpop.f32.mrf.mxu0
    %v8552 = vadd.f32 %v8503, %v8551
    %v8553 = vpop.f32.mrf.mxu0
    %v8554 = vadd.f32 %v8505, %v8553
    %8555 = vmatmul.bf16.gmra.mxu0 %v7956
    %v8556 = vpop.f32.mrf.mxu0
    %v8557 = vadd.f32 %v8508, %v8556
    %v8558 = vpop.f32.mrf.mxu0
    %v8559 = vadd.f32 %v8510, %v8558
    %8560 = vmatmul.bf16.gmra.mxu0 %v7958
    %v8561 = vpop.f32.mrf.mxu0
    %v8562 = vadd.f32 %v8513, %v8561
    %v8563 = vpop.f32.mrf.mxu0
    %v8564 = vadd.f32 %v8515, %v8563
    %8565 = vmatmul.bf16.gmra.mxu0 %v7960
    %v8566 = vpop.f32.mrf.mxu0
    %v8567 = vadd.f32 %v8518, %v8566
    %v8568 = vpop.f32.mrf.mxu0
    %v8569 = vadd.f32 %v8520, %v8568
    %8570 = vmatmul.bf16.gmra.mxu0 %v7962
    %v8571 = vpop.f32.mrf.mxu0
    %v8572 = vadd.f32 %v8523, %v8571
    %v8573 = vpop.f32.mrf.mxu0
    %v8574 = vadd.f32 %v8525, %v8573
    %8575 = vmatmul.bf16.gmra.mxu0 %v7964
    %v8576 = vpop.f32.mrf.mxu0
    %v8577 = vadd.f32 %v8528, %v8576
    %v8578 = vpop.f32.mrf.mxu0
    %v8579 = vadd.f32 %v8530, %v8578
    %8580 = vmatmul.bf16.gmra.mxu0 %v7966
    %v8581 = vpop.f32.mrf.mxu0
    %v8582 = vadd.f32 %v8533, %v8581
    %v8583 = vpop.f32.mrf.mxu0
    %v8584 = vadd.f32 %v8535, %v8583
    %8585 = vmatmul.bf16.gmra.mxu0 %v7968
    %v8586 = vpop.f32.mrf.mxu0
    %v8587 = vadd.f32 %v8538, %v8586
    %v8588 = vpop.f32.mrf.mxu0
    %v8589 = vadd.f32 %v8540, %v8588
    %8590 = vdwg.mxu0
    %v8591 = vmax.f32 %v8356, 0.0
    %v8592 = vmax.f32 %v8454, 0.0
    %v8593 = vmax.f32 %v8552, 0.0
    %v8594 = vmax.f32 %v8358, 0.0
    %v8595 = vmax.f32 %v8456, 0.0
    %v8596 = vmax.f32 %v8554, 0.0
    %v8597 = vmax.f32 %v8361, 0.0
    %v8598 = vmax.f32 %v8459, 0.0
    %v8599 = vmax.f32 %v8557, 0.0
    %v8600 = vmax.f32 %v8363, 0.0
    %v8601 = vmax.f32 %v8461, 0.0
    %v8602 = vmax.f32 %v8559, 0.0
    %v8603 = vmax.f32 %v8366, 0.0
    %v8604 = vmax.f32 %v8464, 0.0
    %v8605 = vmax.f32 %v8562, 0.0
    %v8606 = vmax.f32 %v8368, 0.0
    %v8607 = vmax.f32 %v8466, 0.0
    %v8608 = vmax.f32 %v8564, 0.0
    %v8609 = vmax.f32 %v8371, 0.0
    %v8610 = vmax.f32 %v8469, 0.0
    %v8611 = vmax.f32 %v8567, 0.0
    %v8612 = vmax.f32 %v8373, 0.0
    %v8613 = vmax.f32 %v8471, 0.0
    %v8614 = vmax.f32 %v8569, 0.0
    %v8615 = vmax.f32 %v8376, 0.0
    %v8616 = vmax.f32 %v8474, 0.0
    %v8617 = vmax.f32 %v8572, 0.0
    %v8618 = vmax.f32 %v8378, 0.0
    %v8619 = vmax.f32 %v8476, 0.0
    %v8620 = vmax.f32 %v8574, 0.0
    %v8621 = vmax.f32 %v8381, 0.0
    %v8622 = vmax.f32 %v8479, 0.0
    %v8623 = vmax.f32 %v8577, 0.0
    %v8624 = vmax.f32 %v8383, 0.0
    %v8625 = vmax.f32 %v8481, 0.0
    %v8626 = vmax.f32 %v8579, 0.0
    %v8627 = vmax.f32 %v8386, 0.0
    %v8628 = vmax.f32 %v8484, 0.0
    %v8629 = vmax.f32 %v8582, 0.0
    %v8630 = vmax.f32 %v8388, 0.0
    %v8631 = vmax.f32 %v8486, 0.0
    %v8632 = vmax.f32 %v8584, 0.0
    %v8633 = vmax.f32 %v8391, 0.0
    %v8634 = vmax.f32 %v8489, 0.0
    %v8635 = vmax.f32 %v8587, 0.0
    %v8636 = vmax.f32 %v8393, 0.0
    %v8637 = vmax.f32 %v8491, 0.0
    %v8638 = vmax.f32 %v8589, 0.0
    %v8639 = vpack.c.bf16 %v8594, %v8591
    %v8640 = vpack.c.bf16 %v8595, %v8592
    %v8641 = vpack.c.bf16 %v8596, %v8593
    %v8642 = vpack.c.bf16 %v8600, %v8597
    %v8643 = vpack.c.bf16 %v8601, %v8598
    %v8644 = vpack.c.bf16 %v8602, %v8599
    %v8645 = vpack.c.bf16 %v8606, %v8603
    %v8646 = vpack.c.bf16 %v8607, %v8604
    %v8647 = vpack.c.bf16 %v8608, %v8605
    %v8648 = vpack.c.bf16 %v8612, %v8609
    %v8649 = vpack.c.bf16 %v8613, %v8610
    %v8650 = vpack.c.bf16 %v8614, %v8611
    %v8651 = vpack.c.bf16 %v8618, %v8615
    %v8652 = vpack.c.bf16 %v8619, %v8616
    %v8653 = vpack.c.bf16 %v8620, %v8617
    %v8654 = vpack.c.bf16 %v8624, %v8621
    %v8655 = vpack.c.bf16 %v8625, %v8622
    %v8656 = vpack.c.bf16 %v8626, %v8623
    %v8657 = vpack.c.bf16 %v8630, %v8627
    %v8658 = vpack.c.bf16 %v8631, %v8628
    %v8659 = vpack.c.bf16 %v8632, %v8629
    %v8660 = vpack.c.bf16 %v8636, %v8633
    %v8661 = vpack.c.bf16 %v8637, %v8634
    %v8662 = vpack.c.bf16 %v8638, %v8635
    %v8663 = vld [vmem:[%s10] sm:$0xf]
    %v8664 = vld [vmem:[%s10 + $0x4] sm:$0xf]
    %v8665 = vld [vmem:[%s10 + $0x8] sm:$0xf]
    %v8666 = vld [vmem:[%s10 + $0xc] sm:$0xf]
    %v8667 = vld [vmem:[%s10 + $0x10] sm:$0xf]
    %v8668 = vld [vmem:[%s10 + $0x14] sm:$0xf]
    %v8669 = vld [vmem:[%s10 + $0x18] sm:$0xf]
    %v8670 = vld [vmem:[%s10 + $0x1c] sm:$0xf]
    %v8671 = vld [vmem:[%s10 + $0x20] sm:$0xf]
    %v8672 = vld [vmem:[%s10 + $0x24] sm:$0xf]
    %v8673 = vld [vmem:[%s10 + $0x28] sm:$0xf]
    %v8674 = vld [vmem:[%s10 + $0x2c] sm:$0xf]
    %v8675 = vld [vmem:[%s10 + $0x30] sm:$0xf]
    %v8676 = vld [vmem:[%s10 + $0x34] sm:$0xf]
    %v8677 = vld [vmem:[%s10 + $0x38] sm:$0xf]
    %v8678 = vld [vmem:[%s10 + $0x3c] sm:$0xf]
    %v8679 = vld [vmem:[%s10 + $0x40] sm:$0xf]
    %v8680 = vld [vmem:[%s10 + $0x44] sm:$0xf]
    %v8681 = vld [vmem:[%s10 + $0x48] sm:$0xf]
    %v8682 = vld [vmem:[%s10 + $0x4c] sm:$0xf]
    %v8683 = vld [vmem:[%s10 + $0x50] sm:$0xf]
    %v8684 = vld [vmem:[%s10 + $0x54] sm:$0xf]
    %v8685 = vld [vmem:[%s10 + $0x58] sm:$0xf]
    %v8686 = vld [vmem:[%s10 + $0x5c] sm:$0xf]
    %v8687 = vld [vmem:[%s10 + $0x60] sm:$0xf]
    %v8688 = vld [vmem:[%s10 + $0x64] sm:$0xf]
    %v8689 = vld [vmem:[%s10 + $0x68] sm:$0xf]
    %v8690 = vld [vmem:[%s10 + $0x6c] sm:$0xf]
    %v8691 = vld [vmem:[%s10 + $0x70] sm:$0xf]
    %v8692 = vld [vmem:[%s10 + $0x74] sm:$0xf]
    %v8693 = vld [vmem:[%s10 + $0x78] sm:$0xf]
    %v8694 = vld [vmem:[%s10 + $0x7c] sm:$0xf]
    %v8695 = vld [vmem:[%s10 + $0x80] sm:$0xf]
    %v8696 = vld [vmem:[%s10 + $0x84] sm:$0xf]
    %v8697 = vld [vmem:[%s10 + $0x88] sm:$0xf]
    %v8698 = vld [vmem:[%s10 + $0x8c] sm:$0xf]
    %v8699 = vld [vmem:[%s10 + $0x90] sm:$0xf]
    %v8700 = vld [vmem:[%s10 + $0x94] sm:$0xf]
    %v8701 = vld [vmem:[%s10 + $0x98] sm:$0xf]
    %v8702 = vld [vmem:[%s10 + $0x9c] sm:$0xf]
    %v8703 = vld [vmem:[%s10 + $0xa0] sm:$0xf]
    %v8704 = vld [vmem:[%s10 + $0xa4] sm:$0xf]
    %v8705 = vld [vmem:[%s10 + $0xa8] sm:$0xf]
    %v8706 = vld [vmem:[%s10 + $0xac] sm:$0xf]
    %v8707 = vld [vmem:[%s10 + $0xb0] sm:$0xf]
    %v8708 = vld [vmem:[%s10 + $0xb4] sm:$0xf]
    %v8709 = vld [vmem:[%s10 + $0xb8] sm:$0xf]
    %v8710 = vld [vmem:[%s10 + $0xbc] sm:$0xf]
    %v8711 = vld [vmem:[%s11] sm:$0x1]
    %v8713 = vperm.slane %v8711, 0
    %v8763 = vunpack.c.l.b16 %v8663
    %v8764 = vunpack.c.l.b16 %v8664
    %v8765 = vunpack.c.l.b16 %v8665
    %v8766 = vunpack.c.l.b16 %v8666
    %v8767 = vunpack.c.l.b16 %v8667
    %v8768 = vunpack.c.l.b16 %v8668
    %v8769 = vunpack.c.l.b16 %v8669
    %v8770 = vunpack.c.l.b16 %v8670
    %v8771 = vunpack.c.l.b16 %v8671
    %v8772 = vunpack.c.l.b16 %v8672
    %v8773 = vunpack.c.l.b16 %v8673
    %v8774 = vunpack.c.l.b16 %v8674
    %v8775 = vunpack.c.l.b16 %v8675
    %v8776 = vunpack.c.l.b16 %v8676
    %v8777 = vunpack.c.l.b16 %v8677
    %v8778 = vunpack.c.l.b16 %v8678
    %v8779 = vunpack.c.l.b16 %v8679
    %v8780 = vunpack.c.l.b16 %v8680
    %v8781 = vunpack.c.l.b16 %v8681
    %v8782 = vunpack.c.l.b16 %v8682
    %v8783 = vunpack.c.l.b16 %v8683
    %v8784 = vunpack.c.l.b16 %v8684
    %v8785 = vunpack.c.l.b16 %v8685
    %v8786 = vunpack.c.l.b16 %v8686
    %v8787 = vunpack.c.l.b16 %v8687
    %v8788 = vunpack.c.l.b16 %v8688
    %v8789 = vunpack.c.l.b16 %v8689
    %v8790 = vunpack.c.l.b16 %v8690
    %v8791 = vunpack.c.l.b16 %v8691
    %v8792 = vunpack.c.l.b16 %v8692
    %v8793 = vunpack.c.l.b16 %v8693
    %v8794 = vunpack.c.l.b16 %v8694
    %v8795 = vunpack.c.l.b16 %v8695
    %v8796 = vunpack.c.l.b16 %v8696
    %v8797 = vunpack.c.l.b16 %v8697
    %v8798 = vunpack.c.l.b16 %v8698
    %v8799 = vunpack.c.l.b16 %v8699
    %v8800 = vunpack.c.l.b16 %v8700
    %v8801 = vunpack.c.l.b16 %v8701
    %v8802 = vunpack.c.l.b16 %v8702
    %v8803 = vunpack.c.l.b16 %v8703
    %v8804 = vunpack.c.l.b16 %v8704
    %v8805 = vunpack.c.l.b16 %v8705
    %v8806 = vunpack.c.l.b16 %v8706
    %v8807 = vunpack.c.l.b16 %v8707
    %v8808 = vunpack.c.l.b16 %v8708
    %v8809 = vunpack.c.l.b16 %v8709
    %v8810 = vunpack.c.l.b16 %v8710
    %v8811 = vpack.c.b16 %v8764, %v8763
    %v8812 = vpack.c.b16 %v8766, %v8765
    %v8813 = vpack.c.b16 %v8768, %v8767
    %v8814 = vpack.c.b16 %v8770, %v8769
    %v8815 = vpack.c.b16 %v8772, %v8771
    %v8816 = vpack.c.b16 %v8774, %v8773
    %v8817 = vpack.c.b16 %v8776, %v8775
    %v8818 = vpack.c.b16 %v8778, %v8777
    %v8819 = vpack.c.b16 %v8780, %v8779
    %v8820 = vpack.c.b16 %v8782, %v8781
    %v8821 = vpack.c.b16 %v8784, %v8783
    %v8822 = vpack.c.b16 %v8786, %v8785
    %v8823 = vpack.c.b16 %v8788, %v8787
    %v8824 = vpack.c.b16 %v8790, %v8789
    %v8825 = vpack.c.b16 %v8792, %v8791
    %v8826 = vpack.c.b16 %v8794, %v8793
    %v8827 = vpack.c.b16 %v8796, %v8795
    %v8828 = vpack.c.b16 %v8798, %v8797
    %v8829 = vpack.c.b16 %v8800, %v8799
    %v8830 = vpack.c.b16 %v8802, %v8801
    %v8831 = vpack.c.b16 %v8804, %v8803
    %v8832 = vpack.c.b16 %v8806, %v8805
    %v8833 = vpack.c.b16 %v8808, %v8807
    %v8834 = vpack.c.b16 %v8810, %v8809
    %8859 = vmatpush.bf16.msra.mxu0 %v8818
    %8860 = vmatpush.bf16.msra.mxu0 %v8817
    %8861 = vmatpush.bf16.msra.mxu0 %v8816
    %8862 = vmatpush.bf16.msra.mxu0 %v8815
    %8863 = vmatpush.bf16.msra.mxu0 %v8814
    %8864 = vmatpush.bf16.msra.mxu0 %v8813
    %8865 = vmatpush.bf16.msra.mxu0 %v8812
    %8866 = vmatpush.bf16.msra.mxu0 %v8811
    %8867 = vmatmul.bf16.gmra.mxu0 %v8639
    %v8868 = vpop.f32.mrf.mxu0
    %v8869 = vadd.f32 %v8713, %v8868
    %v8870 = vpop.f32.mrf.mxu0
    %v8871 = vadd.f32 %v8713, %v8870
    %8872 = vmatmul.bf16.gmra.mxu0 %v8642
    %v8873 = vpop.f32.mrf.mxu0
    %v8874 = vadd.f32 %v8713, %v8873
    %v8875 = vpop.f32.mrf.mxu0
    %v8876 = vadd.f32 %v8713, %v8875
    %8877 = vmatmul.bf16.gmra.mxu0 %v8645
    %v8878 = vpop.f32.mrf.mxu0
    %v8879 = vadd.f32 %v8713, %v8878
    %v8880 = vpop.f32.mrf.mxu0
    %v8881 = vadd.f32 %v8713, %v8880
    %8882 = vmatmul.bf16.gmra.mxu0 %v8648
    %v8883 = vpop.f32.mrf.mxu0
    %v8884 = vadd.f32 %v8713, %v8883
    %v8885 = vpop.f32.mrf.mxu0
    %v8886 = vadd.f32 %v8713, %v8885
    %8887 = vmatmul.bf16.gmra.mxu0 %v8651
    %v8888 = vpop.f32.mrf.mxu0
    %v8889 = vadd.f32 %v8713, %v8888
    %v8890 = vpop.f32.mrf.mxu0
    %v8891 = vadd.f32 %v8713, %v8890
    %8892 = vmatmul.bf16.gmra.mxu0 %v8654
    %v8893 = vpop.f32.mrf.mxu0
    %v8894 = vadd.f32 %v8713, %v8893
    %v8895 = vpop.f32.mrf.mxu0
    %v8896 = vadd.f32 %v8713, %v8895
    %8897 = vmatmul.bf16.gmra.mxu0 %v8657
    %v8898 = vpop.f32.mrf.mxu0
    %v8899 = vadd.f32 %v8713, %v8898
    %v8900 = vpop.f32.mrf.mxu0
    %v8901 = vadd.f32 %v8713, %v8900
    %8902 = vmatmul.bf16.gmra.mxu0 %v8660
    %v8903 = vpop.f32.mrf.mxu0
    %v8904 = vadd.f32 %v8713, %v8903
    %v8905 = vpop.f32.mrf.mxu0
    %v8906 = vadd.f32 %v8713, %v8905
    %8907 = vdwg.mxu0
    %8908 = vmatpush.bf16.msra.mxu0 %v8826
    %8909 = vmatpush.bf16.msra.mxu0 %v8825
    %8910 = vmatpush.bf16.msra.mxu0 %v8824
    %8911 = vmatpush.bf16.msra.mxu0 %v8823
    %8912 = vmatpush.bf16.msra.mxu0 %v8822
    %8913 = vmatpush.bf16.msra.mxu0 %v8821
    %8914 = vmatpush.bf16.msra.mxu0 %v8820
    %8915 = vmatpush.bf16.msra.mxu0 %v8819
    %8916 = vmatmul.bf16.gmra.mxu0 %v8640
    %v8917 = vpop.f32.mrf.mxu0
    %v8918 = vadd.f32 %v8869, %v8917
    %v8919 = vpop.f32.mrf.mxu0
    %v8920 = vadd.f32 %v8871, %v8919
    %8921 = vmatmul.bf16.gmra.mxu0 %v8643
    %v8922 = vpop.f32.mrf.mxu0
    %v8923 = vadd.f32 %v8874, %v8922
    %v8924 = vpop.f32.mrf.mxu0
    %v8925 = vadd.f32 %v8876, %v8924
    %8926 = vmatmul.bf16.gmra.mxu0 %v8646
    %v8927 = vpop.f32.mrf.mxu0
    %v8928 = vadd.f32 %v8879, %v8927
    %v8929 = vpop.f32.mrf.mxu0
    %v8930 = vadd.f32 %v8881, %v8929
    %8931 = vmatmul.bf16.gmra.mxu0 %v8649
    %v8932 = vpop.f32.mrf.mxu0
    %v8933 = vadd.f32 %v8884, %v8932
    %v8934 = vpop.f32.mrf.mxu0
    %v8935 = vadd.f32 %v8886, %v8934
    %8936 = vmatmul.bf16.gmra.mxu0 %v8652
    %v8937 = vpop.f32.mrf.mxu0
    %v8938 = vadd.f32 %v8889, %v8937
    %v8939 = vpop.f32.mrf.mxu0
    %v8940 = vadd.f32 %v8891, %v8939
    %8941 = vmatmul.bf16.gmra.mxu0 %v8655
    %v8942 = vpop.f32.mrf.mxu0
    %v8943 = vadd.f32 %v8894, %v8942
    %v8944 = vpop.f32.mrf.mxu0
    %v8945 = vadd.f32 %v8896, %v8944
    %8946 = vmatmul.bf16.gmra.mxu0 %v8658
    %v8947 = vpop.f32.mrf.mxu0
    %v8948 = vadd.f32 %v8899, %v8947
    %v8949 = vpop.f32.mrf.mxu0
    %v8950 = vadd.f32 %v8901, %v8949
    %8951 = vmatmul.bf16.gmra.mxu0 %v8661
    %v8952 = vpop.f32.mrf.mxu0
    %v8953 = vadd.f32 %v8904, %v8952
    %v8954 = vpop.f32.mrf.mxu0
    %v8955 = vadd.f32 %v8906, %v8954
    %8956 = vdwg.mxu0
    %8957 = vmatpush.bf16.msra.mxu0 %v8834
    %8958 = vmatpush.bf16.msra.mxu0 %v8833
    %8959 = vmatpush.bf16.msra.mxu0 %v8832
    %8960 = vmatpush.bf16.msra.mxu0 %v8831
    %8961 = vmatpush.bf16.msra.mxu0 %v8830
    %8962 = vmatpush.bf16.msra.mxu0 %v8829
    %8963 = vmatpush.bf16.msra.mxu0 %v8828
    %8964 = vmatpush.bf16.msra.mxu0 %v8827
    %8965 = vmatmul.bf16.gmra.mxu0 %v8641
    %v8966 = vpop.f32.mrf.mxu0
    %v8967 = vadd.f32 %v8918, %v8966
    %v8968 = vpop.f32.mrf.mxu0
    %v8969 = vadd.f32 %v8920, %v8968
    %8970 = vmatmul.bf16.gmra.mxu0 %v8644
    %v8971 = vpop.f32.mrf.mxu0
    %v8972 = vadd.f32 %v8923, %v8971
    %v8973 = vpop.f32.mrf.mxu0
    %v8974 = vadd.f32 %v8925, %v8973
    %8975 = vmatmul.bf16.gmra.mxu0 %v8647
    %v8976 = vpop.f32.mrf.mxu0
    %v8977 = vadd.f32 %v8928, %v8976
    %v8978 = vpop.f32.mrf.mxu0
    %v8979 = vadd.f32 %v8930, %v8978
    %8980 = vmatmul.bf16.gmra.mxu0 %v8650
    %v8981 = vpop.f32.mrf.mxu0
    %v8982 = vadd.f32 %v8933, %v8981
    %v8983 = vpop.f32.mrf.mxu0
    %v8984 = vadd.f32 %v8935, %v8983
    %8985 = vmatmul.bf16.gmra.mxu0 %v8653
    %v8986 = vpop.f32.mrf.mxu0
    %v8987 = vadd.f32 %v8938, %v8986
    %v8988 = vpop.f32.mrf.mxu0
    %v8989 = vadd.f32 %v8940, %v8988
    %8990 = vmatmul.bf16.gmra.mxu0 %v8656
    %v8991 = vpop.f32.mrf.mxu0
    %v8992 = vadd.f32 %v8943, %v8991
    %v8993 = vpop.f32.mrf.mxu0
    %v8994 = vadd.f32 %v8945, %v8993
    %8995 = vmatmul.bf16.gmra.mxu0 %v8659
    %v8996 = vpop.f32.mrf.mxu0
    %v8997 = vadd.f32 %v8948, %v8996
    %v8998 = vpop.f32.mrf.mxu0
    %v8999 = vadd.f32 %v8950, %v8998
    %9000 = vmatmul.bf16.gmra.mxu0 %v8662
    %v9001 = vpop.f32.mrf.mxu0
    %v9002 = vadd.f32 %v8953, %v9001
    %v9003 = vpop.f32.mrf.mxu0
    %v9004 = vadd.f32 %v8955, %v9003
    %9005 = vdwg.mxu0
    %v9006 = vpack.c.bf16 %v8967, %v8967
    %v9007 = vpack.c.bf16 %v8969, %v8969
    %v9008 = vpack.c.bf16 %v8972, %v8972
    %v9009 = vpack.c.bf16 %v8974, %v8974
    %v9010 = vpack.c.bf16 %v8977, %v8977
    %v9011 = vpack.c.bf16 %v8979, %v8979
    %v9012 = vpack.c.bf16 %v8982, %v8982
    %v9013 = vpack.c.bf16 %v8984, %v8984
    %v9014 = vpack.c.bf16 %v8987, %v8987
    %v9015 = vpack.c.bf16 %v8989, %v8989
    %v9016 = vpack.c.bf16 %v8992, %v8992
    %v9017 = vpack.c.bf16 %v8994, %v8994
    %v9018 = vpack.c.bf16 %v8997, %v8997
    %v9019 = vpack.c.bf16 %v8999, %v8999
    %v9020 = vpack.c.bf16 %v9002, %v9002
    %v9021 = vpack.c.bf16 %v9004, %v9004
    %9022 = vst [vmem:[%s12] sm:$0xf] %v9006
    %9023 = vst [vmem:[%s12 + $0x4] sm:$0xf] %v9007
    %9024 = vst [vmem:[%s12 + $0x8] sm:$0xf] %v9008
    %9025 = vst [vmem:[%s12 + $0xc] sm:$0xf] %v9009
    %9026 = vst [vmem:[%s12 + $0x10] sm:$0xf] %v9010
    %9027 = vst [vmem:[%s12 + $0x14] sm:$0xf] %v9011
    %9028 = vst [vmem:[%s12 + $0x18] sm:$0xf] %v9012
    %9029 = vst [vmem:[%s12 + $0x1c] sm:$0xf] %v9013
    %9030 = vst [vmem:[%s12 + $0x20] sm:$0xf] %v9014
    %9031 = vst [vmem:[%s12 + $0x24] sm:$0xf] %v9015
    %9032 = vst [vmem:[%s12 + $0x28] sm:$0xf] %v9016
    %9033 = vst [vmem:[%s12 + $0x2c] sm:$0xf] %v9017
    %9034 = vst [vmem:[%s12 + $0x30] sm:$0xf] %v9018
    %9035 = vst [vmem:[%s12 + $0x34] sm:$0xf] %v9019
    %9036 = vst [vmem:[%s12 + $0x38] sm:$0xf] %v9020
    %9037 = vst [vmem:[%s12 + $0x3c] sm:$0xf] %v9021
    // Predicated region
    $region70: #{em_nerf_forward.1} parent=1 // pred_check
      _
    $region71: #{em_nerf_forward.1} parent=1 // pred_check_branch
      %9039 = sbr.rel (0) target = $region73
    $region72: #{em_nerf_forward.1} parent=1 // pred_region
      _
    $region73: #{em_nerf_forward.1} parent=1 // pred_fallthru
      _
    // Predicated region
    $region74: #{em_nerf_forward.1} parent=1 // pred_check
      _
    $region75: #{em_nerf_forward.1} parent=1 // pred_check_branch
      %9041 = sbr.rel (0) target = $region77
    $region76: #{em_nerf_forward.1} parent=1 // pred_region
      _
    $region77: #{em_nerf_forward.1} parent=1 // pred_fallthru
      _
    %9042 = vsyncpa [#allocation3], 1
    %9043 = vsyncpa [#allocation5], 1
    %9044 = vsyncpa [#allocation8], 1

</llo_original>
